<compile_context>
chip_gen: v6e
topology: v6e:2x2x1
jax: 0.10.0
libtpu: 0.0.40
codegen_flags: <defaults>
</compile_context>

<pallas_src>
import jax
import jax.numpy as jnp
from jax.experimental import pallas as pl
from jax.experimental.pallas import tpu as pltpu


# --------------------------------------------------------------------------- kernel
def _discriminator_kernel(p1_ref, w1_ref, b1_ref, w2_ref, b2_ref,
                          fcw_ref, fcb_ref, o_ref, x1p_ref):
    """Fused conv1+BN+LReLU -> conv2+BN+LReLU -> FC+sigmoid for ONE sample.

    p1_ref : (1, 4, 49, 25) bf16  conv1 im2col patches, rows grouped by conv1 output
             parity g = 2*(ho%2)+(wo%2), row = (ho//2)*7+(wo//2), col = kh*5+kw
    w1_ref : (25, 64)  bf16   conv1 weights per tap (BN1 scale folded in)
    b1_ref : (1, 64)   f32    folded BN1 bias
    w2_ref : (25, 64, 128) bf16  conv2 weights per tap (BN2 scale folded in)
    b2_ref : (1, 128)  f32    folded BN2 bias
    fcw_ref: (49, 128) f32    fc weights reordered to [h*7+w, c]
    fcb_ref: (1, 1)    f32    fc bias
    o_ref  : (1, 1, 1) f32    sigmoid probability
    x1p_ref: (2, 2, 9, 9, 64) bf16 scratch: zero-padded, parity-decomposed conv1
             activation, x1p[ph, pw, i, j, :] == x1_pad[2i+ph, 2j+pw, :]
    """
    # ---- zero the padded parity scratch (borders = conv2's zero padding) ----
    zero_slab = jnp.zeros((9, 9, 64), x1p_ref.dtype)
    for ph in range(2):
        for pw in range(2):
            x1p_ref[ph, pw] = zero_slab

    # ---- conv1 (1->64, 5x5, s2, p2) + folded BN + LeakyReLU(0.2) ----
    w1 = w1_ref[...]
    b1 = b1_ref[...]
    for pa in range(2):
        for pb in range(2):
            g = 2 * pa + pb
            y = jnp.dot(p1_ref[0, g], w1, preferred_element_type=jnp.float32)
            y = y + b1
            y = jnp.where(y > 0, y, 0.2 * y)                 # (49, 64) f32
            y = y.astype(x1p_ref.dtype)
            # scatter the 7x7 spatial block into the interior of the parity plane
            for a in range(7):
                x1p_ref[pa, pb, 1 + a, 1:8, :] = y[7 * a:7 * a + 7, :]

    # ---- conv2 (64->128, 5x5, s2, p2) as 25 shifted-tap matmuls, all in VMEM ----
    acc = jnp.zeros((49, 128), jnp.float32)
    for kh in range(5):
        for kw in range(5):
            ph, i0 = kh % 2, kh // 2
            pw, j0 = kw % 2, kw // 2
            # contiguous slices of the parity-decomposed activation -> (49, 64)
            tap = jnp.concatenate(
                [x1p_ref[ph, pw, i0 + a, j0:j0 + 7, :] for a in range(7)],
                axis=0)
            acc = acc + jnp.dot(tap, w2_ref[5 * kh + kw],
                                preferred_element_type=jnp.float32)
    x2 = acc + b2_ref[...]
    x2 = jnp.where(x2 > 0, x2, 0.2 * x2)                     # (49, 128) f32
    # Dropout2d(0.5): identity in eval mode.

    # ---- fc (6272 -> 1) + sigmoid: VPU multiply + XLU reduce + EUP reciprocal ----
    prod = x2 * fcw_ref[...]                                 # (49, 128)
    logit = jnp.sum(jnp.sum(prod, axis=1, keepdims=True), axis=0, keepdims=True)
    logit = logit + fcb_ref[...]                             # (1, 1)
    prob = pl.reciprocal(1.0 + jnp.exp(-logit), approx=True)
    o_ref[0] = prob


# --------------------------------------------------------------------------- glue
def _conv1_patches_grouped(img):
    """img: (N,1,28,28) f32 -> (N, 4, 49, 25) conv1 patches, parity-grouped rows.

    Group g = 2*(ho%2)+(wo%2), row = (ho//2)*7+(wo//2), col = kh*5+kw.  This lets the
    kernel write the conv1 activation directly into a parity-decomposed padded layout
    so all of conv2's stride-2 taps become contiguous VMEM slices.
    """
    N = img.shape[0]
    xp = jnp.pad(img[:, 0], ((0, 0), (2, 2), (2, 2)))        # (N, 32, 32)
    taps = []
    for kh in range(5):
        for kw in range(5):
            taps.append(xp[:, kh:kh + 28:2, kw:kw + 28:2])   # (N, 14, 14)
    p = jnp.stack(taps, axis=-1)                             # (N, 14, 14, 25)
    p = p.reshape(N, 7, 2, 7, 2, 25).transpose(0, 2, 4, 1, 3, 5)
    return p.reshape(N, 4, 49, 25)


@jax.jit
def discriminator_forward(img, params):
    """img: (N, 1, 28, 28) float32 NCHW. Returns (N, 1) probabilities (eval mode)."""
    N = img.shape[0]
    p1g = _conv1_patches_grouped(img).astype(jnp.bfloat16)   # (N, 4, 49, 25)
    out = pl.pallas_call(
        _discriminator_kernel,
        out_shape=jax.ShapeDtypeStruct((N, 1, 1), jnp.float32),
        grid=(N,),
        in_specs=[
            pl.BlockSpec((1, 4, 49, 25), lambda n: (n, 0, 0, 0)),
            pl.BlockSpec((25, 64), lambda n: (0, 0)),
            pl.BlockSpec((1, 64), lambda n: (0, 0)),
            pl.BlockSpec((25, 64, 128), lambda n: (0, 0, 0)),
            pl.BlockSpec((1, 128), lambda n: (0, 0)),
            pl.BlockSpec((49, 128), lambda n: (0, 0)),
            pl.BlockSpec((1, 1), lambda n: (0, 0)),
        ],
        out_specs=pl.BlockSpec((1, 1, 1), lambda n: (n, 0, 0)),
        scratch_shapes=[pltpu.VMEM((2, 2, 9, 9, 64), jnp.bfloat16)],
        compiler_params=pltpu.CompilerParams(
            dimension_semantics=("parallel",)),
    )(p1g, params["w1"], params["b1"], params["w2"], params["b2"],
      params["fcw"], params["fcb"])
    return out[:, 0, :]                                      # (N, 1)


def _fold_conv_bn_taps(conv_w, conv_b, gamma, beta, mean, var, eps=1e-5):
    """Fold eval-mode BN into per-tap conv weights + a single bias.

    w_taps[kh*5+kw, ci, co] = conv_w[co, ci, kh, kw] * scale[co]
    bias[co]                = (conv_b[co] - mean[co]) * scale[co] + beta[co]
    """
    c_out, c_in, kh, kw = conv_w.shape
    scale = gamma / jnp.sqrt(var + eps)
    bias = (conv_b - mean) * scale + beta
    w_taps = (conv_w * scale[:, None, None, None]).transpose(2, 3, 1, 0)
    return w_taps.reshape(kh * kw, c_in, c_out), bias


def init_raw_params(key):
    ks = jax.random.split(key, 14)
    f32 = jnp.float32
    return dict(
        w1=jax.random.normal(ks[0], (64, 1, 5, 5), f32) * 0.02,
        b1=jax.random.normal(ks[1], (64,), f32) * 0.02,
        g1=1.0 + 0.1 * jax.random.normal(ks[2], (64,), f32),
        be1=0.1 * jax.random.normal(ks[3], (64,), f32),
        m1=0.1 * jax.random.normal(ks[4], (64,), f32),
        v1=0.5 + jax.random.uniform(ks[5], (64,), f32),
        w2=jax.random.normal(ks[6], (128, 64, 5, 5), f32) * 0.02,
        b2=jax.random.normal(ks[7], (128,), f32) * 0.02,
        g2=1.0 + 0.1 * jax.random.normal(ks[8], (128,), f32),
        be2=0.1 * jax.random.normal(ks[9], (128,), f32),
        m2=0.1 * jax.random.normal(ks[10], (128,), f32),
        v2=0.5 + jax.random.uniform(ks[11], (128,), f32),
        fc_w=jax.random.normal(ks[12], (1, 6272), f32) * 0.02,   # PyTorch (out, in)
        fc_b=jax.random.normal(ks[13], (1,), f32) * 0.02,
    )


def prepare_kernel_params(raw):
    w1_taps, b1f = _fold_conv_bn_taps(raw["w1"], raw["b1"], raw["g1"], raw["be1"],
                                      raw["m1"], raw["v1"])
    w2_taps, b2f = _fold_conv_bn_taps(raw["w2"], raw["b2"], raw["g2"], raw["be2"],
                                      raw["m2"], raw["v2"])
    # Re-order fc weights once at init so rows are (h*7+w) and cols are channels;
    # this reproduces PyTorch's x.view(N, -1) over (C, H, W) exactly.
    fcw = raw["fc_w"].reshape(128, 7, 7).transpose(1, 2, 0).reshape(49, 128)
    return dict(
        w1=w1_taps[:, 0, :].astype(jnp.bfloat16),            # (25, 64)
        b1=b1f.reshape(1, 64).astype(jnp.float32),
        w2=w2_taps.astype(jnp.bfloat16),                      # (25, 64, 128)
        b2=b2f.reshape(1, 128).astype(jnp.float32),
        fcw=fcw.astype(jnp.float32),                          # (49, 128)
        fcb=raw["fc_b"].reshape(1, 1).astype(jnp.float32),
    )


def reference_forward(img, raw):
    """Pure-XLA f32 eval-mode reference (for correctness check only)."""
    def conv(x, w, b):
        y = jax.lax.conv_general_dilated(
            x, w, window_strides=(2, 2), padding=((2, 2), (2, 2)),
            dimension_numbers=("NCHW", "OIHW", "NCHW"))
        return y + b[None, :, None, None]

    def bn(x, g, bta, m, v, eps=1e-5):
        inv = (g / jnp.sqrt(v + eps))[None, :, None, None]
        return (x - m[None, :, None, None]) * inv + bta[None, :, None, None]

    def lrelu(x):
        return jnp.where(x > 0, x, 0.2 * x)

    x = lrelu(bn(conv(img, raw["w1"], raw["b1"]),
                 raw["g1"], raw["be1"], raw["m1"], raw["v1"]))
    x = lrelu(bn(conv(x, raw["w2"], raw["b2"]),
                 raw["g2"], raw["be2"], raw["m2"], raw["v2"]))
    x = x.reshape(x.shape[0], -1)
    logit = x @ raw["fc_w"].T + raw["fc_b"]
    return jax.nn.sigmoid(logit)


if __name__ == "__main__":
    key = jax.random.PRNGKey(0)
    k_img, k_par = jax.random.split(key)
    # Spatial size is fixed at 28x28 by Linear(6272, 1); keep batch small.
    img = jax.random.normal(k_img, (2, 1, 28, 28), jnp.float32)
    raw = init_raw_params(k_par)
    params = prepare_kernel_params(raw)

    out = discriminator_forward(img, params)
    out = jax.block_until_ready(out)
    assert out.shape == (2, 1)
    assert bool(jnp.all(jnp.isfinite(out)))

    ref = reference_forward(img, raw)
    err = float(jnp.max(jnp.abs(out - ref)))
    assert err < 2e-2, f"kernel/reference mismatch: max abs err = {err}"
    print("KERNEL_OK")
</pallas_src>

<mosaic_0001>
module attributes {stable_mosaic.version = 11 : i64} {
  func.func @_discriminator_kernel(%arg0: i32, %arg1: memref<1x4x49x25xbf16, #tpu.memory_space<vmem>>, %arg2: memref<25x64xbf16, #tpu.memory_space<vmem>>, %arg3: memref<1x64xf32, #tpu.memory_space<vmem>>, %arg4: memref<25x64x128xbf16, #tpu.memory_space<vmem>>, %arg5: memref<1x128xf32, #tpu.memory_space<vmem>>, %arg6: memref<49x128xf32, #tpu.memory_space<vmem>>, %arg7: memref<1x1xf32, #tpu.memory_space<vmem>>, %arg8: memref<1x1x1xf32, #tpu.memory_space<vmem>>, %arg9: memref<2x2x9x9x64xbf16, #tpu.memory_space<vmem>>) attributes {dimension_semantics = [#tpu.dimension_semantics<parallel>], iteration_bounds = array<i64: 2>, scalar_prefetch = 0 : i64, scratch_operands = 1 : i64, tpu.core_type = #tpu.core_type<tc>, window_params = [{transform_indices = @transform_0, window_bounds = array<i64: 1, 4, 49, 25>}, {pipeline_mode = #tpu.pipeline_mode<synchronous>, transform_indices = @transform_1, window_bounds = array<i64: 25, 64>}, {pipeline_mode = #tpu.pipeline_mode<synchronous>, transform_indices = @transform_2, window_bounds = array<i64: 1, 64>}, {pipeline_mode = #tpu.pipeline_mode<synchronous>, transform_indices = @transform_3, window_bounds = array<i64: 25, 64, 128>}, {pipeline_mode = #tpu.pipeline_mode<synchronous>, transform_indices = @transform_4, window_bounds = array<i64: 1, 128>}, {pipeline_mode = #tpu.pipeline_mode<synchronous>, transform_indices = @transform_5, window_bounds = array<i64: 49, 128>}, {pipeline_mode = #tpu.pipeline_mode<synchronous>, transform_indices = @transform_6, window_bounds = array<i64: 1, 1>}, {transform_indices = @transform_7, window_bounds = array<i64: 1, 1, 1>}]} {
    %cst = arith.constant 0.000000e+00 : bf16
    %0 = vector.broadcast %cst : bf16 to vector<9x9x64xbf16>
    %c0 = arith.constant 0 : index
    %c0_0 = arith.constant 0 : index
    %c0_1 = arith.constant 0 : index
    %c0_2 = arith.constant 0 : index
    %c0_3 = arith.constant 0 : index
    %1 = vector.load %arg9[%c0, %c0_0, %c0_1, %c0_2, %c0_3] : memref<2x2x9x9x64xbf16, #tpu.memory_space<vmem>>, vector<1x1x9x9x64xbf16>
    %2 = vector.shape_cast %1 : vector<1x1x9x9x64xbf16> to vector<9x9x64xbf16>
    %3 = vector.shape_cast %0 : vector<9x9x64xbf16> to vector<1x1x9x9x64xbf16>
    tpu.vector_store %arg9[%c0, %c0_0, %c0_1, %c0_2, %c0_3], %3 {strides = array<i32>} : memref<2x2x9x9x64xbf16, #tpu.memory_space<vmem>>, vector<1x1x9x9x64xbf16>,
    %c0_4 = arith.constant 0 : index
    %c1 = arith.constant 1 : index
    %c0_5 = arith.constant 0 : index
    %c0_6 = arith.constant 0 : index
    %c0_7 = arith.constant 0 : index
    %4 = vector.load %arg9[%c0_4, %c1, %c0_5, %c0_6, %c0_7] : memref<2x2x9x9x64xbf16, #tpu.memory_space<vmem>>, vector<1x1x9x9x64xbf16>
    %5 = vector.shape_cast %4 : vector<1x1x9x9x64xbf16> to vector<9x9x64xbf16>
    %6 = vector.shape_cast %0 : vector<9x9x64xbf16> to vector<1x1x9x9x64xbf16>
    tpu.vector_store %arg9[%c0_4, %c1, %c0_5, %c0_6, %c0_7], %6 {strides = array<i32>} : memref<2x2x9x9x64xbf16, #tpu.memory_space<vmem>>, vector<1x1x9x9x64xbf16>,
    %c1_8 = arith.constant 1 : index
    %c0_9 = arith.constant 0 : index
    %c0_10 = arith.constant 0 : index
    %c0_11 = arith.constant 0 : index
    %c0_12 = arith.constant 0 : index
    %7 = vector.load %arg9[%c1_8, %c0_9, %c0_10, %c0_11, %c0_12] : memref<2x2x9x9x64xbf16, #tpu.memory_space<vmem>>, vector<1x1x9x9x64xbf16>
    %8 = vector.shape_cast %7 : vector<1x1x9x9x64xbf16> to vector<9x9x64xbf16>
    %9 = vector.shape_cast %0 : vector<9x9x64xbf16> to vector<1x1x9x9x64xbf16>
    tpu.vector_store %arg9[%c1_8, %c0_9, %c0_10, %c0_11, %c0_12], %9 {strides = array<i32>} : memref<2x2x9x9x64xbf16, #tpu.memory_space<vmem>>, vector<1x1x9x9x64xbf16>,
    %c1_13 = arith.constant 1 : index
    %c1_14 = arith.constant 1 : index
    %c0_15 = arith.constant 0 : index
    %c0_16 = arith.constant 0 : index
    %c0_17 = arith.constant 0 : index
    %10 = vector.load %arg9[%c1_13, %c1_14, %c0_15, %c0_16, %c0_17] : memref<2x2x9x9x64xbf16, #tpu.memory_space<vmem>>, vector<1x1x9x9x64xbf16>
    %11 = vector.shape_cast %10 : vector<1x1x9x9x64xbf16> to vector<9x9x64xbf16>
    %12 = vector.shape_cast %0 : vector<9x9x64xbf16> to vector<1x1x9x9x64xbf16>
    tpu.vector_store %arg9[%c1_13, %c1_14, %c0_15, %c0_16, %c0_17], %12 {strides = array<i32>} : memref<2x2x9x9x64xbf16, #tpu.memory_space<vmem>>, vector<1x1x9x9x64xbf16>,
    %c0_18 = arith.constant 0 : index
    %c0_19 = arith.constant 0 : index
    %13 = vector.load %arg2[%c0_18, %c0_19] : memref<25x64xbf16, #tpu.memory_space<vmem>>, vector<25x64xbf16>
    %c0_20 = arith.constant 0 : index
    %c0_21 = arith.constant 0 : index
    %14 = vector.load %arg3[%c0_20, %c0_21] : memref<1x64xf32, #tpu.memory_space<vmem>>, vector<1x64xf32>
    %c0_22 = arith.constant 0 : index
    %c0_23 = arith.constant 0 : index
    %c0_24 = arith.constant 0 : index
    %c0_25 = arith.constant 0 : index
    %15 = vector.load %arg1[%c0_22, %c0_23, %c0_24, %c0_25] : memref<1x4x49x25xbf16, #tpu.memory_space<vmem>>, vector<1x1x49x25xbf16>
    %16 = vector.shape_cast %15 : vector<1x1x49x25xbf16> to vector<49x25xbf16>
    %cst_26 = arith.constant dense<0.000000e+00> : vector<49x64xf32>
    %17 = tpu.matmul %16, %13, %cst_26 {dimension_numbers = #tpu.dot_dimension_numbers<[1], [0], [0], [1], [0, 0, 1, 1], [], []>} : vector<49x25xbf16>, vector<25x64xbf16>, vector<49x64xf32> -> vector<49x64xf32>
    %18 = vector.broadcast %14 : vector<1x64xf32> to vector<49x64xf32>
    %19 = arith.addf %17, %18 : vector<49x64xf32>
    %cst_27 = arith.constant 0.000000e+00 : f32
    %20 = vector.broadcast %cst_27 : f32 to vector<49x64xf32>
    %21 = arith.cmpf ogt, %19, %20 : vector<49x64xf32>
    %cst_28 = arith.constant 2.000000e-01 : f32
    %22 = vector.broadcast %cst_28 : f32 to vector<49x64xf32>
    %23 = arith.mulf %22, %19 : vector<49x64xf32>
    %24 = arith.select %21, %19, %23 : vector<49x64xi1>, vector<49x64xf32>
    %25 = arith.truncf %24 : vector<49x64xf32> to vector<49x64xbf16>
    %26 = vector.extract_strided_slice %25 {offsets = [0, 0], sizes = [7, 64], strides = [1, 1]} : vector<49x64xbf16> to vector<7x64xbf16>
    %c0_29 = arith.constant 0 : index
    %c0_30 = arith.constant 0 : index
    %c1_31 = arith.constant 1 : index
    %c1_32 = arith.constant 1 : index
    %c0_33 = arith.constant 0 : index
    %27 = vector.load %arg9[%c0_29, %c0_30, %c1_31, %c1_32, %c0_33] : memref<2x2x9x9x64xbf16, #tpu.memory_space<vmem>>, vector<1x1x1x7x64xbf16>
    %28 = vector.shape_cast %27 : vector<1x1x1x7x64xbf16> to vector<7x64xbf16>
    %29 = vector.shape_cast %26 : vector<7x64xbf16> to vector<1x1x1x7x64xbf16>
    tpu.vector_store %arg9[%c0_29, %c0_30, %c1_31, %c1_32, %c0_33], %29 {strides = array<i32>} : memref<2x2x9x9x64xbf16, #tpu.memory_space<vmem>>, vector<1x1x1x7x64xbf16>,
    %30 = vector.extract_strided_slice %25 {offsets = [7, 0], sizes = [7, 64], strides = [1, 1]} : vector<49x64xbf16> to vector<7x64xbf16>
    %c0_34 = arith.constant 0 : index
    %c0_35 = arith.constant 0 : index
    %c2 = arith.constant 2 : index
    %c1_36 = arith.constant 1 : index
    %c0_37 = arith.constant 0 : index
    %31 = vector.load %arg9[%c0_34, %c0_35, %c2, %c1_36, %c0_37] : memref<2x2x9x9x64xbf16, #tpu.memory_space<vmem>>, vector<1x1x1x7x64xbf16>
    %32 = vector.shape_cast %31 : vector<1x1x1x7x64xbf16> to vector<7x64xbf16>
    %33 = vector.shape_cast %30 : vector<7x64xbf16> to vector<1x1x1x7x64xbf16>
    tpu.vector_store %arg9[%c0_34, %c0_35, %c2, %c1_36, %c0_37], %33 {strides = array<i32>} : memref<2x2x9x9x64xbf16, #tpu.memory_space<vmem>>, vector<1x1x1x7x64xbf16>,
    %34 = vector.extract_strided_slice %25 {offsets = [14, 0], sizes = [7, 64], strides = [1, 1]} : vector<49x64xbf16> to vector<7x64xbf16>
    %c0_38 = arith.constant 0 : index
    %c0_39 = arith.constant 0 : index
    %c3 = arith.constant 3 : index
    %c1_40 = arith.constant 1 : index
    %c0_41 = arith.constant 0 : index
    %35 = vector.load %arg9[%c0_38, %c0_39, %c3, %c1_40, %c0_41] : memref<2x2x9x9x64xbf16, #tpu.memory_space<vmem>>, vector<1x1x1x7x64xbf16>
    %36 = vector.shape_cast %35 : vector<1x1x1x7x64xbf16> to vector<7x64xbf16>
    %37 = vector.shape_cast %34 : vector<7x64xbf16> to vector<1x1x1x7x64xbf16>
    tpu.vector_store %arg9[%c0_38, %c0_39, %c3, %c1_40, %c0_41], %37 {strides = array<i32>} : memref<2x2x9x9x64xbf16, #tpu.memory_space<vmem>>, vector<1x1x1x7x64xbf16>,
    %38 = vector.extract_strided_slice %25 {offsets = [21, 0], sizes = [7, 64], strides = [1, 1]} : vector<49x64xbf16> to vector<7x64xbf16>
    %c0_42 = arith.constant 0 : index
    %c0_43 = arith.constant 0 : index
    %c4 = arith.constant 4 : index
    %c1_44 = arith.constant 1 : index
    %c0_45 = arith.constant 0 : index
    %39 = vector.load %arg9[%c0_42, %c0_43, %c4, %c1_44, %c0_45] : memref<2x2x9x9x64xbf16, #tpu.memory_space<vmem>>, vector<1x1x1x7x64xbf16>
    %40 = vector.shape_cast %39 : vector<1x1x1x7x64xbf16> to vector<7x64xbf16>
    %41 = vector.shape_cast %38 : vector<7x64xbf16> to vector<1x1x1x7x64xbf16>
    tpu.vector_store %arg9[%c0_42, %c0_43, %c4, %c1_44, %c0_45], %41 {strides = array<i32>} : memref<2x2x9x9x64xbf16, #tpu.memory_space<vmem>>, vector<1x1x1x7x64xbf16>,
    %42 = vector.extract_strided_slice %25 {offsets = [28, 0], sizes = [7, 64], strides = [1, 1]} : vector<49x64xbf16> to vector<7x64xbf16>
    %c0_46 = arith.constant 0 : index
    %c0_47 = arith.constant 0 : index
    %c5 = arith.constant 5 : index
    %c1_48 = arith.constant 1 : index
    %c0_49 = arith.constant 0 : index
    %43 = vector.load %arg9[%c0_46, %c0_47, %c5, %c1_48, %c0_49] : memref<2x2x9x9x64xbf16, #tpu.memory_space<vmem>>, vector<1x1x1x7x64xbf16>
    %44 = vector.shape_cast %43 : vector<1x1x1x7x64xbf16> to vector<7x64xbf16>
    %45 = vector.shape_cast %42 : vector<7x64xbf16> to vector<1x1x1x7x64xbf16>
    tpu.vector_store %arg9[%c0_46, %c0_47, %c5, %c1_48, %c0_49], %45 {strides = array<i32>} : memref<2x2x9x9x64xbf16, #tpu.memory_space<vmem>>, vector<1x1x1x7x64xbf16>,
    %46 = vector.extract_strided_slice %25 {offsets = [35, 0], sizes = [7, 64], strides = [1, 1]} : vector<49x64xbf16> to vector<7x64xbf16>
    %c0_50 = arith.constant 0 : index
    %c0_51 = arith.constant 0 : index
    %c6 = arith.constant 6 : index
    %c1_52 = arith.constant 1 : index
    %c0_53 = arith.constant 0 : index
    %47 = vector.load %arg9[%c0_50, %c0_51, %c6, %c1_52, %c0_53] : memref<2x2x9x9x64xbf16, #tpu.memory_space<vmem>>, vector<1x1x1x7x64xbf16>
    %48 = vector.shape_cast %47 : vector<1x1x1x7x64xbf16> to vector<7x64xbf16>
    %49 = vector.shape_cast %46 : vector<7x64xbf16> to vector<1x1x1x7x64xbf16>
    tpu.vector_store %arg9[%c0_50, %c0_51, %c6, %c1_52, %c0_53], %49 {strides = array<i32>} : memref<2x2x9x9x64xbf16, #tpu.memory_space<vmem>>, vector<1x1x1x7x64xbf16>,
    %50 = vector.extract_strided_slice %25 {offsets = [42, 0], sizes = [7, 64], strides = [1, 1]} : vector<49x64xbf16> to vector<7x64xbf16>
    %c0_54 = arith.constant 0 : index
    %c0_55 = arith.constant 0 : index
    %c7 = arith.constant 7 : index
    %c1_56 = arith.constant 1 : index
    %c0_57 = arith.constant 0 : index
    %51 = vector.load %arg9[%c0_54, %c0_55, %c7, %c1_56, %c0_57] : memref<2x2x9x9x64xbf16, #tpu.memory_space<vmem>>, vector<1x1x1x7x64xbf16>
    %52 = vector.shape_cast %51 : vector<1x1x1x7x64xbf16> to vector<7x64xbf16>
    %53 = vector.shape_cast %50 : vector<7x64xbf16> to vector<1x1x1x7x64xbf16>
    tpu.vector_store %arg9[%c0_54, %c0_55, %c7, %c1_56, %c0_57], %53 {strides = array<i32>} : memref<2x2x9x9x64xbf16, #tpu.memory_space<vmem>>, vector<1x1x1x7x64xbf16>,
    %c0_58 = arith.constant 0 : index
    %c1_59 = arith.constant 1 : index
    %c0_60 = arith.constant 0 : index
    %c0_61 = arith.constant 0 : index
    %54 = vector.load %arg1[%c0_58, %c1_59, %c0_60, %c0_61] : memref<1x4x49x25xbf16, #tpu.memory_space<vmem>>, vector<1x1x49x25xbf16>
    %55 = vector.shape_cast %54 : vector<1x1x49x25xbf16> to vector<49x25xbf16>
    %cst_62 = arith.constant dense<0.000000e+00> : vector<49x64xf32>
    %56 = tpu.matmul %55, %13, %cst_62 {dimension_numbers = #tpu.dot_dimension_numbers<[1], [0], [0], [1], [0, 0, 1, 1], [], []>} : vector<49x25xbf16>, vector<25x64xbf16>, vector<49x64xf32> -> vector<49x64xf32>
    %57 = vector.broadcast %14 : vector<1x64xf32> to vector<49x64xf32>
    %58 = arith.addf %56, %57 : vector<49x64xf32>
    %cst_63 = arith.constant 0.000000e+00 : f32
    %59 = vector.broadcast %cst_63 : f32 to vector<49x64xf32>
    %60 = arith.cmpf ogt, %58, %59 : vector<49x64xf32>
    %cst_64 = arith.constant 2.000000e-01 : f32
    %61 = vector.broadcast %cst_64 : f32 to vector<49x64xf32>
    %62 = arith.mulf %61, %58 : vector<49x64xf32>
    %63 = arith.select %60, %58, %62 : vector<49x64xi1>, vector<49x64xf32>
    %64 = arith.truncf %63 : vector<49x64xf32> to vector<49x64xbf16>
    %65 = vector.extract_strided_slice %64 {offsets = [0, 0], sizes = [7, 64], strides = [1, 1]} : vector<49x64xbf16> to vector<7x64xbf16>
    %c0_65 = arith.constant 0 : index
    %c1_66 = arith.constant 1 : index
    %c1_67 = arith.constant 1 : index
    %c1_68 = arith.constant 1 : index
    %c0_69 = arith.constant 0 : index
    %66 = vector.load %arg9[%c0_65, %c1_66, %c1_67, %c1_68, %c0_69] : memref<2x2x9x9x64xbf16, #tpu.memory_space<vmem>>, vector<1x1x1x7x64xbf16>
    %67 = vector.shape_cast %66 : vector<1x1x1x7x64xbf16> to vector<7x64xbf16>
    %68 = vector.shape_cast %65 : vector<7x64xbf16> to vector<1x1x1x7x64xbf16>
    tpu.vector_store %arg9[%c0_65, %c1_66, %c1_67, %c1_68, %c0_69], %68 {strides = array<i32>} : memref<2x2x9x9x64xbf16, #tpu.memory_space<vmem>>, vector<1x1x1x7x64xbf16>,
    %69 = vector.extract_strided_slice %64 {offsets = [7, 0], sizes = [7, 64], strides = [1, 1]} : vector<49x64xbf16> to vector<7x64xbf16>
    %c0_70 = arith.constant 0 : index
    %c1_71 = arith.constant 1 : index
    %c2_72 = arith.constant 2 : index
    %c1_73 = arith.constant 1 : index
    %c0_74 = arith.constant 0 : index
    %70 = vector.load %arg9[%c0_70, %c1_71, %c2_72, %c1_73, %c0_74] : memref<2x2x9x9x64xbf16, #tpu.memory_space<vmem>>, vector<1x1x1x7x64xbf16>
    %71 = vector.shape_cast %70 : vector<1x1x1x7x64xbf16> to vector<7x64xbf16>
    %72 = vector.shape_cast %69 : vector<7x64xbf16> to vector<1x1x1x7x64xbf16>
    tpu.vector_store %arg9[%c0_70, %c1_71, %c2_72, %c1_73, %c0_74], %72 {strides = array<i32>} : memref<2x2x9x9x64xbf16, #tpu.memory_space<vmem>>, vector<1x1x1x7x64xbf16>,
    %73 = vector.extract_strided_slice %64 {offsets = [14, 0], sizes = [7, 64], strides = [1, 1]} : vector<49x64xbf16> to vector<7x64xbf16>
    %c0_75 = arith.constant 0 : index
    %c1_76 = arith.constant 1 : index
    %c3_77 = arith.constant 3 : index
    %c1_78 = arith.constant 1 : index
    %c0_79 = arith.constant 0 : index
    %74 = vector.load %arg9[%c0_75, %c1_76, %c3_77, %c1_78, %c0_79] : memref<2x2x9x9x64xbf16, #tpu.memory_space<vmem>>, vector<1x1x1x7x64xbf16>
    %75 = vector.shape_cast %74 : vector<1x1x1x7x64xbf16> to vector<7x64xbf16>
    %76 = vector.shape_cast %73 : vector<7x64xbf16> to vector<1x1x1x7x64xbf16>
    tpu.vector_store %arg9[%c0_75, %c1_76, %c3_77, %c1_78, %c0_79], %76 {strides = array<i32>} : memref<2x2x9x9x64xbf16, #tpu.memory_space<vmem>>, vector<1x1x1x7x64xbf16>,
    %77 = vector.extract_strided_slice %64 {offsets = [21, 0], sizes = [7, 64], strides = [1, 1]} : vector<49x64xbf16> to vector<7x64xbf16>
    %c0_80 = arith.constant 0 : index
    %c1_81 = arith.constant 1 : index
    %c4_82 = arith.constant 4 : index
    %c1_83 = arith.constant 1 : index
    %c0_84 = arith.constant 0 : index
    %78 = vector.load %arg9[%c0_80, %c1_81, %c4_82, %c1_83, %c0_84] : memref<2x2x9x9x64xbf16, #tpu.memory_space<vmem>>, vector<1x1x1x7x64xbf16>
    %79 = vector.shape_cast %78 : vector<1x1x1x7x64xbf16> to vector<7x64xbf16>
    %80 = vector.shape_cast %77 : vector<7x64xbf16> to vector<1x1x1x7x64xbf16>
    tpu.vector_store %arg9[%c0_80, %c1_81, %c4_82, %c1_83, %c0_84], %80 {strides = array<i32>} : memref<2x2x9x9x64xbf16, #tpu.memory_space<vmem>>, vector<1x1x1x7x64xbf16>,
    %81 = vector.extract_strided_slice %64 {offsets = [28, 0], sizes = [7, 64], strides = [1, 1]} : vector<49x64xbf16> to vector<7x64xbf16>
    %c0_85 = arith.constant 0 : index
    %c1_86 = arith.constant 1 : index
    %c5_87 = arith.constant 5 : index
    %c1_88 = arith.constant 1 : index
    %c0_89 = arith.constant 0 : index
    %82 = vector.load %arg9[%c0_85, %c1_86, %c5_87, %c1_88, %c0_89] : memref<2x2x9x9x64xbf16, #tpu.memory_space<vmem>>, vector<1x1x1x7x64xbf16>
    %83 = vector.shape_cast %82 : vector<1x1x1x7x64xbf16> to vector<7x64xbf16>
    %84 = vector.shape_cast %81 : vector<7x64xbf16> to vector<1x1x1x7x64xbf16>
    tpu.vector_store %arg9[%c0_85, %c1_86, %c5_87, %c1_88, %c0_89], %84 {strides = array<i32>} : memref<2x2x9x9x64xbf16, #tpu.memory_space<vmem>>, vector<1x1x1x7x64xbf16>,
    %85 = vector.extract_strided_slice %64 {offsets = [35, 0], sizes = [7, 64], strides = [1, 1]} : vector<49x64xbf16> to vector<7x64xbf16>
    %c0_90 = arith.constant 0 : index
    %c1_91 = arith.constant 1 : index
    %c6_92 = arith.constant 6 : index
    %c1_93 = arith.constant 1 : index
    %c0_94 = arith.constant 0 : index
    %86 = vector.load %arg9[%c0_90, %c1_91, %c6_92, %c1_93, %c0_94] : memref<2x2x9x9x64xbf16, #tpu.memory_space<vmem>>, vector<1x1x1x7x64xbf16>
    %87 = vector.shape_cast %86 : vector<1x1x1x7x64xbf16> to vector<7x64xbf16>
    %88 = vector.shape_cast %85 : vector<7x64xbf16> to vector<1x1x1x7x64xbf16>
    tpu.vector_store %arg9[%c0_90, %c1_91, %c6_92, %c1_93, %c0_94], %88 {strides = array<i32>} : memref<2x2x9x9x64xbf16, #tpu.memory_space<vmem>>, vector<1x1x1x7x64xbf16>,
    %89 = vector.extract_strided_slice %64 {offsets = [42, 0], sizes = [7, 64], strides = [1, 1]} : vector<49x64xbf16> to vector<7x64xbf16>
    %c0_95 = arith.constant 0 : index
    %c1_96 = arith.constant 1 : index
    %c7_97 = arith.constant 7 : index
    %c1_98 = arith.constant 1 : index
    %c0_99 = arith.constant 0 : index
    %90 = vector.load %arg9[%c0_95, %c1_96, %c7_97, %c1_98, %c0_99] : memref<2x2x9x9x64xbf16, #tpu.memory_space<vmem>>, vector<1x1x1x7x64xbf16>
    %91 = vector.shape_cast %90 : vector<1x1x1x7x64xbf16> to vector<7x64xbf16>
    %92 = vector.shape_cast %89 : vector<7x64xbf16> to vector<1x1x1x7x64xbf16>
    tpu.vector_store %arg9[%c0_95, %c1_96, %c7_97, %c1_98, %c0_99], %92 {strides = array<i32>} : memref<2x2x9x9x64xbf16, #tpu.memory_space<vmem>>, vector<1x1x1x7x64xbf16>,
    %c0_100 = arith.constant 0 : index
    %c2_101 = arith.constant 2 : index
    %c0_102 = arith.constant 0 : index
    %c0_103 = arith.constant 0 : index
    %93 = vector.load %arg1[%c0_100, %c2_101, %c0_102, %c0_103] : memref<1x4x49x25xbf16, #tpu.memory_space<vmem>>, vector<1x1x49x25xbf16>
    %94 = vector.shape_cast %93 : vector<1x1x49x25xbf16> to vector<49x25xbf16>
    %cst_104 = arith.constant dense<0.000000e+00> : vector<49x64xf32>
    %95 = tpu.matmul %94, %13, %cst_104 {dimension_numbers = #tpu.dot_dimension_numbers<[1], [0], [0], [1], [0, 0, 1, 1], [], []>} : vector<49x25xbf16>, vector<25x64xbf16>, vector<49x64xf32> -> vector<49x64xf32>
    %96 = vector.broadcast %14 : vector<1x64xf32> to vector<49x64xf32>
    %97 = arith.addf %95, %96 : vector<49x64xf32>
    %cst_105 = arith.constant 0.000000e+00 : f32
    %98 = vector.broadcast %cst_105 : f32 to vector<49x64xf32>
    %99 = arith.cmpf ogt, %97, %98 : vector<49x64xf32>
    %cst_106 = arith.constant 2.000000e-01 : f32
    %100 = vector.broadcast %cst_106 : f32 to vector<49x64xf32>
    %101 = arith.mulf %100, %97 : vector<49x64xf32>
    %102 = arith.select %99, %97, %101 : vector<49x64xi1>, vector<49x64xf32>
    %103 = arith.truncf %102 : vector<49x64xf32> to vector<49x64xbf16>
    %104 = vector.extract_strided_slice %103 {offsets = [0, 0], sizes = [7, 64], strides = [1, 1]} : vector<49x64xbf16> to vector<7x64xbf16>
    %c1_107 = arith.constant 1 : index
    %c0_108 = arith.constant 0 : index
    %c1_109 = arith.constant 1 : index
    %c1_110 = arith.constant 1 : index
    %c0_111 = arith.constant 0 : index
    %105 = vector.load %arg9[%c1_107, %c0_108, %c1_109, %c1_110, %c0_111] : memref<2x2x9x9x64xbf16, #tpu.memory_space<vmem>>, vector<1x1x1x7x64xbf16>
    %106 = vector.shape_cast %105 : vector<1x1x1x7x64xbf16> to vector<7x64xbf16>
    %107 = vector.shape_cast %104 : vector<7x64xbf16> to vector<1x1x1x7x64xbf16>
    tpu.vector_store %arg9[%c1_107, %c0_108, %c1_109, %c1_110, %c0_111], %107 {strides = array<i32>} : memref<2x2x9x9x64xbf16, #tpu.memory_space<vmem>>, vector<1x1x1x7x64xbf16>,
    %108 = vector.extract_strided_slice %103 {offsets = [7, 0], sizes = [7, 64], strides = [1, 1]} : vector<49x64xbf16> to vector<7x64xbf16>
    %c1_112 = arith.constant 1 : index
    %c0_113 = arith.constant 0 : index
    %c2_114 = arith.constant 2 : index
    %c1_115 = arith.constant 1 : index
    %c0_116 = arith.constant 0 : index
    %109 = vector.load %arg9[%c1_112, %c0_113, %c2_114, %c1_115, %c0_116] : memref<2x2x9x9x64xbf16, #tpu.memory_space<vmem>>, vector<1x1x1x7x64xbf16>
    %110 = vector.shape_cast %109 : vector<1x1x1x7x64xbf16> to vector<7x64xbf16>
    %111 = vector.shape_cast %108 : vector<7x64xbf16> to vector<1x1x1x7x64xbf16>
    tpu.vector_store %arg9[%c1_112, %c0_113, %c2_114, %c1_115, %c0_116], %111 {strides = array<i32>} : memref<2x2x9x9x64xbf16, #tpu.memory_space<vmem>>, vector<1x1x1x7x64xbf16>,
    %112 = vector.extract_strided_slice %103 {offsets = [14, 0], sizes = [7, 64], strides = [1, 1]} : vector<49x64xbf16> to vector<7x64xbf16>
    %c1_117 = arith.constant 1 : index
    %c0_118 = arith.constant 0 : index
    %c3_119 = arith.constant 3 : index
    %c1_120 = arith.constant 1 : index
    %c0_121 = arith.constant 0 : index
    %113 = vector.load %arg9[%c1_117, %c0_118, %c3_119, %c1_120, %c0_121] : memref<2x2x9x9x64xbf16, #tpu.memory_space<vmem>>, vector<1x1x1x7x64xbf16>
    %114 = vector.shape_cast %113 : vector<1x1x1x7x64xbf16> to vector<7x64xbf16>
    %115 = vector.shape_cast %112 : vector<7x64xbf16> to vector<1x1x1x7x64xbf16>
    tpu.vector_store %arg9[%c1_117, %c0_118, %c3_119, %c1_120, %c0_121], %115 {strides = array<i32>} : memref<2x2x9x9x64xbf16, #tpu.memory_space<vmem>>, vector<1x1x1x7x64xbf16>,
    %116 = vector.extract_strided_slice %103 {offsets = [21, 0], sizes = [7, 64], strides = [1, 1]} : vector<49x64xbf16> to vector<7x64xbf16>
    %c1_122 = arith.constant 1 : index
    %c0_123 = arith.constant 0 : index
    %c4_124 = arith.constant 4 : index
    %c1_125 = arith.constant 1 : index
    %c0_126 = arith.constant 0 : index
    %117 = vector.load %arg9[%c1_122, %c0_123, %c4_124, %c1_125, %c0_126] : memref<2x2x9x9x64xbf16, #tpu.memory_space<vmem>>, vector<1x1x1x7x64xbf16>
    %118 = vector.shape_cast %117 : vector<1x1x1x7x64xbf16> to vector<7x64xbf16>
    %119 = vector.shape_cast %116 : vector<7x64xbf16> to vector<1x1x1x7x64xbf16>
    tpu.vector_store %arg9[%c1_122, %c0_123, %c4_124, %c1_125, %c0_126], %119 {strides = array<i32>} : memref<2x2x9x9x64xbf16, #tpu.memory_space<vmem>>, vector<1x1x1x7x64xbf16>,
    %120 = vector.extract_strided_slice %103 {offsets = [28, 0], sizes = [7, 64], strides = [1, 1]} : vector<49x64xbf16> to vector<7x64xbf16>
    %c1_127 = arith.constant 1 : index
    %c0_128 = arith.constant 0 : index
    %c5_129 = arith.constant 5 : index
    %c1_130 = arith.constant 1 : index
    %c0_131 = arith.constant 0 : index
    %121 = vector.load %arg9[%c1_127, %c0_128, %c5_129, %c1_130, %c0_131] : memref<2x2x9x9x64xbf16, #tpu.memory_space<vmem>>, vector<1x1x1x7x64xbf16>
    %122 = vector.shape_cast %121 : vector<1x1x1x7x64xbf16> to vector<7x64xbf16>
    %123 = vector.shape_cast %120 : vector<7x64xbf16> to vector<1x1x1x7x64xbf16>
    tpu.vector_store %arg9[%c1_127, %c0_128, %c5_129, %c1_130, %c0_131], %123 {strides = array<i32>} : memref<2x2x9x9x64xbf16, #tpu.memory_space<vmem>>, vector<1x1x1x7x64xbf16>,
    %124 = vector.extract_strided_slice %103 {offsets = [35, 0], sizes = [7, 64], strides = [1, 1]} : vector<49x64xbf16> to vector<7x64xbf16>
    %c1_132 = arith.constant 1 : index
    %c0_133 = arith.constant 0 : index
    %c6_134 = arith.constant 6 : index
    %c1_135 = arith.constant 1 : index
    %c0_136 = arith.constant 0 : index
    %125 = vector.load %arg9[%c1_132, %c0_133, %c6_134, %c1_135, %c0_136] : memref<2x2x9x9x64xbf16, #tpu.memory_space<vmem>>, vector<1x1x1x7x64xbf16>
    %126 = vector.shape_cast %125 : vector<1x1x1x7x64xbf16> to vector<7x64xbf16>
    %127 = vector.shape_cast %124 : vector<7x64xbf16> to vector<1x1x1x7x64xbf16>
    tpu.vector_store %arg9[%c1_132, %c0_133, %c6_134, %c1_135, %c0_136], %127 {strides = array<i32>} : memref<2x2x9x9x64xbf16, #tpu.memory_space<vmem>>, vector<1x1x1x7x64xbf16>,
    %128 = vector.extract_strided_slice %103 {offsets = [42, 0], sizes = [7, 64], strides = [1, 1]} : vector<49x64xbf16> to vector<7x64xbf16>
    %c1_137 = arith.constant 1 : index
    %c0_138 = arith.constant 0 : index
    %c7_139 = arith.constant 7 : index
    %c1_140 = arith.constant 1 : index
    %c0_141 = arith.constant 0 : index
    %129 = vector.load %arg9[%c1_137, %c0_138, %c7_139, %c1_140, %c0_141] : memref<2x2x9x9x64xbf16, #tpu.memory_space<vmem>>, vector<1x1x1x7x64xbf16>
    %130 = vector.shape_cast %129 : vector<1x1x1x7x64xbf16> to vector<7x64xbf16>
    %131 = vector.shape_cast %128 : vector<7x64xbf16> to vector<1x1x1x7x64xbf16>
    tpu.vector_store %arg9[%c1_137, %c0_138, %c7_139, %c1_140, %c0_141], %131 {strides = array<i32>} : memref<2x2x9x9x64xbf16, #tpu.memory_space<vmem>>, vector<1x1x1x7x64xbf16>,
    %c0_142 = arith.constant 0 : index
    %c3_143 = arith.constant 3 : index
    %c0_144 = arith.constant 0 : index
    %c0_145 = arith.constant 0 : index
    %132 = vector.load %arg1[%c0_142, %c3_143, %c0_144, %c0_145] : memref<1x4x49x25xbf16, #tpu.memory_space<vmem>>, vector<1x1x49x25xbf16>
    %133 = vector.shape_cast %132 : vector<1x1x49x25xbf16> to vector<49x25xbf16>
    %cst_146 = arith.constant dense<0.000000e+00> : vector<49x64xf32>
    %134 = tpu.matmul %133, %13, %cst_146 {dimension_numbers = #tpu.dot_dimension_numbers<[1], [0], [0], [1], [0, 0, 1, 1], [], []>} : vector<49x25xbf16>, vector<25x64xbf16>, vector<49x64xf32> -> vector<49x64xf32>
    %135 = vector.broadcast %14 : vector<1x64xf32> to vector<49x64xf32>
    %136 = arith.addf %134, %135 : vector<49x64xf32>
    %cst_147 = arith.constant 0.000000e+00 : f32
    %137 = vector.broadcast %cst_147 : f32 to vector<49x64xf32>
    %138 = arith.cmpf ogt, %136, %137 : vector<49x64xf32>
    %cst_148 = arith.constant 2.000000e-01 : f32
    %139 = vector.broadcast %cst_148 : f32 to vector<49x64xf32>
    %140 = arith.mulf %139, %136 : vector<49x64xf32>
    %141 = arith.select %138, %136, %140 : vector<49x64xi1>, vector<49x64xf32>
    %142 = arith.truncf %141 : vector<49x64xf32> to vector<49x64xbf16>
    %143 = vector.extract_strided_slice %142 {offsets = [0, 0], sizes = [7, 64], strides = [1, 1]} : vector<49x64xbf16> to vector<7x64xbf16>
    %c1_149 = arith.constant 1 : index
    %c1_150 = arith.constant 1 : index
    %c1_151 = arith.constant 1 : index
    %c1_152 = arith.constant 1 : index
    %c0_153 = arith.constant 0 : index
    %144 = vector.load %arg9[%c1_149, %c1_150, %c1_151, %c1_152, %c0_153] : memref<2x2x9x9x64xbf16, #tpu.memory_space<vmem>>, vector<1x1x1x7x64xbf16>
    %145 = vector.shape_cast %144 : vector<1x1x1x7x64xbf16> to vector<7x64xbf16>
    %146 = vector.shape_cast %143 : vector<7x64xbf16> to vector<1x1x1x7x64xbf16>
    tpu.vector_store %arg9[%c1_149, %c1_150, %c1_151, %c1_152, %c0_153], %146 {strides = array<i32>} : memref<2x2x9x9x64xbf16, #tpu.memory_space<vmem>>, vector<1x1x1x7x64xbf16>,
    %147 = vector.extract_strided_slice %142 {offsets = [7, 0], sizes = [7, 64], strides = [1, 1]} : vector<49x64xbf16> to vector<7x64xbf16>
    %c1_154 = arith.constant 1 : index
    %c1_155 = arith.constant 1 : index
    %c2_156 = arith.constant 2 : index
    %c1_157 = arith.constant 1 : index
    %c0_158 = arith.constant 0 : index
    %148 = vector.load %arg9[%c1_154, %c1_155, %c2_156, %c1_157, %c0_158] : memref<2x2x9x9x64xbf16, #tpu.memory_space<vmem>>, vector<1x1x1x7x64xbf16>
    %149 = vector.shape_cast %148 : vector<1x1x1x7x64xbf16> to vector<7x64xbf16>
    %150 = vector.shape_cast %147 : vector<7x64xbf16> to vector<1x1x1x7x64xbf16>
    tpu.vector_store %arg9[%c1_154, %c1_155, %c2_156, %c1_157, %c0_158], %150 {strides = array<i32>} : memref<2x2x9x9x64xbf16, #tpu.memory_space<vmem>>, vector<1x1x1x7x64xbf16>,
    %151 = vector.extract_strided_slice %142 {offsets = [14, 0], sizes = [7, 64], strides = [1, 1]} : vector<49x64xbf16> to vector<7x64xbf16>
    %c1_159 = arith.constant 1 : index
    %c1_160 = arith.constant 1 : index
    %c3_161 = arith.constant 3 : index
    %c1_162 = arith.constant 1 : index
    %c0_163 = arith.constant 0 : index
    %152 = vector.load %arg9[%c1_159, %c1_160, %c3_161, %c1_162, %c0_163] : memref<2x2x9x9x64xbf16, #tpu.memory_space<vmem>>, vector<1x1x1x7x64xbf16>
    %153 = vector.shape_cast %152 : vector<1x1x1x7x64xbf16> to vector<7x64xbf16>
    %154 = vector.shape_cast %151 : vector<7x64xbf16> to vector<1x1x1x7x64xbf16>
    tpu.vector_store %arg9[%c1_159, %c1_160, %c3_161, %c1_162, %c0_163], %154 {strides = array<i32>} : memref<2x2x9x9x64xbf16, #tpu.memory_space<vmem>>, vector<1x1x1x7x64xbf16>,
    %155 = vector.extract_strided_slice %142 {offsets = [21, 0], sizes = [7, 64], strides = [1, 1]} : vector<49x64xbf16> to vector<7x64xbf16>
    %c1_164 = arith.constant 1 : index
    %c1_165 = arith.constant 1 : index
    %c4_166 = arith.constant 4 : index
    %c1_167 = arith.constant 1 : index
    %c0_168 = arith.constant 0 : index
    %156 = vector.load %arg9[%c1_164, %c1_165, %c4_166, %c1_167, %c0_168] : memref<2x2x9x9x64xbf16, #tpu.memory_space<vmem>>, vector<1x1x1x7x64xbf16>
    %157 = vector.shape_cast %156 : vector<1x1x1x7x64xbf16> to vector<7x64xbf16>
    %158 = vector.shape_cast %155 : vector<7x64xbf16> to vector<1x1x1x7x64xbf16>
    tpu.vector_store %arg9[%c1_164, %c1_165, %c4_166, %c1_167, %c0_168], %158 {strides = array<i32>} : memref<2x2x9x9x64xbf16, #tpu.memory_space<vmem>>, vector<1x1x1x7x64xbf16>,
    %159 = vector.extract_strided_slice %142 {offsets = [28, 0], sizes = [7, 64], strides = [1, 1]} : vector<49x64xbf16> to vector<7x64xbf16>
    %c1_169 = arith.constant 1 : index
    %c1_170 = arith.constant 1 : index
    %c5_171 = arith.constant 5 : index
    %c1_172 = arith.constant 1 : index
    %c0_173 = arith.constant 0 : index
    %160 = vector.load %arg9[%c1_169, %c1_170, %c5_171, %c1_172, %c0_173] : memref<2x2x9x9x64xbf16, #tpu.memory_space<vmem>>, vector<1x1x1x7x64xbf16>
    %161 = vector.shape_cast %160 : vector<1x1x1x7x64xbf16> to vector<7x64xbf16>
    %162 = vector.shape_cast %159 : vector<7x64xbf16> to vector<1x1x1x7x64xbf16>
    tpu.vector_store %arg9[%c1_169, %c1_170, %c5_171, %c1_172, %c0_173], %162 {strides = array<i32>} : memref<2x2x9x9x64xbf16, #tpu.memory_space<vmem>>, vector<1x1x1x7x64xbf16>,
    %163 = vector.extract_strided_slice %142 {offsets = [35, 0], sizes = [7, 64], strides = [1, 1]} : vector<49x64xbf16> to vector<7x64xbf16>
    %c1_174 = arith.constant 1 : index
    %c1_175 = arith.constant 1 : index
    %c6_176 = arith.constant 6 : index
    %c1_177 = arith.constant 1 : index
    %c0_178 = arith.constant 0 : index
    %164 = vector.load %arg9[%c1_174, %c1_175, %c6_176, %c1_177, %c0_178] : memref<2x2x9x9x64xbf16, #tpu.memory_space<vmem>>, vector<1x1x1x7x64xbf16>
    %165 = vector.shape_cast %164 : vector<1x1x1x7x64xbf16> to vector<7x64xbf16>
    %166 = vector.shape_cast %163 : vector<7x64xbf16> to vector<1x1x1x7x64xbf16>
    tpu.vector_store %arg9[%c1_174, %c1_175, %c6_176, %c1_177, %c0_178], %166 {strides = array<i32>} : memref<2x2x9x9x64xbf16, #tpu.memory_space<vmem>>, vector<1x1x1x7x64xbf16>,
    %167 = vector.extract_strided_slice %142 {offsets = [42, 0], sizes = [7, 64], strides = [1, 1]} : vector<49x64xbf16> to vector<7x64xbf16>
    %c1_179 = arith.constant 1 : index
    %c1_180 = arith.constant 1 : index
    %c7_181 = arith.constant 7 : index
    %c1_182 = arith.constant 1 : index
    %c0_183 = arith.constant 0 : index
    %168 = vector.load %arg9[%c1_179, %c1_180, %c7_181, %c1_182, %c0_183] : memref<2x2x9x9x64xbf16, #tpu.memory_space<vmem>>, vector<1x1x1x7x64xbf16>
    %169 = vector.shape_cast %168 : vector<1x1x1x7x64xbf16> to vector<7x64xbf16>
    %170 = vector.shape_cast %167 : vector<7x64xbf16> to vector<1x1x1x7x64xbf16>
    tpu.vector_store %arg9[%c1_179, %c1_180, %c7_181, %c1_182, %c0_183], %170 {strides = array<i32>} : memref<2x2x9x9x64xbf16, #tpu.memory_space<vmem>>, vector<1x1x1x7x64xbf16>,
    %cst_184 = arith.constant 0.000000e+00 : f32
    %171 = vector.broadcast %cst_184 : f32 to vector<49x128xf32>
    %c0_185 = arith.constant 0 : index
    %c0_186 = arith.constant 0 : index
    %c0_187 = arith.constant 0 : index
    %c0_188 = arith.constant 0 : index
    %c0_189 = arith.constant 0 : index
    %172 = vector.load %arg9[%c0_185, %c0_186, %c0_187, %c0_188, %c0_189] : memref<2x2x9x9x64xbf16, #tpu.memory_space<vmem>>, vector<1x1x1x7x64xbf16>
    %173 = vector.shape_cast %172 : vector<1x1x1x7x64xbf16> to vector<7x64xbf16>
    %c0_190 = arith.constant 0 : index
    %c0_191 = arith.constant 0 : index
    %c1_192 = arith.constant 1 : index
    %c0_193 = arith.constant 0 : index
    %c0_194 = arith.constant 0 : index
    %174 = vector.load %arg9[%c0_190, %c0_191, %c1_192, %c0_193, %c0_194] : memref<2x2x9x9x64xbf16, #tpu.memory_space<vmem>>, vector<1x1x1x7x64xbf16>
    %175 = vector.shape_cast %174 : vector<1x1x1x7x64xbf16> to vector<7x64xbf16>
    %c0_195 = arith.constant 0 : index
    %c0_196 = arith.constant 0 : index
    %c2_197 = arith.constant 2 : index
    %c0_198 = arith.constant 0 : index
    %c0_199 = arith.constant 0 : index
    %176 = vector.load %arg9[%c0_195, %c0_196, %c2_197, %c0_198, %c0_199] : memref<2x2x9x9x64xbf16, #tpu.memory_space<vmem>>, vector<1x1x1x7x64xbf16>
    %177 = vector.shape_cast %176 : vector<1x1x1x7x64xbf16> to vector<7x64xbf16>
    %c0_200 = arith.constant 0 : index
    %c0_201 = arith.constant 0 : index
    %c3_202 = arith.constant 3 : index
    %c0_203 = arith.constant 0 : index
    %c0_204 = arith.constant 0 : index
    %178 = vector.load %arg9[%c0_200, %c0_201, %c3_202, %c0_203, %c0_204] : memref<2x2x9x9x64xbf16, #tpu.memory_space<vmem>>, vector<1x1x1x7x64xbf16>
    %179 = vector.shape_cast %178 : vector<1x1x1x7x64xbf16> to vector<7x64xbf16>
    %c0_205 = arith.constant 0 : index
    %c0_206 = arith.constant 0 : index
    %c4_207 = arith.constant 4 : index
    %c0_208 = arith.constant 0 : index
    %c0_209 = arith.constant 0 : index
    %180 = vector.load %arg9[%c0_205, %c0_206, %c4_207, %c0_208, %c0_209] : memref<2x2x9x9x64xbf16, #tpu.memory_space<vmem>>, vector<1x1x1x7x64xbf16>
    %181 = vector.shape_cast %180 : vector<1x1x1x7x64xbf16> to vector<7x64xbf16>
    %c0_210 = arith.constant 0 : index
    %c0_211 = arith.constant 0 : index
    %c5_212 = arith.constant 5 : index
    %c0_213 = arith.constant 0 : index
    %c0_214 = arith.constant 0 : index
    %182 = vector.load %arg9[%c0_210, %c0_211, %c5_212, %c0_213, %c0_214] : memref<2x2x9x9x64xbf16, #tpu.memory_space<vmem>>, vector<1x1x1x7x64xbf16>
    %183 = vector.shape_cast %182 : vector<1x1x1x7x64xbf16> to vector<7x64xbf16>
    %c0_215 = arith.constant 0 : index
    %c0_216 = arith.constant 0 : index
    %c6_217 = arith.constant 6 : index
    %c0_218 = arith.constant 0 : index
    %c0_219 = arith.constant 0 : index
    %184 = vector.load %arg9[%c0_215, %c0_216, %c6_217, %c0_218, %c0_219] : memref<2x2x9x9x64xbf16, #tpu.memory_space<vmem>>, vector<1x1x1x7x64xbf16>
    %185 = vector.shape_cast %184 : vector<1x1x1x7x64xbf16> to vector<7x64xbf16>
    %186 = tpu.concatenate %173, %175, %177, %179, %181, %183, %185 in 0 : vector<7x64xbf16>, vector<7x64xbf16>, vector<7x64xbf16>, vector<7x64xbf16>, vector<7x64xbf16>, vector<7x64xbf16>, vector<7x64xbf16> -> vector<49x64xbf16>
    %c0_220 = arith.constant 0 : index
    %c0_221 = arith.constant 0 : index
    %c0_222 = arith.constant 0 : index
    %187 = vector.load %arg4[%c0_220, %c0_221, %c0_222] : memref<25x64x128xbf16, #tpu.memory_space<vmem>>, vector<1x64x128xbf16>
    %188 = vector.shape_cast %187 : vector<1x64x128xbf16> to vector<64x128xbf16>
    %cst_223 = arith.constant dense<0.000000e+00> : vector<49x128xf32>
    %189 = tpu.matmul %186, %188, %cst_223 {dimension_numbers = #tpu.dot_dimension_numbers<[1], [0], [0], [1], [0, 0, 1, 1], [], []>} : vector<49x64xbf16>, vector<64x128xbf16>, vector<49x128xf32> -> vector<49x128xf32>
    %190 = arith.addf %171, %189 : vector<49x128xf32>
    %c0_224 = arith.constant 0 : index
    %c1_225 = arith.constant 1 : index
    %c0_226 = arith.constant 0 : index
    %c0_227 = arith.constant 0 : index
    %c0_228 = arith.constant 0 : index
    %191 = vector.load %arg9[%c0_224, %c1_225, %c0_226, %c0_227, %c0_228] : memref<2x2x9x9x64xbf16, #tpu.memory_space<vmem>>, vector<1x1x1x7x64xbf16>
    %192 = vector.shape_cast %191 : vector<1x1x1x7x64xbf16> to vector<7x64xbf16>
    %c0_229 = arith.constant 0 : index
    %c1_230 = arith.constant 1 : index
    %c1_231 = arith.constant 1 : index
    %c0_232 = arith.constant 0 : index
    %c0_233 = arith.constant 0 : index
    %193 = vector.load %arg9[%c0_229, %c1_230, %c1_231, %c0_232, %c0_233] : memref<2x2x9x9x64xbf16, #tpu.memory_space<vmem>>, vector<1x1x1x7x64xbf16>
    %194 = vector.shape_cast %193 : vector<1x1x1x7x64xbf16> to vector<7x64xbf16>
    %c0_234 = arith.constant 0 : index
    %c1_235 = arith.constant 1 : index
    %c2_236 = arith.constant 2 : index
    %c0_237 = arith.constant 0 : index
    %c0_238 = arith.constant 0 : index
    %195 = vector.load %arg9[%c0_234, %c1_235, %c2_236, %c0_237, %c0_238] : memref<2x2x9x9x64xbf16, #tpu.memory_space<vmem>>, vector<1x1x1x7x64xbf16>
    %196 = vector.shape_cast %195 : vector<1x1x1x7x64xbf16> to vector<7x64xbf16>
    %c0_239 = arith.constant 0 : index
    %c1_240 = arith.constant 1 : index
    %c3_241 = arith.constant 3 : index
    %c0_242 = arith.constant 0 : index
    %c0_243 = arith.constant 0 : index
    %197 = vector.load %arg9[%c0_239, %c1_240, %c3_241, %c0_242, %c0_243] : memref<2x2x9x9x64xbf16, #tpu.memory_space<vmem>>, vector<1x1x1x7x64xbf16>
    %198 = vector.shape_cast %197 : vector<1x1x1x7x64xbf16> to vector<7x64xbf16>
    %c0_244 = arith.constant 0 : index
    %c1_245 = arith.constant 1 : index
    %c4_246 = arith.constant 4 : index
    %c0_247 = arith.constant 0 : index
    %c0_248 = arith.constant 0 : index
    %199 = vector.load %arg9[%c0_244, %c1_245, %c4_246, %c0_247, %c0_248] : memref<2x2x9x9x64xbf16, #tpu.memory_space<vmem>>, vector<1x1x1x7x64xbf16>
    %200 = vector.shape_cast %199 : vector<1x1x1x7x64xbf16> to vector<7x64xbf16>
    %c0_249 = arith.constant 0 : index
    %c1_250 = arith.constant 1 : index
    %c5_251 = arith.constant 5 : index
    %c0_252 = arith.constant 0 : index
    %c0_253 = arith.constant 0 : index
    %201 = vector.load %arg9[%c0_249, %c1_250, %c5_251, %c0_252, %c0_253] : memref<2x2x9x9x64xbf16, #tpu.memory_space<vmem>>, vector<1x1x1x7x64xbf16>
    %202 = vector.shape_cast %201 : vector<1x1x1x7x64xbf16> to vector<7x64xbf16>
    %c0_254 = arith.constant 0 : index
    %c1_255 = arith.constant 1 : index
    %c6_256 = arith.constant 6 : index
    %c0_257 = arith.constant 0 : index
    %c0_258 = arith.constant 0 : index
    %203 = vector.load %arg9[%c0_254, %c1_255, %c6_256, %c0_257, %c0_258] : memref<2x2x9x9x64xbf16, #tpu.memory_space<vmem>>, vector<1x1x1x7x64xbf16>
    %204 = vector.shape_cast %203 : vector<1x1x1x7x64xbf16> to vector<7x64xbf16>
    %205 = tpu.concatenate %192, %194, %196, %198, %200, %202, %204 in 0 : vector<7x64xbf16>, vector<7x64xbf16>, vector<7x64xbf16>, vector<7x64xbf16>, vector<7x64xbf16>, vector<7x64xbf16>, vector<7x64xbf16> -> vector<49x64xbf16>
    %c1_259 = arith.constant 1 : index
    %c0_260 = arith.constant 0 : index
    %c0_261 = arith.constant 0 : index
    %206 = vector.load %arg4[%c1_259, %c0_260, %c0_261] : memref<25x64x128xbf16, #tpu.memory_space<vmem>>, vector<1x64x128xbf16>
    %207 = vector.shape_cast %206 : vector<1x64x128xbf16> to vector<64x128xbf16>
    %cst_262 = arith.constant dense<0.000000e+00> : vector<49x128xf32>
    %208 = tpu.matmul %205, %207, %cst_262 {dimension_numbers = #tpu.dot_dimension_numbers<[1], [0], [0], [1], [0, 0, 1, 1], [], []>} : vector<49x64xbf16>, vector<64x128xbf16>, vector<49x128xf32> -> vector<49x128xf32>
    %209 = arith.addf %190, %208 : vector<49x128xf32>
    %c0_263 = arith.constant 0 : index
    %c0_264 = arith.constant 0 : index
    %c0_265 = arith.constant 0 : index
    %c1_266 = arith.constant 1 : index
    %c0_267 = arith.constant 0 : index
    %210 = vector.load %arg9[%c0_263, %c0_264, %c0_265, %c1_266, %c0_267] : memref<2x2x9x9x64xbf16, #tpu.memory_space<vmem>>, vector<1x1x1x7x64xbf16>
    %211 = vector.shape_cast %210 : vector<1x1x1x7x64xbf16> to vector<7x64xbf16>
    %c0_268 = arith.constant 0 : index
    %c0_269 = arith.constant 0 : index
    %c1_270 = arith.constant 1 : index
    %c1_271 = arith.constant 1 : index
    %c0_272 = arith.constant 0 : index
    %212 = vector.load %arg9[%c0_268, %c0_269, %c1_270, %c1_271, %c0_272] : memref<2x2x9x9x64xbf16, #tpu.memory_space<vmem>>, vector<1x1x1x7x64xbf16>
    %213 = vector.shape_cast %212 : vector<1x1x1x7x64xbf16> to vector<7x64xbf16>
    %c0_273 = arith.constant 0 : index
    %c0_274 = arith.constant 0 : index
    %c2_275 = arith.constant 2 : index
    %c1_276 = arith.constant 1 : index
    %c0_277 = arith.constant 0 : index
    %214 = vector.load %arg9[%c0_273, %c0_274, %c2_275, %c1_276, %c0_277] : memref<2x2x9x9x64xbf16, #tpu.memory_space<vmem>>, vector<1x1x1x7x64xbf16>
    %215 = vector.shape_cast %214 : vector<1x1x1x7x64xbf16> to vector<7x64xbf16>
    %c0_278 = arith.constant 0 : index
    %c0_279 = arith.constant 0 : index
    %c3_280 = arith.constant 3 : index
    %c1_281 = arith.constant 1 : index
    %c0_282 = arith.constant 0 : index
    %216 = vector.load %arg9[%c0_278, %c0_279, %c3_280, %c1_281, %c0_282] : memref<2x2x9x9x64xbf16, #tpu.memory_space<vmem>>, vector<1x1x1x7x64xbf16>
    %217 = vector.shape_cast %216 : vector<1x1x1x7x64xbf16> to vector<7x64xbf16>
    %c0_283 = arith.constant 0 : index
    %c0_284 = arith.constant 0 : index
    %c4_285 = arith.constant 4 : index
    %c1_286 = arith.constant 1 : index
    %c0_287 = arith.constant 0 : index
    %218 = vector.load %arg9[%c0_283, %c0_284, %c4_285, %c1_286, %c0_287] : memref<2x2x9x9x64xbf16, #tpu.memory_space<vmem>>, vector<1x1x1x7x64xbf16>
    %219 = vector.shape_cast %218 : vector<1x1x1x7x64xbf16> to vector<7x64xbf16>
    %c0_288 = arith.constant 0 : index
    %c0_289 = arith.constant 0 : index
    %c5_290 = arith.constant 5 : index
    %c1_291 = arith.constant 1 : index
    %c0_292 = arith.constant 0 : index
    %220 = vector.load %arg9[%c0_288, %c0_289, %c5_290, %c1_291, %c0_292] : memref<2x2x9x9x64xbf16, #tpu.memory_space<vmem>>, vector<1x1x1x7x64xbf16>
    %221 = vector.shape_cast %220 : vector<1x1x1x7x64xbf16> to vector<7x64xbf16>
    %c0_293 = arith.constant 0 : index
    %c0_294 = arith.constant 0 : index
    %c6_295 = arith.constant 6 : index
    %c1_296 = arith.constant 1 : index
    %c0_297 = arith.constant 0 : index
    %222 = vector.load %arg9[%c0_293, %c0_294, %c6_295, %c1_296, %c0_297] : memref<2x2x9x9x64xbf16, #tpu.memory_space<vmem>>, vector<1x1x1x7x64xbf16>
    %223 = vector.shape_cast %222 : vector<1x1x1x7x64xbf16> to vector<7x64xbf16>
    %224 = tpu.concatenate %211, %213, %215, %217, %219, %221, %223 in 0 : vector<7x64xbf16>, vector<7x64xbf16>, vector<7x64xbf16>, vector<7x64xbf16>, vector<7x64xbf16>, vector<7x64xbf16>, vector<7x64xbf16> -> vector<49x64xbf16>
    %c2_298 = arith.constant 2 : index
    %c0_299 = arith.constant 0 : index
    %c0_300 = arith.constant 0 : index
    %225 = vector.load %arg4[%c2_298, %c0_299, %c0_300] : memref<25x64x128xbf16, #tpu.memory_space<vmem>>, vector<1x64x128xbf16>
    %226 = vector.shape_cast %225 : vector<1x64x128xbf16> to vector<64x128xbf16>
    %cst_301 = arith.constant dense<0.000000e+00> : vector<49x128xf32>
    %227 = tpu.matmul %224, %226, %cst_301 {dimension_numbers = #tpu.dot_dimension_numbers<[1], [0], [0], [1], [0, 0, 1, 1], [], []>} : vector<49x64xbf16>, vector<64x128xbf16>, vector<49x128xf32> -> vector<49x128xf32>
    %228 = arith.addf %209, %227 : vector<49x128xf32>
    %c0_302 = arith.constant 0 : index
    %c1_303 = arith.constant 1 : index
    %c0_304 = arith.constant 0 : index
    %c1_305 = arith.constant 1 : index
    %c0_306 = arith.constant 0 : index
    %229 = vector.load %arg9[%c0_302, %c1_303, %c0_304, %c1_305, %c0_306] : memref<2x2x9x9x64xbf16, #tpu.memory_space<vmem>>, vector<1x1x1x7x64xbf16>
    %230 = vector.shape_cast %229 : vector<1x1x1x7x64xbf16> to vector<7x64xbf16>
    %c0_307 = arith.constant 0 : index
    %c1_308 = arith.constant 1 : index
    %c1_309 = arith.constant 1 : index
    %c1_310 = arith.constant 1 : index
    %c0_311 = arith.constant 0 : index
    %231 = vector.load %arg9[%c0_307, %c1_308, %c1_309, %c1_310, %c0_311] : memref<2x2x9x9x64xbf16, #tpu.memory_space<vmem>>, vector<1x1x1x7x64xbf16>
    %232 = vector.shape_cast %231 : vector<1x1x1x7x64xbf16> to vector<7x64xbf16>
    %c0_312 = arith.constant 0 : index
    %c1_313 = arith.constant 1 : index
    %c2_314 = arith.constant 2 : index
    %c1_315 = arith.constant 1 : index
    %c0_316 = arith.constant 0 : index
    %233 = vector.load %arg9[%c0_312, %c1_313, %c2_314, %c1_315, %c0_316] : memref<2x2x9x9x64xbf16, #tpu.memory_space<vmem>>, vector<1x1x1x7x64xbf16>
    %234 = vector.shape_cast %233 : vector<1x1x1x7x64xbf16> to vector<7x64xbf16>
    %c0_317 = arith.constant 0 : index
    %c1_318 = arith.constant 1 : index
    %c3_319 = arith.constant 3 : index
    %c1_320 = arith.constant 1 : index
    %c0_321 = arith.constant 0 : index
    %235 = vector.load %arg9[%c0_317, %c1_318, %c3_319, %c1_320, %c0_321] : memref<2x2x9x9x64xbf16, #tpu.memory_space<vmem>>, vector<1x1x1x7x64xbf16>
    %236 = vector.shape_cast %235 : vector<1x1x1x7x64xbf16> to vector<7x64xbf16>
    %c0_322 = arith.constant 0 : index
    %c1_323 = arith.constant 1 : index
    %c4_324 = arith.constant 4 : index
    %c1_325 = arith.constant 1 : index
    %c0_326 = arith.constant 0 : index
    %237 = vector.load %arg9[%c0_322, %c1_323, %c4_324, %c1_325, %c0_326] : memref<2x2x9x9x64xbf16, #tpu.memory_space<vmem>>, vector<1x1x1x7x64xbf16>
    %238 = vector.shape_cast %237 : vector<1x1x1x7x64xbf16> to vector<7x64xbf16>
    %c0_327 = arith.constant 0 : index
    %c1_328 = arith.constant 1 : index
    %c5_329 = arith.constant 5 : index
    %c1_330 = arith.constant 1 : index
    %c0_331 = arith.constant 0 : index
    %239 = vector.load %arg9[%c0_327, %c1_328, %c5_329, %c1_330, %c0_331] : memref<2x2x9x9x64xbf16, #tpu.memory_space<vmem>>, vector<1x1x1x7x64xbf16>
    %240 = vector.shape_cast %239 : vector<1x1x1x7x64xbf16> to vector<7x64xbf16>
    %c0_332 = arith.constant 0 : index
    %c1_333 = arith.constant 1 : index
    %c6_334 = arith.constant 6 : index
    %c1_335 = arith.constant 1 : index
    %c0_336 = arith.constant 0 : index
    %241 = vector.load %arg9[%c0_332, %c1_333, %c6_334, %c1_335, %c0_336] : memref<2x2x9x9x64xbf16, #tpu.memory_space<vmem>>, vector<1x1x1x7x64xbf16>
    %242 = vector.shape_cast %241 : vector<1x1x1x7x64xbf16> to vector<7x64xbf16>
    %243 = tpu.concatenate %230, %232, %234, %236, %238, %240, %242 in 0 : vector<7x64xbf16>, vector<7x64xbf16>, vector<7x64xbf16>, vector<7x64xbf16>, vector<7x64xbf16>, vector<7x64xbf16>, vector<7x64xbf16> -> vector<49x64xbf16>
    %c3_337 = arith.constant 3 : index
    %c0_338 = arith.constant 0 : index
    %c0_339 = arith.constant 0 : index
    %244 = vector.load %arg4[%c3_337, %c0_338, %c0_339] : memref<25x64x128xbf16, #tpu.memory_space<vmem>>, vector<1x64x128xbf16>
    %245 = vector.shape_cast %244 : vector<1x64x128xbf16> to vector<64x128xbf16>
    %cst_340 = arith.constant dense<0.000000e+00> : vector<49x128xf32>
    %246 = tpu.matmul %243, %245, %cst_340 {dimension_numbers = #tpu.dot_dimension_numbers<[1], [0], [0], [1], [0, 0, 1, 1], [], []>} : vector<49x64xbf16>, vector<64x128xbf16>, vector<49x128xf32> -> vector<49x128xf32>
    %247 = arith.addf %228, %246 : vector<49x128xf32>
    %c0_341 = arith.constant 0 : index
    %c0_342 = arith.constant 0 : index
    %c0_343 = arith.constant 0 : index
    %c2_344 = arith.constant 2 : index
    %c0_345 = arith.constant 0 : index
    %248 = vector.load %arg9[%c0_341, %c0_342, %c0_343, %c2_344, %c0_345] : memref<2x2x9x9x64xbf16, #tpu.memory_space<vmem>>, vector<1x1x1x7x64xbf16>
    %249 = vector.shape_cast %248 : vector<1x1x1x7x64xbf16> to vector<7x64xbf16>
    %c0_346 = arith.constant 0 : index
    %c0_347 = arith.constant 0 : index
    %c1_348 = arith.constant 1 : index
    %c2_349 = arith.constant 2 : index
    %c0_350 = arith.constant 0 : index
    %250 = vector.load %arg9[%c0_346, %c0_347, %c1_348, %c2_349, %c0_350] : memref<2x2x9x9x64xbf16, #tpu.memory_space<vmem>>, vector<1x1x1x7x64xbf16>
    %251 = vector.shape_cast %250 : vector<1x1x1x7x64xbf16> to vector<7x64xbf16>
    %c0_351 = arith.constant 0 : index
    %c0_352 = arith.constant 0 : index
    %c2_353 = arith.constant 2 : index
    %c2_354 = arith.constant 2 : index
    %c0_355 = arith.constant 0 : index
    %252 = vector.load %arg9[%c0_351, %c0_352, %c2_353, %c2_354, %c0_355] : memref<2x2x9x9x64xbf16, #tpu.memory_space<vmem>>, vector<1x1x1x7x64xbf16>
    %253 = vector.shape_cast %252 : vector<1x1x1x7x64xbf16> to vector<7x64xbf16>
    %c0_356 = arith.constant 0 : index
    %c0_357 = arith.constant 0 : index
    %c3_358 = arith.constant 3 : index
    %c2_359 = arith.constant 2 : index
    %c0_360 = arith.constant 0 : index
    %254 = vector.load %arg9[%c0_356, %c0_357, %c3_358, %c2_359, %c0_360] : memref<2x2x9x9x64xbf16, #tpu.memory_space<vmem>>, vector<1x1x1x7x64xbf16>
    %255 = vector.shape_cast %254 : vector<1x1x1x7x64xbf16> to vector<7x64xbf16>
    %c0_361 = arith.constant 0 : index
    %c0_362 = arith.constant 0 : index
    %c4_363 = arith.constant 4 : index
    %c2_364 = arith.constant 2 : index
    %c0_365 = arith.constant 0 : index
    %256 = vector.load %arg9[%c0_361, %c0_362, %c4_363, %c2_364, %c0_365] : memref<2x2x9x9x64xbf16, #tpu.memory_space<vmem>>, vector<1x1x1x7x64xbf16>
    %257 = vector.shape_cast %256 : vector<1x1x1x7x64xbf16> to vector<7x64xbf16>
    %c0_366 = arith.constant 0 : index
    %c0_367 = arith.constant 0 : index
    %c5_368 = arith.constant 5 : index
    %c2_369 = arith.constant 2 : index
    %c0_370 = arith.constant 0 : index
    %258 = vector.load %arg9[%c0_366, %c0_367, %c5_368, %c2_369, %c0_370] : memref<2x2x9x9x64xbf16, #tpu.memory_space<vmem>>, vector<1x1x1x7x64xbf16>
    %259 = vector.shape_cast %258 : vector<1x1x1x7x64xbf16> to vector<7x64xbf16>
    %c0_371 = arith.constant 0 : index
    %c0_372 = arith.constant 0 : index
    %c6_373 = arith.constant 6 : index
    %c2_374 = arith.constant 2 : index
    %c0_375 = arith.constant 0 : index
    %260 = vector.load %arg9[%c0_371, %c0_372, %c6_373, %c2_374, %c0_375] : memref<2x2x9x9x64xbf16, #tpu.memory_space<vmem>>, vector<1x1x1x7x64xbf16>
    %261 = vector.shape_cast %260 : vector<1x1x1x7x64xbf16> to vector<7x64xbf16>
    %262 = tpu.concatenate %249, %251, %253, %255, %257, %259, %261 in 0 : vector<7x64xbf16>, vector<7x64xbf16>, vector<7x64xbf16>, vector<7x64xbf16>, vector<7x64xbf16>, vector<7x64xbf16>, vector<7x64xbf16> -> vector<49x64xbf16>
    %c4_376 = arith.constant 4 : index
    %c0_377 = arith.constant 0 : index
    %c0_378 = arith.constant 0 : index
    %263 = vector.load %arg4[%c4_376, %c0_377, %c0_378] : memref<25x64x128xbf16, #tpu.memory_space<vmem>>, vector<1x64x128xbf16>
    %264 = vector.shape_cast %263 : vector<1x64x128xbf16> to vector<64x128xbf16>
    %cst_379 = arith.constant dense<0.000000e+00> : vector<49x128xf32>
    %265 = tpu.matmul %262, %264, %cst_379 {dimension_numbers = #tpu.dot_dimension_numbers<[1], [0], [0], [1], [0, 0, 1, 1], [], []>} : vector<49x64xbf16>, vector<64x128xbf16>, vector<49x128xf32> -> vector<49x128xf32>
    %266 = arith.addf %247, %265 : vector<49x128xf32>
    %c1_380 = arith.constant 1 : index
    %c0_381 = arith.constant 0 : index
    %c0_382 = arith.constant 0 : index
    %c0_383 = arith.constant 0 : index
    %c0_384 = arith.constant 0 : index
    %267 = vector.load %arg9[%c1_380, %c0_381, %c0_382, %c0_383, %c0_384] : memref<2x2x9x9x64xbf16, #tpu.memory_space<vmem>>, vector<1x1x1x7x64xbf16>
    %268 = vector.shape_cast %267 : vector<1x1x1x7x64xbf16> to vector<7x64xbf16>
    %c1_385 = arith.constant 1 : index
    %c0_386 = arith.constant 0 : index
    %c1_387 = arith.constant 1 : index
    %c0_388 = arith.constant 0 : index
    %c0_389 = arith.constant 0 : index
    %269 = vector.load %arg9[%c1_385, %c0_386, %c1_387, %c0_388, %c0_389] : memref<2x2x9x9x64xbf16, #tpu.memory_space<vmem>>, vector<1x1x1x7x64xbf16>
    %270 = vector.shape_cast %269 : vector<1x1x1x7x64xbf16> to vector<7x64xbf16>
    %c1_390 = arith.constant 1 : index
    %c0_391 = arith.constant 0 : index
    %c2_392 = arith.constant 2 : index
    %c0_393 = arith.constant 0 : index
    %c0_394 = arith.constant 0 : index
    %271 = vector.load %arg9[%c1_390, %c0_391, %c2_392, %c0_393, %c0_394] : memref<2x2x9x9x64xbf16, #tpu.memory_space<vmem>>, vector<1x1x1x7x64xbf16>
    %272 = vector.shape_cast %271 : vector<1x1x1x7x64xbf16> to vector<7x64xbf16>
    %c1_395 = arith.constant 1 : index
    %c0_396 = arith.constant 0 : index
    %c3_397 = arith.constant 3 : index
    %c0_398 = arith.constant 0 : index
    %c0_399 = arith.constant 0 : index
    %273 = vector.load %arg9[%c1_395, %c0_396, %c3_397, %c0_398, %c0_399] : memref<2x2x9x9x64xbf16, #tpu.memory_space<vmem>>, vector<1x1x1x7x64xbf16>
    %274 = vector.shape_cast %273 : vector<1x1x1x7x64xbf16> to vector<7x64xbf16>
    %c1_400 = arith.constant 1 : index
    %c0_401 = arith.constant 0 : index
    %c4_402 = arith.constant 4 : index
    %c0_403 = arith.constant 0 : index
    %c0_404 = arith.constant 0 : index
    %275 = vector.load %arg9[%c1_400, %c0_401, %c4_402, %c0_403, %c0_404] : memref<2x2x9x9x64xbf16, #tpu.memory_space<vmem>>, vector<1x1x1x7x64xbf16>
    %276 = vector.shape_cast %275 : vector<1x1x1x7x64xbf16> to vector<7x64xbf16>
    %c1_405 = arith.constant 1 : index
    %c0_406 = arith.constant 0 : index
    %c5_407 = arith.constant 5 : index
    %c0_408 = arith.constant 0 : index
    %c0_409 = arith.constant 0 : index
    %277 = vector.load %arg9[%c1_405, %c0_406, %c5_407, %c0_408, %c0_409] : memref<2x2x9x9x64xbf16, #tpu.memory_space<vmem>>, vector<1x1x1x7x64xbf16>
    %278 = vector.shape_cast %277 : vector<1x1x1x7x64xbf16> to vector<7x64xbf16>
    %c1_410 = arith.constant 1 : index
    %c0_411 = arith.constant 0 : index
    %c6_412 = arith.constant 6 : index
    %c0_413 = arith.constant 0 : index
    %c0_414 = arith.constant 0 : index
    %279 = vector.load %arg9[%c1_410, %c0_411, %c6_412, %c0_413, %c0_414] : memref<2x2x9x9x64xbf16, #tpu.memory_space<vmem>>, vector<1x1x1x7x64xbf16>
    %280 = vector.shape_cast %279 : vector<1x1x1x7x64xbf16> to vector<7x64xbf16>
    %281 = tpu.concatenate %268, %270, %272, %274, %276, %278, %280 in 0 : vector<7x64xbf16>, vector<7x64xbf16>, vector<7x64xbf16>, vector<7x64xbf16>, vector<7x64xbf16>, vector<7x64xbf16>, vector<7x64xbf16> -> vector<49x64xbf16>
    %c5_415 = arith.constant 5 : index
    %c0_416 = arith.constant 0 : index
    %c0_417 = arith.constant 0 : index
    %282 = vector.load %arg4[%c5_415, %c0_416, %c0_417] : memref<25x64x128xbf16, #tpu.memory_space<vmem>>, vector<1x64x128xbf16>
    %283 = vector.shape_cast %282 : vector<1x64x128xbf16> to vector<64x128xbf16>
    %cst_418 = arith.constant dense<0.000000e+00> : vector<49x128xf32>
    %284 = tpu.matmul %281, %283, %cst_418 {dimension_numbers = #tpu.dot_dimension_numbers<[1], [0], [0], [1], [0, 0, 1, 1], [], []>} : vector<49x64xbf16>, vector<64x128xbf16>, vector<49x128xf32> -> vector<49x128xf32>
    %285 = arith.addf %266, %284 : vector<49x128xf32>
    %c1_419 = arith.constant 1 : index
    %c1_420 = arith.constant 1 : index
    %c0_421 = arith.constant 0 : index
    %c0_422 = arith.constant 0 : index
    %c0_423 = arith.constant 0 : index
    %286 = vector.load %arg9[%c1_419, %c1_420, %c0_421, %c0_422, %c0_423] : memref<2x2x9x9x64xbf16, #tpu.memory_space<vmem>>, vector<1x1x1x7x64xbf16>
    %287 = vector.shape_cast %286 : vector<1x1x1x7x64xbf16> to vector<7x64xbf16>
    %c1_424 = arith.constant 1 : index
    %c1_425 = arith.constant 1 : index
    %c1_426 = arith.constant 1 : index
    %c0_427 = arith.constant 0 : index
    %c0_428 = arith.constant 0 : index
    %288 = vector.load %arg9[%c1_424, %c1_425, %c1_426, %c0_427, %c0_428] : memref<2x2x9x9x64xbf16, #tpu.memory_space<vmem>>, vector<1x1x1x7x64xbf16>
    %289 = vector.shape_cast %288 : vector<1x1x1x7x64xbf16> to vector<7x64xbf16>
    %c1_429 = arith.constant 1 : index
    %c1_430 = arith.constant 1 : index
    %c2_431 = arith.constant 2 : index
    %c0_432 = arith.constant 0 : index
    %c0_433 = arith.constant 0 : index
    %290 = vector.load %arg9[%c1_429, %c1_430, %c2_431, %c0_432, %c0_433] : memref<2x2x9x9x64xbf16, #tpu.memory_space<vmem>>, vector<1x1x1x7x64xbf16>
    %291 = vector.shape_cast %290 : vector<1x1x1x7x64xbf16> to vector<7x64xbf16>
    %c1_434 = arith.constant 1 : index
    %c1_435 = arith.constant 1 : index
    %c3_436 = arith.constant 3 : index
    %c0_437 = arith.constant 0 : index
    %c0_438 = arith.constant 0 : index
    %292 = vector.load %arg9[%c1_434, %c1_435, %c3_436, %c0_437, %c0_438] : memref<2x2x9x9x64xbf16, #tpu.memory_space<vmem>>, vector<1x1x1x7x64xbf16>
    %293 = vector.shape_cast %292 : vector<1x1x1x7x64xbf16> to vector<7x64xbf16>
    %c1_439 = arith.constant 1 : index
    %c1_440 = arith.constant 1 : index
    %c4_441 = arith.constant 4 : index
    %c0_442 = arith.constant 0 : index
    %c0_443 = arith.constant 0 : index
    %294 = vector.load %arg9[%c1_439, %c1_440, %c4_441, %c0_442, %c0_443] : memref<2x2x9x9x64xbf16, #tpu.memory_space<vmem>>, vector<1x1x1x7x64xbf16>
    %295 = vector.shape_cast %294 : vector<1x1x1x7x64xbf16> to vector<7x64xbf16>
    %c1_444 = arith.constant 1 : index
    %c1_445 = arith.constant 1 : index
    %c5_446 = arith.constant 5 : index
    %c0_447 = arith.constant 0 : index
    %c0_448 = arith.constant 0 : index
    %296 = vector.load %arg9[%c1_444, %c1_445, %c5_446, %c0_447, %c0_448] : memref<2x2x9x9x64xbf16, #tpu.memory_space<vmem>>, vector<1x1x1x7x64xbf16>
    %297 = vector.shape_cast %296 : vector<1x1x1x7x64xbf16> to vector<7x64xbf16>
    %c1_449 = arith.constant 1 : index
    %c1_450 = arith.constant 1 : index
    %c6_451 = arith.constant 6 : index
    %c0_452 = arith.constant 0 : index
    %c0_453 = arith.constant 0 : index
    %298 = vector.load %arg9[%c1_449, %c1_450, %c6_451, %c0_452, %c0_453] : memref<2x2x9x9x64xbf16, #tpu.memory_space<vmem>>, vector<1x1x1x7x64xbf16>
    %299 = vector.shape_cast %298 : vector<1x1x1x7x64xbf16> to vector<7x64xbf16>
    %300 = tpu.concatenate %287, %289, %291, %293, %295, %297, %299 in 0 : vector<7x64xbf16>, vector<7x64xbf16>, vector<7x64xbf16>, vector<7x64xbf16>, vector<7x64xbf16>, vector<7x64xbf16>, vector<7x64xbf16> -> vector<49x64xbf16>
    %c6_454 = arith.constant 6 : index
    %c0_455 = arith.constant 0 : index
    %c0_456 = arith.constant 0 : index
    %301 = vector.load %arg4[%c6_454, %c0_455, %c0_456] : memref<25x64x128xbf16, #tpu.memory_space<vmem>>, vector<1x64x128xbf16>
    %302 = vector.shape_cast %301 : vector<1x64x128xbf16> to vector<64x128xbf16>
    %cst_457 = arith.constant dense<0.000000e+00> : vector<49x128xf32>
    %303 = tpu.matmul %300, %302, %cst_457 {dimension_numbers = #tpu.dot_dimension_numbers<[1], [0], [0], [1], [0, 0, 1, 1], [], []>} : vector<49x64xbf16>, vector<64x128xbf16>, vector<49x128xf32> -> vector<49x128xf32>
    %304 = arith.addf %285, %303 : vector<49x128xf32>
    %c1_458 = arith.constant 1 : index
    %c0_459 = arith.constant 0 : index
    %c0_460 = arith.constant 0 : index
    %c1_461 = arith.constant 1 : index
    %c0_462 = arith.constant 0 : index
    %305 = vector.load %arg9[%c1_458, %c0_459, %c0_460, %c1_461, %c0_462] : memref<2x2x9x9x64xbf16, #tpu.memory_space<vmem>>, vector<1x1x1x7x64xbf16>
    %306 = vector.shape_cast %305 : vector<1x1x1x7x64xbf16> to vector<7x64xbf16>
    %c1_463 = arith.constant 1 : index
    %c0_464 = arith.constant 0 : index
    %c1_465 = arith.constant 1 : index
    %c1_466 = arith.constant 1 : index
    %c0_467 = arith.constant 0 : index
    %307 = vector.load %arg9[%c1_463, %c0_464, %c1_465, %c1_466, %c0_467] : memref<2x2x9x9x64xbf16, #tpu.memory_space<vmem>>, vector<1x1x1x7x64xbf16>
    %308 = vector.shape_cast %307 : vector<1x1x1x7x64xbf16> to vector<7x64xbf16>
    %c1_468 = arith.constant 1 : index
    %c0_469 = arith.constant 0 : index
    %c2_470 = arith.constant 2 : index
    %c1_471 = arith.constant 1 : index
    %c0_472 = arith.constant 0 : index
    %309 = vector.load %arg9[%c1_468, %c0_469, %c2_470, %c1_471, %c0_472] : memref<2x2x9x9x64xbf16, #tpu.memory_space<vmem>>, vector<1x1x1x7x64xbf16>
    %310 = vector.shape_cast %309 : vector<1x1x1x7x64xbf16> to vector<7x64xbf16>
    %c1_473 = arith.constant 1 : index
    %c0_474 = arith.constant 0 : index
    %c3_475 = arith.constant 3 : index
    %c1_476 = arith.constant 1 : index
    %c0_477 = arith.constant 0 : index
    %311 = vector.load %arg9[%c1_473, %c0_474, %c3_475, %c1_476, %c0_477] : memref<2x2x9x9x64xbf16, #tpu.memory_space<vmem>>, vector<1x1x1x7x64xbf16>
    %312 = vector.shape_cast %311 : vector<1x1x1x7x64xbf16> to vector<7x64xbf16>
    %c1_478 = arith.constant 1 : index
    %c0_479 = arith.constant 0 : index
    %c4_480 = arith.constant 4 : index
    %c1_481 = arith.constant 1 : index
    %c0_482 = arith.constant 0 : index
    %313 = vector.load %arg9[%c1_478, %c0_479, %c4_480, %c1_481, %c0_482] : memref<2x2x9x9x64xbf16, #tpu.memory_space<vmem>>, vector<1x1x1x7x64xbf16>
    %314 = vector.shape_cast %313 : vector<1x1x1x7x64xbf16> to vector<7x64xbf16>
    %c1_483 = arith.constant 1 : index
    %c0_484 = arith.constant 0 : index
    %c5_485 = arith.constant 5 : index
    %c1_486 = arith.constant 1 : index
    %c0_487 = arith.constant 0 : index
    %315 = vector.load %arg9[%c1_483, %c0_484, %c5_485, %c1_486, %c0_487] : memref<2x2x9x9x64xbf16, #tpu.memory_space<vmem>>, vector<1x1x1x7x64xbf16>
    %316 = vector.shape_cast %315 : vector<1x1x1x7x64xbf16> to vector<7x64xbf16>
    %c1_488 = arith.constant 1 : index
    %c0_489 = arith.constant 0 : index
    %c6_490 = arith.constant 6 : index
    %c1_491 = arith.constant 1 : index
    %c0_492 = arith.constant 0 : index
    %317 = vector.load %arg9[%c1_488, %c0_489, %c6_490, %c1_491, %c0_492] : memref<2x2x9x9x64xbf16, #tpu.memory_space<vmem>>, vector<1x1x1x7x64xbf16>
    %318 = vector.shape_cast %317 : vector<1x1x1x7x64xbf16> to vector<7x64xbf16>
    %319 = tpu.concatenate %306, %308, %310, %312, %314, %316, %318 in 0 : vector<7x64xbf16>, vector<7x64xbf16>, vector<7x64xbf16>, vector<7x64xbf16>, vector<7x64xbf16>, vector<7x64xbf16>, vector<7x64xbf16> -> vector<49x64xbf16>
    %c7_493 = arith.constant 7 : index
    %c0_494 = arith.constant 0 : index
    %c0_495 = arith.constant 0 : index
    %320 = vector.load %arg4[%c7_493, %c0_494, %c0_495] : memref<25x64x128xbf16, #tpu.memory_space<vmem>>, vector<1x64x128xbf16>
    %321 = vector.shape_cast %320 : vector<1x64x128xbf16> to vector<64x128xbf16>
    %cst_496 = arith.constant dense<0.000000e+00> : vector<49x128xf32>
    %322 = tpu.matmul %319, %321, %cst_496 {dimension_numbers = #tpu.dot_dimension_numbers<[1], [0], [0], [1], [0, 0, 1, 1], [], []>} : vector<49x64xbf16>, vector<64x128xbf16>, vector<49x128xf32> -> vector<49x128xf32>
    %323 = arith.addf %304, %322 : vector<49x128xf32>
    %c1_497 = arith.constant 1 : index
    %c1_498 = arith.constant 1 : index
    %c0_499 = arith.constant 0 : index
    %c1_500 = arith.constant 1 : index
    %c0_501 = arith.constant 0 : index
    %324 = vector.load %arg9[%c1_497, %c1_498, %c0_499, %c1_500, %c0_501] : memref<2x2x9x9x64xbf16, #tpu.memory_space<vmem>>, vector<1x1x1x7x64xbf16>
    %325 = vector.shape_cast %324 : vector<1x1x1x7x64xbf16> to vector<7x64xbf16>
    %c1_502 = arith.constant 1 : index
    %c1_503 = arith.constant 1 : index
    %c1_504 = arith.constant 1 : index
    %c1_505 = arith.constant 1 : index
    %c0_506 = arith.constant 0 : index
    %326 = vector.load %arg9[%c1_502, %c1_503, %c1_504, %c1_505, %c0_506] : memref<2x2x9x9x64xbf16, #tpu.memory_space<vmem>>, vector<1x1x1x7x64xbf16>
    %327 = vector.shape_cast %326 : vector<1x1x1x7x64xbf16> to vector<7x64xbf16>
    %c1_507 = arith.constant 1 : index
    %c1_508 = arith.constant 1 : index
    %c2_509 = arith.constant 2 : index
    %c1_510 = arith.constant 1 : index
    %c0_511 = arith.constant 0 : index
    %328 = vector.load %arg9[%c1_507, %c1_508, %c2_509, %c1_510, %c0_511] : memref<2x2x9x9x64xbf16, #tpu.memory_space<vmem>>, vector<1x1x1x7x64xbf16>
    %329 = vector.shape_cast %328 : vector<1x1x1x7x64xbf16> to vector<7x64xbf16>
    %c1_512 = arith.constant 1 : index
    %c1_513 = arith.constant 1 : index
    %c3_514 = arith.constant 3 : index
    %c1_515 = arith.constant 1 : index
    %c0_516 = arith.constant 0 : index
    %330 = vector.load %arg9[%c1_512, %c1_513, %c3_514, %c1_515, %c0_516] : memref<2x2x9x9x64xbf16, #tpu.memory_space<vmem>>, vector<1x1x1x7x64xbf16>
    %331 = vector.shape_cast %330 : vector<1x1x1x7x64xbf16> to vector<7x64xbf16>
    %c1_517 = arith.constant 1 : index
    %c1_518 = arith.constant 1 : index
    %c4_519 = arith.constant 4 : index
    %c1_520 = arith.constant 1 : index
    %c0_521 = arith.constant 0 : index
    %332 = vector.load %arg9[%c1_517, %c1_518, %c4_519, %c1_520, %c0_521] : memref<2x2x9x9x64xbf16, #tpu.memory_space<vmem>>, vector<1x1x1x7x64xbf16>
    %333 = vector.shape_cast %332 : vector<1x1x1x7x64xbf16> to vector<7x64xbf16>
    %c1_522 = arith.constant 1 : index
    %c1_523 = arith.constant 1 : index
    %c5_524 = arith.constant 5 : index
    %c1_525 = arith.constant 1 : index
    %c0_526 = arith.constant 0 : index
    %334 = vector.load %arg9[%c1_522, %c1_523, %c5_524, %c1_525, %c0_526] : memref<2x2x9x9x64xbf16, #tpu.memory_space<vmem>>, vector<1x1x1x7x64xbf16>
    %335 = vector.shape_cast %334 : vector<1x1x1x7x64xbf16> to vector<7x64xbf16>
    %c1_527 = arith.constant 1 : index
    %c1_528 = arith.constant 1 : index
    %c6_529 = arith.constant 6 : index
    %c1_530 = arith.constant 1 : index
    %c0_531 = arith.constant 0 : index
    %336 = vector.load %arg9[%c1_527, %c1_528, %c6_529, %c1_530, %c0_531] : memref<2x2x9x9x64xbf16, #tpu.memory_space<vmem>>, vector<1x1x1x7x64xbf16>
    %337 = vector.shape_cast %336 : vector<1x1x1x7x64xbf16> to vector<7x64xbf16>
    %338 = tpu.concatenate %325, %327, %329, %331, %333, %335, %337 in 0 : vector<7x64xbf16>, vector<7x64xbf16>, vector<7x64xbf16>, vector<7x64xbf16>, vector<7x64xbf16>, vector<7x64xbf16>, vector<7x64xbf16> -> vector<49x64xbf16>
    %c8 = arith.constant 8 : index
    %c0_532 = arith.constant 0 : index
    %c0_533 = arith.constant 0 : index
    %339 = vector.load %arg4[%c8, %c0_532, %c0_533] : memref<25x64x128xbf16, #tpu.memory_space<vmem>>, vector<1x64x128xbf16>
    %340 = vector.shape_cast %339 : vector<1x64x128xbf16> to vector<64x128xbf16>
    %cst_534 = arith.constant dense<0.000000e+00> : vector<49x128xf32>
    %341 = tpu.matmul %338, %340, %cst_534 {dimension_numbers = #tpu.dot_dimension_numbers<[1], [0], [0], [1], [0, 0, 1, 1], [], []>} : vector<49x64xbf16>, vector<64x128xbf16>, vector<49x128xf32> -> vector<49x128xf32>
    %342 = arith.addf %323, %341 : vector<49x128xf32>
    %c1_535 = arith.constant 1 : index
    %c0_536 = arith.constant 0 : index
    %c0_537 = arith.constant 0 : index
    %c2_538 = arith.constant 2 : index
    %c0_539 = arith.constant 0 : index
    %343 = vector.load %arg9[%c1_535, %c0_536, %c0_537, %c2_538, %c0_539] : memref<2x2x9x9x64xbf16, #tpu.memory_space<vmem>>, vector<1x1x1x7x64xbf16>
    %344 = vector.shape_cast %343 : vector<1x1x1x7x64xbf16> to vector<7x64xbf16>
    %c1_540 = arith.constant 1 : index
    %c0_541 = arith.constant 0 : index
    %c1_542 = arith.constant 1 : index
    %c2_543 = arith.constant 2 : index
    %c0_544 = arith.constant 0 : index
    %345 = vector.load %arg9[%c1_540, %c0_541, %c1_542, %c2_543, %c0_544] : memref<2x2x9x9x64xbf16, #tpu.memory_space<vmem>>, vector<1x1x1x7x64xbf16>
    %346 = vector.shape_cast %345 : vector<1x1x1x7x64xbf16> to vector<7x64xbf16>
    %c1_545 = arith.constant 1 : index
    %c0_546 = arith.constant 0 : index
    %c2_547 = arith.constant 2 : index
    %c2_548 = arith.constant 2 : index
    %c0_549 = arith.constant 0 : index
    %347 = vector.load %arg9[%c1_545, %c0_546, %c2_547, %c2_548, %c0_549] : memref<2x2x9x9x64xbf16, #tpu.memory_space<vmem>>, vector<1x1x1x7x64xbf16>
    %348 = vector.shape_cast %347 : vector<1x1x1x7x64xbf16> to vector<7x64xbf16>
    %c1_550 = arith.constant 1 : index
    %c0_551 = arith.constant 0 : index
    %c3_552 = arith.constant 3 : index
    %c2_553 = arith.constant 2 : index
    %c0_554 = arith.constant 0 : index
    %349 = vector.load %arg9[%c1_550, %c0_551, %c3_552, %c2_553, %c0_554] : memref<2x2x9x9x64xbf16, #tpu.memory_space<vmem>>, vector<1x1x1x7x64xbf16>
    %350 = vector.shape_cast %349 : vector<1x1x1x7x64xbf16> to vector<7x64xbf16>
    %c1_555 = arith.constant 1 : index
    %c0_556 = arith.constant 0 : index
    %c4_557 = arith.constant 4 : index
    %c2_558 = arith.constant 2 : index
    %c0_559 = arith.constant 0 : index
    %351 = vector.load %arg9[%c1_555, %c0_556, %c4_557, %c2_558, %c0_559] : memref<2x2x9x9x64xbf16, #tpu.memory_space<vmem>>, vector<1x1x1x7x64xbf16>
    %352 = vector.shape_cast %351 : vector<1x1x1x7x64xbf16> to vector<7x64xbf16>
    %c1_560 = arith.constant 1 : index
    %c0_561 = arith.constant 0 : index
    %c5_562 = arith.constant 5 : index
    %c2_563 = arith.constant 2 : index
    %c0_564 = arith.constant 0 : index
    %353 = vector.load %arg9[%c1_560, %c0_561, %c5_562, %c2_563, %c0_564] : memref<2x2x9x9x64xbf16, #tpu.memory_space<vmem>>, vector<1x1x1x7x64xbf16>
    %354 = vector.shape_cast %353 : vector<1x1x1x7x64xbf16> to vector<7x64xbf16>
    %c1_565 = arith.constant 1 : index
    %c0_566 = arith.constant 0 : index
    %c6_567 = arith.constant 6 : index
    %c2_568 = arith.constant 2 : index
    %c0_569 = arith.constant 0 : index
    %355 = vector.load %arg9[%c1_565, %c0_566, %c6_567, %c2_568, %c0_569] : memref<2x2x9x9x64xbf16, #tpu.memory_space<vmem>>, vector<1x1x1x7x64xbf16>
    %356 = vector.shape_cast %355 : vector<1x1x1x7x64xbf16> to vector<7x64xbf16>
    %357 = tpu.concatenate %344, %346, %348, %350, %352, %354, %356 in 0 : vector<7x64xbf16>, vector<7x64xbf16>, vector<7x64xbf16>, vector<7x64xbf16>, vector<7x64xbf16>, vector<7x64xbf16>, vector<7x64xbf16> -> vector<49x64xbf16>
    %c9 = arith.constant 9 : index
    %c0_570 = arith.constant 0 : index
    %c0_571 = arith.constant 0 : index
    %358 = vector.load %arg4[%c9, %c0_570, %c0_571] : memref<25x64x128xbf16, #tpu.memory_space<vmem>>, vector<1x64x128xbf16>
    %359 = vector.shape_cast %358 : vector<1x64x128xbf16> to vector<64x128xbf16>
    %cst_572 = arith.constant dense<0.000000e+00> : vector<49x128xf32>
    %360 = tpu.matmul %357, %359, %cst_572 {dimension_numbers = #tpu.dot_dimension_numbers<[1], [0], [0], [1], [0, 0, 1, 1], [], []>} : vector<49x64xbf16>, vector<64x128xbf16>, vector<49x128xf32> -> vector<49x128xf32>
    %361 = arith.addf %342, %360 : vector<49x128xf32>
    %c0_573 = arith.constant 0 : index
    %c0_574 = arith.constant 0 : index
    %c1_575 = arith.constant 1 : index
    %c0_576 = arith.constant 0 : index
    %c0_577 = arith.constant 0 : index
    %362 = vector.load %arg9[%c0_573, %c0_574, %c1_575, %c0_576, %c0_577] : memref<2x2x9x9x64xbf16, #tpu.memory_space<vmem>>, vector<1x1x1x7x64xbf16>
    %363 = vector.shape_cast %362 : vector<1x1x1x7x64xbf16> to vector<7x64xbf16>
    %c0_578 = arith.constant 0 : index
    %c0_579 = arith.constant 0 : index
    %c2_580 = arith.constant 2 : index
    %c0_581 = arith.constant 0 : index
    %c0_582 = arith.constant 0 : index
    %364 = vector.load %arg9[%c0_578, %c0_579, %c2_580, %c0_581, %c0_582] : memref<2x2x9x9x64xbf16, #tpu.memory_space<vmem>>, vector<1x1x1x7x64xbf16>
    %365 = vector.shape_cast %364 : vector<1x1x1x7x64xbf16> to vector<7x64xbf16>
    %c0_583 = arith.constant 0 : index
    %c0_584 = arith.constant 0 : index
    %c3_585 = arith.constant 3 : index
    %c0_586 = arith.constant 0 : index
    %c0_587 = arith.constant 0 : index
    %366 = vector.load %arg9[%c0_583, %c0_584, %c3_585, %c0_586, %c0_587] : memref<2x2x9x9x64xbf16, #tpu.memory_space<vmem>>, vector<1x1x1x7x64xbf16>
    %367 = vector.shape_cast %366 : vector<1x1x1x7x64xbf16> to vector<7x64xbf16>
    %c0_588 = arith.constant 0 : index
    %c0_589 = arith.constant 0 : index
    %c4_590 = arith.constant 4 : index
    %c0_591 = arith.constant 0 : index
    %c0_592 = arith.constant 0 : index
    %368 = vector.load %arg9[%c0_588, %c0_589, %c4_590, %c0_591, %c0_592] : memref<2x2x9x9x64xbf16, #tpu.memory_space<vmem>>, vector<1x1x1x7x64xbf16>
    %369 = vector.shape_cast %368 : vector<1x1x1x7x64xbf16> to vector<7x64xbf16>
    %c0_593 = arith.constant 0 : index
    %c0_594 = arith.constant 0 : index
    %c5_595 = arith.constant 5 : index
    %c0_596 = arith.constant 0 : index
    %c0_597 = arith.constant 0 : index
    %370 = vector.load %arg9[%c0_593, %c0_594, %c5_595, %c0_596, %c0_597] : memref<2x2x9x9x64xbf16, #tpu.memory_space<vmem>>, vector<1x1x1x7x64xbf16>
    %371 = vector.shape_cast %370 : vector<1x1x1x7x64xbf16> to vector<7x64xbf16>
    %c0_598 = arith.constant 0 : index
    %c0_599 = arith.constant 0 : index
    %c6_600 = arith.constant 6 : index
    %c0_601 = arith.constant 0 : index
    %c0_602 = arith.constant 0 : index
    %372 = vector.load %arg9[%c0_598, %c0_599, %c6_600, %c0_601, %c0_602] : memref<2x2x9x9x64xbf16, #tpu.memory_space<vmem>>, vector<1x1x1x7x64xbf16>
    %373 = vector.shape_cast %372 : vector<1x1x1x7x64xbf16> to vector<7x64xbf16>
    %c0_603 = arith.constant 0 : index
    %c0_604 = arith.constant 0 : index
    %c7_605 = arith.constant 7 : index
    %c0_606 = arith.constant 0 : index
    %c0_607 = arith.constant 0 : index
    %374 = vector.load %arg9[%c0_603, %c0_604, %c7_605, %c0_606, %c0_607] : memref<2x2x9x9x64xbf16, #tpu.memory_space<vmem>>, vector<1x1x1x7x64xbf16>
    %375 = vector.shape_cast %374 : vector<1x1x1x7x64xbf16> to vector<7x64xbf16>
    %376 = tpu.concatenate %363, %365, %367, %369, %371, %373, %375 in 0 : vector<7x64xbf16>, vector<7x64xbf16>, vector<7x64xbf16>, vector<7x64xbf16>, vector<7x64xbf16>, vector<7x64xbf16>, vector<7x64xbf16> -> vector<49x64xbf16>
    %c10 = arith.constant 10 : index
    %c0_608 = arith.constant 0 : index
    %c0_609 = arith.constant 0 : index
    %377 = vector.load %arg4[%c10, %c0_608, %c0_609] : memref<25x64x128xbf16, #tpu.memory_space<vmem>>, vector<1x64x128xbf16>
    %378 = vector.shape_cast %377 : vector<1x64x128xbf16> to vector<64x128xbf16>
    %cst_610 = arith.constant dense<0.000000e+00> : vector<49x128xf32>
    %379 = tpu.matmul %376, %378, %cst_610 {dimension_numbers = #tpu.dot_dimension_numbers<[1], [0], [0], [1], [0, 0, 1, 1], [], []>} : vector<49x64xbf16>, vector<64x128xbf16>, vector<49x128xf32> -> vector<49x128xf32>
    %380 = arith.addf %361, %379 : vector<49x128xf32>
    %c0_611 = arith.constant 0 : index
    %c1_612 = arith.constant 1 : index
    %c1_613 = arith.constant 1 : index
    %c0_614 = arith.constant 0 : index
    %c0_615 = arith.constant 0 : index
    %381 = vector.load %arg9[%c0_611, %c1_612, %c1_613, %c0_614, %c0_615] : memref<2x2x9x9x64xbf16, #tpu.memory_space<vmem>>, vector<1x1x1x7x64xbf16>
    %382 = vector.shape_cast %381 : vector<1x1x1x7x64xbf16> to vector<7x64xbf16>
    %c0_616 = arith.constant 0 : index
    %c1_617 = arith.constant 1 : index
    %c2_618 = arith.constant 2 : index
    %c0_619 = arith.constant 0 : index
    %c0_620 = arith.constant 0 : index
    %383 = vector.load %arg9[%c0_616, %c1_617, %c2_618, %c0_619, %c0_620] : memref<2x2x9x9x64xbf16, #tpu.memory_space<vmem>>, vector<1x1x1x7x64xbf16>
    %384 = vector.shape_cast %383 : vector<1x1x1x7x64xbf16> to vector<7x64xbf16>
    %c0_621 = arith.constant 0 : index
    %c1_622 = arith.constant 1 : index
    %c3_623 = arith.constant 3 : index
    %c0_624 = arith.constant 0 : index
    %c0_625 = arith.constant 0 : index
    %385 = vector.load %arg9[%c0_621, %c1_622, %c3_623, %c0_624, %c0_625] : memref<2x2x9x9x64xbf16, #tpu.memory_space<vmem>>, vector<1x1x1x7x64xbf16>
    %386 = vector.shape_cast %385 : vector<1x1x1x7x64xbf16> to vector<7x64xbf16>
    %c0_626 = arith.constant 0 : index
    %c1_627 = arith.constant 1 : index
    %c4_628 = arith.constant 4 : index
    %c0_629 = arith.constant 0 : index
    %c0_630 = arith.constant 0 : index
    %387 = vector.load %arg9[%c0_626, %c1_627, %c4_628, %c0_629, %c0_630] : memref<2x2x9x9x64xbf16, #tpu.memory_space<vmem>>, vector<1x1x1x7x64xbf16>
    %388 = vector.shape_cast %387 : vector<1x1x1x7x64xbf16> to vector<7x64xbf16>
    %c0_631 = arith.constant 0 : index
    %c1_632 = arith.constant 1 : index
    %c5_633 = arith.constant 5 : index
    %c0_634 = arith.constant 0 : index
    %c0_635 = arith.constant 0 : index
    %389 = vector.load %arg9[%c0_631, %c1_632, %c5_633, %c0_634, %c0_635] : memref<2x2x9x9x64xbf16, #tpu.memory_space<vmem>>, vector<1x1x1x7x64xbf16>
    %390 = vector.shape_cast %389 : vector<1x1x1x7x64xbf16> to vector<7x64xbf16>
    %c0_636 = arith.constant 0 : index
    %c1_637 = arith.constant 1 : index
    %c6_638 = arith.constant 6 : index
    %c0_639 = arith.constant 0 : index
    %c0_640 = arith.constant 0 : index
    %391 = vector.load %arg9[%c0_636, %c1_637, %c6_638, %c0_639, %c0_640] : memref<2x2x9x9x64xbf16, #tpu.memory_space<vmem>>, vector<1x1x1x7x64xbf16>
    %392 = vector.shape_cast %391 : vector<1x1x1x7x64xbf16> to vector<7x64xbf16>
    %c0_641 = arith.constant 0 : index
    %c1_642 = arith.constant 1 : index
    %c7_643 = arith.constant 7 : index
    %c0_644 = arith.constant 0 : index
    %c0_645 = arith.constant 0 : index
    %393 = vector.load %arg9[%c0_641, %c1_642, %c7_643, %c0_644, %c0_645] : memref<2x2x9x9x64xbf16, #tpu.memory_space<vmem>>, vector<1x1x1x7x64xbf16>
    %394 = vector.shape_cast %393 : vector<1x1x1x7x64xbf16> to vector<7x64xbf16>
    %395 = tpu.concatenate %382, %384, %386, %388, %390, %392, %394 in 0 : vector<7x64xbf16>, vector<7x64xbf16>, vector<7x64xbf16>, vector<7x64xbf16>, vector<7x64xbf16>, vector<7x64xbf16>, vector<7x64xbf16> -> vector<49x64xbf16>
    %c11 = arith.constant 11 : index
    %c0_646 = arith.constant 0 : index
    %c0_647 = arith.constant 0 : index
    %396 = vector.load %arg4[%c11, %c0_646, %c0_647] : memref<25x64x128xbf16, #tpu.memory_space<vmem>>, vector<1x64x128xbf16>
    %397 = vector.shape_cast %396 : vector<1x64x128xbf16> to vector<64x128xbf16>
    %cst_648 = arith.constant dense<0.000000e+00> : vector<49x128xf32>
    %398 = tpu.matmul %395, %397, %cst_648 {dimension_numbers = #tpu.dot_dimension_numbers<[1], [0], [0], [1], [0, 0, 1, 1], [], []>} : vector<49x64xbf16>, vector<64x128xbf16>, vector<49x128xf32> -> vector<49x128xf32>
    %399 = arith.addf %380, %398 : vector<49x128xf32>
    %c0_649 = arith.constant 0 : index
    %c0_650 = arith.constant 0 : index
    %c1_651 = arith.constant 1 : index
    %c1_652 = arith.constant 1 : index
    %c0_653 = arith.constant 0 : index
    %400 = vector.load %arg9[%c0_649, %c0_650, %c1_651, %c1_652, %c0_653] : memref<2x2x9x9x64xbf16, #tpu.memory_space<vmem>>, vector<1x1x1x7x64xbf16>
    %401 = vector.shape_cast %400 : vector<1x1x1x7x64xbf16> to vector<7x64xbf16>
    %c0_654 = arith.constant 0 : index
    %c0_655 = arith.constant 0 : index
    %c2_656 = arith.constant 2 : index
    %c1_657 = arith.constant 1 : index
    %c0_658 = arith.constant 0 : index
    %402 = vector.load %arg9[%c0_654, %c0_655, %c2_656, %c1_657, %c0_658] : memref<2x2x9x9x64xbf16, #tpu.memory_space<vmem>>, vector<1x1x1x7x64xbf16>
    %403 = vector.shape_cast %402 : vector<1x1x1x7x64xbf16> to vector<7x64xbf16>
    %c0_659 = arith.constant 0 : index
    %c0_660 = arith.constant 0 : index
    %c3_661 = arith.constant 3 : index
    %c1_662 = arith.constant 1 : index
    %c0_663 = arith.constant 0 : index
    %404 = vector.load %arg9[%c0_659, %c0_660, %c3_661, %c1_662, %c0_663] : memref<2x2x9x9x64xbf16, #tpu.memory_space<vmem>>, vector<1x1x1x7x64xbf16>
    %405 = vector.shape_cast %404 : vector<1x1x1x7x64xbf16> to vector<7x64xbf16>
    %c0_664 = arith.constant 0 : index
    %c0_665 = arith.constant 0 : index
    %c4_666 = arith.constant 4 : index
    %c1_667 = arith.constant 1 : index
    %c0_668 = arith.constant 0 : index
    %406 = vector.load %arg9[%c0_664, %c0_665, %c4_666, %c1_667, %c0_668] : memref<2x2x9x9x64xbf16, #tpu.memory_space<vmem>>, vector<1x1x1x7x64xbf16>
    %407 = vector.shape_cast %406 : vector<1x1x1x7x64xbf16> to vector<7x64xbf16>
    %c0_669 = arith.constant 0 : index
    %c0_670 = arith.constant 0 : index
    %c5_671 = arith.constant 5 : index
    %c1_672 = arith.constant 1 : index
    %c0_673 = arith.constant 0 : index
    %408 = vector.load %arg9[%c0_669, %c0_670, %c5_671, %c1_672, %c0_673] : memref<2x2x9x9x64xbf16, #tpu.memory_space<vmem>>, vector<1x1x1x7x64xbf16>
    %409 = vector.shape_cast %408 : vector<1x1x1x7x64xbf16> to vector<7x64xbf16>
    %c0_674 = arith.constant 0 : index
    %c0_675 = arith.constant 0 : index
    %c6_676 = arith.constant 6 : index
    %c1_677 = arith.constant 1 : index
    %c0_678 = arith.constant 0 : index
    %410 = vector.load %arg9[%c0_674, %c0_675, %c6_676, %c1_677, %c0_678] : memref<2x2x9x9x64xbf16, #tpu.memory_space<vmem>>, vector<1x1x1x7x64xbf16>
    %411 = vector.shape_cast %410 : vector<1x1x1x7x64xbf16> to vector<7x64xbf16>
    %c0_679 = arith.constant 0 : index
    %c0_680 = arith.constant 0 : index
    %c7_681 = arith.constant 7 : index
    %c1_682 = arith.constant 1 : index
    %c0_683 = arith.constant 0 : index
    %412 = vector.load %arg9[%c0_679, %c0_680, %c7_681, %c1_682, %c0_683] : memref<2x2x9x9x64xbf16, #tpu.memory_space<vmem>>, vector<1x1x1x7x64xbf16>
    %413 = vector.shape_cast %412 : vector<1x1x1x7x64xbf16> to vector<7x64xbf16>
    %414 = tpu.concatenate %401, %403, %405, %407, %409, %411, %413 in 0 : vector<7x64xbf16>, vector<7x64xbf16>, vector<7x64xbf16>, vector<7x64xbf16>, vector<7x64xbf16>, vector<7x64xbf16>, vector<7x64xbf16> -> vector<49x64xbf16>
    %c12 = arith.constant 12 : index
    %c0_684 = arith.constant 0 : index
    %c0_685 = arith.constant 0 : index
    %415 = vector.load %arg4[%c12, %c0_684, %c0_685] : memref<25x64x128xbf16, #tpu.memory_space<vmem>>, vector<1x64x128xbf16>
    %416 = vector.shape_cast %415 : vector<1x64x128xbf16> to vector<64x128xbf16>
    %cst_686 = arith.constant dense<0.000000e+00> : vector<49x128xf32>
    %417 = tpu.matmul %414, %416, %cst_686 {dimension_numbers = #tpu.dot_dimension_numbers<[1], [0], [0], [1], [0, 0, 1, 1], [], []>} : vector<49x64xbf16>, vector<64x128xbf16>, vector<49x128xf32> -> vector<49x128xf32>
    %418 = arith.addf %399, %417 : vector<49x128xf32>
    %c0_687 = arith.constant 0 : index
    %c1_688 = arith.constant 1 : index
    %c1_689 = arith.constant 1 : index
    %c1_690 = arith.constant 1 : index
    %c0_691 = arith.constant 0 : index
    %419 = vector.load %arg9[%c0_687, %c1_688, %c1_689, %c1_690, %c0_691] : memref<2x2x9x9x64xbf16, #tpu.memory_space<vmem>>, vector<1x1x1x7x64xbf16>
    %420 = vector.shape_cast %419 : vector<1x1x1x7x64xbf16> to vector<7x64xbf16>
    %c0_692 = arith.constant 0 : index
    %c1_693 = arith.constant 1 : index
    %c2_694 = arith.constant 2 : index
    %c1_695 = arith.constant 1 : index
    %c0_696 = arith.constant 0 : index
    %421 = vector.load %arg9[%c0_692, %c1_693, %c2_694, %c1_695, %c0_696] : memref<2x2x9x9x64xbf16, #tpu.memory_space<vmem>>, vector<1x1x1x7x64xbf16>
    %422 = vector.shape_cast %421 : vector<1x1x1x7x64xbf16> to vector<7x64xbf16>
    %c0_697 = arith.constant 0 : index
    %c1_698 = arith.constant 1 : index
    %c3_699 = arith.constant 3 : index
    %c1_700 = arith.constant 1 : index
    %c0_701 = arith.constant 0 : index
    %423 = vector.load %arg9[%c0_697, %c1_698, %c3_699, %c1_700, %c0_701] : memref<2x2x9x9x64xbf16, #tpu.memory_space<vmem>>, vector<1x1x1x7x64xbf16>
    %424 = vector.shape_cast %423 : vector<1x1x1x7x64xbf16> to vector<7x64xbf16>
    %c0_702 = arith.constant 0 : index
    %c1_703 = arith.constant 1 : index
    %c4_704 = arith.constant 4 : index
    %c1_705 = arith.constant 1 : index
    %c0_706 = arith.constant 0 : index
    %425 = vector.load %arg9[%c0_702, %c1_703, %c4_704, %c1_705, %c0_706] : memref<2x2x9x9x64xbf16, #tpu.memory_space<vmem>>, vector<1x1x1x7x64xbf16>
    %426 = vector.shape_cast %425 : vector<1x1x1x7x64xbf16> to vector<7x64xbf16>
    %c0_707 = arith.constant 0 : index
    %c1_708 = arith.constant 1 : index
    %c5_709 = arith.constant 5 : index
    %c1_710 = arith.constant 1 : index
    %c0_711 = arith.constant 0 : index
    %427 = vector.load %arg9[%c0_707, %c1_708, %c5_709, %c1_710, %c0_711] : memref<2x2x9x9x64xbf16, #tpu.memory_space<vmem>>, vector<1x1x1x7x64xbf16>
    %428 = vector.shape_cast %427 : vector<1x1x1x7x64xbf16> to vector<7x64xbf16>
    %c0_712 = arith.constant 0 : index
    %c1_713 = arith.constant 1 : index
    %c6_714 = arith.constant 6 : index
    %c1_715 = arith.constant 1 : index
    %c0_716 = arith.constant 0 : index
    %429 = vector.load %arg9[%c0_712, %c1_713, %c6_714, %c1_715, %c0_716] : memref<2x2x9x9x64xbf16, #tpu.memory_space<vmem>>, vector<1x1x1x7x64xbf16>
    %430 = vector.shape_cast %429 : vector<1x1x1x7x64xbf16> to vector<7x64xbf16>
    %c0_717 = arith.constant 0 : index
    %c1_718 = arith.constant 1 : index
    %c7_719 = arith.constant 7 : index
    %c1_720 = arith.constant 1 : index
    %c0_721 = arith.constant 0 : index
    %431 = vector.load %arg9[%c0_717, %c1_718, %c7_719, %c1_720, %c0_721] : memref<2x2x9x9x64xbf16, #tpu.memory_space<vmem>>, vector<1x1x1x7x64xbf16>
    %432 = vector.shape_cast %431 : vector<1x1x1x7x64xbf16> to vector<7x64xbf16>
    %433 = tpu.concatenate %420, %422, %424, %426, %428, %430, %432 in 0 : vector<7x64xbf16>, vector<7x64xbf16>, vector<7x64xbf16>, vector<7x64xbf16>, vector<7x64xbf16>, vector<7x64xbf16>, vector<7x64xbf16> -> vector<49x64xbf16>
    %c13 = arith.constant 13 : index
    %c0_722 = arith.constant 0 : index
    %c0_723 = arith.constant 0 : index
    %434 = vector.load %arg4[%c13, %c0_722, %c0_723] : memref<25x64x128xbf16, #tpu.memory_space<vmem>>, vector<1x64x128xbf16>
    %435 = vector.shape_cast %434 : vector<1x64x128xbf16> to vector<64x128xbf16>
    %cst_724 = arith.constant dense<0.000000e+00> : vector<49x128xf32>
    %436 = tpu.matmul %433, %435, %cst_724 {dimension_numbers = #tpu.dot_dimension_numbers<[1], [0], [0], [1], [0, 0, 1, 1], [], []>} : vector<49x64xbf16>, vector<64x128xbf16>, vector<49x128xf32> -> vector<49x128xf32>
    %437 = arith.addf %418, %436 : vector<49x128xf32>
    %c0_725 = arith.constant 0 : index
    %c0_726 = arith.constant 0 : index
    %c1_727 = arith.constant 1 : index
    %c2_728 = arith.constant 2 : index
    %c0_729 = arith.constant 0 : index
    %438 = vector.load %arg9[%c0_725, %c0_726, %c1_727, %c2_728, %c0_729] : memref<2x2x9x9x64xbf16, #tpu.memory_space<vmem>>, vector<1x1x1x7x64xbf16>
    %439 = vector.shape_cast %438 : vector<1x1x1x7x64xbf16> to vector<7x64xbf16>
    %c0_730 = arith.constant 0 : index
    %c0_731 = arith.constant 0 : index
    %c2_732 = arith.constant 2 : index
    %c2_733 = arith.constant 2 : index
    %c0_734 = arith.constant 0 : index
    %440 = vector.load %arg9[%c0_730, %c0_731, %c2_732, %c2_733, %c0_734] : memref<2x2x9x9x64xbf16, #tpu.memory_space<vmem>>, vector<1x1x1x7x64xbf16>
    %441 = vector.shape_cast %440 : vector<1x1x1x7x64xbf16> to vector<7x64xbf16>
    %c0_735 = arith.constant 0 : index
    %c0_736 = arith.constant 0 : index
    %c3_737 = arith.constant 3 : index
    %c2_738 = arith.constant 2 : index
    %c0_739 = arith.constant 0 : index
    %442 = vector.load %arg9[%c0_735, %c0_736, %c3_737, %c2_738, %c0_739] : memref<2x2x9x9x64xbf16, #tpu.memory_space<vmem>>, vector<1x1x1x7x64xbf16>
    %443 = vector.shape_cast %442 : vector<1x1x1x7x64xbf16> to vector<7x64xbf16>
    %c0_740 = arith.constant 0 : index
    %c0_741 = arith.constant 0 : index
    %c4_742 = arith.constant 4 : index
    %c2_743 = arith.constant 2 : index
    %c0_744 = arith.constant 0 : index
    %444 = vector.load %arg9[%c0_740, %c0_741, %c4_742, %c2_743, %c0_744] : memref<2x2x9x9x64xbf16, #tpu.memory_space<vmem>>, vector<1x1x1x7x64xbf16>
    %445 = vector.shape_cast %444 : vector<1x1x1x7x64xbf16> to vector<7x64xbf16>
    %c0_745 = arith.constant 0 : index
    %c0_746 = arith.constant 0 : index
    %c5_747 = arith.constant 5 : index
    %c2_748 = arith.constant 2 : index
    %c0_749 = arith.constant 0 : index
    %446 = vector.load %arg9[%c0_745, %c0_746, %c5_747, %c2_748, %c0_749] : memref<2x2x9x9x64xbf16, #tpu.memory_space<vmem>>, vector<1x1x1x7x64xbf16>
    %447 = vector.shape_cast %446 : vector<1x1x1x7x64xbf16> to vector<7x64xbf16>
    %c0_750 = arith.constant 0 : index
    %c0_751 = arith.constant 0 : index
    %c6_752 = arith.constant 6 : index
    %c2_753 = arith.constant 2 : index
    %c0_754 = arith.constant 0 : index
    %448 = vector.load %arg9[%c0_750, %c0_751, %c6_752, %c2_753, %c0_754] : memref<2x2x9x9x64xbf16, #tpu.memory_space<vmem>>, vector<1x1x1x7x64xbf16>
    %449 = vector.shape_cast %448 : vector<1x1x1x7x64xbf16> to vector<7x64xbf16>
    %c0_755 = arith.constant 0 : index
    %c0_756 = arith.constant 0 : index
    %c7_757 = arith.constant 7 : index
    %c2_758 = arith.constant 2 : index
    %c0_759 = arith.constant 0 : index
    %450 = vector.load %arg9[%c0_755, %c0_756, %c7_757, %c2_758, %c0_759] : memref<2x2x9x9x64xbf16, #tpu.memory_space<vmem>>, vector<1x1x1x7x64xbf16>
    %451 = vector.shape_cast %450 : vector<1x1x1x7x64xbf16> to vector<7x64xbf16>
    %452 = tpu.concatenate %439, %441, %443, %445, %447, %449, %451 in 0 : vector<7x64xbf16>, vector<7x64xbf16>, vector<7x64xbf16>, vector<7x64xbf16>, vector<7x64xbf16>, vector<7x64xbf16>, vector<7x64xbf16> -> vector<49x64xbf16>
    %c14 = arith.constant 14 : index
    %c0_760 = arith.constant 0 : index
    %c0_761 = arith.constant 0 : index
    %453 = vector.load %arg4[%c14, %c0_760, %c0_761] : memref<25x64x128xbf16, #tpu.memory_space<vmem>>, vector<1x64x128xbf16>
    %454 = vector.shape_cast %453 : vector<1x64x128xbf16> to vector<64x128xbf16>
    %cst_762 = arith.constant dense<0.000000e+00> : vector<49x128xf32>
    %455 = tpu.matmul %452, %454, %cst_762 {dimension_numbers = #tpu.dot_dimension_numbers<[1], [0], [0], [1], [0, 0, 1, 1], [], []>} : vector<49x64xbf16>, vector<64x128xbf16>, vector<49x128xf32> -> vector<49x128xf32>
    %456 = arith.addf %437, %455 : vector<49x128xf32>
    %c1_763 = arith.constant 1 : index
    %c0_764 = arith.constant 0 : index
    %c1_765 = arith.constant 1 : index
    %c0_766 = arith.constant 0 : index
    %c0_767 = arith.constant 0 : index
    %457 = vector.load %arg9[%c1_763, %c0_764, %c1_765, %c0_766, %c0_767] : memref<2x2x9x9x64xbf16, #tpu.memory_space<vmem>>, vector<1x1x1x7x64xbf16>
    %458 = vector.shape_cast %457 : vector<1x1x1x7x64xbf16> to vector<7x64xbf16>
    %c1_768 = arith.constant 1 : index
    %c0_769 = arith.constant 0 : index
    %c2_770 = arith.constant 2 : index
    %c0_771 = arith.constant 0 : index
    %c0_772 = arith.constant 0 : index
    %459 = vector.load %arg9[%c1_768, %c0_769, %c2_770, %c0_771, %c0_772] : memref<2x2x9x9x64xbf16, #tpu.memory_space<vmem>>, vector<1x1x1x7x64xbf16>
    %460 = vector.shape_cast %459 : vector<1x1x1x7x64xbf16> to vector<7x64xbf16>
    %c1_773 = arith.constant 1 : index
    %c0_774 = arith.constant 0 : index
    %c3_775 = arith.constant 3 : index
    %c0_776 = arith.constant 0 : index
    %c0_777 = arith.constant 0 : index
    %461 = vector.load %arg9[%c1_773, %c0_774, %c3_775, %c0_776, %c0_777] : memref<2x2x9x9x64xbf16, #tpu.memory_space<vmem>>, vector<1x1x1x7x64xbf16>
    %462 = vector.shape_cast %461 : vector<1x1x1x7x64xbf16> to vector<7x64xbf16>
    %c1_778 = arith.constant 1 : index
    %c0_779 = arith.constant 0 : index
    %c4_780 = arith.constant 4 : index
    %c0_781 = arith.constant 0 : index
    %c0_782 = arith.constant 0 : index
    %463 = vector.load %arg9[%c1_778, %c0_779, %c4_780, %c0_781, %c0_782] : memref<2x2x9x9x64xbf16, #tpu.memory_space<vmem>>, vector<1x1x1x7x64xbf16>
    %464 = vector.shape_cast %463 : vector<1x1x1x7x64xbf16> to vector<7x64xbf16>
    %c1_783 = arith.constant 1 : index
    %c0_784 = arith.constant 0 : index
    %c5_785 = arith.constant 5 : index
    %c0_786 = arith.constant 0 : index
    %c0_787 = arith.constant 0 : index
    %465 = vector.load %arg9[%c1_783, %c0_784, %c5_785, %c0_786, %c0_787] : memref<2x2x9x9x64xbf16, #tpu.memory_space<vmem>>, vector<1x1x1x7x64xbf16>
    %466 = vector.shape_cast %465 : vector<1x1x1x7x64xbf16> to vector<7x64xbf16>
    %c1_788 = arith.constant 1 : index
    %c0_789 = arith.constant 0 : index
    %c6_790 = arith.constant 6 : index
    %c0_791 = arith.constant 0 : index
    %c0_792 = arith.constant 0 : index
    %467 = vector.load %arg9[%c1_788, %c0_789, %c6_790, %c0_791, %c0_792] : memref<2x2x9x9x64xbf16, #tpu.memory_space<vmem>>, vector<1x1x1x7x64xbf16>
    %468 = vector.shape_cast %467 : vector<1x1x1x7x64xbf16> to vector<7x64xbf16>
    %c1_793 = arith.constant 1 : index
    %c0_794 = arith.constant 0 : index
    %c7_795 = arith.constant 7 : index
    %c0_796 = arith.constant 0 : index
    %c0_797 = arith.constant 0 : index
    %469 = vector.load %arg9[%c1_793, %c0_794, %c7_795, %c0_796, %c0_797] : memref<2x2x9x9x64xbf16, #tpu.memory_space<vmem>>, vector<1x1x1x7x64xbf16>
    %470 = vector.shape_cast %469 : vector<1x1x1x7x64xbf16> to vector<7x64xbf16>
    %471 = tpu.concatenate %458, %460, %462, %464, %466, %468, %470 in 0 : vector<7x64xbf16>, vector<7x64xbf16>, vector<7x64xbf16>, vector<7x64xbf16>, vector<7x64xbf16>, vector<7x64xbf16>, vector<7x64xbf16> -> vector<49x64xbf16>
    %c15 = arith.constant 15 : index
    %c0_798 = arith.constant 0 : index
    %c0_799 = arith.constant 0 : index
    %472 = vector.load %arg4[%c15, %c0_798, %c0_799] : memref<25x64x128xbf16, #tpu.memory_space<vmem>>, vector<1x64x128xbf16>
    %473 = vector.shape_cast %472 : vector<1x64x128xbf16> to vector<64x128xbf16>
    %cst_800 = arith.constant dense<0.000000e+00> : vector<49x128xf32>
    %474 = tpu.matmul %471, %473, %cst_800 {dimension_numbers = #tpu.dot_dimension_numbers<[1], [0], [0], [1], [0, 0, 1, 1], [], []>} : vector<49x64xbf16>, vector<64x128xbf16>, vector<49x128xf32> -> vector<49x128xf32>
    %475 = arith.addf %456, %474 : vector<49x128xf32>
    %c1_801 = arith.constant 1 : index
    %c1_802 = arith.constant 1 : index
    %c1_803 = arith.constant 1 : index
    %c0_804 = arith.constant 0 : index
    %c0_805 = arith.constant 0 : index
    %476 = vector.load %arg9[%c1_801, %c1_802, %c1_803, %c0_804, %c0_805] : memref<2x2x9x9x64xbf16, #tpu.memory_space<vmem>>, vector<1x1x1x7x64xbf16>
    %477 = vector.shape_cast %476 : vector<1x1x1x7x64xbf16> to vector<7x64xbf16>
    %c1_806 = arith.constant 1 : index
    %c1_807 = arith.constant 1 : index
    %c2_808 = arith.constant 2 : index
    %c0_809 = arith.constant 0 : index
    %c0_810 = arith.constant 0 : index
    %478 = vector.load %arg9[%c1_806, %c1_807, %c2_808, %c0_809, %c0_810] : memref<2x2x9x9x64xbf16, #tpu.memory_space<vmem>>, vector<1x1x1x7x64xbf16>
    %479 = vector.shape_cast %478 : vector<1x1x1x7x64xbf16> to vector<7x64xbf16>
    %c1_811 = arith.constant 1 : index
    %c1_812 = arith.constant 1 : index
    %c3_813 = arith.constant 3 : index
    %c0_814 = arith.constant 0 : index
    %c0_815 = arith.constant 0 : index
    %480 = vector.load %arg9[%c1_811, %c1_812, %c3_813, %c0_814, %c0_815] : memref<2x2x9x9x64xbf16, #tpu.memory_space<vmem>>, vector<1x1x1x7x64xbf16>
    %481 = vector.shape_cast %480 : vector<1x1x1x7x64xbf16> to vector<7x64xbf16>
    %c1_816 = arith.constant 1 : index
    %c1_817 = arith.constant 1 : index
    %c4_818 = arith.constant 4 : index
    %c0_819 = arith.constant 0 : index
    %c0_820 = arith.constant 0 : index
    %482 = vector.load %arg9[%c1_816, %c1_817, %c4_818, %c0_819, %c0_820] : memref<2x2x9x9x64xbf16, #tpu.memory_space<vmem>>, vector<1x1x1x7x64xbf16>
    %483 = vector.shape_cast %482 : vector<1x1x1x7x64xbf16> to vector<7x64xbf16>
    %c1_821 = arith.constant 1 : index
    %c1_822 = arith.constant 1 : index
    %c5_823 = arith.constant 5 : index
    %c0_824 = arith.constant 0 : index
    %c0_825 = arith.constant 0 : index
    %484 = vector.load %arg9[%c1_821, %c1_822, %c5_823, %c0_824, %c0_825] : memref<2x2x9x9x64xbf16, #tpu.memory_space<vmem>>, vector<1x1x1x7x64xbf16>
    %485 = vector.shape_cast %484 : vector<1x1x1x7x64xbf16> to vector<7x64xbf16>
    %c1_826 = arith.constant 1 : index
    %c1_827 = arith.constant 1 : index
    %c6_828 = arith.constant 6 : index
    %c0_829 = arith.constant 0 : index
    %c0_830 = arith.constant 0 : index
    %486 = vector.load %arg9[%c1_826, %c1_827, %c6_828, %c0_829, %c0_830] : memref<2x2x9x9x64xbf16, #tpu.memory_space<vmem>>, vector<1x1x1x7x64xbf16>
    %487 = vector.shape_cast %486 : vector<1x1x1x7x64xbf16> to vector<7x64xbf16>
    %c1_831 = arith.constant 1 : index
    %c1_832 = arith.constant 1 : index
    %c7_833 = arith.constant 7 : index
    %c0_834 = arith.constant 0 : index
    %c0_835 = arith.constant 0 : index
    %488 = vector.load %arg9[%c1_831, %c1_832, %c7_833, %c0_834, %c0_835] : memref<2x2x9x9x64xbf16, #tpu.memory_space<vmem>>, vector<1x1x1x7x64xbf16>
    %489 = vector.shape_cast %488 : vector<1x1x1x7x64xbf16> to vector<7x64xbf16>
    %490 = tpu.concatenate %477, %479, %481, %483, %485, %487, %489 in 0 : vector<7x64xbf16>, vector<7x64xbf16>, vector<7x64xbf16>, vector<7x64xbf16>, vector<7x64xbf16>, vector<7x64xbf16>, vector<7x64xbf16> -> vector<49x64xbf16>
    %c16 = arith.constant 16 : index
    %c0_836 = arith.constant 0 : index
    %c0_837 = arith.constant 0 : index
    %491 = vector.load %arg4[%c16, %c0_836, %c0_837] : memref<25x64x128xbf16, #tpu.memory_space<vmem>>, vector<1x64x128xbf16>
    %492 = vector.shape_cast %491 : vector<1x64x128xbf16> to vector<64x128xbf16>
    %cst_838 = arith.constant dense<0.000000e+00> : vector<49x128xf32>
    %493 = tpu.matmul %490, %492, %cst_838 {dimension_numbers = #tpu.dot_dimension_numbers<[1], [0], [0], [1], [0, 0, 1, 1], [], []>} : vector<49x64xbf16>, vector<64x128xbf16>, vector<49x128xf32> -> vector<49x128xf32>
    %494 = arith.addf %475, %493 : vector<49x128xf32>
    %c1_839 = arith.constant 1 : index
    %c0_840 = arith.constant 0 : index
    %c1_841 = arith.constant 1 : index
    %c1_842 = arith.constant 1 : index
    %c0_843 = arith.constant 0 : index
    %495 = vector.load %arg9[%c1_839, %c0_840, %c1_841, %c1_842, %c0_843] : memref<2x2x9x9x64xbf16, #tpu.memory_space<vmem>>, vector<1x1x1x7x64xbf16>
    %496 = vector.shape_cast %495 : vector<1x1x1x7x64xbf16> to vector<7x64xbf16>
    %c1_844 = arith.constant 1 : index
    %c0_845 = arith.constant 0 : index
    %c2_846 = arith.constant 2 : index
    %c1_847 = arith.constant 1 : index
    %c0_848 = arith.constant 0 : index
    %497 = vector.load %arg9[%c1_844, %c0_845, %c2_846, %c1_847, %c0_848] : memref<2x2x9x9x64xbf16, #tpu.memory_space<vmem>>, vector<1x1x1x7x64xbf16>
    %498 = vector.shape_cast %497 : vector<1x1x1x7x64xbf16> to vector<7x64xbf16>
    %c1_849 = arith.constant 1 : index
    %c0_850 = arith.constant 0 : index
    %c3_851 = arith.constant 3 : index
    %c1_852 = arith.constant 1 : index
    %c0_853 = arith.constant 0 : index
    %499 = vector.load %arg9[%c1_849, %c0_850, %c3_851, %c1_852, %c0_853] : memref<2x2x9x9x64xbf16, #tpu.memory_space<vmem>>, vector<1x1x1x7x64xbf16>
    %500 = vector.shape_cast %499 : vector<1x1x1x7x64xbf16> to vector<7x64xbf16>
    %c1_854 = arith.constant 1 : index
    %c0_855 = arith.constant 0 : index
    %c4_856 = arith.constant 4 : index
    %c1_857 = arith.constant 1 : index
    %c0_858 = arith.constant 0 : index
    %501 = vector.load %arg9[%c1_854, %c0_855, %c4_856, %c1_857, %c0_858] : memref<2x2x9x9x64xbf16, #tpu.memory_space<vmem>>, vector<1x1x1x7x64xbf16>
    %502 = vector.shape_cast %501 : vector<1x1x1x7x64xbf16> to vector<7x64xbf16>
    %c1_859 = arith.constant 1 : index
    %c0_860 = arith.constant 0 : index
    %c5_861 = arith.constant 5 : index
    %c1_862 = arith.constant 1 : index
    %c0_863 = arith.constant 0 : index
    %503 = vector.load %arg9[%c1_859, %c0_860, %c5_861, %c1_862, %c0_863] : memref<2x2x9x9x64xbf16, #tpu.memory_space<vmem>>, vector<1x1x1x7x64xbf16>
    %504 = vector.shape_cast %503 : vector<1x1x1x7x64xbf16> to vector<7x64xbf16>
    %c1_864 = arith.constant 1 : index
    %c0_865 = arith.constant 0 : index
    %c6_866 = arith.constant 6 : index
    %c1_867 = arith.constant 1 : index
    %c0_868 = arith.constant 0 : index
    %505 = vector.load %arg9[%c1_864, %c0_865, %c6_866, %c1_867, %c0_868] : memref<2x2x9x9x64xbf16, #tpu.memory_space<vmem>>, vector<1x1x1x7x64xbf16>
    %506 = vector.shape_cast %505 : vector<1x1x1x7x64xbf16> to vector<7x64xbf16>
    %c1_869 = arith.constant 1 : index
    %c0_870 = arith.constant 0 : index
    %c7_871 = arith.constant 7 : index
    %c1_872 = arith.constant 1 : index
    %c0_873 = arith.constant 0 : index
    %507 = vector.load %arg9[%c1_869, %c0_870, %c7_871, %c1_872, %c0_873] : memref<2x2x9x9x64xbf16, #tpu.memory_space<vmem>>, vector<1x1x1x7x64xbf16>
    %508 = vector.shape_cast %507 : vector<1x1x1x7x64xbf16> to vector<7x64xbf16>
    %509 = tpu.concatenate %496, %498, %500, %502, %504, %506, %508 in 0 : vector<7x64xbf16>, vector<7x64xbf16>, vector<7x64xbf16>, vector<7x64xbf16>, vector<7x64xbf16>, vector<7x64xbf16>, vector<7x64xbf16> -> vector<49x64xbf16>
    %c17 = arith.constant 17 : index
    %c0_874 = arith.constant 0 : index
    %c0_875 = arith.constant 0 : index
    %510 = vector.load %arg4[%c17, %c0_874, %c0_875] : memref<25x64x128xbf16, #tpu.memory_space<vmem>>, vector<1x64x128xbf16>
    %511 = vector.shape_cast %510 : vector<1x64x128xbf16> to vector<64x128xbf16>
    %cst_876 = arith.constant dense<0.000000e+00> : vector<49x128xf32>
    %512 = tpu.matmul %509, %511, %cst_876 {dimension_numbers = #tpu.dot_dimension_numbers<[1], [0], [0], [1], [0, 0, 1, 1], [], []>} : vector<49x64xbf16>, vector<64x128xbf16>, vector<49x128xf32> -> vector<49x128xf32>
    %513 = arith.addf %494, %512 : vector<49x128xf32>
    %c1_877 = arith.constant 1 : index
    %c1_878 = arith.constant 1 : index
    %c1_879 = arith.constant 1 : index
    %c1_880 = arith.constant 1 : index
    %c0_881 = arith.constant 0 : index
    %514 = vector.load %arg9[%c1_877, %c1_878, %c1_879, %c1_880, %c0_881] : memref<2x2x9x9x64xbf16, #tpu.memory_space<vmem>>, vector<1x1x1x7x64xbf16>
    %515 = vector.shape_cast %514 : vector<1x1x1x7x64xbf16> to vector<7x64xbf16>
    %c1_882 = arith.constant 1 : index
    %c1_883 = arith.constant 1 : index
    %c2_884 = arith.constant 2 : index
    %c1_885 = arith.constant 1 : index
    %c0_886 = arith.constant 0 : index
    %516 = vector.load %arg9[%c1_882, %c1_883, %c2_884, %c1_885, %c0_886] : memref<2x2x9x9x64xbf16, #tpu.memory_space<vmem>>, vector<1x1x1x7x64xbf16>
    %517 = vector.shape_cast %516 : vector<1x1x1x7x64xbf16> to vector<7x64xbf16>
    %c1_887 = arith.constant 1 : index
    %c1_888 = arith.constant 1 : index
    %c3_889 = arith.constant 3 : index
    %c1_890 = arith.constant 1 : index
    %c0_891 = arith.constant 0 : index
    %518 = vector.load %arg9[%c1_887, %c1_888, %c3_889, %c1_890, %c0_891] : memref<2x2x9x9x64xbf16, #tpu.memory_space<vmem>>, vector<1x1x1x7x64xbf16>
    %519 = vector.shape_cast %518 : vector<1x1x1x7x64xbf16> to vector<7x64xbf16>
    %c1_892 = arith.constant 1 : index
    %c1_893 = arith.constant 1 : index
    %c4_894 = arith.constant 4 : index
    %c1_895 = arith.constant 1 : index
    %c0_896 = arith.constant 0 : index
    %520 = vector.load %arg9[%c1_892, %c1_893, %c4_894, %c1_895, %c0_896] : memref<2x2x9x9x64xbf16, #tpu.memory_space<vmem>>, vector<1x1x1x7x64xbf16>
    %521 = vector.shape_cast %520 : vector<1x1x1x7x64xbf16> to vector<7x64xbf16>
    %c1_897 = arith.constant 1 : index
    %c1_898 = arith.constant 1 : index
    %c5_899 = arith.constant 5 : index
    %c1_900 = arith.constant 1 : index
    %c0_901 = arith.constant 0 : index
    %522 = vector.load %arg9[%c1_897, %c1_898, %c5_899, %c1_900, %c0_901] : memref<2x2x9x9x64xbf16, #tpu.memory_space<vmem>>, vector<1x1x1x7x64xbf16>
    %523 = vector.shape_cast %522 : vector<1x1x1x7x64xbf16> to vector<7x64xbf16>
    %c1_902 = arith.constant 1 : index
    %c1_903 = arith.constant 1 : index
    %c6_904 = arith.constant 6 : index
    %c1_905 = arith.constant 1 : index
    %c0_906 = arith.constant 0 : index
    %524 = vector.load %arg9[%c1_902, %c1_903, %c6_904, %c1_905, %c0_906] : memref<2x2x9x9x64xbf16, #tpu.memory_space<vmem>>, vector<1x1x1x7x64xbf16>
    %525 = vector.shape_cast %524 : vector<1x1x1x7x64xbf16> to vector<7x64xbf16>
    %c1_907 = arith.constant 1 : index
    %c1_908 = arith.constant 1 : index
    %c7_909 = arith.constant 7 : index
    %c1_910 = arith.constant 1 : index
    %c0_911 = arith.constant 0 : index
    %526 = vector.load %arg9[%c1_907, %c1_908, %c7_909, %c1_910, %c0_911] : memref<2x2x9x9x64xbf16, #tpu.memory_space<vmem>>, vector<1x1x1x7x64xbf16>
    %527 = vector.shape_cast %526 : vector<1x1x1x7x64xbf16> to vector<7x64xbf16>
    %528 = tpu.concatenate %515, %517, %519, %521, %523, %525, %527 in 0 : vector<7x64xbf16>, vector<7x64xbf16>, vector<7x64xbf16>, vector<7x64xbf16>, vector<7x64xbf16>, vector<7x64xbf16>, vector<7x64xbf16> -> vector<49x64xbf16>
    %c18 = arith.constant 18 : index
    %c0_912 = arith.constant 0 : index
    %c0_913 = arith.constant 0 : index
    %529 = vector.load %arg4[%c18, %c0_912, %c0_913] : memref<25x64x128xbf16, #tpu.memory_space<vmem>>, vector<1x64x128xbf16>
    %530 = vector.shape_cast %529 : vector<1x64x128xbf16> to vector<64x128xbf16>
    %cst_914 = arith.constant dense<0.000000e+00> : vector<49x128xf32>
    %531 = tpu.matmul %528, %530, %cst_914 {dimension_numbers = #tpu.dot_dimension_numbers<[1], [0], [0], [1], [0, 0, 1, 1], [], []>} : vector<49x64xbf16>, vector<64x128xbf16>, vector<49x128xf32> -> vector<49x128xf32>
    %532 = arith.addf %513, %531 : vector<49x128xf32>
    %c1_915 = arith.constant 1 : index
    %c0_916 = arith.constant 0 : index
    %c1_917 = arith.constant 1 : index
    %c2_918 = arith.constant 2 : index
    %c0_919 = arith.constant 0 : index
    %533 = vector.load %arg9[%c1_915, %c0_916, %c1_917, %c2_918, %c0_919] : memref<2x2x9x9x64xbf16, #tpu.memory_space<vmem>>, vector<1x1x1x7x64xbf16>
    %534 = vector.shape_cast %533 : vector<1x1x1x7x64xbf16> to vector<7x64xbf16>
    %c1_920 = arith.constant 1 : index
    %c0_921 = arith.constant 0 : index
    %c2_922 = arith.constant 2 : index
    %c2_923 = arith.constant 2 : index
    %c0_924 = arith.constant 0 : index
    %535 = vector.load %arg9[%c1_920, %c0_921, %c2_922, %c2_923, %c0_924] : memref<2x2x9x9x64xbf16, #tpu.memory_space<vmem>>, vector<1x1x1x7x64xbf16>
    %536 = vector.shape_cast %535 : vector<1x1x1x7x64xbf16> to vector<7x64xbf16>
    %c1_925 = arith.constant 1 : index
    %c0_926 = arith.constant 0 : index
    %c3_927 = arith.constant 3 : index
    %c2_928 = arith.constant 2 : index
    %c0_929 = arith.constant 0 : index
    %537 = vector.load %arg9[%c1_925, %c0_926, %c3_927, %c2_928, %c0_929] : memref<2x2x9x9x64xbf16, #tpu.memory_space<vmem>>, vector<1x1x1x7x64xbf16>
    %538 = vector.shape_cast %537 : vector<1x1x1x7x64xbf16> to vector<7x64xbf16>
    %c1_930 = arith.constant 1 : index
    %c0_931 = arith.constant 0 : index
    %c4_932 = arith.constant 4 : index
    %c2_933 = arith.constant 2 : index
    %c0_934 = arith.constant 0 : index
    %539 = vector.load %arg9[%c1_930, %c0_931, %c4_932, %c2_933, %c0_934] : memref<2x2x9x9x64xbf16, #tpu.memory_space<vmem>>, vector<1x1x1x7x64xbf16>
    %540 = vector.shape_cast %539 : vector<1x1x1x7x64xbf16> to vector<7x64xbf16>
    %c1_935 = arith.constant 1 : index
    %c0_936 = arith.constant 0 : index
    %c5_937 = arith.constant 5 : index
    %c2_938 = arith.constant 2 : index
    %c0_939 = arith.constant 0 : index
    %541 = vector.load %arg9[%c1_935, %c0_936, %c5_937, %c2_938, %c0_939] : memref<2x2x9x9x64xbf16, #tpu.memory_space<vmem>>, vector<1x1x1x7x64xbf16>
    %542 = vector.shape_cast %541 : vector<1x1x1x7x64xbf16> to vector<7x64xbf16>
    %c1_940 = arith.constant 1 : index
    %c0_941 = arith.constant 0 : index
    %c6_942 = arith.constant 6 : index
    %c2_943 = arith.constant 2 : index
    %c0_944 = arith.constant 0 : index
    %543 = vector.load %arg9[%c1_940, %c0_941, %c6_942, %c2_943, %c0_944] : memref<2x2x9x9x64xbf16, #tpu.memory_space<vmem>>, vector<1x1x1x7x64xbf16>
    %544 = vector.shape_cast %543 : vector<1x1x1x7x64xbf16> to vector<7x64xbf16>
    %c1_945 = arith.constant 1 : index
    %c0_946 = arith.constant 0 : index
    %c7_947 = arith.constant 7 : index
    %c2_948 = arith.constant 2 : index
    %c0_949 = arith.constant 0 : index
    %545 = vector.load %arg9[%c1_945, %c0_946, %c7_947, %c2_948, %c0_949] : memref<2x2x9x9x64xbf16, #tpu.memory_space<vmem>>, vector<1x1x1x7x64xbf16>
    %546 = vector.shape_cast %545 : vector<1x1x1x7x64xbf16> to vector<7x64xbf16>
    %547 = tpu.concatenate %534, %536, %538, %540, %542, %544, %546 in 0 : vector<7x64xbf16>, vector<7x64xbf16>, vector<7x64xbf16>, vector<7x64xbf16>, vector<7x64xbf16>, vector<7x64xbf16>, vector<7x64xbf16> -> vector<49x64xbf16>
    %c19 = arith.constant 19 : index
    %c0_950 = arith.constant 0 : index
    %c0_951 = arith.constant 0 : index
    %548 = vector.load %arg4[%c19, %c0_950, %c0_951] : memref<25x64x128xbf16, #tpu.memory_space<vmem>>, vector<1x64x128xbf16>
    %549 = vector.shape_cast %548 : vector<1x64x128xbf16> to vector<64x128xbf16>
    %cst_952 = arith.constant dense<0.000000e+00> : vector<49x128xf32>
    %550 = tpu.matmul %547, %549, %cst_952 {dimension_numbers = #tpu.dot_dimension_numbers<[1], [0], [0], [1], [0, 0, 1, 1], [], []>} : vector<49x64xbf16>, vector<64x128xbf16>, vector<49x128xf32> -> vector<49x128xf32>
    %551 = arith.addf %532, %550 : vector<49x128xf32>
    %c0_953 = arith.constant 0 : index
    %c0_954 = arith.constant 0 : index
    %c2_955 = arith.constant 2 : index
    %c0_956 = arith.constant 0 : index
    %c0_957 = arith.constant 0 : index
    %552 = vector.load %arg9[%c0_953, %c0_954, %c2_955, %c0_956, %c0_957] : memref<2x2x9x9x64xbf16, #tpu.memory_space<vmem>>, vector<1x1x1x7x64xbf16>
    %553 = vector.shape_cast %552 : vector<1x1x1x7x64xbf16> to vector<7x64xbf16>
    %c0_958 = arith.constant 0 : index
    %c0_959 = arith.constant 0 : index
    %c3_960 = arith.constant 3 : index
    %c0_961 = arith.constant 0 : index
    %c0_962 = arith.constant 0 : index
    %554 = vector.load %arg9[%c0_958, %c0_959, %c3_960, %c0_961, %c0_962] : memref<2x2x9x9x64xbf16, #tpu.memory_space<vmem>>, vector<1x1x1x7x64xbf16>
    %555 = vector.shape_cast %554 : vector<1x1x1x7x64xbf16> to vector<7x64xbf16>
    %c0_963 = arith.constant 0 : index
    %c0_964 = arith.constant 0 : index
    %c4_965 = arith.constant 4 : index
    %c0_966 = arith.constant 0 : index
    %c0_967 = arith.constant 0 : index
    %556 = vector.load %arg9[%c0_963, %c0_964, %c4_965, %c0_966, %c0_967] : memref<2x2x9x9x64xbf16, #tpu.memory_space<vmem>>, vector<1x1x1x7x64xbf16>
    %557 = vector.shape_cast %556 : vector<1x1x1x7x64xbf16> to vector<7x64xbf16>
    %c0_968 = arith.constant 0 : index
    %c0_969 = arith.constant 0 : index
    %c5_970 = arith.constant 5 : index
    %c0_971 = arith.constant 0 : index
    %c0_972 = arith.constant 0 : index
    %558 = vector.load %arg9[%c0_968, %c0_969, %c5_970, %c0_971, %c0_972] : memref<2x2x9x9x64xbf16, #tpu.memory_space<vmem>>, vector<1x1x1x7x64xbf16>
    %559 = vector.shape_cast %558 : vector<1x1x1x7x64xbf16> to vector<7x64xbf16>
    %c0_973 = arith.constant 0 : index
    %c0_974 = arith.constant 0 : index
    %c6_975 = arith.constant 6 : index
    %c0_976 = arith.constant 0 : index
    %c0_977 = arith.constant 0 : index
    %560 = vector.load %arg9[%c0_973, %c0_974, %c6_975, %c0_976, %c0_977] : memref<2x2x9x9x64xbf16, #tpu.memory_space<vmem>>, vector<1x1x1x7x64xbf16>
    %561 = vector.shape_cast %560 : vector<1x1x1x7x64xbf16> to vector<7x64xbf16>
    %c0_978 = arith.constant 0 : index
    %c0_979 = arith.constant 0 : index
    %c7_980 = arith.constant 7 : index
    %c0_981 = arith.constant 0 : index
    %c0_982 = arith.constant 0 : index
    %562 = vector.load %arg9[%c0_978, %c0_979, %c7_980, %c0_981, %c0_982] : memref<2x2x9x9x64xbf16, #tpu.memory_space<vmem>>, vector<1x1x1x7x64xbf16>
    %563 = vector.shape_cast %562 : vector<1x1x1x7x64xbf16> to vector<7x64xbf16>
    %c0_983 = arith.constant 0 : index
    %c0_984 = arith.constant 0 : index
    %c8_985 = arith.constant 8 : index
    %c0_986 = arith.constant 0 : index
    %c0_987 = arith.constant 0 : index
    %564 = vector.load %arg9[%c0_983, %c0_984, %c8_985, %c0_986, %c0_987] : memref<2x2x9x9x64xbf16, #tpu.memory_space<vmem>>, vector<1x1x1x7x64xbf16>
    %565 = vector.shape_cast %564 : vector<1x1x1x7x64xbf16> to vector<7x64xbf16>
    %566 = tpu.concatenate %553, %555, %557, %559, %561, %563, %565 in 0 : vector<7x64xbf16>, vector<7x64xbf16>, vector<7x64xbf16>, vector<7x64xbf16>, vector<7x64xbf16>, vector<7x64xbf16>, vector<7x64xbf16> -> vector<49x64xbf16>
    %c20 = arith.constant 20 : index
    %c0_988 = arith.constant 0 : index
    %c0_989 = arith.constant 0 : index
    %567 = vector.load %arg4[%c20, %c0_988, %c0_989] : memref<25x64x128xbf16, #tpu.memory_space<vmem>>, vector<1x64x128xbf16>
    %568 = vector.shape_cast %567 : vector<1x64x128xbf16> to vector<64x128xbf16>
    %cst_990 = arith.constant dense<0.000000e+00> : vector<49x128xf32>
    %569 = tpu.matmul %566, %568, %cst_990 {dimension_numbers = #tpu.dot_dimension_numbers<[1], [0], [0], [1], [0, 0, 1, 1], [], []>} : vector<49x64xbf16>, vector<64x128xbf16>, vector<49x128xf32> -> vector<49x128xf32>
    %570 = arith.addf %551, %569 : vector<49x128xf32>
    %c0_991 = arith.constant 0 : index
    %c1_992 = arith.constant 1 : index
    %c2_993 = arith.constant 2 : index
    %c0_994 = arith.constant 0 : index
    %c0_995 = arith.constant 0 : index
    %571 = vector.load %arg9[%c0_991, %c1_992, %c2_993, %c0_994, %c0_995] : memref<2x2x9x9x64xbf16, #tpu.memory_space<vmem>>, vector<1x1x1x7x64xbf16>
    %572 = vector.shape_cast %571 : vector<1x1x1x7x64xbf16> to vector<7x64xbf16>
    %c0_996 = arith.constant 0 : index
    %c1_997 = arith.constant 1 : index
    %c3_998 = arith.constant 3 : index
    %c0_999 = arith.constant 0 : index
    %c0_1000 = arith.constant 0 : index
    %573 = vector.load %arg9[%c0_996, %c1_997, %c3_998, %c0_999, %c0_1000] : memref<2x2x9x9x64xbf16, #tpu.memory_space<vmem>>, vector<1x1x1x7x64xbf16>
    %574 = vector.shape_cast %573 : vector<1x1x1x7x64xbf16> to vector<7x64xbf16>
    %c0_1001 = arith.constant 0 : index
    %c1_1002 = arith.constant 1 : index
    %c4_1003 = arith.constant 4 : index
    %c0_1004 = arith.constant 0 : index
    %c0_1005 = arith.constant 0 : index
    %575 = vector.load %arg9[%c0_1001, %c1_1002, %c4_1003, %c0_1004, %c0_1005] : memref<2x2x9x9x64xbf16, #tpu.memory_space<vmem>>, vector<1x1x1x7x64xbf16>
    %576 = vector.shape_cast %575 : vector<1x1x1x7x64xbf16> to vector<7x64xbf16>
    %c0_1006 = arith.constant 0 : index
    %c1_1007 = arith.constant 1 : index
    %c5_1008 = arith.constant 5 : index
    %c0_1009 = arith.constant 0 : index
    %c0_1010 = arith.constant 0 : index
    %577 = vector.load %arg9[%c0_1006, %c1_1007, %c5_1008, %c0_1009, %c0_1010] : memref<2x2x9x9x64xbf16, #tpu.memory_space<vmem>>, vector<1x1x1x7x64xbf16>
    %578 = vector.shape_cast %577 : vector<1x1x1x7x64xbf16> to vector<7x64xbf16>
    %c0_1011 = arith.constant 0 : index
    %c1_1012 = arith.constant 1 : index
    %c6_1013 = arith.constant 6 : index
    %c0_1014 = arith.constant 0 : index
    %c0_1015 = arith.constant 0 : index
    %579 = vector.load %arg9[%c0_1011, %c1_1012, %c6_1013, %c0_1014, %c0_1015] : memref<2x2x9x9x64xbf16, #tpu.memory_space<vmem>>, vector<1x1x1x7x64xbf16>
    %580 = vector.shape_cast %579 : vector<1x1x1x7x64xbf16> to vector<7x64xbf16>
    %c0_1016 = arith.constant 0 : index
    %c1_1017 = arith.constant 1 : index
    %c7_1018 = arith.constant 7 : index
    %c0_1019 = arith.constant 0 : index
    %c0_1020 = arith.constant 0 : index
    %581 = vector.load %arg9[%c0_1016, %c1_1017, %c7_1018, %c0_1019, %c0_1020] : memref<2x2x9x9x64xbf16, #tpu.memory_space<vmem>>, vector<1x1x1x7x64xbf16>
    %582 = vector.shape_cast %581 : vector<1x1x1x7x64xbf16> to vector<7x64xbf16>
    %c0_1021 = arith.constant 0 : index
    %c1_1022 = arith.constant 1 : index
    %c8_1023 = arith.constant 8 : index
    %c0_1024 = arith.constant 0 : index
    %c0_1025 = arith.constant 0 : index
    %583 = vector.load %arg9[%c0_1021, %c1_1022, %c8_1023, %c0_1024, %c0_1025] : memref<2x2x9x9x64xbf16, #tpu.memory_space<vmem>>, vector<1x1x1x7x64xbf16>
    %584 = vector.shape_cast %583 : vector<1x1x1x7x64xbf16> to vector<7x64xbf16>
    %585 = tpu.concatenate %572, %574, %576, %578, %580, %582, %584 in 0 : vector<7x64xbf16>, vector<7x64xbf16>, vector<7x64xbf16>, vector<7x64xbf16>, vector<7x64xbf16>, vector<7x64xbf16>, vector<7x64xbf16> -> vector<49x64xbf16>
    %c21 = arith.constant 21 : index
    %c0_1026 = arith.constant 0 : index
    %c0_1027 = arith.constant 0 : index
    %586 = vector.load %arg4[%c21, %c0_1026, %c0_1027] : memref<25x64x128xbf16, #tpu.memory_space<vmem>>, vector<1x64x128xbf16>
    %587 = vector.shape_cast %586 : vector<1x64x128xbf16> to vector<64x128xbf16>
    %cst_1028 = arith.constant dense<0.000000e+00> : vector<49x128xf32>
    %588 = tpu.matmul %585, %587, %cst_1028 {dimension_numbers = #tpu.dot_dimension_numbers<[1], [0], [0], [1], [0, 0, 1, 1], [], []>} : vector<49x64xbf16>, vector<64x128xbf16>, vector<49x128xf32> -> vector<49x128xf32>
    %589 = arith.addf %570, %588 : vector<49x128xf32>
    %c0_1029 = arith.constant 0 : index
    %c0_1030 = arith.constant 0 : index
    %c2_1031 = arith.constant 2 : index
    %c1_1032 = arith.constant 1 : index
    %c0_1033 = arith.constant 0 : index
    %590 = vector.load %arg9[%c0_1029, %c0_1030, %c2_1031, %c1_1032, %c0_1033] : memref<2x2x9x9x64xbf16, #tpu.memory_space<vmem>>, vector<1x1x1x7x64xbf16>
    %591 = vector.shape_cast %590 : vector<1x1x1x7x64xbf16> to vector<7x64xbf16>
    %c0_1034 = arith.constant 0 : index
    %c0_1035 = arith.constant 0 : index
    %c3_1036 = arith.constant 3 : index
    %c1_1037 = arith.constant 1 : index
    %c0_1038 = arith.constant 0 : index
    %592 = vector.load %arg9[%c0_1034, %c0_1035, %c3_1036, %c1_1037, %c0_1038] : memref<2x2x9x9x64xbf16, #tpu.memory_space<vmem>>, vector<1x1x1x7x64xbf16>
    %593 = vector.shape_cast %592 : vector<1x1x1x7x64xbf16> to vector<7x64xbf16>
    %c0_1039 = arith.constant 0 : index
    %c0_1040 = arith.constant 0 : index
    %c4_1041 = arith.constant 4 : index
    %c1_1042 = arith.constant 1 : index
    %c0_1043 = arith.constant 0 : index
    %594 = vector.load %arg9[%c0_1039, %c0_1040, %c4_1041, %c1_1042, %c0_1043] : memref<2x2x9x9x64xbf16, #tpu.memory_space<vmem>>, vector<1x1x1x7x64xbf16>
    %595 = vector.shape_cast %594 : vector<1x1x1x7x64xbf16> to vector<7x64xbf16>
    %c0_1044 = arith.constant 0 : index
    %c0_1045 = arith.constant 0 : index
    %c5_1046 = arith.constant 5 : index
    %c1_1047 = arith.constant 1 : index
    %c0_1048 = arith.constant 0 : index
    %596 = vector.load %arg9[%c0_1044, %c0_1045, %c5_1046, %c1_1047, %c0_1048] : memref<2x2x9x9x64xbf16, #tpu.memory_space<vmem>>, vector<1x1x1x7x64xbf16>
    %597 = vector.shape_cast %596 : vector<1x1x1x7x64xbf16> to vector<7x64xbf16>
    %c0_1049 = arith.constant 0 : index
    %c0_1050 = arith.constant 0 : index
    %c6_1051 = arith.constant 6 : index
    %c1_1052 = arith.constant 1 : index
    %c0_1053 = arith.constant 0 : index
    %598 = vector.load %arg9[%c0_1049, %c0_1050, %c6_1051, %c1_1052, %c0_1053] : memref<2x2x9x9x64xbf16, #tpu.memory_space<vmem>>, vector<1x1x1x7x64xbf16>
    %599 = vector.shape_cast %598 : vector<1x1x1x7x64xbf16> to vector<7x64xbf16>
    %c0_1054 = arith.constant 0 : index
    %c0_1055 = arith.constant 0 : index
    %c7_1056 = arith.constant 7 : index
    %c1_1057 = arith.constant 1 : index
    %c0_1058 = arith.constant 0 : index
    %600 = vector.load %arg9[%c0_1054, %c0_1055, %c7_1056, %c1_1057, %c0_1058] : memref<2x2x9x9x64xbf16, #tpu.memory_space<vmem>>, vector<1x1x1x7x64xbf16>
    %601 = vector.shape_cast %600 : vector<1x1x1x7x64xbf16> to vector<7x64xbf16>
    %c0_1059 = arith.constant 0 : index
    %c0_1060 = arith.constant 0 : index
    %c8_1061 = arith.constant 8 : index
    %c1_1062 = arith.constant 1 : index
    %c0_1063 = arith.constant 0 : index
    %602 = vector.load %arg9[%c0_1059, %c0_1060, %c8_1061, %c1_1062, %c0_1063] : memref<2x2x9x9x64xbf16, #tpu.memory_space<vmem>>, vector<1x1x1x7x64xbf16>
    %603 = vector.shape_cast %602 : vector<1x1x1x7x64xbf16> to vector<7x64xbf16>
    %604 = tpu.concatenate %591, %593, %595, %597, %599, %601, %603 in 0 : vector<7x64xbf16>, vector<7x64xbf16>, vector<7x64xbf16>, vector<7x64xbf16>, vector<7x64xbf16>, vector<7x64xbf16>, vector<7x64xbf16> -> vector<49x64xbf16>
    %c22 = arith.constant 22 : index
    %c0_1064 = arith.constant 0 : index
    %c0_1065 = arith.constant 0 : index
    %605 = vector.load %arg4[%c22, %c0_1064, %c0_1065] : memref<25x64x128xbf16, #tpu.memory_space<vmem>>, vector<1x64x128xbf16>
    %606 = vector.shape_cast %605 : vector<1x64x128xbf16> to vector<64x128xbf16>
    %cst_1066 = arith.constant dense<0.000000e+00> : vector<49x128xf32>
    %607 = tpu.matmul %604, %606, %cst_1066 {dimension_numbers = #tpu.dot_dimension_numbers<[1], [0], [0], [1], [0, 0, 1, 1], [], []>} : vector<49x64xbf16>, vector<64x128xbf16>, vector<49x128xf32> -> vector<49x128xf32>
    %608 = arith.addf %589, %607 : vector<49x128xf32>
    %c0_1067 = arith.constant 0 : index
    %c1_1068 = arith.constant 1 : index
    %c2_1069 = arith.constant 2 : index
    %c1_1070 = arith.constant 1 : index
    %c0_1071 = arith.constant 0 : index
    %609 = vector.load %arg9[%c0_1067, %c1_1068, %c2_1069, %c1_1070, %c0_1071] : memref<2x2x9x9x64xbf16, #tpu.memory_space<vmem>>, vector<1x1x1x7x64xbf16>
    %610 = vector.shape_cast %609 : vector<1x1x1x7x64xbf16> to vector<7x64xbf16>
    %c0_1072 = arith.constant 0 : index
    %c1_1073 = arith.constant 1 : index
    %c3_1074 = arith.constant 3 : index
    %c1_1075 = arith.constant 1 : index
    %c0_1076 = arith.constant 0 : index
    %611 = vector.load %arg9[%c0_1072, %c1_1073, %c3_1074, %c1_1075, %c0_1076] : memref<2x2x9x9x64xbf16, #tpu.memory_space<vmem>>, vector<1x1x1x7x64xbf16>
    %612 = vector.shape_cast %611 : vector<1x1x1x7x64xbf16> to vector<7x64xbf16>
    %c0_1077 = arith.constant 0 : index
    %c1_1078 = arith.constant 1 : index
    %c4_1079 = arith.constant 4 : index
    %c1_1080 = arith.constant 1 : index
    %c0_1081 = arith.constant 0 : index
    %613 = vector.load %arg9[%c0_1077, %c1_1078, %c4_1079, %c1_1080, %c0_1081] : memref<2x2x9x9x64xbf16, #tpu.memory_space<vmem>>, vector<1x1x1x7x64xbf16>
    %614 = vector.shape_cast %613 : vector<1x1x1x7x64xbf16> to vector<7x64xbf16>
    %c0_1082 = arith.constant 0 : index
    %c1_1083 = arith.constant 1 : index
    %c5_1084 = arith.constant 5 : index
    %c1_1085 = arith.constant 1 : index
    %c0_1086 = arith.constant 0 : index
    %615 = vector.load %arg9[%c0_1082, %c1_1083, %c5_1084, %c1_1085, %c0_1086] : memref<2x2x9x9x64xbf16, #tpu.memory_space<vmem>>, vector<1x1x1x7x64xbf16>
    %616 = vector.shape_cast %615 : vector<1x1x1x7x64xbf16> to vector<7x64xbf16>
    %c0_1087 = arith.constant 0 : index
    %c1_1088 = arith.constant 1 : index
    %c6_1089 = arith.constant 6 : index
    %c1_1090 = arith.constant 1 : index
    %c0_1091 = arith.constant 0 : index
    %617 = vector.load %arg9[%c0_1087, %c1_1088, %c6_1089, %c1_1090, %c0_1091] : memref<2x2x9x9x64xbf16, #tpu.memory_space<vmem>>, vector<1x1x1x7x64xbf16>
    %618 = vector.shape_cast %617 : vector<1x1x1x7x64xbf16> to vector<7x64xbf16>
    %c0_1092 = arith.constant 0 : index
    %c1_1093 = arith.constant 1 : index
    %c7_1094 = arith.constant 7 : index
    %c1_1095 = arith.constant 1 : index
    %c0_1096 = arith.constant 0 : index
    %619 = vector.load %arg9[%c0_1092, %c1_1093, %c7_1094, %c1_1095, %c0_1096] : memref<2x2x9x9x64xbf16, #tpu.memory_space<vmem>>, vector<1x1x1x7x64xbf16>
    %620 = vector.shape_cast %619 : vector<1x1x1x7x64xbf16> to vector<7x64xbf16>
    %c0_1097 = arith.constant 0 : index
    %c1_1098 = arith.constant 1 : index
    %c8_1099 = arith.constant 8 : index
    %c1_1100 = arith.constant 1 : index
    %c0_1101 = arith.constant 0 : index
    %621 = vector.load %arg9[%c0_1097, %c1_1098, %c8_1099, %c1_1100, %c0_1101] : memref<2x2x9x9x64xbf16, #tpu.memory_space<vmem>>, vector<1x1x1x7x64xbf16>
    %622 = vector.shape_cast %621 : vector<1x1x1x7x64xbf16> to vector<7x64xbf16>
    %623 = tpu.concatenate %610, %612, %614, %616, %618, %620, %622 in 0 : vector<7x64xbf16>, vector<7x64xbf16>, vector<7x64xbf16>, vector<7x64xbf16>, vector<7x64xbf16>, vector<7x64xbf16>, vector<7x64xbf16> -> vector<49x64xbf16>
    %c23 = arith.constant 23 : index
    %c0_1102 = arith.constant 0 : index
    %c0_1103 = arith.constant 0 : index
    %624 = vector.load %arg4[%c23, %c0_1102, %c0_1103] : memref<25x64x128xbf16, #tpu.memory_space<vmem>>, vector<1x64x128xbf16>
    %625 = vector.shape_cast %624 : vector<1x64x128xbf16> to vector<64x128xbf16>
    %cst_1104 = arith.constant dense<0.000000e+00> : vector<49x128xf32>
    %626 = tpu.matmul %623, %625, %cst_1104 {dimension_numbers = #tpu.dot_dimension_numbers<[1], [0], [0], [1], [0, 0, 1, 1], [], []>} : vector<49x64xbf16>, vector<64x128xbf16>, vector<49x128xf32> -> vector<49x128xf32>
    %627 = arith.addf %608, %626 : vector<49x128xf32>
    %c0_1105 = arith.constant 0 : index
    %c0_1106 = arith.constant 0 : index
    %c2_1107 = arith.constant 2 : index
    %c2_1108 = arith.constant 2 : index
    %c0_1109 = arith.constant 0 : index
    %628 = vector.load %arg9[%c0_1105, %c0_1106, %c2_1107, %c2_1108, %c0_1109] : memref<2x2x9x9x64xbf16, #tpu.memory_space<vmem>>, vector<1x1x1x7x64xbf16>
    %629 = vector.shape_cast %628 : vector<1x1x1x7x64xbf16> to vector<7x64xbf16>
    %c0_1110 = arith.constant 0 : index
    %c0_1111 = arith.constant 0 : index
    %c3_1112 = arith.constant 3 : index
    %c2_1113 = arith.constant 2 : index
    %c0_1114 = arith.constant 0 : index
    %630 = vector.load %arg9[%c0_1110, %c0_1111, %c3_1112, %c2_1113, %c0_1114] : memref<2x2x9x9x64xbf16, #tpu.memory_space<vmem>>, vector<1x1x1x7x64xbf16>
    %631 = vector.shape_cast %630 : vector<1x1x1x7x64xbf16> to vector<7x64xbf16>
    %c0_1115 = arith.constant 0 : index
    %c0_1116 = arith.constant 0 : index
    %c4_1117 = arith.constant 4 : index
    %c2_1118 = arith.constant 2 : index
    %c0_1119 = arith.constant 0 : index
    %632 = vector.load %arg9[%c0_1115, %c0_1116, %c4_1117, %c2_1118, %c0_1119] : memref<2x2x9x9x64xbf16, #tpu.memory_space<vmem>>, vector<1x1x1x7x64xbf16>
    %633 = vector.shape_cast %632 : vector<1x1x1x7x64xbf16> to vector<7x64xbf16>
    %c0_1120 = arith.constant 0 : index
    %c0_1121 = arith.constant 0 : index
    %c5_1122 = arith.constant 5 : index
    %c2_1123 = arith.constant 2 : index
    %c0_1124 = arith.constant 0 : index
    %634 = vector.load %arg9[%c0_1120, %c0_1121, %c5_1122, %c2_1123, %c0_1124] : memref<2x2x9x9x64xbf16, #tpu.memory_space<vmem>>, vector<1x1x1x7x64xbf16>
    %635 = vector.shape_cast %634 : vector<1x1x1x7x64xbf16> to vector<7x64xbf16>
    %c0_1125 = arith.constant 0 : index
    %c0_1126 = arith.constant 0 : index
    %c6_1127 = arith.constant 6 : index
    %c2_1128 = arith.constant 2 : index
    %c0_1129 = arith.constant 0 : index
    %636 = vector.load %arg9[%c0_1125, %c0_1126, %c6_1127, %c2_1128, %c0_1129] : memref<2x2x9x9x64xbf16, #tpu.memory_space<vmem>>, vector<1x1x1x7x64xbf16>
    %637 = vector.shape_cast %636 : vector<1x1x1x7x64xbf16> to vector<7x64xbf16>
    %c0_1130 = arith.constant 0 : index
    %c0_1131 = arith.constant 0 : index
    %c7_1132 = arith.constant 7 : index
    %c2_1133 = arith.constant 2 : index
    %c0_1134 = arith.constant 0 : index
    %638 = vector.load %arg9[%c0_1130, %c0_1131, %c7_1132, %c2_1133, %c0_1134] : memref<2x2x9x9x64xbf16, #tpu.memory_space<vmem>>, vector<1x1x1x7x64xbf16>
    %639 = vector.shape_cast %638 : vector<1x1x1x7x64xbf16> to vector<7x64xbf16>
    %c0_1135 = arith.constant 0 : index
    %c0_1136 = arith.constant 0 : index
    %c8_1137 = arith.constant 8 : index
    %c2_1138 = arith.constant 2 : index
    %c0_1139 = arith.constant 0 : index
    %640 = vector.load %arg9[%c0_1135, %c0_1136, %c8_1137, %c2_1138, %c0_1139] : memref<2x2x9x9x64xbf16, #tpu.memory_space<vmem>>, vector<1x1x1x7x64xbf16>
    %641 = vector.shape_cast %640 : vector<1x1x1x7x64xbf16> to vector<7x64xbf16>
    %642 = tpu.concatenate %629, %631, %633, %635, %637, %639, %641 in 0 : vector<7x64xbf16>, vector<7x64xbf16>, vector<7x64xbf16>, vector<7x64xbf16>, vector<7x64xbf16>, vector<7x64xbf16>, vector<7x64xbf16> -> vector<49x64xbf16>
    %c24 = arith.constant 24 : index
    %c0_1140 = arith.constant 0 : index
    %c0_1141 = arith.constant 0 : index
    %643 = vector.load %arg4[%c24, %c0_1140, %c0_1141] : memref<25x64x128xbf16, #tpu.memory_space<vmem>>, vector<1x64x128xbf16>
    %644 = vector.shape_cast %643 : vector<1x64x128xbf16> to vector<64x128xbf16>
    %cst_1142 = arith.constant dense<0.000000e+00> : vector<49x128xf32>
    %645 = tpu.matmul %642, %644, %cst_1142 {dimension_numbers = #tpu.dot_dimension_numbers<[1], [0], [0], [1], [0, 0, 1, 1], [], []>} : vector<49x64xbf16>, vector<64x128xbf16>, vector<49x128xf32> -> vector<49x128xf32>
    %646 = arith.addf %627, %645 : vector<49x128xf32>
    %c0_1143 = arith.constant 0 : index
    %c0_1144 = arith.constant 0 : index
    %647 = vector.load %arg5[%c0_1143, %c0_1144] : memref<1x128xf32, #tpu.memory_space<vmem>>, vector<1x128xf32>
    %648 = vector.broadcast %647 : vector<1x128xf32> to vector<49x128xf32>
    %649 = arith.addf %646, %648 : vector<49x128xf32>
    %cst_1145 = arith.constant 0.000000e+00 : f32
    %650 = vector.broadcast %cst_1145 : f32 to vector<49x128xf32>
    %651 = arith.cmpf ogt, %649, %650 : vector<49x128xf32>
    %cst_1146 = arith.constant 2.000000e-01 : f32
    %652 = vector.broadcast %cst_1146 : f32 to vector<49x128xf32>
    %653 = arith.mulf %652, %649 : vector<49x128xf32>
    %654 = arith.select %651, %649, %653 : vector<49x128xi1>, vector<49x128xf32>
    %c0_1147 = arith.constant 0 : index
    %c0_1148 = arith.constant 0 : index
    %655 = vector.load %arg6[%c0_1147, %c0_1148] : memref<49x128xf32, #tpu.memory_space<vmem>>, vector<49x128xf32>
    %656 = arith.mulf %654, %655 : vector<49x128xf32>
    %cst_1149 = arith.constant dense<0.000000e+00> : vector<49xf32>
    %657 = vector.multi_reduction <add>, %656, %cst_1149 [1] : vector<49x128xf32> to vector<49xf32>
    %658 = vector.shape_cast %657 : vector<49xf32> to vector<49x1xf32>
    %cst_1150 = arith.constant dense<0.000000e+00> : vector<1xf32>
    %659 = vector.multi_reduction <add>, %658, %cst_1150 [0] : vector<49x1xf32> to vector<1xf32>
    %660 = vector.shape_cast %659 : vector<1xf32> to vector<1x1xf32>
    %c0_1151 = arith.constant 0 : index
    %c0_1152 = arith.constant 0 : index
    %661 = vector.load %arg7[%c0_1151, %c0_1152] : memref<1x1xf32, #tpu.memory_space<vmem>>, vector<1x1xf32>
    %662 = arith.addf %660, %661 : vector<1x1xf32>
    %cst_1153 = arith.constant 0.000000e+00 : f32
    %663 = vector.broadcast %cst_1153 : f32 to vector<1x1xf32>
    %664 = arith.subf %663, %662 : vector<1x1xf32>
    %665 = math.exp %664 : vector<1x1xf32>
    %cst_1154 = arith.constant 1.000000e+00 : f32
    %666 = vector.broadcast %cst_1154 : f32 to vector<1x1xf32>
    %667 = arith.addf %666, %665 : vector<1x1xf32>
    %668 = tpu.reciprocal %667 {approx = true} : vector<1x1xf32> -> vector<1x1xf32>
    %c0_1155 = arith.constant 0 : index
    %c0_1156 = arith.constant 0 : index
    %c0_1157 = arith.constant 0 : index
    %669 = vector.load %arg8[%c0_1155, %c0_1156, %c0_1157] : memref<1x1x1xf32, #tpu.memory_space<vmem>>, vector<1x1x1xf32>
    %670 = vector.shape_cast %669 : vector<1x1x1xf32> to vector<1x1xf32>
    %671 = vector.shape_cast %668 : vector<1x1xf32> to vector<1x1x1xf32>
    tpu.vector_store %arg8[%c0_1155, %c0_1156, %c0_1157], %671 {strides = array<i32>} : memref<1x1x1xf32, #tpu.memory_space<vmem>>, vector<1x1x1xf32>,
    return
  }
  func.func @transform_0(%arg0: i32) -> (i32, i32, i32, i32) {
    %c0_i32 = arith.constant 0 : i32
    %c0_i32_0 = arith.constant 0 : i32
    %c0_i32_1 = arith.constant 0 : i32
    %c0_i32_2 = arith.constant 0 : i32
    return %arg0, %c0_i32, %c0_i32_0, %c0_i32_1 : i32, i32, i32, i32
  }
  func.func @transform_1(%arg0: i32) -> (i32, i32) {
    %c0_i32 = arith.constant 0 : i32
    %c0_i32_0 = arith.constant 0 : i32
    %c0_i32_1 = arith.constant 0 : i32
    return %c0_i32, %c0_i32_0 : i32, i32
  }
  func.func @transform_2(%arg0: i32) -> (i32, i32) {
    %c0_i32 = arith.constant 0 : i32
    %c0_i32_0 = arith.constant 0 : i32
    %c0_i32_1 = arith.constant 0 : i32
    return %c0_i32, %c0_i32_0 : i32, i32
  }
  func.func @transform_3(%arg0: i32) -> (i32, i32, i32) {
    %c0_i32 = arith.constant 0 : i32
    %c0_i32_0 = arith.constant 0 : i32
    %c0_i32_1 = arith.constant 0 : i32
    %c0_i32_2 = arith.constant 0 : i32
    return %c0_i32, %c0_i32_0, %c0_i32_1 : i32, i32, i32
  }
  func.func @transform_4(%arg0: i32) -> (i32, i32) {
    %c0_i32 = arith.constant 0 : i32
    %c0_i32_0 = arith.constant 0 : i32
    %c0_i32_1 = arith.constant 0 : i32
    return %c0_i32, %c0_i32_0 : i32, i32
  }
  func.func @transform_5(%arg0: i32) -> (i32, i32) {
    %c0_i32 = arith.constant 0 : i32
    %c0_i32_0 = arith.constant 0 : i32
    %c0_i32_1 = arith.constant 0 : i32
    return %c0_i32, %c0_i32_0 : i32, i32
  }
  func.func @transform_6(%arg0: i32) -> (i32, i32) {
    %c0_i32 = arith.constant 0 : i32
    %c0_i32_0 = arith.constant 0 : i32
    %c0_i32_1 = arith.constant 0 : i32
    return %c0_i32, %c0_i32_0 : i32, i32
  }
  func.func @transform_7(%arg0: i32) -> (i32, i32, i32) {
    %c0_i32 = arith.constant 0 : i32
    %c0_i32_0 = arith.constant 0 : i32
    %c0_i32_1 = arith.constant 0 : i32
    return %arg0, %c0_i32, %c0_i32_0 : i32, i32, i32
  }
}

</mosaic_0001>

<llo_original>
// kernel: discriminator_forward.1
$region0: #{discriminator_forward.1}
  #allocation0 [shape = 'u32[]', space=smem, size = 0x4, offset = 0x4, fixed_abs, tag = 'smem constant byte address 0x4 - core index']
  #allocation1 [shape = 'u32[144,128]{1,0:T(1,128)}', space=vmem, size = 0x12000, scoped, tag = 'internal scratch']
  #allocation2 [shape = 'bf16[2,2,9,9,64]{4,3,2,1,0:T(8,128)(2,1)}', space=vmem, size = 0x24000, scoped, tag = 'scratch operand']
  #allocation3 [shape = 'f32[1,1]{1,0:T(1,128)S(1)}', space=vmem, size = 0x200, scoped, tag = 'scoped memory for discriminator_forward.1']
  %s0 = inlined_call_operand.vmem [shape: bf16[2,4,49,25], index: 0, kind: input, shape index: {}]
  %s1 = inlined_call_operand.vmem [shape: bf16[25,64], index: 1, kind: input, shape index: {}]
  %s2 = inlined_call_operand.vmem [shape: f32[1,64], index: 2, kind: input, shape index: {}]
  %s3 = inlined_call_operand.vmem [shape: bf16[25,64,128], index: 3, kind: input, shape index: {}]
  %s4 = inlined_call_operand.vmem [shape: f32[1,128], index: 4, kind: input, shape index: {}]
  %s5 = inlined_call_operand.vmem [shape: f32[49,128], index: 5, kind: input, shape index: {}]
  %s6 = inlined_call_operand.<no memory space> [shape: f32[1,1], index: 6, kind: input, shape index: {}]
  %s7 = inlined_call_operand.vmem [shape: f32[2,1,1], index: 7, kind: output, shape index: {}]
  %s8 = sld [smem:[#allocation0]]
  $region61: #{discriminator_forward.1} parent=0
    _
  %s10 = ssub.s32 1, %s8
  %s11 = scalar_select 0, %s10, %s8
  %v12 = vstv %s6
  %13 = vst [vmem:[#allocation3] sm:$0x1] %v12
  loop: start=0, step=1, limit=4
  $region2: #{discriminator_forward.1} parent=0 // loop_pre_header
    _
  $region3: #{discriminator_forward.1} parent=0 // loop_header
    %s15 = sphi 0, %s19
    %p16 = scmp.ge.s32.totalorder %s15, 4
    %s25 = sphi 0, %s27
    %s28 = sphi 0, %s25
    %s29 = sphi 0, %s28
    %s45 = sphi 0, %s29
    %s49 = sphi 0, %s49
    %s51 = sphi 0, %s49
    %s52 = sphi 0, %s51
    %s66 = sphi 0, %s52
    %s70 = sphi 0, %s70
    %s72 = sphi 0, %s70
    %s73 = sphi 0, %s72
    %s87 = sphi 0, %s73
    %s91 = sphi 0, %s91
    %s93 = sphi 0, %s91
    %s94 = sphi 0, %s93
    %s108 = sphi 0, %s94
    %s112 = sphi 0, %s112
    %s114 = sphi 0, %s112
    %s115 = sphi 0, %s114
    %s129 = sphi 0, %s115
    %s133 = sphi 0, %s133
    %s135 = sphi 0, %s133
    %s136 = sphi 0, %s135
    %s150 = sphi 0, %s136
    %s154 = sphi 0, %s154
    %s156 = sphi 0, %s154
    %s157 = sphi 0, %s156
    %s171 = sphi 0, %s157
    %s177 = sphi 0, %s179
    %s180 = sphi 0, %s177
    %s181 = sphi 0, %s180
    %s197 = sphi 0, %s181
  $region4: #{discriminator_forward.1} parent=0 // loop_header_branch
    %18 = sbr.rel (%p16) target = $region8
  $region5: #{discriminator_forward.1} parent=0 // loop_body
    %s20 = ssub.s32 %s15, 1
    %s21 = ssub.s32 %s15, 2
    %s22 = sadd.s32 %s15, 1
    %s23 = ssub.s32 %s15, %s22
    %p24 = scmp.eq.s32.totalorder %s23, 0
    %s26 = sadd.s32 %s25, 1
    %s27 = scalar_select %p24, %s25, %s26
    %p30 = pneg %p24
    %p31 = scmp.eq.s32.totalorder %s15, 1
    %p32 = por %p30, %p31
    %p33 = scmp.ne.s32.totalorder %s25, %s28
    %p34 = scmp.eq.s32.totalorder %s15, 0
    %p35 = por %p33, %p34
    %p36 = scmp.ne.s32.totalorder %s25, %s28
    %p37 = scmp.eq.s32.totalorder %s20, 1
    %p38 = por %p36, %p37
    %p39 = scmp.ne.s32.totalorder %s28, %s29
    %p40 = scmp.eq.s32.totalorder %s20, 0
    %p41 = por %p39, %p40
    %p42 = scmp.ne.s32.totalorder %s28, %s29
    %p43 = scmp.eq.s32.totalorder %s21, 1
    %p44 = por %p42, %p43
    %p46 = scmp.ne.s32.totalorder %s29, %s45
    %p47 = scmp.eq.s32.totalorder %s21, 0
    %p48 = por %p46, %p47
    %s50 = sadd.s32 %s49, 1
    %p53 = scmp.eq.s32.totalorder %s15, 1
    %p54 = scmp.ne.s32.totalorder %s49, %s51
    %p55 = scmp.eq.s32.totalorder %s15, 0
    %p56 = por %p54, %p55
    %p57 = scmp.ne.s32.totalorder %s49, %s51
    %p58 = scmp.eq.s32.totalorder %s20, 1
    %p59 = por %p57, %p58
    %p60 = scmp.ne.s32.totalorder %s51, %s52
    %p61 = scmp.eq.s32.totalorder %s20, 0
    %p62 = por %p60, %p61
    %p63 = scmp.ne.s32.totalorder %s51, %s52
    %p64 = scmp.eq.s32.totalorder %s21, 1
    %p65 = por %p63, %p64
    %p67 = scmp.ne.s32.totalorder %s52, %s66
    %p68 = scmp.eq.s32.totalorder %s21, 0
    %p69 = por %p67, %p68
    %s71 = sadd.s32 %s70, 1
    %p74 = scmp.eq.s32.totalorder %s15, 1
    %p75 = scmp.ne.s32.totalorder %s70, %s72
    %p76 = scmp.eq.s32.totalorder %s15, 0
    %p77 = por %p75, %p76
    %p78 = scmp.ne.s32.totalorder %s70, %s72
    %p79 = scmp.eq.s32.totalorder %s20, 1
    %p80 = por %p78, %p79
    %p81 = scmp.ne.s32.totalorder %s72, %s73
    %p82 = scmp.eq.s32.totalorder %s20, 0
    %p83 = por %p81, %p82
    %p84 = scmp.ne.s32.totalorder %s72, %s73
    %p85 = scmp.eq.s32.totalorder %s21, 1
    %p86 = por %p84, %p85
    %p88 = scmp.ne.s32.totalorder %s73, %s87
    %p89 = scmp.eq.s32.totalorder %s21, 0
    %p90 = por %p88, %p89
    %s92 = sadd.s32 %s91, 1
    %p95 = scmp.eq.s32.totalorder %s15, 1
    %p96 = scmp.ne.s32.totalorder %s91, %s93
    %p97 = scmp.eq.s32.totalorder %s15, 0
    %p98 = por %p96, %p97
    %p99 = scmp.ne.s32.totalorder %s91, %s93
    %p100 = scmp.eq.s32.totalorder %s20, 1
    %p101 = por %p99, %p100
    %p102 = scmp.ne.s32.totalorder %s93, %s94
    %p103 = scmp.eq.s32.totalorder %s20, 0
    %p104 = por %p102, %p103
    %p105 = scmp.ne.s32.totalorder %s93, %s94
    %p106 = scmp.eq.s32.totalorder %s21, 1
    %p107 = por %p105, %p106
    %p109 = scmp.ne.s32.totalorder %s94, %s108
    %p110 = scmp.eq.s32.totalorder %s21, 0
    %p111 = por %p109, %p110
    %s113 = sadd.s32 %s112, 1
    %p116 = scmp.eq.s32.totalorder %s15, 1
    %p117 = scmp.ne.s32.totalorder %s112, %s114
    %p118 = scmp.eq.s32.totalorder %s15, 0
    %p119 = por %p117, %p118
    %p120 = scmp.ne.s32.totalorder %s112, %s114
    %p121 = scmp.eq.s32.totalorder %s20, 1
    %p122 = por %p120, %p121
    %p123 = scmp.ne.s32.totalorder %s114, %s115
    %p124 = scmp.eq.s32.totalorder %s20, 0
    %p125 = por %p123, %p124
    %p126 = scmp.ne.s32.totalorder %s114, %s115
    %p127 = scmp.eq.s32.totalorder %s21, 1
    %p128 = por %p126, %p127
    %p130 = scmp.ne.s32.totalorder %s115, %s129
    %p131 = scmp.eq.s32.totalorder %s21, 0
    %p132 = por %p130, %p131
    %s134 = sadd.s32 %s133, 1
    %p137 = scmp.eq.s32.totalorder %s15, 1
    %p138 = scmp.ne.s32.totalorder %s133, %s135
    %p139 = scmp.eq.s32.totalorder %s15, 0
    %p140 = por %p138, %p139
    %p141 = scmp.ne.s32.totalorder %s133, %s135
    %p142 = scmp.eq.s32.totalorder %s20, 1
    %p143 = por %p141, %p142
    %p144 = scmp.ne.s32.totalorder %s135, %s136
    %p145 = scmp.eq.s32.totalorder %s20, 0
    %p146 = por %p144, %p145
    %p147 = scmp.ne.s32.totalorder %s135, %s136
    %p148 = scmp.eq.s32.totalorder %s21, 1
    %p149 = por %p147, %p148
    %p151 = scmp.ne.s32.totalorder %s136, %s150
    %p152 = scmp.eq.s32.totalorder %s21, 0
    %p153 = por %p151, %p152
    %s155 = sadd.s32 %s154, 1
    %p158 = scmp.eq.s32.totalorder %s15, 1
    %p159 = scmp.ne.s32.totalorder %s154, %s156
    %p160 = scmp.eq.s32.totalorder %s15, 0
    %p161 = por %p159, %p160
    %p162 = scmp.ne.s32.totalorder %s154, %s156
    %p163 = scmp.eq.s32.totalorder %s20, 1
    %p164 = por %p162, %p163
    %p165 = scmp.ne.s32.totalorder %s156, %s157
    %p166 = scmp.eq.s32.totalorder %s20, 0
    %p167 = por %p165, %p166
    %p168 = scmp.ne.s32.totalorder %s156, %s157
    %p169 = scmp.eq.s32.totalorder %s21, 1
    %p170 = por %p168, %p169
    %p172 = scmp.ne.s32.totalorder %s157, %s171
    %p173 = scmp.eq.s32.totalorder %s21, 0
    %p174 = por %p172, %p173
    %s175 = ssub.s32 %s15, %s22
    %p176 = scmp.eq.s32.totalorder %s175, 0
    %s178 = sadd.s32 %s177, 1
    %s179 = scalar_select %p176, %s177, %s178
    %p182 = pneg %p176
    %p183 = scmp.eq.s32.totalorder %s15, 1
    %p184 = por %p182, %p183
    %p185 = scmp.ne.s32.totalorder %s177, %s180
    %p186 = scmp.eq.s32.totalorder %s15, 0
    %p187 = por %p185, %p186
    %p188 = scmp.ne.s32.totalorder %s177, %s180
    %p189 = scmp.eq.s32.totalorder %s20, 1
    %p190 = por %p188, %p189
    %p191 = scmp.ne.s32.totalorder %s180, %s181
    %p192 = scmp.eq.s32.totalorder %s20, 0
    %p193 = por %p191, %p192
    %p194 = scmp.ne.s32.totalorder %s180, %s181
    %p195 = scmp.eq.s32.totalorder %s21, 1
    %p196 = por %p194, %p195
    %p198 = scmp.ne.s32.totalorder %s181, %s197
    %p199 = scmp.eq.s32.totalorder %s21, 0
    %p200 = por %p198, %p199
    %p201 = scmp.le.s32.totalorder 1, %s15
    %p202 = scmp.lt.s32.totalorder %s15, 3
    %p203 = pnand %p201, %p202
    %p204 = pneg %p203
    // Predicated region
    $region9: #{discriminator_forward.1} parent=5 // pred_check
      _
    $region10: #{discriminator_forward.1} parent=5 // pred_check_branch
      %206 = sbr.rel (%p203) target = $region12
    $region11: #{discriminator_forward.1} parent=5 // pred_region
      %s207 = ssub.s32 %s15, 1
      // Predicated region
      $region13: #{discriminator_forward.1} parent=11 // pred_check
        %p208 = pneg %p62
      $region14: #{discriminator_forward.1} parent=11 // pred_check_branch
        %210 = sbr.rel (%p208) target = $region16
      $region15: #{discriminator_forward.1} parent=11 // pred_region
        _
      $region16: #{discriminator_forward.1} parent=11 // pred_fallthru
        _
      // Predicated region
      $region17: #{discriminator_forward.1} parent=11 // pred_check
        %p211 = pneg %p83
      $region18: #{discriminator_forward.1} parent=11 // pred_check_branch
        %213 = sbr.rel (%p211) target = $region20
      $region19: #{discriminator_forward.1} parent=11 // pred_region
        _
      $region20: #{discriminator_forward.1} parent=11 // pred_fallthru
        _
      // Predicated region
      $region21: #{discriminator_forward.1} parent=11 // pred_check
        %p214 = pneg %p104
      $region22: #{discriminator_forward.1} parent=11 // pred_check_branch
        %216 = sbr.rel (%p214) target = $region24
      $region23: #{discriminator_forward.1} parent=11 // pred_region
        _
      $region24: #{discriminator_forward.1} parent=11 // pred_fallthru
        _
      // Predicated region
      $region25: #{discriminator_forward.1} parent=11 // pred_check
        %p217 = pneg %p125
      $region26: #{discriminator_forward.1} parent=11 // pred_check_branch
        %219 = sbr.rel (%p217) target = $region28
      $region27: #{discriminator_forward.1} parent=11 // pred_region
        _
      $region28: #{discriminator_forward.1} parent=11 // pred_fallthru
        _
      // Predicated region
      $region29: #{discriminator_forward.1} parent=11 // pred_check
        %p220 = pneg %p146
      $region30: #{discriminator_forward.1} parent=11 // pred_check_branch
        %222 = sbr.rel (%p220) target = $region32
      $region31: #{discriminator_forward.1} parent=11 // pred_region
        _
      $region32: #{discriminator_forward.1} parent=11 // pred_fallthru
        _
      // Predicated region
      $region33: #{discriminator_forward.1} parent=11 // pred_check
        %p223 = pneg %p167
      $region34: #{discriminator_forward.1} parent=11 // pred_check_branch
        %225 = sbr.rel (%p223) target = $region36
      $region35: #{discriminator_forward.1} parent=11 // pred_region
        _
      $region36: #{discriminator_forward.1} parent=11 // pred_fallthru
        _
    $region12: #{discriminator_forward.1} parent=5 // pred_fallthru
      _
    %p226 = scmp.lt.s32.totalorder %s15, 2
    // Predicated region
    $region37: #{discriminator_forward.1} parent=5 // pred_check
      %p227 = pneg %p226
    $region38: #{discriminator_forward.1} parent=5 // pred_check_branch
      %229 = sbr.rel (%p227) target = $region40
    $region39: #{discriminator_forward.1} parent=5 // pred_region
      // Predicated region
      $region41: #{discriminator_forward.1} parent=39 // pred_check
        %p230 = pneg %p35
      $region42: #{discriminator_forward.1} parent=39 // pred_check_branch
        %232 = sbr.rel (%p230) target = $region44
      $region43: #{discriminator_forward.1} parent=39 // pred_region
        %p233 = scmp.lt.s32.totalorder %s15, 1
        %s234 = scalar_select %p233, %s15, 1
        %s235 = smul.addr %s234, 28
        %s236 = smul.addr %s235, 4
        %s237 = scalar_lea.vmem %s0, %s236
      $region44: #{discriminator_forward.1} parent=39 // pred_fallthru
        _
    $region40: #{discriminator_forward.1} parent=5 // pred_fallthru
      _
    %p238 = scmp.le.s32.totalorder 1, %s15
    %p239 = scmp.lt.s32.totalorder %s15, 3
    %p240 = pnand %p238, %p239
    %p241 = pneg %p240
    // Predicated region
    $region45: #{discriminator_forward.1} parent=5 // pred_check
      _
    $region46: #{discriminator_forward.1} parent=5 // pred_check_branch
      %243 = sbr.rel (%p240) target = $region48
    $region47: #{discriminator_forward.1} parent=5 // pred_region
      %s244 = ssub.s32 %s15, 1
      %p245 = scmp.lt.s32.totalorder %s20, 1
      %s246 = scalar_select %p245, %s20, 1
      %s247 = smul.addr %s246, 28
      %s248 = smul.addr %s247, 4
      %s249 = scalar_lea.vmem %s0, %s248
      %p250 = pneg %p41
      %p251 = pneg %p38
      %p252 = pneg %p62
      %p253 = pneg %p59
      %p254 = pneg %p83
      %p255 = pneg %p80
      %p256 = pneg %p104
      %p257 = pneg %p101
      %p258 = pneg %p125
      %p259 = pneg %p122
      %p260 = pneg %p146
      %p261 = pneg %p143
      %p262 = pneg %p167
      %p263 = pneg %p164
      %p264 = pneg %p193
      %p265 = pneg %p190
      %p266 = scmp.lt.s32.totalorder %s20, 1
      %s267 = scalar_select %p266, %s20, 1
      %s268 = scalar_lea.vmem %s7, %s267
      %p269 = scmp.lt.s32.totalorder %s20, 1
      %s270 = scalar_select %p269, %s20, 1
      %s271 = smul.addr %s270, 28
      %s272 = smul.addr %s271, 4
      %s273 = scalar_lea.vmem %s0, %s272
      %p274 = scmp.lt.s32.totalorder %s20, 1
      %s275 = scalar_select %p274, %s20, 1
      %s276 = scalar_lea.vmem %s7, %s275
      %vm278 = vcmask 519168
      %279 = vst.msk [vmem:[#allocation2] sm:$0xf] %vm278, 0
      %vm280 = vcmask 516096
      %vm281 = vsmask.f32 256
      %vm282 = vmand %vm280, %vm281
      %v283 = vld [vmem:[#allocation2 + $0x4] sm:$0x1]
      %v284 = vsel %vm282, 0, %v283
      %285 = vst [vmem:[#allocation2 + $0x4] sm:$0x1] %v284
      %286 = vst.msk [vmem:[#allocation2 + $0x8] sm:$0xf] %vm278, 0
      %v287 = vld [vmem:[#allocation2 + $0xc] sm:$0x1]
      %v288 = vsel %vm282, 0, %v287
      %289 = vst [vmem:[#allocation2 + $0xc] sm:$0x1] %v288
      %290 = vst.msk [vmem:[#allocation2 + $0x10] sm:$0xf] %vm278, 0
      %v291 = vld [vmem:[#allocation2 + $0x14] sm:$0x1]
      %v292 = vsel %vm282, 0, %v291
      %293 = vst [vmem:[#allocation2 + $0x14] sm:$0x1] %v292
      %294 = vst.msk [vmem:[#allocation2 + $0x18] sm:$0xf] %vm278, 0
      %v295 = vld [vmem:[#allocation2 + $0x1c] sm:$0x1]
      %v296 = vsel %vm282, 0, %v295
      %297 = vst [vmem:[#allocation2 + $0x1c] sm:$0x1] %v296
      %298 = vst.msk [vmem:[#allocation2 + $0x20] sm:$0xf] %vm278, 0
      %v299 = vld [vmem:[#allocation2 + $0x24] sm:$0x1]
      %v300 = vsel %vm282, 0, %v299
      %301 = vst [vmem:[#allocation2 + $0x24] sm:$0x1] %v300
      %302 = vst.msk [vmem:[#allocation2 + $0x28] sm:$0xf] %vm278, 0
      %v303 = vld [vmem:[#allocation2 + $0x2c] sm:$0x1]
      %v304 = vsel %vm282, 0, %v303
      %305 = vst [vmem:[#allocation2 + $0x2c] sm:$0x1] %v304
      %306 = vst.msk [vmem:[#allocation2 + $0x30] sm:$0xf] %vm278, 0
      %v307 = vld [vmem:[#allocation2 + $0x34] sm:$0x1]
      %v308 = vsel %vm282, 0, %v307
      %309 = vst [vmem:[#allocation2 + $0x34] sm:$0x1] %v308
      %310 = vst.msk [vmem:[#allocation2 + $0x38] sm:$0xf] %vm278, 0
      %v311 = vld [vmem:[#allocation2 + $0x3c] sm:$0x1]
      %v312 = vsel %vm282, 0, %v311
      %313 = vst [vmem:[#allocation2 + $0x3c] sm:$0x1] %v312
      %314 = vst.msk [vmem:[#allocation2 + $0x40] sm:$0xf] %vm278, 0
      %v315 = vld [vmem:[#allocation2 + $0x44] sm:$0x1]
      %v316 = vsel %vm282, 0, %v315
      %317 = vst [vmem:[#allocation2 + $0x44] sm:$0x1] %v316
      %s318 = scalar_lea.vmem [#allocation2], 72
      %319 = vst.msk [vmem:[%s318] sm:$0xf] %vm278, 0
      %v320 = vld [vmem:[%s318 + $0x4] sm:$0x1]
      %v321 = vsel %vm282, 0, %v320
      %322 = vst [vmem:[%s318 + $0x4] sm:$0x1] %v321
      %323 = vst.msk [vmem:[%s318 + $0x8] sm:$0xf] %vm278, 0
      %v324 = vld [vmem:[%s318 + $0xc] sm:$0x1]
      %v325 = vsel %vm282, 0, %v324
      %326 = vst [vmem:[%s318 + $0xc] sm:$0x1] %v325
      %327 = vst.msk [vmem:[%s318 + $0x10] sm:$0xf] %vm278, 0
      %v328 = vld [vmem:[%s318 + $0x14] sm:$0x1]
      %v329 = vsel %vm282, 0, %v328
      %330 = vst [vmem:[%s318 + $0x14] sm:$0x1] %v329
      %331 = vst.msk [vmem:[%s318 + $0x18] sm:$0xf] %vm278, 0
      %v332 = vld [vmem:[%s318 + $0x1c] sm:$0x1]
      %v333 = vsel %vm282, 0, %v332
      %334 = vst [vmem:[%s318 + $0x1c] sm:$0x1] %v333
      %335 = vst.msk [vmem:[%s318 + $0x20] sm:$0xf] %vm278, 0
      %v336 = vld [vmem:[%s318 + $0x24] sm:$0x1]
      %v337 = vsel %vm282, 0, %v336
      %338 = vst [vmem:[%s318 + $0x24] sm:$0x1] %v337
      %339 = vst.msk [vmem:[%s318 + $0x28] sm:$0xf] %vm278, 0
      %v340 = vld [vmem:[%s318 + $0x2c] sm:$0x1]
      %v341 = vsel %vm282, 0, %v340
      %342 = vst [vmem:[%s318 + $0x2c] sm:$0x1] %v341
      %343 = vst.msk [vmem:[%s318 + $0x30] sm:$0xf] %vm278, 0
      %v344 = vld [vmem:[%s318 + $0x34] sm:$0x1]
      %v345 = vsel %vm282, 0, %v344
      %346 = vst [vmem:[%s318 + $0x34] sm:$0x1] %v345
      %347 = vst.msk [vmem:[%s318 + $0x38] sm:$0xf] %vm278, 0
      %v348 = vld [vmem:[%s318 + $0x3c] sm:$0x1]
      %v349 = vsel %vm282, 0, %v348
      %350 = vst [vmem:[%s318 + $0x3c] sm:$0x1] %v349
      %351 = vst.msk [vmem:[%s318 + $0x40] sm:$0xf] %vm278, 0
      %v352 = vld [vmem:[%s318 + $0x44] sm:$0x1]
      %v353 = vsel %vm282, 0, %v352
      %354 = vst [vmem:[%s318 + $0x44] sm:$0x1] %v353
      %s355 = scalar_lea.vmem [#allocation2], 144
      %356 = vst.msk [vmem:[%s355] sm:$0xf] %vm278, 0
      %v357 = vld [vmem:[%s355 + $0x4] sm:$0x1]
      %v358 = vsel %vm282, 0, %v357
      %359 = vst [vmem:[%s355 + $0x4] sm:$0x1] %v358
      %360 = vst.msk [vmem:[%s355 + $0x8] sm:$0xf] %vm278, 0
      %v361 = vld [vmem:[%s355 + $0xc] sm:$0x1]
      %v362 = vsel %vm282, 0, %v361
      %363 = vst [vmem:[%s355 + $0xc] sm:$0x1] %v362
      %364 = vst.msk [vmem:[%s355 + $0x10] sm:$0xf] %vm278, 0
      %v365 = vld [vmem:[%s355 + $0x14] sm:$0x1]
      %v366 = vsel %vm282, 0, %v365
      %367 = vst [vmem:[%s355 + $0x14] sm:$0x1] %v366
      %368 = vst.msk [vmem:[%s355 + $0x18] sm:$0xf] %vm278, 0
      %v369 = vld [vmem:[%s355 + $0x1c] sm:$0x1]
      %v370 = vsel %vm282, 0, %v369
      %371 = vst [vmem:[%s355 + $0x1c] sm:$0x1] %v370
      %372 = vst.msk [vmem:[%s355 + $0x20] sm:$0xf] %vm278, 0
      %v373 = vld [vmem:[%s355 + $0x24] sm:$0x1]
      %v374 = vsel %vm282, 0, %v373
      %375 = vst [vmem:[%s355 + $0x24] sm:$0x1] %v374
      %376 = vst.msk [vmem:[%s355 + $0x28] sm:$0xf] %vm278, 0
      %v377 = vld [vmem:[%s355 + $0x2c] sm:$0x1]
      %v378 = vsel %vm282, 0, %v377
      %379 = vst [vmem:[%s355 + $0x2c] sm:$0x1] %v378
      %380 = vst.msk [vmem:[%s355 + $0x30] sm:$0xf] %vm278, 0
      %v381 = vld [vmem:[%s355 + $0x34] sm:$0x1]
      %v382 = vsel %vm282, 0, %v381
      %383 = vst [vmem:[%s355 + $0x34] sm:$0x1] %v382
      %384 = vst.msk [vmem:[%s355 + $0x38] sm:$0xf] %vm278, 0
      %v385 = vld [vmem:[%s355 + $0x3c] sm:$0x1]
      %v386 = vsel %vm282, 0, %v385
      %387 = vst [vmem:[%s355 + $0x3c] sm:$0x1] %v386
      %388 = vst.msk [vmem:[%s355 + $0x40] sm:$0xf] %vm278, 0
      %v389 = vld [vmem:[%s355 + $0x44] sm:$0x1]
      %v390 = vsel %vm282, 0, %v389
      %391 = vst [vmem:[%s355 + $0x44] sm:$0x1] %v390
      %s392 = scalar_lea.vmem [#allocation2], 216
      %393 = vst.msk [vmem:[%s392] sm:$0xf] %vm278, 0
      %v394 = vld [vmem:[%s392 + $0x4] sm:$0x1]
      %v395 = vsel %vm282, 0, %v394
      %396 = vst [vmem:[%s392 + $0x4] sm:$0x1] %v395
      %397 = vst.msk [vmem:[%s392 + $0x8] sm:$0xf] %vm278, 0
      %v398 = vld [vmem:[%s392 + $0xc] sm:$0x1]
      %v399 = vsel %vm282, 0, %v398
      %400 = vst [vmem:[%s392 + $0xc] sm:$0x1] %v399
      %401 = vst.msk [vmem:[%s392 + $0x10] sm:$0xf] %vm278, 0
      %v402 = vld [vmem:[%s392 + $0x14] sm:$0x1]
      %v403 = vsel %vm282, 0, %v402
      %404 = vst [vmem:[%s392 + $0x14] sm:$0x1] %v403
      %405 = vst.msk [vmem:[%s392 + $0x18] sm:$0xf] %vm278, 0
      %v406 = vld [vmem:[%s392 + $0x1c] sm:$0x1]
      %v407 = vsel %vm282, 0, %v406
      %408 = vst [vmem:[%s392 + $0x1c] sm:$0x1] %v407
      %409 = vst.msk [vmem:[%s392 + $0x20] sm:$0xf] %vm278, 0
      %v410 = vld [vmem:[%s392 + $0x24] sm:$0x1]
      %v411 = vsel %vm282, 0, %v410
      %412 = vst [vmem:[%s392 + $0x24] sm:$0x1] %v411
      %413 = vst.msk [vmem:[%s392 + $0x28] sm:$0xf] %vm278, 0
      %v414 = vld [vmem:[%s392 + $0x2c] sm:$0x1]
      %v415 = vsel %vm282, 0, %v414
      %416 = vst [vmem:[%s392 + $0x2c] sm:$0x1] %v415
      %417 = vst.msk [vmem:[%s392 + $0x30] sm:$0xf] %vm278, 0
      %v418 = vld [vmem:[%s392 + $0x34] sm:$0x1]
      %v419 = vsel %vm282, 0, %v418
      %420 = vst [vmem:[%s392 + $0x34] sm:$0x1] %v419
      %421 = vst.msk [vmem:[%s392 + $0x38] sm:$0xf] %vm278, 0
      %v422 = vld [vmem:[%s392 + $0x3c] sm:$0x1]
      %v423 = vsel %vm282, 0, %v422
      %424 = vst [vmem:[%s392 + $0x3c] sm:$0x1] %v423
      %425 = vst.msk [vmem:[%s392 + $0x40] sm:$0xf] %vm278, 0
      %v426 = vld [vmem:[%s392 + $0x44] sm:$0x1]
      %v427 = vsel %vm282, 0, %v426
      %428 = vst [vmem:[%s392 + $0x44] sm:$0x1] %v427
      %v429 = vld [vmem:[%s1] sm:$0xf]
      %v430 = vld [vmem:[%s1 + $0x4] sm:$0xf]
      %v431 = vld [vmem:[%s1 + $0x8] sm:$0xf]
      %v432 = vld [vmem:[%s1 + $0xc] sm:$0x1]
      %v433 = vld [vmem:[%s2] sm:$0x1]
      %v434 = vld [vmem:[%s273] sm:$0xf]
      %v435 = vld [vmem:[%s273 + $0x4] sm:$0xf]
      %v436 = vld [vmem:[%s273 + $0x8] sm:$0xf]
      %v437 = vld [vmem:[%s273 + $0xc] sm:$0xf]
      %v438 = vld [vmem:[%s273 + $0x10] sm:$0xf]
      %v439 = vld [vmem:[%s273 + $0x14] sm:$0xf]
      %v440 = vld [vmem:[%s273 + $0x18] sm:$0x1]
      %v442 = vlaneseq
      %v443 = vshrl.u32 %v442, 7
      %v444 = vsub.s32 0, %v443
      %v445 = vrot.slane %v433, %v444
      %v454 = vunpack.c.l.b16 %v434
      %v455 = vunpack.c.l.b16 %v435
      %v456 = vunpack.c.l.b16 %v436
      %v457 = vunpack.c.l.b16 %v437
      %v458 = vunpack.c.l.b16 %v438
      %v459 = vunpack.c.l.b16 %v439
      %v460 = vunpack.c.l.b16 %v440
      %v461 = vpack.c.b16 %v455, %v454
      %v462 = vpack.c.b16 %v457, %v456
      %v463 = vpack.c.b16 %v459, %v458
      %v464 = vpack.c.b16 %v460, %v460
      %v469 = vunpack.c.l.b16 %v429
      %v470 = vunpack.c.l.b16 %v430
      %v471 = vunpack.c.l.b16 %v431
      %v472 = vunpack.c.l.b16 %v432
      %v473 = vpack.c.b16 %v470, %v469
      %v474 = vpack.c.b16 %v472, %v471
      %vm476 = vcmask 203776
      %v478 = vsel %vm476, %v461, 0
      %v481 = vsel %vm476, %v462, 0
      %v484 = vsel %vm476, %v463, 0
      %v487 = vsel %vm476, %v464, 0
      %vm489 = vcmask 1043456
      %vm490 = vcmask 1044480
      %v491 = vsel %vm489, 4294967295, 65535
      %v492 = vsel %vm490, %v491, 0
      %v494 = vand.u32 %v474, %v492
      %496 = vmatprep.subr.bf16.mxu0 0
      %497 = vmatpush1.bf16.msra.mxu0 0
      %498 = vmatprep.subr.bf16.mxu0 0
      %499 = vmatpush1.bf16.msra.mxu0 0
      %500 = vmatprep.subr.bf16.mxu0 0
      %501 = vmatpush1.bf16.msra.mxu0 0
      %502 = vmatprep.subr.bf16.mxu0 0
      %503 = vmatpush1.bf16.msra.mxu0 0
      %504 = vmatprep.subr.bf16.mxu0 0
      %505 = vmatpush1.bf16.msra.mxu0 0
      %506 = vmatprep.subr.bf16.mxu0 0
      %507 = vmatpush1.bf16.msra.mxu0 0
      %508 = vmatprep.subr.bf16.mxu0 0
      %509 = vmatpush1.bf16.msra.mxu0 %v494
      %510 = vmatprep.subr.bf16.mxu0 0
      %511 = vmatpush1.bf16.msra.mxu0 %v473
      %512 = vmatprep.subr.bf16.mxu0 0
      %513 = vmatpush2.bf16.msra.mxu0 0
      %514 = vmatprep.subr.bf16.mxu0 0
      %515 = vmatpush2.bf16.msra.mxu0 0
      %516 = vmatprep.subr.bf16.mxu0 0
      %517 = vmatpush2.bf16.msra.mxu0 0
      %518 = vmatprep.subr.bf16.mxu0 0
      %519 = vmatpush2.bf16.msra.mxu0 0
      %520 = vmatprep.subr.bf16.mxu0 0
      %521 = vmatpush2.bf16.msra.mxu0 0
      %522 = vmatprep.subr.bf16.mxu0 0
      %523 = vmatpush2.bf16.msra.mxu0 0
      %524 = vmatprep.subr.bf16.mxu0 0
      %525 = vmatpush2.bf16.msra.mxu0 0
      %526 = vmatprep.subr.bf16.mxu0 0
      %527 = vmatpush2.bf16.msra.mxu0 0
      %528 = vmatprep.mubr.bf16.mxu0 0
      %529 = vmatmul.mubr.bf16.gmra.mxu0 %v478
      %v530 = vpop.f32.mrf.mxu0
      %v531 = vadd.f32 %v445, %v530
      %v532 = vpop.f32.mrf.mxu0
      %v533 = vpop.f32.mrf.mxu0
      %v534 = vadd.f32 %v445, %v533
      %v535 = vpop.f32.mrf.mxu0
      %536 = vmatprep.mubr.bf16.mxu0 0
      %537 = vmatmul.mubr.bf16.gmra.mxu0 %v481
      %v538 = vpop.f32.mrf.mxu0
      %v539 = vadd.f32 %v445, %v538
      %v540 = vpop.f32.mrf.mxu0
      %v541 = vpop.f32.mrf.mxu0
      %v542 = vadd.f32 %v445, %v541
      %v543 = vpop.f32.mrf.mxu0
      %544 = vmatprep.mubr.bf16.mxu0 0
      %545 = vmatmul.mubr.bf16.gmra.mxu0 %v484
      %v546 = vpop.f32.mrf.mxu0
      %v547 = vadd.f32 %v445, %v546
      %v548 = vpop.f32.mrf.mxu0
      %v549 = vpop.f32.mrf.mxu0
      %v550 = vadd.f32 %v445, %v549
      %v551 = vpop.f32.mrf.mxu0
      %552 = vmatprep.mubr.bf16.mxu0 0
      %553 = vmatmul.mubr.bf16.gmra.mxu0 %v487
      %v554 = vpop.f32.mrf.mxu0
      %v555 = vadd.f32 %v445, %v554
      %v556 = vpop.f32.mrf.mxu0
      %v557 = vpop.f32.mrf.mxu0
      %v558 = vpop.f32.mrf.mxu0
      %559 = vdwg.mxu0
      %vm560 = vcmp.gt.f32.partialorder %v531, 0.0
      %vm561 = vcmp.gt.f32.partialorder %v534, 0.0
      %vm562 = vcmp.gt.f32.partialorder %v539, 0.0
      %vm563 = vcmp.gt.f32.partialorder %v542, 0.0
      %vm564 = vcmp.gt.f32.partialorder %v547, 0.0
      %vm565 = vcmp.gt.f32.partialorder %v550, 0.0
      %vm566 = vcmp.gt.f32.partialorder %v555, 0.0
      %v567 = vmul.f32 %v531, 0.2
      %v568 = vmul.f32 %v534, 0.2
      %v569 = vmul.f32 %v539, 0.2
      %v570 = vmul.f32 %v542, 0.2
      %v571 = vmul.f32 %v547, 0.2
      %v572 = vmul.f32 %v550, 0.2
      %v573 = vmul.f32 %v555, 0.2
      %v574 = vsel %vm560, %v531, %v567
      %v575 = vsel %vm561, %v534, %v568
      %v576 = vsel %vm562, %v539, %v569
      %v577 = vsel %vm563, %v542, %v570
      %v578 = vsel %vm564, %v547, %v571
      %v579 = vsel %vm565, %v550, %v572
      %v580 = vsel %vm566, %v555, %v573
      %v581 = vpack.c.bf16 %v575, %v574
      %v582 = vpack.c.bf16 %v577, %v576
      %v583 = vpack.c.bf16 %v579, %v578
      %v584 = vpack.c.bf16 %v580, %v580
      %v586 = vunpack.c.l.b16 %v581
      %v587 = vpack.c.b16 %v586, %v586
      %v589 = vshrl.u32 %v587, 16
      %v591 = vrot.slane %v589, 7
      %v592 = vshll.u32 %v587, 16
      %v594 = vor.u32 %v591, %v592
      %s596 = scalar_lea.vmem [#allocation2], 8
      %vm597 = vcmask 519168
      %vm598 = vsmask.f32 7938
      %vm599 = vmand %vm597, %vm598
      %v600 = vld [vmem:[%s596] sm:$0xf]
      %v601 = vsel %vm599, %v594, %v600
      %602 = vst [vmem:[%s596] sm:$0xf] %v601
      %v603 = vunpack.c.h.b16 %v581
      %v604 = vpack.c.b16 %v603, %v603
      %vm605 = vcmask 1040384
      %vm606 = vcmask 1044484
      %vm607 = vmor %vm605, %vm606
      %v608 = vrot.slane %v587, 7
      %v609 = vrot.slane %v608, 4
      %v610 = vrot.slane %v604, 7
      %v611 = vsel %vm607, %v609, %v610
      %s613 = scalar_lea.vmem [#allocation2], 16
      %v614 = vld [vmem:[%s613] sm:$0xf]
      %v615 = vsel %vm599, %v611, %v614
      %616 = vst [vmem:[%s613] sm:$0xf] %v615
      %v618 = vunpack.c.l.b16 %v582
      %v619 = vpack.c.b16 %v618, %v618
      %vm620 = vsmask.f32 1280
      %vm621 = vsmask.f32 5392
      %vm622 = vmor %vm620, %vm621
      %v624 = vshrl.u32 %v604, 16
      %v626 = vrot.slane %v624, 6
      %v627 = vshll.u32 %v604, 16
      %v629 = vrot.slane %v627, 7
      %v630 = vor.u32 %v626, %v629
      %v631 = vrot.slane %v630, 4
      %v633 = vshrl.u32 %v619, 16
      %v635 = vrot.slane %v633, 6
      %v636 = vshll.u32 %v619, 16
      %v638 = vrot.slane %v636, 7
      %v639 = vor.u32 %v635, %v638
      %v640 = vsel %vm622, %v631, %v639
      %s642 = scalar_lea.vmem [#allocation2], 24
      %v643 = vld [vmem:[%s642] sm:$0xf]
      %v644 = vsel %vm599, %v640, %v643
      %645 = vst [vmem:[%s642] sm:$0xf] %v644
      %v646 = vunpack.c.h.b16 %v582
      %v647 = vpack.c.b16 %v646, %v646
      %vm648 = vcmask 1041408
      %vm649 = vcmask 1045508
      %vm650 = vmor %vm648, %vm649
      %v651 = vrot.slane %v619, 6
      %v652 = vrot.slane %v651, 4
      %v653 = vrot.slane %v647, 6
      %v654 = vsel %vm650, %v652, %v653
      %s656 = scalar_lea.vmem [#allocation2], 32
      %v657 = vld [vmem:[%s656] sm:$0xf]
      %v658 = vsel %vm599, %v654, %v657
      %659 = vst [vmem:[%s656] sm:$0xf] %v658
      %v661 = vunpack.c.l.b16 %v583
      %v662 = vpack.c.b16 %v661, %v661
      %vm663 = vsmask.f32 2304
      %vm664 = vsmask.f32 6416
      %vm665 = vmor %vm663, %vm664
      %v667 = vshrl.u32 %v647, 16
      %v669 = vrot.slane %v667, 5
      %v670 = vshll.u32 %v647, 16
      %v672 = vrot.slane %v670, 6
      %v673 = vor.u32 %v669, %v672
      %v674 = vrot.slane %v673, 4
      %v676 = vshrl.u32 %v662, 16
      %v678 = vrot.slane %v676, 5
      %v679 = vshll.u32 %v662, 16
      %v681 = vrot.slane %v679, 6
      %v682 = vor.u32 %v678, %v681
      %v683 = vsel %vm665, %v674, %v682
      %s685 = scalar_lea.vmem [#allocation2], 40
      %v686 = vld [vmem:[%s685] sm:$0xf]
      %v687 = vsel %vm599, %v683, %v686
      %688 = vst [vmem:[%s685] sm:$0xf] %v687
      %v689 = vunpack.c.h.b16 %v583
      %v690 = vpack.c.b16 %v689, %v689
      %vm691 = vcmask 1042432
      %vm692 = vcmask 1046532
      %vm693 = vmor %vm691, %vm692
      %v694 = vrot.slane %v662, 5
      %v695 = vrot.slane %v694, 4
      %v696 = vrot.slane %v690, 5
      %v697 = vsel %vm693, %v695, %v696
      %s699 = scalar_lea.vmem [#allocation2], 48
      %v700 = vld [vmem:[%s699] sm:$0xf]
      %v701 = vsel %vm599, %v697, %v700
      %702 = vst [vmem:[%s699] sm:$0xf] %v701
      %v704 = vunpack.c.l.b16 %v584
      %v705 = vpack.c.b16 %v704, %v704
      %vm706 = vsmask.f32 3328
      %vm707 = vsmask.f32 7440
      %vm708 = vmor %vm706, %vm707
      %v710 = vshrl.u32 %v690, 16
      %v712 = vrot.slane %v710, 4
      %v713 = vshll.u32 %v690, 16
      %v715 = vrot.slane %v713, 5
      %v716 = vor.u32 %v712, %v715
      %v717 = vrot.slane %v716, 4
      %v719 = vshll.u32 %v705, 16
      %v721 = vrot.slane %v719, 5
      %v722 = vsel %vm708, %v717, %v721
      %s724 = scalar_lea.vmem [#allocation2], 56
      %v725 = vld [vmem:[%s724] sm:$0xf]
      %v726 = vsel %vm599, %v722, %v725
      %727 = vst [vmem:[%s724] sm:$0xf] %v726
      %s728 = scalar_lea.vmem %s273, 28
      %v729 = vld [vmem:[%s728] sm:$0xf]
      %v730 = vld [vmem:[%s728 + $0x4] sm:$0xf]
      %v731 = vld [vmem:[%s728 + $0x8] sm:$0xf]
      %v732 = vld [vmem:[%s728 + $0xc] sm:$0xf]
      %v733 = vld [vmem:[%s728 + $0x10] sm:$0xf]
      %v734 = vld [vmem:[%s728 + $0x14] sm:$0xf]
      %v735 = vld [vmem:[%s728 + $0x18] sm:$0x1]
      %v743 = vunpack.c.l.b16 %v729
      %v744 = vunpack.c.l.b16 %v730
      %v745 = vunpack.c.l.b16 %v731
      %v746 = vunpack.c.l.b16 %v732
      %v747 = vunpack.c.l.b16 %v733
      %v748 = vunpack.c.l.b16 %v734
      %v749 = vunpack.c.l.b16 %v735
      %v750 = vpack.c.b16 %v744, %v743
      %v751 = vpack.c.b16 %v746, %v745
      %v752 = vpack.c.b16 %v748, %v747
      %v753 = vpack.c.b16 %v749, %v749
      %v755 = vsel %vm476, %v750, 0
      %v758 = vsel %vm476, %v751, 0
      %v761 = vsel %vm476, %v752, 0
      %v764 = vsel %vm476, %v753, 0
      %766 = vmatprep.subr.bf16.mxu0 0
      %767 = vmatpush1.bf16.msra.mxu0 0
      %768 = vmatprep.subr.bf16.mxu0 0
      %769 = vmatpush1.bf16.msra.mxu0 0
      %770 = vmatprep.subr.bf16.mxu0 0
      %771 = vmatpush1.bf16.msra.mxu0 0
      %772 = vmatprep.subr.bf16.mxu0 0
      %773 = vmatpush1.bf16.msra.mxu0 0
      %774 = vmatprep.subr.bf16.mxu0 0
      %775 = vmatpush1.bf16.msra.mxu0 0
      %776 = vmatprep.subr.bf16.mxu0 0
      %777 = vmatpush1.bf16.msra.mxu0 0
      %778 = vmatprep.subr.bf16.mxu0 0
      %779 = vmatpush1.bf16.msra.mxu0 %v494
      %780 = vmatprep.subr.bf16.mxu0 0
      %781 = vmatpush1.bf16.msra.mxu0 %v473
      %782 = vmatprep.subr.bf16.mxu0 0
      %783 = vmatpush2.bf16.msra.mxu0 0
      %784 = vmatprep.subr.bf16.mxu0 0
      %785 = vmatpush2.bf16.msra.mxu0 0
      %786 = vmatprep.subr.bf16.mxu0 0
      %787 = vmatpush2.bf16.msra.mxu0 0
      %788 = vmatprep.subr.bf16.mxu0 0
      %789 = vmatpush2.bf16.msra.mxu0 0
      %790 = vmatprep.subr.bf16.mxu0 0
      %791 = vmatpush2.bf16.msra.mxu0 0
      %792 = vmatprep.subr.bf16.mxu0 0
      %793 = vmatpush2.bf16.msra.mxu0 0
      %794 = vmatprep.subr.bf16.mxu0 0
      %795 = vmatpush2.bf16.msra.mxu0 0
      %796 = vmatprep.subr.bf16.mxu0 0
      %797 = vmatpush2.bf16.msra.mxu0 0
      %798 = vmatprep.mubr.bf16.mxu0 0
      %799 = vmatmul.mubr.bf16.gmra.mxu0 %v755
      %v800 = vpop.f32.mrf.mxu0
      %v801 = vadd.f32 %v445, %v800
      %v802 = vpop.f32.mrf.mxu0
      %v803 = vpop.f32.mrf.mxu0
      %v804 = vadd.f32 %v445, %v803
      %v805 = vpop.f32.mrf.mxu0
      %806 = vmatprep.mubr.bf16.mxu0 0
      %807 = vmatmul.mubr.bf16.gmra.mxu0 %v758
      %v808 = vpop.f32.mrf.mxu0
      %v809 = vadd.f32 %v445, %v808
      %v810 = vpop.f32.mrf.mxu0
      %v811 = vpop.f32.mrf.mxu0
      %v812 = vadd.f32 %v445, %v811
      %v813 = vpop.f32.mrf.mxu0
      %814 = vmatprep.mubr.bf16.mxu0 0
      %815 = vmatmul.mubr.bf16.gmra.mxu0 %v761
      %v816 = vpop.f32.mrf.mxu0
      %v817 = vadd.f32 %v445, %v816
      %v818 = vpop.f32.mrf.mxu0
      %v819 = vpop.f32.mrf.mxu0
      %v820 = vadd.f32 %v445, %v819
      %v821 = vpop.f32.mrf.mxu0
      %822 = vmatprep.mubr.bf16.mxu0 0
      %823 = vmatmul.mubr.bf16.gmra.mxu0 %v764
      %v824 = vpop.f32.mrf.mxu0
      %v825 = vadd.f32 %v445, %v824
      %v826 = vpop.f32.mrf.mxu0
      %v827 = vpop.f32.mrf.mxu0
      %v828 = vpop.f32.mrf.mxu0
      %829 = vdwg.mxu0
      %vm830 = vcmp.gt.f32.partialorder %v801, 0.0
      %vm831 = vcmp.gt.f32.partialorder %v804, 0.0
      %vm832 = vcmp.gt.f32.partialorder %v809, 0.0
      %vm833 = vcmp.gt.f32.partialorder %v812, 0.0
      %vm834 = vcmp.gt.f32.partialorder %v817, 0.0
      %vm835 = vcmp.gt.f32.partialorder %v820, 0.0
      %vm836 = vcmp.gt.f32.partialorder %v825, 0.0
      %v837 = vmul.f32 %v801, 0.2
      %v838 = vmul.f32 %v804, 0.2
      %v839 = vmul.f32 %v809, 0.2
      %v840 = vmul.f32 %v812, 0.2
      %v841 = vmul.f32 %v817, 0.2
      %v842 = vmul.f32 %v820, 0.2
      %v843 = vmul.f32 %v825, 0.2
      %v844 = vsel %vm830, %v801, %v837
      %v845 = vsel %vm831, %v804, %v838
      %v846 = vsel %vm832, %v809, %v839
      %v847 = vsel %vm833, %v812, %v840
      %v848 = vsel %vm834, %v817, %v841
      %v849 = vsel %vm835, %v820, %v842
      %v850 = vsel %vm836, %v825, %v843
      %v851 = vpack.c.bf16 %v845, %v844
      %v852 = vpack.c.bf16 %v847, %v846
      %v853 = vpack.c.bf16 %v849, %v848
      %v854 = vpack.c.bf16 %v850, %v850
      %v856 = vunpack.c.l.b16 %v851
      %v857 = vpack.c.b16 %v856, %v856
      %v859 = vshrl.u32 %v857, 16
      %v861 = vrot.slane %v859, 7
      %v862 = vshll.u32 %v857, 16
      %v864 = vor.u32 %v861, %v862
      %s866 = scalar_lea.vmem [#allocation2], 80
      %v867 = vld [vmem:[%s866] sm:$0xf]
      %v868 = vsel %vm599, %v864, %v867
      %869 = vst [vmem:[%s866] sm:$0xf] %v868
      %v870 = vunpack.c.h.b16 %v851
      %v871 = vpack.c.b16 %v870, %v870
      %v872 = vrot.slane %v857, 7
      %v873 = vrot.slane %v872, 4
      %v874 = vrot.slane %v871, 7
      %v875 = vsel %vm607, %v873, %v874
      %s877 = scalar_lea.vmem [#allocation2], 88
      %v878 = vld [vmem:[%s877] sm:$0xf]
      %v879 = vsel %vm599, %v875, %v878
      %880 = vst [vmem:[%s877] sm:$0xf] %v879
      %v882 = vunpack.c.l.b16 %v852
      %v883 = vpack.c.b16 %v882, %v882
      %v885 = vshrl.u32 %v871, 16
      %v887 = vrot.slane %v885, 6
      %v888 = vshll.u32 %v871, 16
      %v890 = vrot.slane %v888, 7
      %v891 = vor.u32 %v887, %v890
      %v892 = vrot.slane %v891, 4
      %v894 = vshrl.u32 %v883, 16
      %v896 = vrot.slane %v894, 6
      %v897 = vshll.u32 %v883, 16
      %v899 = vrot.slane %v897, 7
      %v900 = vor.u32 %v896, %v899
      %v901 = vsel %vm622, %v892, %v900
      %s903 = scalar_lea.vmem [#allocation2], 96
      %v904 = vld [vmem:[%s903] sm:$0xf]
      %v905 = vsel %vm599, %v901, %v904
      %906 = vst [vmem:[%s903] sm:$0xf] %v905
      %v907 = vunpack.c.h.b16 %v852
      %v908 = vpack.c.b16 %v907, %v907
      %v909 = vrot.slane %v883, 6
      %v910 = vrot.slane %v909, 4
      %v911 = vrot.slane %v908, 6
      %v912 = vsel %vm650, %v910, %v911
      %s914 = scalar_lea.vmem [#allocation2], 104
      %v915 = vld [vmem:[%s914] sm:$0xf]
      %v916 = vsel %vm599, %v912, %v915
      %917 = vst [vmem:[%s914] sm:$0xf] %v916
      %v919 = vunpack.c.l.b16 %v853
      %v920 = vpack.c.b16 %v919, %v919
      %v922 = vshrl.u32 %v908, 16
      %v924 = vrot.slane %v922, 5
      %v925 = vshll.u32 %v908, 16
      %v927 = vrot.slane %v925, 6
      %v928 = vor.u32 %v924, %v927
      %v929 = vrot.slane %v928, 4
      %v931 = vshrl.u32 %v920, 16
      %v933 = vrot.slane %v931, 5
      %v934 = vshll.u32 %v920, 16
      %v936 = vrot.slane %v934, 6
      %v937 = vor.u32 %v933, %v936
      %v938 = vsel %vm665, %v929, %v937
      %s940 = scalar_lea.vmem [#allocation2], 112
      %v941 = vld [vmem:[%s940] sm:$0xf]
      %v942 = vsel %vm599, %v938, %v941
      %943 = vst [vmem:[%s940] sm:$0xf] %v942
      %v944 = vunpack.c.h.b16 %v853
      %v945 = vpack.c.b16 %v944, %v944
      %v946 = vrot.slane %v920, 5
      %v947 = vrot.slane %v946, 4
      %v948 = vrot.slane %v945, 5
      %v949 = vsel %vm693, %v947, %v948
      %s951 = scalar_lea.vmem [#allocation2], 120
      %v952 = vld [vmem:[%s951] sm:$0xf]
      %v953 = vsel %vm599, %v949, %v952
      %954 = vst [vmem:[%s951] sm:$0xf] %v953
      %v956 = vunpack.c.l.b16 %v854
      %v957 = vpack.c.b16 %v956, %v956
      %v959 = vshrl.u32 %v945, 16
      %v961 = vrot.slane %v959, 4
      %v962 = vshll.u32 %v945, 16
      %v964 = vrot.slane %v962, 5
      %v965 = vor.u32 %v961, %v964
      %v966 = vrot.slane %v965, 4
      %v968 = vshll.u32 %v957, 16
      %v970 = vrot.slane %v968, 5
      %v971 = vsel %vm708, %v966, %v970
      %s973 = scalar_lea.vmem [#allocation2], 128
      %v974 = vld [vmem:[%s973] sm:$0xf]
      %v975 = vsel %vm599, %v971, %v974
      %976 = vst [vmem:[%s973] sm:$0xf] %v975
      %s977 = scalar_lea.vmem %s273, 56
      %v978 = vld [vmem:[%s977] sm:$0xf]
      %v979 = vld [vmem:[%s977 + $0x4] sm:$0xf]
      %v980 = vld [vmem:[%s977 + $0x8] sm:$0xf]
      %v981 = vld [vmem:[%s977 + $0xc] sm:$0xf]
      %v982 = vld [vmem:[%s977 + $0x10] sm:$0xf]
      %v983 = vld [vmem:[%s977 + $0x14] sm:$0xf]
      %v984 = vld [vmem:[%s977 + $0x18] sm:$0x1]
      %v992 = vunpack.c.l.b16 %v978
      %v993 = vunpack.c.l.b16 %v979
      %v994 = vunpack.c.l.b16 %v980
      %v995 = vunpack.c.l.b16 %v981
      %v996 = vunpack.c.l.b16 %v982
      %v997 = vunpack.c.l.b16 %v983
      %v998 = vunpack.c.l.b16 %v984
      %v999 = vpack.c.b16 %v993, %v992
      %v1000 = vpack.c.b16 %v995, %v994
      %v1001 = vpack.c.b16 %v997, %v996
      %v1002 = vpack.c.b16 %v998, %v998
      %v1004 = vsel %vm476, %v999, 0
      %v1007 = vsel %vm476, %v1000, 0
      %v1010 = vsel %vm476, %v1001, 0
      %v1013 = vsel %vm476, %v1002, 0
      %1015 = vmatprep.subr.bf16.mxu0 0
      %1016 = vmatpush1.bf16.msra.mxu0 0
      %1017 = vmatprep.subr.bf16.mxu0 0
      %1018 = vmatpush1.bf16.msra.mxu0 0
      %1019 = vmatprep.subr.bf16.mxu0 0
      %1020 = vmatpush1.bf16.msra.mxu0 0
      %1021 = vmatprep.subr.bf16.mxu0 0
      %1022 = vmatpush1.bf16.msra.mxu0 0
      %1023 = vmatprep.subr.bf16.mxu0 0
      %1024 = vmatpush1.bf16.msra.mxu0 0
      %1025 = vmatprep.subr.bf16.mxu0 0
      %1026 = vmatpush1.bf16.msra.mxu0 0
      %1027 = vmatprep.subr.bf16.mxu0 0
      %1028 = vmatpush1.bf16.msra.mxu0 %v494
      %1029 = vmatprep.subr.bf16.mxu0 0
      %1030 = vmatpush1.bf16.msra.mxu0 %v473
      %1031 = vmatprep.subr.bf16.mxu0 0
      %1032 = vmatpush2.bf16.msra.mxu0 0
      %1033 = vmatprep.subr.bf16.mxu0 0
      %1034 = vmatpush2.bf16.msra.mxu0 0
      %1035 = vmatprep.subr.bf16.mxu0 0
      %1036 = vmatpush2.bf16.msra.mxu0 0
      %1037 = vmatprep.subr.bf16.mxu0 0
      %1038 = vmatpush2.bf16.msra.mxu0 0
      %1039 = vmatprep.subr.bf16.mxu0 0
      %1040 = vmatpush2.bf16.msra.mxu0 0
      %1041 = vmatprep.subr.bf16.mxu0 0
      %1042 = vmatpush2.bf16.msra.mxu0 0
      %1043 = vmatprep.subr.bf16.mxu0 0
      %1044 = vmatpush2.bf16.msra.mxu0 0
      %1045 = vmatprep.subr.bf16.mxu0 0
      %1046 = vmatpush2.bf16.msra.mxu0 0
      %1047 = vmatprep.mubr.bf16.mxu0 0
      %1048 = vmatmul.mubr.bf16.gmra.mxu0 %v1004
      %v1049 = vpop.f32.mrf.mxu0
      %v1050 = vadd.f32 %v445, %v1049
      %v1051 = vpop.f32.mrf.mxu0
      %v1052 = vpop.f32.mrf.mxu0
      %v1053 = vadd.f32 %v445, %v1052
      %v1054 = vpop.f32.mrf.mxu0
      %1055 = vmatprep.mubr.bf16.mxu0 0
      %1056 = vmatmul.mubr.bf16.gmra.mxu0 %v1007
      %v1057 = vpop.f32.mrf.mxu0
      %v1058 = vadd.f32 %v445, %v1057
      %v1059 = vpop.f32.mrf.mxu0
      %v1060 = vpop.f32.mrf.mxu0
      %v1061 = vadd.f32 %v445, %v1060
      %v1062 = vpop.f32.mrf.mxu0
      %1063 = vmatprep.mubr.bf16.mxu0 0
      %1064 = vmatmul.mubr.bf16.gmra.mxu0 %v1010
      %v1065 = vpop.f32.mrf.mxu0
      %v1066 = vadd.f32 %v445, %v1065
      %v1067 = vpop.f32.mrf.mxu0
      %v1068 = vpop.f32.mrf.mxu0
      %v1069 = vadd.f32 %v445, %v1068
      %v1070 = vpop.f32.mrf.mxu0
      %1071 = vmatprep.mubr.bf16.mxu0 0
      %1072 = vmatmul.mubr.bf16.gmra.mxu0 %v1013
      %v1073 = vpop.f32.mrf.mxu0
      %v1074 = vadd.f32 %v445, %v1073
      %v1075 = vpop.f32.mrf.mxu0
      %v1076 = vpop.f32.mrf.mxu0
      %v1077 = vpop.f32.mrf.mxu0
      %1078 = vdwg.mxu0
      %vm1079 = vcmp.gt.f32.partialorder %v1050, 0.0
      %vm1080 = vcmp.gt.f32.partialorder %v1053, 0.0
      %vm1081 = vcmp.gt.f32.partialorder %v1058, 0.0
      %vm1082 = vcmp.gt.f32.partialorder %v1061, 0.0
      %vm1083 = vcmp.gt.f32.partialorder %v1066, 0.0
      %vm1084 = vcmp.gt.f32.partialorder %v1069, 0.0
      %vm1085 = vcmp.gt.f32.partialorder %v1074, 0.0
      %v1086 = vmul.f32 %v1050, 0.2
      %v1087 = vmul.f32 %v1053, 0.2
      %v1088 = vmul.f32 %v1058, 0.2
      %v1089 = vmul.f32 %v1061, 0.2
      %v1090 = vmul.f32 %v1066, 0.2
      %v1091 = vmul.f32 %v1069, 0.2
      %v1092 = vmul.f32 %v1074, 0.2
      %v1093 = vsel %vm1079, %v1050, %v1086
      %v1094 = vsel %vm1080, %v1053, %v1087
      %v1095 = vsel %vm1081, %v1058, %v1088
      %v1096 = vsel %vm1082, %v1061, %v1089
      %v1097 = vsel %vm1083, %v1066, %v1090
      %v1098 = vsel %vm1084, %v1069, %v1091
      %v1099 = vsel %vm1085, %v1074, %v1092
      %v1100 = vpack.c.bf16 %v1094, %v1093
      %v1101 = vpack.c.bf16 %v1096, %v1095
      %v1102 = vpack.c.bf16 %v1098, %v1097
      %v1103 = vpack.c.bf16 %v1099, %v1099
      %v1105 = vunpack.c.l.b16 %v1100
      %v1106 = vpack.c.b16 %v1105, %v1105
      %v1108 = vshrl.u32 %v1106, 16
      %v1110 = vrot.slane %v1108, 7
      %v1111 = vshll.u32 %v1106, 16
      %v1113 = vor.u32 %v1110, %v1111
      %s1115 = scalar_lea.vmem [#allocation2], 152
      %v1116 = vld [vmem:[%s1115] sm:$0xf]
      %v1117 = vsel %vm599, %v1113, %v1116
      %1118 = vst [vmem:[%s1115] sm:$0xf] %v1117
      %v1119 = vunpack.c.h.b16 %v1100
      %v1120 = vpack.c.b16 %v1119, %v1119
      %v1121 = vrot.slane %v1106, 7
      %v1122 = vrot.slane %v1121, 4
      %v1123 = vrot.slane %v1120, 7
      %v1124 = vsel %vm607, %v1122, %v1123
      %s1126 = scalar_lea.vmem [#allocation2], 160
      %v1127 = vld [vmem:[%s1126] sm:$0xf]
      %v1128 = vsel %vm599, %v1124, %v1127
      %1129 = vst [vmem:[%s1126] sm:$0xf] %v1128
      %v1131 = vunpack.c.l.b16 %v1101
      %v1132 = vpack.c.b16 %v1131, %v1131
      %v1134 = vshrl.u32 %v1120, 16
      %v1136 = vrot.slane %v1134, 6
      %v1137 = vshll.u32 %v1120, 16
      %v1139 = vrot.slane %v1137, 7
      %v1140 = vor.u32 %v1136, %v1139
      %v1141 = vrot.slane %v1140, 4
      %v1143 = vshrl.u32 %v1132, 16
      %v1145 = vrot.slane %v1143, 6
      %v1146 = vshll.u32 %v1132, 16
      %v1148 = vrot.slane %v1146, 7
      %v1149 = vor.u32 %v1145, %v1148
      %v1150 = vsel %vm622, %v1141, %v1149
      %s1152 = scalar_lea.vmem [#allocation2], 168
      %v1153 = vld [vmem:[%s1152] sm:$0xf]
      %v1154 = vsel %vm599, %v1150, %v1153
      %1155 = vst [vmem:[%s1152] sm:$0xf] %v1154
      %v1156 = vunpack.c.h.b16 %v1101
      %v1157 = vpack.c.b16 %v1156, %v1156
      %v1158 = vrot.slane %v1132, 6
      %v1159 = vrot.slane %v1158, 4
      %v1160 = vrot.slane %v1157, 6
      %v1161 = vsel %vm650, %v1159, %v1160
      %s1163 = scalar_lea.vmem [#allocation2], 176
      %v1164 = vld [vmem:[%s1163] sm:$0xf]
      %v1165 = vsel %vm599, %v1161, %v1164
      %1166 = vst [vmem:[%s1163] sm:$0xf] %v1165
      %v1168 = vunpack.c.l.b16 %v1102
      %v1169 = vpack.c.b16 %v1168, %v1168
      %v1171 = vshrl.u32 %v1157, 16
      %v1173 = vrot.slane %v1171, 5
      %v1174 = vshll.u32 %v1157, 16
      %v1176 = vrot.slane %v1174, 6
      %v1177 = vor.u32 %v1173, %v1176
      %v1178 = vrot.slane %v1177, 4
      %v1180 = vshrl.u32 %v1169, 16
      %v1182 = vrot.slane %v1180, 5
      %v1183 = vshll.u32 %v1169, 16
      %v1185 = vrot.slane %v1183, 6
      %v1186 = vor.u32 %v1182, %v1185
      %v1187 = vsel %vm665, %v1178, %v1186
      %s1189 = scalar_lea.vmem [#allocation2], 184
      %v1190 = vld [vmem:[%s1189] sm:$0xf]
      %v1191 = vsel %vm599, %v1187, %v1190
      %1192 = vst [vmem:[%s1189] sm:$0xf] %v1191
      %v1193 = vunpack.c.h.b16 %v1102
      %v1194 = vpack.c.b16 %v1193, %v1193
      %v1195 = vrot.slane %v1169, 5
      %v1196 = vrot.slane %v1195, 4
      %v1197 = vrot.slane %v1194, 5
      %v1198 = vsel %vm693, %v1196, %v1197
      %s1200 = scalar_lea.vmem [#allocation2], 192
      %v1201 = vld [vmem:[%s1200] sm:$0xf]
      %v1202 = vsel %vm599, %v1198, %v1201
      %1203 = vst [vmem:[%s1200] sm:$0xf] %v1202
      %v1205 = vunpack.c.l.b16 %v1103
      %v1206 = vpack.c.b16 %v1205, %v1205
      %v1208 = vshrl.u32 %v1194, 16
      %v1210 = vrot.slane %v1208, 4
      %v1211 = vshll.u32 %v1194, 16
      %v1213 = vrot.slane %v1211, 5
      %v1214 = vor.u32 %v1210, %v1213
      %v1215 = vrot.slane %v1214, 4
      %v1217 = vshll.u32 %v1206, 16
      %v1219 = vrot.slane %v1217, 5
      %v1220 = vsel %vm708, %v1215, %v1219
      %s1222 = scalar_lea.vmem [#allocation2], 200
      %v1223 = vld [vmem:[%s1222] sm:$0xf]
      %v1224 = vsel %vm599, %v1220, %v1223
      %1225 = vst [vmem:[%s1222] sm:$0xf] %v1224
      %s1226 = scalar_lea.vmem %s273, 84
      %v1227 = vld [vmem:[%s1226] sm:$0xf]
      %v1228 = vld [vmem:[%s1226 + $0x4] sm:$0xf]
      %v1229 = vld [vmem:[%s1226 + $0x8] sm:$0xf]
      %v1230 = vld [vmem:[%s1226 + $0xc] sm:$0xf]
      %v1231 = vld [vmem:[%s1226 + $0x10] sm:$0xf]
      %v1232 = vld [vmem:[%s1226 + $0x14] sm:$0xf]
      %v1233 = vld [vmem:[%s1226 + $0x18] sm:$0x1]
      %v1241 = vunpack.c.l.b16 %v1227
      %v1242 = vunpack.c.l.b16 %v1228
      %v1243 = vunpack.c.l.b16 %v1229
      %v1244 = vunpack.c.l.b16 %v1230
      %v1245 = vunpack.c.l.b16 %v1231
      %v1246 = vunpack.c.l.b16 %v1232
      %v1247 = vunpack.c.l.b16 %v1233
      %v1248 = vpack.c.b16 %v1242, %v1241
      %v1249 = vpack.c.b16 %v1244, %v1243
      %v1250 = vpack.c.b16 %v1246, %v1245
      %v1251 = vpack.c.b16 %v1247, %v1247
      %v1253 = vsel %vm476, %v1248, 0
      %v1256 = vsel %vm476, %v1249, 0
      %v1259 = vsel %vm476, %v1250, 0
      %v1262 = vsel %vm476, %v1251, 0
      %1264 = vmatprep.subr.bf16.mxu0 0
      %1265 = vmatpush1.bf16.msra.mxu0 0
      %1266 = vmatprep.subr.bf16.mxu0 0
      %1267 = vmatpush1.bf16.msra.mxu0 0
      %1268 = vmatprep.subr.bf16.mxu0 0
      %1269 = vmatpush1.bf16.msra.mxu0 0
      %1270 = vmatprep.subr.bf16.mxu0 0
      %1271 = vmatpush1.bf16.msra.mxu0 0
      %1272 = vmatprep.subr.bf16.mxu0 0
      %1273 = vmatpush1.bf16.msra.mxu0 0
      %1274 = vmatprep.subr.bf16.mxu0 0
      %1275 = vmatpush1.bf16.msra.mxu0 0
      %1276 = vmatprep.subr.bf16.mxu0 0
      %1277 = vmatpush1.bf16.msra.mxu0 %v494
      %1278 = vmatprep.subr.bf16.mxu0 0
      %1279 = vmatpush1.bf16.msra.mxu0 %v473
      %1280 = vmatprep.subr.bf16.mxu0 0
      %1281 = vmatpush2.bf16.msra.mxu0 0
      %1282 = vmatprep.subr.bf16.mxu0 0
      %1283 = vmatpush2.bf16.msra.mxu0 0
      %1284 = vmatprep.subr.bf16.mxu0 0
      %1285 = vmatpush2.bf16.msra.mxu0 0
      %1286 = vmatprep.subr.bf16.mxu0 0
      %1287 = vmatpush2.bf16.msra.mxu0 0
      %1288 = vmatprep.subr.bf16.mxu0 0
      %1289 = vmatpush2.bf16.msra.mxu0 0
      %1290 = vmatprep.subr.bf16.mxu0 0
      %1291 = vmatpush2.bf16.msra.mxu0 0
      %1292 = vmatprep.subr.bf16.mxu0 0
      %1293 = vmatpush2.bf16.msra.mxu0 0
      %1294 = vmatprep.subr.bf16.mxu0 0
      %1295 = vmatpush2.bf16.msra.mxu0 0
      %1296 = vmatprep.mubr.bf16.mxu0 0
      %1297 = vmatmul.mubr.bf16.gmra.mxu0 %v1253
      %v1298 = vpop.f32.mrf.mxu0
      %v1299 = vadd.f32 %v445, %v1298
      %v1300 = vpop.f32.mrf.mxu0
      %v1301 = vpop.f32.mrf.mxu0
      %v1302 = vadd.f32 %v445, %v1301
      %v1303 = vpop.f32.mrf.mxu0
      %1304 = vmatprep.mubr.bf16.mxu0 0
      %1305 = vmatmul.mubr.bf16.gmra.mxu0 %v1256
      %v1306 = vpop.f32.mrf.mxu0
      %v1307 = vadd.f32 %v445, %v1306
      %v1308 = vpop.f32.mrf.mxu0
      %v1309 = vpop.f32.mrf.mxu0
      %v1310 = vadd.f32 %v445, %v1309
      %v1311 = vpop.f32.mrf.mxu0
      %1312 = vmatprep.mubr.bf16.mxu0 0
      %1313 = vmatmul.mubr.bf16.gmra.mxu0 %v1259
      %v1314 = vpop.f32.mrf.mxu0
      %v1315 = vadd.f32 %v445, %v1314
      %v1316 = vpop.f32.mrf.mxu0
      %v1317 = vpop.f32.mrf.mxu0
      %v1318 = vadd.f32 %v445, %v1317
      %v1319 = vpop.f32.mrf.mxu0
      %1320 = vmatprep.mubr.bf16.mxu0 0
      %1321 = vmatmul.mubr.bf16.gmra.mxu0 %v1262
      %v1322 = vpop.f32.mrf.mxu0
      %v1323 = vadd.f32 %v445, %v1322
      %v1324 = vpop.f32.mrf.mxu0
      %v1325 = vpop.f32.mrf.mxu0
      %v1326 = vpop.f32.mrf.mxu0
      %1327 = vdwg.mxu0
      %vm1328 = vcmp.gt.f32.partialorder %v1299, 0.0
      %vm1329 = vcmp.gt.f32.partialorder %v1302, 0.0
      %vm1330 = vcmp.gt.f32.partialorder %v1307, 0.0
      %vm1331 = vcmp.gt.f32.partialorder %v1310, 0.0
      %vm1332 = vcmp.gt.f32.partialorder %v1315, 0.0
      %vm1333 = vcmp.gt.f32.partialorder %v1318, 0.0
      %vm1334 = vcmp.gt.f32.partialorder %v1323, 0.0
      %v1335 = vmul.f32 %v1299, 0.2
      %v1336 = vmul.f32 %v1302, 0.2
      %v1337 = vmul.f32 %v1307, 0.2
      %v1338 = vmul.f32 %v1310, 0.2
      %v1339 = vmul.f32 %v1315, 0.2
      %v1340 = vmul.f32 %v1318, 0.2
      %v1341 = vmul.f32 %v1323, 0.2
      %v1342 = vsel %vm1328, %v1299, %v1335
      %v1343 = vsel %vm1329, %v1302, %v1336
      %v1344 = vsel %vm1330, %v1307, %v1337
      %v1345 = vsel %vm1331, %v1310, %v1338
      %v1346 = vsel %vm1332, %v1315, %v1339
      %v1347 = vsel %vm1333, %v1318, %v1340
      %v1348 = vsel %vm1334, %v1323, %v1341
      %v1349 = vpack.c.bf16 %v1343, %v1342
      %v1350 = vpack.c.bf16 %v1345, %v1344
      %v1351 = vpack.c.bf16 %v1347, %v1346
      %v1352 = vpack.c.bf16 %v1348, %v1348
      %v1354 = vunpack.c.l.b16 %v1349
      %v1355 = vpack.c.b16 %v1354, %v1354
      %v1357 = vshrl.u32 %v1355, 16
      %v1359 = vrot.slane %v1357, 7
      %v1360 = vshll.u32 %v1355, 16
      %v1362 = vor.u32 %v1359, %v1360
      %s1364 = scalar_lea.vmem [#allocation2], 224
      %v1365 = vld [vmem:[%s1364] sm:$0xf]
      %v1366 = vsel %vm599, %v1362, %v1365
      %1367 = vst [vmem:[%s1364] sm:$0xf] %v1366
      %v1368 = vunpack.c.h.b16 %v1349
      %v1369 = vpack.c.b16 %v1368, %v1368
      %v1370 = vrot.slane %v1355, 7
      %v1371 = vrot.slane %v1370, 4
      %v1372 = vrot.slane %v1369, 7
      %v1373 = vsel %vm607, %v1371, %v1372
      %s1375 = scalar_lea.vmem [#allocation2], 232
      %v1376 = vld [vmem:[%s1375] sm:$0xf]
      %v1377 = vsel %vm599, %v1373, %v1376
      %1378 = vst [vmem:[%s1375] sm:$0xf] %v1377
      %v1380 = vunpack.c.l.b16 %v1350
      %v1381 = vpack.c.b16 %v1380, %v1380
      %v1383 = vshrl.u32 %v1369, 16
      %v1385 = vrot.slane %v1383, 6
      %v1386 = vshll.u32 %v1369, 16
      %v1388 = vrot.slane %v1386, 7
      %v1389 = vor.u32 %v1385, %v1388
      %v1390 = vrot.slane %v1389, 4
      %v1392 = vshrl.u32 %v1381, 16
      %v1394 = vrot.slane %v1392, 6
      %v1395 = vshll.u32 %v1381, 16
      %v1397 = vrot.slane %v1395, 7
      %v1398 = vor.u32 %v1394, %v1397
      %v1399 = vsel %vm622, %v1390, %v1398
      %s1401 = scalar_lea.vmem [#allocation2], 240
      %v1402 = vld [vmem:[%s1401] sm:$0xf]
      %v1403 = vsel %vm599, %v1399, %v1402
      %1404 = vst [vmem:[%s1401] sm:$0xf] %v1403
      %v1405 = vunpack.c.h.b16 %v1350
      %v1406 = vpack.c.b16 %v1405, %v1405
      %v1407 = vrot.slane %v1381, 6
      %v1408 = vrot.slane %v1407, 4
      %v1409 = vrot.slane %v1406, 6
      %v1410 = vsel %vm650, %v1408, %v1409
      %s1412 = scalar_lea.vmem [#allocation2], 248
      %v1413 = vld [vmem:[%s1412] sm:$0xf]
      %v1414 = vsel %vm599, %v1410, %v1413
      %1415 = vst [vmem:[%s1412] sm:$0xf] %v1414
      %v1417 = vunpack.c.l.b16 %v1351
      %v1418 = vpack.c.b16 %v1417, %v1417
      %v1420 = vshrl.u32 %v1406, 16
      %v1422 = vrot.slane %v1420, 5
      %v1423 = vshll.u32 %v1406, 16
      %v1425 = vrot.slane %v1423, 6
      %v1426 = vor.u32 %v1422, %v1425
      %v1427 = vrot.slane %v1426, 4
      %v1429 = vshrl.u32 %v1418, 16
      %v1431 = vrot.slane %v1429, 5
      %v1432 = vshll.u32 %v1418, 16
      %v1434 = vrot.slane %v1432, 6
      %v1435 = vor.u32 %v1431, %v1434
      %v1436 = vsel %vm665, %v1427, %v1435
      %s1438 = scalar_lea.vmem [#allocation2], 256
      %v1439 = vld [vmem:[%s1438] sm:$0xf]
      %v1440 = vsel %vm599, %v1436, %v1439
      %1441 = vst [vmem:[%s1438] sm:$0xf] %v1440
      %v1442 = vunpack.c.h.b16 %v1351
      %v1443 = vpack.c.b16 %v1442, %v1442
      %v1444 = vrot.slane %v1418, 5
      %v1445 = vrot.slane %v1444, 4
      %v1446 = vrot.slane %v1443, 5
      %v1447 = vsel %vm693, %v1445, %v1446
      %s1449 = scalar_lea.vmem [#allocation2], 264
      %v1450 = vld [vmem:[%s1449] sm:$0xf]
      %v1451 = vsel %vm599, %v1447, %v1450
      %1452 = vst [vmem:[%s1449] sm:$0xf] %v1451
      %v1454 = vunpack.c.l.b16 %v1352
      %v1455 = vpack.c.b16 %v1454, %v1454
      %v1457 = vshrl.u32 %v1443, 16
      %v1459 = vrot.slane %v1457, 4
      %v1460 = vshll.u32 %v1443, 16
      %v1462 = vrot.slane %v1460, 5
      %v1463 = vor.u32 %v1459, %v1462
      %v1464 = vrot.slane %v1463, 4
      %v1466 = vshll.u32 %v1455, 16
      %v1468 = vrot.slane %v1466, 5
      %v1469 = vsel %vm708, %v1464, %v1468
      %s1471 = scalar_lea.vmem [#allocation2], 272
      %v1472 = vld [vmem:[%s1471] sm:$0xf]
      %v1473 = vsel %vm599, %v1469, %v1472
      %1474 = vst [vmem:[%s1471] sm:$0xf] %v1473
      %v1475 = vld [vmem:[#allocation2] sm:$0xf]
      %v1476 = vld [vmem:[%s596] sm:$0xf]
      %v1477 = vld [vmem:[%s613] sm:$0xf]
      %v1478 = vld [vmem:[%s642] sm:$0xf]
      %v1479 = vld [vmem:[%s656] sm:$0xf]
      %v1480 = vld [vmem:[%s685] sm:$0xf]
      %v1481 = vld [vmem:[%s699] sm:$0xf]
      %v1483 = vunpack.c.l.b16 %v1476
      %v1484 = vpack.c.b16 %v1483, %v1483
      %v1486 = vshrl.u32 %v1484, 16
      %v1488 = vrot.slane %v1486, 4
      %v1489 = vshll.u32 %v1484, 16
      %v1491 = vrot.slane %v1489, 5
      %v1492 = vor.u32 %v1488, %v1491
      %v1495 = vunpack.c.l.b16 %v1477
      %v1496 = vpack.c.b16 %v1495, %v1495
      %v1497 = vrot.slane %v1496, 1
      %v1500 = vunpack.c.l.b16 %v1478
      %v1501 = vpack.c.b16 %v1500, %v1500
      %v1503 = vshrl.u32 %v1501, 16
      %v1505 = vrot.slane %v1503, 5
      %v1506 = vshll.u32 %v1501, 16
      %v1508 = vrot.slane %v1506, 6
      %v1509 = vor.u32 %v1505, %v1508
      %v1512 = vunpack.c.l.b16 %v1479
      %v1513 = vpack.c.b16 %v1512, %v1512
      %v1514 = vrot.slane %v1513, 2
      %v1517 = vunpack.c.l.b16 %v1480
      %v1518 = vpack.c.b16 %v1517, %v1517
      %v1520 = vshrl.u32 %v1518, 16
      %v1522 = vrot.slane %v1520, 6
      %v1523 = vshll.u32 %v1518, 16
      %v1525 = vrot.slane %v1523, 7
      %v1526 = vor.u32 %v1522, %v1525
      %v1529 = vunpack.c.l.b16 %v1481
      %v1530 = vpack.c.b16 %v1529, %v1529
      %v1531 = vrot.slane %v1530, 3
      %vm1532 = vcmask 1043456
      %vm1533 = vmand %vm1532, %vm706
      %v1534 = vsel %vm1533, %v1475, %v1492
      %vm1535 = vcmask 1046528
      %v1538 = vsel %vm1535, %v1534, %v1497
      %vm1539 = vmand %vm691, %vm663
      %v1540 = vsel %vm1539, %v1497, %v1509
      %vm1541 = vcmask 1045504
      %v1544 = vsel %vm1541, %v1540, %v1514
      %vm1545 = vmand %vm648, %vm620
      %v1546 = vsel %vm1545, %v1514, %v1526
      %v1549 = vsel %vm490, %v1546, %v1531
      %v1550 = vld [vmem:[%s3] sm:$0xf]
      %v1551 = vld [vmem:[%s3 + $0x4] sm:$0xf]
      %v1552 = vld [vmem:[%s3 + $0x8] sm:$0xf]
      %v1553 = vld [vmem:[%s3 + $0xc] sm:$0xf]
      %v1554 = vld [vmem:[%s3 + $0x10] sm:$0xf]
      %v1555 = vld [vmem:[%s3 + $0x14] sm:$0xf]
      %v1556 = vld [vmem:[%s3 + $0x18] sm:$0xf]
      %v1557 = vld [vmem:[%s3 + $0x1c] sm:$0xf]
      %v1558 = vld [vmem:[%s318] sm:$0xf]
      %v1559 = vld [vmem:[%s866] sm:$0xf]
      %v1560 = vld [vmem:[%s877] sm:$0xf]
      %v1561 = vld [vmem:[%s903] sm:$0xf]
      %v1562 = vld [vmem:[%s914] sm:$0xf]
      %v1563 = vld [vmem:[%s940] sm:$0xf]
      %v1564 = vld [vmem:[%s951] sm:$0xf]
      %v1566 = vunpack.c.l.b16 %v1559
      %v1567 = vpack.c.b16 %v1566, %v1566
      %v1569 = vshrl.u32 %v1567, 16
      %v1571 = vrot.slane %v1569, 4
      %v1572 = vshll.u32 %v1567, 16
      %v1574 = vrot.slane %v1572, 5
      %v1575 = vor.u32 %v1571, %v1574
      %v1578 = vunpack.c.l.b16 %v1560
      %v1579 = vpack.c.b16 %v1578, %v1578
      %v1580 = vrot.slane %v1579, 1
      %v1583 = vunpack.c.l.b16 %v1561
      %v1584 = vpack.c.b16 %v1583, %v1583
      %v1586 = vshrl.u32 %v1584, 16
      %v1588 = vrot.slane %v1586, 5
      %v1589 = vshll.u32 %v1584, 16
      %v1591 = vrot.slane %v1589, 6
      %v1592 = vor.u32 %v1588, %v1591
      %v1595 = vunpack.c.l.b16 %v1562
      %v1596 = vpack.c.b16 %v1595, %v1595
      %v1597 = vrot.slane %v1596, 2
      %v1600 = vunpack.c.l.b16 %v1563
      %v1601 = vpack.c.b16 %v1600, %v1600
      %v1603 = vshrl.u32 %v1601, 16
      %v1605 = vrot.slane %v1603, 6
      %v1606 = vshll.u32 %v1601, 16
      %v1608 = vrot.slane %v1606, 7
      %v1609 = vor.u32 %v1605, %v1608
      %v1612 = vunpack.c.l.b16 %v1564
      %v1613 = vpack.c.b16 %v1612, %v1612
      %v1614 = vrot.slane %v1613, 3
      %v1615 = vsel %vm1533, %v1558, %v1575
      %v1618 = vsel %vm1535, %v1615, %v1580
      %v1619 = vsel %vm1539, %v1580, %v1592
      %v1622 = vsel %vm1541, %v1619, %v1597
      %v1623 = vsel %vm1545, %v1597, %v1609
      %v1626 = vsel %vm490, %v1623, %v1614
      %s1627 = scalar_lea.vmem %s3, 32
      %v1628 = vld [vmem:[%s1627] sm:$0xf]
      %v1629 = vld [vmem:[%s1627 + $0x4] sm:$0xf]
      %v1630 = vld [vmem:[%s1627 + $0x8] sm:$0xf]
      %v1631 = vld [vmem:[%s1627 + $0xc] sm:$0xf]
      %v1632 = vld [vmem:[%s1627 + $0x10] sm:$0xf]
      %v1633 = vld [vmem:[%s1627 + $0x14] sm:$0xf]
      %v1634 = vld [vmem:[%s1627 + $0x18] sm:$0xf]
      %v1635 = vld [vmem:[%s1627 + $0x1c] sm:$0xf]
      %v1644 = vunpack.c.l.b16 %v1628
      %v1645 = vunpack.c.l.b16 %v1629
      %v1646 = vunpack.c.l.b16 %v1630
      %v1647 = vunpack.c.l.b16 %v1631
      %v1648 = vunpack.c.l.b16 %v1632
      %v1649 = vunpack.c.l.b16 %v1633
      %v1650 = vunpack.c.l.b16 %v1634
      %v1651 = vunpack.c.l.b16 %v1635
      %v1652 = vpack.c.b16 %v1645, %v1644
      %v1653 = vpack.c.b16 %v1647, %v1646
      %v1654 = vpack.c.b16 %v1649, %v1648
      %v1655 = vpack.c.b16 %v1651, %v1650
      %vm1660 = vcmask 523264
      %v1661 = vsel %vm1660, %v1618, 0
      %v1663 = vsel %vm1660, %v1622, 0
      %v1665 = vsel %vm1660, %v1626, 0
      %v1667 = vsel %vm1660, %v1614, 0
      %1669 = vmatprep.subr.bf16.mxu0 0
      %1670 = vmatpush1.bf16.msra.mxu0 0
      %1671 = vmatprep.subr.bf16.mxu0 0
      %1672 = vmatpush1.bf16.msra.mxu0 0
      %1673 = vmatprep.subr.bf16.mxu0 0
      %1674 = vmatpush1.bf16.msra.mxu0 0
      %1675 = vmatprep.subr.bf16.mxu0 0
      %1676 = vmatpush1.bf16.msra.mxu0 0
      %1677 = vmatprep.subr.bf16.mxu0 0
      %1678 = vmatpush1.bf16.msra.mxu0 %v1655
      %1679 = vmatprep.subr.bf16.mxu0 0
      %1680 = vmatpush1.bf16.msra.mxu0 %v1654
      %1681 = vmatprep.subr.bf16.mxu0 0
      %1682 = vmatpush1.bf16.msra.mxu0 %v1653
      %1683 = vmatprep.subr.bf16.mxu0 0
      %1684 = vmatpush1.bf16.msra.mxu0 %v1652
      %1685 = vmatprep.subr.bf16.mxu0 0
      %1686 = vmatpush2.bf16.msra.mxu0 0
      %1687 = vmatprep.subr.bf16.mxu0 0
      %1688 = vmatpush2.bf16.msra.mxu0 0
      %1689 = vmatprep.subr.bf16.mxu0 0
      %1690 = vmatpush2.bf16.msra.mxu0 0
      %1691 = vmatprep.subr.bf16.mxu0 0
      %1692 = vmatpush2.bf16.msra.mxu0 0
      %1693 = vmatprep.subr.bf16.mxu0 0
      %1694 = vmatpush2.bf16.msra.mxu0 0
      %1695 = vmatprep.subr.bf16.mxu0 0
      %1696 = vmatpush2.bf16.msra.mxu0 0
      %1697 = vmatprep.subr.bf16.mxu0 0
      %1698 = vmatpush2.bf16.msra.mxu0 0
      %1699 = vmatprep.subr.bf16.mxu0 0
      %1700 = vmatpush2.bf16.msra.mxu0 0
      %1701 = vmatprep.mubr.bf16.mxu0 0
      %1702 = vmatmul.mubr.bf16.gmra.mxu0 %v1661
      %v1703 = vpop.f32.mrf.mxu0
      %v1704 = vadd.f32 0.0, %v1703
      %v1705 = vpop.f32.mrf.mxu0
      %v1706 = vpop.f32.mrf.mxu0
      %v1707 = vadd.f32 0.0, %v1706
      %v1708 = vpop.f32.mrf.mxu0
      %1709 = vmatprep.mubr.bf16.mxu0 0
      %1710 = vmatmul.mubr.bf16.gmra.mxu0 %v1663
      %v1711 = vpop.f32.mrf.mxu0
      %v1712 = vadd.f32 0.0, %v1711
      %v1713 = vpop.f32.mrf.mxu0
      %v1714 = vpop.f32.mrf.mxu0
      %v1715 = vadd.f32 0.0, %v1714
      %v1716 = vpop.f32.mrf.mxu0
      %1717 = vmatprep.mubr.bf16.mxu0 0
      %1718 = vmatmul.mubr.bf16.gmra.mxu0 %v1665
      %v1719 = vpop.f32.mrf.mxu0
      %v1720 = vadd.f32 0.0, %v1719
      %v1721 = vpop.f32.mrf.mxu0
      %v1722 = vpop.f32.mrf.mxu0
      %v1723 = vadd.f32 0.0, %v1722
      %v1724 = vpop.f32.mrf.mxu0
      %1725 = vmatprep.mubr.bf16.mxu0 0
      %1726 = vmatmul.mubr.bf16.gmra.mxu0 %v1667
      %v1727 = vpop.f32.mrf.mxu0
      %v1728 = vadd.f32 0.0, %v1727
      %v1729 = vpop.f32.mrf.mxu0
      %v1730 = vpop.f32.mrf.mxu0
      %v1731 = vpop.f32.mrf.mxu0
      %1732 = vdwg.mxu0
      %v1741 = vunpack.c.l.b16 %v1550
      %v1742 = vunpack.c.l.b16 %v1551
      %v1743 = vunpack.c.l.b16 %v1552
      %v1744 = vunpack.c.l.b16 %v1553
      %v1745 = vunpack.c.l.b16 %v1554
      %v1746 = vunpack.c.l.b16 %v1555
      %v1747 = vunpack.c.l.b16 %v1556
      %v1748 = vunpack.c.l.b16 %v1557
      %v1749 = vpack.c.b16 %v1742, %v1741
      %v1750 = vpack.c.b16 %v1744, %v1743
      %v1751 = vpack.c.b16 %v1746, %v1745
      %v1752 = vpack.c.b16 %v1748, %v1747
      %v1757 = vsel %vm1660, %v1538, 0
      %v1759 = vsel %vm1660, %v1544, 0
      %v1761 = vsel %vm1660, %v1549, 0
      %v1763 = vsel %vm1660, %v1531, 0
      %1765 = vmatprep.subr.bf16.mxu0 0
      %1766 = vmatpush1.bf16.msra.mxu0 0
      %1767 = vmatprep.subr.bf16.mxu0 0
      %1768 = vmatpush1.bf16.msra.mxu0 0
      %1769 = vmatprep.subr.bf16.mxu0 0
      %1770 = vmatpush1.bf16.msra.mxu0 0
      %1771 = vmatprep.subr.bf16.mxu0 0
      %1772 = vmatpush1.bf16.msra.mxu0 0
      %1773 = vmatprep.subr.bf16.mxu0 0
      %1774 = vmatpush1.bf16.msra.mxu0 %v1752
      %1775 = vmatprep.subr.bf16.mxu0 0
      %1776 = vmatpush1.bf16.msra.mxu0 %v1751
      %1777 = vmatprep.subr.bf16.mxu0 0
      %1778 = vmatpush1.bf16.msra.mxu0 %v1750
      %1779 = vmatprep.subr.bf16.mxu0 0
      %1780 = vmatpush1.bf16.msra.mxu0 %v1749
      %1781 = vmatprep.subr.bf16.mxu0 0
      %1782 = vmatpush2.bf16.msra.mxu0 0
      %1783 = vmatprep.subr.bf16.mxu0 0
      %1784 = vmatpush2.bf16.msra.mxu0 0
      %1785 = vmatprep.subr.bf16.mxu0 0
      %1786 = vmatpush2.bf16.msra.mxu0 0
      %1787 = vmatprep.subr.bf16.mxu0 0
      %1788 = vmatpush2.bf16.msra.mxu0 0
      %1789 = vmatprep.subr.bf16.mxu0 0
      %1790 = vmatpush2.bf16.msra.mxu0 0
      %1791 = vmatprep.subr.bf16.mxu0 0
      %1792 = vmatpush2.bf16.msra.mxu0 0
      %1793 = vmatprep.subr.bf16.mxu0 0
      %1794 = vmatpush2.bf16.msra.mxu0 0
      %1795 = vmatprep.subr.bf16.mxu0 0
      %1796 = vmatpush2.bf16.msra.mxu0 0
      %1797 = vmatprep.mubr.bf16.mxu0 0
      %1798 = vmatmul.mubr.bf16.gmra.mxu0 %v1757
      %v1799 = vpop.f32.mrf.mxu0
      %v1800 = vadd.f32 %v1704, %v1799
      %v1801 = vpop.f32.mrf.mxu0
      %v1802 = vpop.f32.mrf.mxu0
      %v1803 = vadd.f32 %v1707, %v1802
      %v1804 = vpop.f32.mrf.mxu0
      %1805 = vmatprep.mubr.bf16.mxu0 0
      %1806 = vmatmul.mubr.bf16.gmra.mxu0 %v1759
      %v1807 = vpop.f32.mrf.mxu0
      %v1808 = vadd.f32 %v1712, %v1807
      %v1809 = vpop.f32.mrf.mxu0
      %v1810 = vpop.f32.mrf.mxu0
      %v1811 = vadd.f32 %v1715, %v1810
      %v1812 = vpop.f32.mrf.mxu0
      %1813 = vmatprep.mubr.bf16.mxu0 0
      %1814 = vmatmul.mubr.bf16.gmra.mxu0 %v1761
      %v1815 = vpop.f32.mrf.mxu0
      %v1816 = vadd.f32 %v1720, %v1815
      %v1817 = vpop.f32.mrf.mxu0
      %v1818 = vpop.f32.mrf.mxu0
      %v1819 = vadd.f32 %v1723, %v1818
      %v1820 = vpop.f32.mrf.mxu0
      %1821 = vmatprep.mubr.bf16.mxu0 0
      %1822 = vmatmul.mubr.bf16.gmra.mxu0 %v1763
      %v1823 = vpop.f32.mrf.mxu0
      %v1824 = vadd.f32 %v1728, %v1823
      %v1825 = vpop.f32.mrf.mxu0
      %v1826 = vpop.f32.mrf.mxu0
      %v1827 = vpop.f32.mrf.mxu0
      %1828 = vdwg.mxu0
      %v1830 = vunpack.c.l.b16 %v1475
      %v1831 = vpack.c.b16 %v1830, %v1830
      %v1833 = vshrl.u32 %v1831, 16
      %v1835 = vshll.u32 %v1831, 16
      %v1837 = vrot.slane %v1835, 1
      %v1838 = vor.u32 %v1833, %v1837
      %v1840 = vrot.slane %v1484, 5
      %v1843 = vshrl.u32 %v1496, 16
      %v1845 = vrot.slane %v1843, 1
      %v1846 = vshll.u32 %v1496, 16
      %v1848 = vrot.slane %v1846, 2
      %v1849 = vor.u32 %v1845, %v1848
      %v1851 = vrot.slane %v1501, 6
      %v1854 = vshrl.u32 %v1513, 16
      %v1856 = vrot.slane %v1854, 2
      %v1857 = vshll.u32 %v1513, 16
      %v1859 = vrot.slane %v1857, 3
      %v1860 = vor.u32 %v1856, %v1859
      %v1862 = vrot.slane %v1518, 7
      %v1865 = vshrl.u32 %v1530, 16
      %v1867 = vrot.slane %v1865, 3
      %v1868 = vshll.u32 %v1530, 16
      %v1870 = vrot.slane %v1868, 4
      %v1871 = vor.u32 %v1867, %v1870
      %v1872 = vsel %vm1533, %v1838, %v1840
      %v1875 = vsel %vm1535, %v1872, %v1849
      %v1876 = vsel %vm1539, %v1849, %v1851
      %v1879 = vsel %vm1541, %v1876, %v1860
      %v1880 = vsel %vm1545, %v1860, %v1862
      %v1883 = vsel %vm490, %v1880, %v1871
      %s1884 = scalar_lea.vmem %s3, 64
      %v1885 = vld [vmem:[%s1884] sm:$0xf]
      %v1886 = vld [vmem:[%s1884 + $0x4] sm:$0xf]
      %v1887 = vld [vmem:[%s1884 + $0x8] sm:$0xf]
      %v1888 = vld [vmem:[%s1884 + $0xc] sm:$0xf]
      %v1889 = vld [vmem:[%s1884 + $0x10] sm:$0xf]
      %v1890 = vld [vmem:[%s1884 + $0x14] sm:$0xf]
      %v1891 = vld [vmem:[%s1884 + $0x18] sm:$0xf]
      %v1892 = vld [vmem:[%s1884 + $0x1c] sm:$0xf]
      %v1901 = vunpack.c.l.b16 %v1885
      %v1902 = vunpack.c.l.b16 %v1886
      %v1903 = vunpack.c.l.b16 %v1887
      %v1904 = vunpack.c.l.b16 %v1888
      %v1905 = vunpack.c.l.b16 %v1889
      %v1906 = vunpack.c.l.b16 %v1890
      %v1907 = vunpack.c.l.b16 %v1891
      %v1908 = vunpack.c.l.b16 %v1892
      %v1909 = vpack.c.b16 %v1902, %v1901
      %v1910 = vpack.c.b16 %v1904, %v1903
      %v1911 = vpack.c.b16 %v1906, %v1905
      %v1912 = vpack.c.b16 %v1908, %v1907
      %v1917 = vsel %vm1660, %v1875, 0
      %v1919 = vsel %vm1660, %v1879, 0
      %v1921 = vsel %vm1660, %v1883, 0
      %v1924 = vsel %vm1660, %v1867, 0
      %1926 = vmatprep.subr.bf16.mxu0 0
      %1927 = vmatpush1.bf16.msra.mxu0 0
      %1928 = vmatprep.subr.bf16.mxu0 0
      %1929 = vmatpush1.bf16.msra.mxu0 0
      %1930 = vmatprep.subr.bf16.mxu0 0
      %1931 = vmatpush1.bf16.msra.mxu0 0
      %1932 = vmatprep.subr.bf16.mxu0 0
      %1933 = vmatpush1.bf16.msra.mxu0 0
      %1934 = vmatprep.subr.bf16.mxu0 0
      %1935 = vmatpush1.bf16.msra.mxu0 %v1912
      %1936 = vmatprep.subr.bf16.mxu0 0
      %1937 = vmatpush1.bf16.msra.mxu0 %v1911
      %1938 = vmatprep.subr.bf16.mxu0 0
      %1939 = vmatpush1.bf16.msra.mxu0 %v1910
      %1940 = vmatprep.subr.bf16.mxu0 0
      %1941 = vmatpush1.bf16.msra.mxu0 %v1909
      %1942 = vmatprep.subr.bf16.mxu0 0
      %1943 = vmatpush2.bf16.msra.mxu0 0
      %1944 = vmatprep.subr.bf16.mxu0 0
      %1945 = vmatpush2.bf16.msra.mxu0 0
      %1946 = vmatprep.subr.bf16.mxu0 0
      %1947 = vmatpush2.bf16.msra.mxu0 0
      %1948 = vmatprep.subr.bf16.mxu0 0
      %1949 = vmatpush2.bf16.msra.mxu0 0
      %1950 = vmatprep.subr.bf16.mxu0 0
      %1951 = vmatpush2.bf16.msra.mxu0 0
      %1952 = vmatprep.subr.bf16.mxu0 0
      %1953 = vmatpush2.bf16.msra.mxu0 0
      %1954 = vmatprep.subr.bf16.mxu0 0
      %1955 = vmatpush2.bf16.msra.mxu0 0
      %1956 = vmatprep.subr.bf16.mxu0 0
      %1957 = vmatpush2.bf16.msra.mxu0 0
      %1958 = vmatprep.mubr.bf16.mxu0 0
      %1959 = vmatmul.mubr.bf16.gmra.mxu0 %v1917
      %v1960 = vpop.f32.mrf.mxu0
      %v1961 = vadd.f32 0.0, %v1960
      %v1962 = vpop.f32.mrf.mxu0
      %v1963 = vpop.f32.mrf.mxu0
      %v1964 = vadd.f32 0.0, %v1963
      %v1965 = vpop.f32.mrf.mxu0
      %1966 = vmatprep.mubr.bf16.mxu0 0
      %1967 = vmatmul.mubr.bf16.gmra.mxu0 %v1919
      %v1968 = vpop.f32.mrf.mxu0
      %v1969 = vadd.f32 0.0, %v1968
      %v1970 = vpop.f32.mrf.mxu0
      %v1971 = vpop.f32.mrf.mxu0
      %v1972 = vadd.f32 0.0, %v1971
      %v1973 = vpop.f32.mrf.mxu0
      %1974 = vmatprep.mubr.bf16.mxu0 0
      %1975 = vmatmul.mubr.bf16.gmra.mxu0 %v1921
      %v1976 = vpop.f32.mrf.mxu0
      %v1977 = vadd.f32 0.0, %v1976
      %v1978 = vpop.f32.mrf.mxu0
      %v1979 = vpop.f32.mrf.mxu0
      %v1980 = vadd.f32 0.0, %v1979
      %v1981 = vpop.f32.mrf.mxu0
      %1982 = vmatprep.mubr.bf16.mxu0 0
      %1983 = vmatmul.mubr.bf16.gmra.mxu0 %v1924
      %v1984 = vpop.f32.mrf.mxu0
      %v1985 = vadd.f32 0.0, %v1984
      %v1986 = vpop.f32.mrf.mxu0
      %v1987 = vpop.f32.mrf.mxu0
      %v1988 = vpop.f32.mrf.mxu0
      %1989 = vdwg.mxu0
      %v1990 = vadd.f32 %v1800, %v1961
      %v1991 = vadd.f32 %v1803, %v1964
      %v1992 = vadd.f32 %v1808, %v1969
      %v1993 = vadd.f32 %v1811, %v1972
      %v1994 = vadd.f32 %v1816, %v1977
      %v1995 = vadd.f32 %v1819, %v1980
      %v1996 = vadd.f32 %v1824, %v1985
      %v1998 = vunpack.c.l.b16 %v1558
      %v1999 = vpack.c.b16 %v1998, %v1998
      %v2001 = vshrl.u32 %v1999, 16
      %v2003 = vshll.u32 %v1999, 16
      %v2005 = vrot.slane %v2003, 1
      %v2006 = vor.u32 %v2001, %v2005
      %v2008 = vrot.slane %v1567, 5
      %v2011 = vshrl.u32 %v1579, 16
      %v2013 = vrot.slane %v2011, 1
      %v2014 = vshll.u32 %v1579, 16
      %v2016 = vrot.slane %v2014, 2
      %v2017 = vor.u32 %v2013, %v2016
      %v2019 = vrot.slane %v1584, 6
      %v2022 = vshrl.u32 %v1596, 16
      %v2024 = vrot.slane %v2022, 2
      %v2025 = vshll.u32 %v1596, 16
      %v2027 = vrot.slane %v2025, 3
      %v2028 = vor.u32 %v2024, %v2027
      %v2030 = vrot.slane %v1601, 7
      %v2033 = vshrl.u32 %v1613, 16
      %v2035 = vrot.slane %v2033, 3
      %v2036 = vshll.u32 %v1613, 16
      %v2038 = vrot.slane %v2036, 4
      %v2039 = vor.u32 %v2035, %v2038
      %v2040 = vsel %vm1533, %v2006, %v2008
      %v2043 = vsel %vm1535, %v2040, %v2017
      %v2044 = vsel %vm1539, %v2017, %v2019
      %v2047 = vsel %vm1541, %v2044, %v2028
      %v2048 = vsel %vm1545, %v2028, %v2030
      %v2051 = vsel %vm490, %v2048, %v2039
      %s2052 = scalar_lea.vmem %s3, 96
      %v2053 = vld [vmem:[%s2052] sm:$0xf]
      %v2054 = vld [vmem:[%s2052 + $0x4] sm:$0xf]
      %v2055 = vld [vmem:[%s2052 + $0x8] sm:$0xf]
      %v2056 = vld [vmem:[%s2052 + $0xc] sm:$0xf]
      %v2057 = vld [vmem:[%s2052 + $0x10] sm:$0xf]
      %v2058 = vld [vmem:[%s2052 + $0x14] sm:$0xf]
      %v2059 = vld [vmem:[%s2052 + $0x18] sm:$0xf]
      %v2060 = vld [vmem:[%s2052 + $0x1c] sm:$0xf]
      %v2069 = vunpack.c.l.b16 %v2053
      %v2070 = vunpack.c.l.b16 %v2054
      %v2071 = vunpack.c.l.b16 %v2055
      %v2072 = vunpack.c.l.b16 %v2056
      %v2073 = vunpack.c.l.b16 %v2057
      %v2074 = vunpack.c.l.b16 %v2058
      %v2075 = vunpack.c.l.b16 %v2059
      %v2076 = vunpack.c.l.b16 %v2060
      %v2077 = vpack.c.b16 %v2070, %v2069
      %v2078 = vpack.c.b16 %v2072, %v2071
      %v2079 = vpack.c.b16 %v2074, %v2073
      %v2080 = vpack.c.b16 %v2076, %v2075
      %v2085 = vsel %vm1660, %v2043, 0
      %v2087 = vsel %vm1660, %v2047, 0
      %v2089 = vsel %vm1660, %v2051, 0
      %v2092 = vsel %vm1660, %v2035, 0
      %2094 = vmatprep.subr.bf16.mxu0 0
      %2095 = vmatpush1.bf16.msra.mxu0 0
      %2096 = vmatprep.subr.bf16.mxu0 0
      %2097 = vmatpush1.bf16.msra.mxu0 0
      %2098 = vmatprep.subr.bf16.mxu0 0
      %2099 = vmatpush1.bf16.msra.mxu0 0
      %2100 = vmatprep.subr.bf16.mxu0 0
      %2101 = vmatpush1.bf16.msra.mxu0 0
      %2102 = vmatprep.subr.bf16.mxu0 0
      %2103 = vmatpush1.bf16.msra.mxu0 %v2080
      %2104 = vmatprep.subr.bf16.mxu0 0
      %2105 = vmatpush1.bf16.msra.mxu0 %v2079
      %2106 = vmatprep.subr.bf16.mxu0 0
      %2107 = vmatpush1.bf16.msra.mxu0 %v2078
      %2108 = vmatprep.subr.bf16.mxu0 0
      %2109 = vmatpush1.bf16.msra.mxu0 %v2077
      %2110 = vmatprep.subr.bf16.mxu0 0
      %2111 = vmatpush2.bf16.msra.mxu0 0
      %2112 = vmatprep.subr.bf16.mxu0 0
      %2113 = vmatpush2.bf16.msra.mxu0 0
      %2114 = vmatprep.subr.bf16.mxu0 0
      %2115 = vmatpush2.bf16.msra.mxu0 0
      %2116 = vmatprep.subr.bf16.mxu0 0
      %2117 = vmatpush2.bf16.msra.mxu0 0
      %2118 = vmatprep.subr.bf16.mxu0 0
      %2119 = vmatpush2.bf16.msra.mxu0 0
      %2120 = vmatprep.subr.bf16.mxu0 0
      %2121 = vmatpush2.bf16.msra.mxu0 0
      %2122 = vmatprep.subr.bf16.mxu0 0
      %2123 = vmatpush2.bf16.msra.mxu0 0
      %2124 = vmatprep.subr.bf16.mxu0 0
      %2125 = vmatpush2.bf16.msra.mxu0 0
      %2126 = vmatprep.mubr.bf16.mxu0 0
      %2127 = vmatmul.mubr.bf16.gmra.mxu0 %v2085
      %v2128 = vpop.f32.mrf.mxu0
      %v2129 = vadd.f32 0.0, %v2128
      %v2130 = vpop.f32.mrf.mxu0
      %v2131 = vpop.f32.mrf.mxu0
      %v2132 = vadd.f32 0.0, %v2131
      %v2133 = vpop.f32.mrf.mxu0
      %2134 = vmatprep.mubr.bf16.mxu0 0
      %2135 = vmatmul.mubr.bf16.gmra.mxu0 %v2087
      %v2136 = vpop.f32.mrf.mxu0
      %v2137 = vadd.f32 0.0, %v2136
      %v2138 = vpop.f32.mrf.mxu0
      %v2139 = vpop.f32.mrf.mxu0
      %v2140 = vadd.f32 0.0, %v2139
      %v2141 = vpop.f32.mrf.mxu0
      %2142 = vmatprep.mubr.bf16.mxu0 0
      %2143 = vmatmul.mubr.bf16.gmra.mxu0 %v2089
      %v2144 = vpop.f32.mrf.mxu0
      %v2145 = vadd.f32 0.0, %v2144
      %v2146 = vpop.f32.mrf.mxu0
      %v2147 = vpop.f32.mrf.mxu0
      %v2148 = vadd.f32 0.0, %v2147
      %v2149 = vpop.f32.mrf.mxu0
      %2150 = vmatprep.mubr.bf16.mxu0 0
      %2151 = vmatmul.mubr.bf16.gmra.mxu0 %v2092
      %v2152 = vpop.f32.mrf.mxu0
      %v2153 = vadd.f32 0.0, %v2152
      %v2154 = vpop.f32.mrf.mxu0
      %v2155 = vpop.f32.mrf.mxu0
      %v2156 = vpop.f32.mrf.mxu0
      %2157 = vdwg.mxu0
      %v2158 = vadd.f32 %v1990, %v2129
      %v2159 = vadd.f32 %v1991, %v2132
      %v2160 = vadd.f32 %v1992, %v2137
      %v2161 = vadd.f32 %v1993, %v2140
      %v2162 = vadd.f32 %v1994, %v2145
      %v2163 = vadd.f32 %v1995, %v2148
      %v2164 = vadd.f32 %v1996, %v2153
      %v2165 = vld [vmem:[#allocation2] sm:$0xe]
      %v2166 = vld [vmem:[#allocation2 + $0x4] sm:$0x1]
      %v2167 = vld [vmem:[%s596] sm:$0xe]
      %v2168 = vld [vmem:[%s596 + $0x4] sm:$0x1]
      %v2169 = vld [vmem:[%s613] sm:$0xe]
      %v2170 = vld [vmem:[%s613 + $0x4] sm:$0x1]
      %v2171 = vld [vmem:[%s642] sm:$0xe]
      %v2172 = vld [vmem:[%s642 + $0x4] sm:$0x1]
      %v2173 = vld [vmem:[%s656] sm:$0xe]
      %v2174 = vld [vmem:[%s656 + $0x4] sm:$0x1]
      %v2175 = vld [vmem:[%s685] sm:$0xe]
      %v2176 = vld [vmem:[%s685 + $0x4] sm:$0x1]
      %v2177 = vld [vmem:[%s699] sm:$0xe]
      %v2178 = vld [vmem:[%s699 + $0x4] sm:$0x1]
      %v2181 = vunpack.c.l.b16 %v2165
      %v2182 = vunpack.c.l.b16 %v2166
      %v2183 = vpack.c.b16 %v2182, %v2181
      %v2184 = vrot.slane %v2183, 1
      %v2188 = vunpack.c.l.b16 %v2167
      %v2189 = vunpack.c.l.b16 %v2168
      %v2190 = vpack.c.b16 %v2189, %v2188
      %v2192 = vshrl.u32 %v2190, 16
      %v2194 = vrot.slane %v2192, 5
      %v2195 = vshll.u32 %v2190, 16
      %v2197 = vrot.slane %v2195, 6
      %v2198 = vor.u32 %v2194, %v2197
      %v2202 = vunpack.c.l.b16 %v2169
      %v2203 = vunpack.c.l.b16 %v2170
      %v2204 = vpack.c.b16 %v2203, %v2202
      %v2205 = vrot.slane %v2204, 2
      %v2209 = vunpack.c.l.b16 %v2171
      %v2210 = vunpack.c.l.b16 %v2172
      %v2211 = vpack.c.b16 %v2210, %v2209
      %v2213 = vshrl.u32 %v2211, 16
      %v2215 = vrot.slane %v2213, 6
      %v2216 = vshll.u32 %v2211, 16
      %v2218 = vrot.slane %v2216, 7
      %v2219 = vor.u32 %v2215, %v2218
      %v2223 = vunpack.c.l.b16 %v2173
      %v2224 = vunpack.c.l.b16 %v2174
      %v2225 = vpack.c.b16 %v2224, %v2223
      %v2226 = vrot.slane %v2225, 3
      %v2230 = vunpack.c.l.b16 %v2175
      %v2231 = vunpack.c.l.b16 %v2176
      %v2232 = vpack.c.b16 %v2231, %v2230
      %v2234 = vshrl.u32 %v2232, 16
      %v2236 = vrot.slane %v2234, 7
      %v2237 = vshll.u32 %v2232, 16
      %v2239 = vor.u32 %v2236, %v2237
      %v2243 = vunpack.c.l.b16 %v2177
      %v2244 = vunpack.c.l.b16 %v2178
      %v2245 = vpack.c.b16 %v2243, %v2243
      %v2246 = vpack.c.b16 %v2244, %v2244
      %v2247 = vsel %vm1533, %v2184, %v2198
      %v2250 = vsel %vm1535, %v2247, %v2205
      %v2251 = vsel %vm1539, %v2205, %v2219
      %v2254 = vsel %vm1541, %v2251, %v2226
      %v2255 = vsel %vm1545, %v2226, %v2239
      %v2258 = vsel %vm490, %v2255, %v2245
      %s2259 = scalar_lea.vmem %s3, 128
      %v2260 = vld [vmem:[%s2259] sm:$0xf]
      %v2261 = vld [vmem:[%s2259 + $0x4] sm:$0xf]
      %v2262 = vld [vmem:[%s2259 + $0x8] sm:$0xf]
      %v2263 = vld [vmem:[%s2259 + $0xc] sm:$0xf]
      %v2264 = vld [vmem:[%s2259 + $0x10] sm:$0xf]
      %v2265 = vld [vmem:[%s2259 + $0x14] sm:$0xf]
      %v2266 = vld [vmem:[%s2259 + $0x18] sm:$0xf]
      %v2267 = vld [vmem:[%s2259 + $0x1c] sm:$0xf]
      %v2276 = vunpack.c.l.b16 %v2260
      %v2277 = vunpack.c.l.b16 %v2261
      %v2278 = vunpack.c.l.b16 %v2262
      %v2279 = vunpack.c.l.b16 %v2263
      %v2280 = vunpack.c.l.b16 %v2264
      %v2281 = vunpack.c.l.b16 %v2265
      %v2282 = vunpack.c.l.b16 %v2266
      %v2283 = vunpack.c.l.b16 %v2267
      %v2284 = vpack.c.b16 %v2277, %v2276
      %v2285 = vpack.c.b16 %v2279, %v2278
      %v2286 = vpack.c.b16 %v2281, %v2280
      %v2287 = vpack.c.b16 %v2283, %v2282
      %v2292 = vsel %vm1660, %v2250, 0
      %v2294 = vsel %vm1660, %v2254, 0
      %v2296 = vsel %vm1660, %v2258, 0
      %v2299 = vsel %vm1660, %v2246, 0
      %2301 = vmatprep.subr.bf16.mxu0 0
      %2302 = vmatpush1.bf16.msra.mxu0 0
      %2303 = vmatprep.subr.bf16.mxu0 0
      %2304 = vmatpush1.bf16.msra.mxu0 0
      %2305 = vmatprep.subr.bf16.mxu0 0
      %2306 = vmatpush1.bf16.msra.mxu0 0
      %2307 = vmatprep.subr.bf16.mxu0 0
      %2308 = vmatpush1.bf16.msra.mxu0 0
      %2309 = vmatprep.subr.bf16.mxu0 0
      %2310 = vmatpush1.bf16.msra.mxu0 %v2287
      %2311 = vmatprep.subr.bf16.mxu0 0
      %2312 = vmatpush1.bf16.msra.mxu0 %v2286
      %2313 = vmatprep.subr.bf16.mxu0 0
      %2314 = vmatpush1.bf16.msra.mxu0 %v2285
      %2315 = vmatprep.subr.bf16.mxu0 0
      %2316 = vmatpush1.bf16.msra.mxu0 %v2284
      %2317 = vmatprep.subr.bf16.mxu0 0
      %2318 = vmatpush2.bf16.msra.mxu0 0
      %2319 = vmatprep.subr.bf16.mxu0 0
      %2320 = vmatpush2.bf16.msra.mxu0 0
      %2321 = vmatprep.subr.bf16.mxu0 0
      %2322 = vmatpush2.bf16.msra.mxu0 0
      %2323 = vmatprep.subr.bf16.mxu0 0
      %2324 = vmatpush2.bf16.msra.mxu0 0
      %2325 = vmatprep.subr.bf16.mxu0 0
      %2326 = vmatpush2.bf16.msra.mxu0 0
      %2327 = vmatprep.subr.bf16.mxu0 0
      %2328 = vmatpush2.bf16.msra.mxu0 0
      %2329 = vmatprep.subr.bf16.mxu0 0
      %2330 = vmatpush2.bf16.msra.mxu0 0
      %2331 = vmatprep.subr.bf16.mxu0 0
      %2332 = vmatpush2.bf16.msra.mxu0 0
      %2333 = vmatprep.mubr.bf16.mxu0 0
      %2334 = vmatmul.mubr.bf16.gmra.mxu0 %v2292
      %v2335 = vpop.f32.mrf.mxu0
      %v2336 = vadd.f32 0.0, %v2335
      %v2337 = vpop.f32.mrf.mxu0
      %v2338 = vpop.f32.mrf.mxu0
      %v2339 = vadd.f32 0.0, %v2338
      %v2340 = vpop.f32.mrf.mxu0
      %2341 = vmatprep.mubr.bf16.mxu0 0
      %2342 = vmatmul.mubr.bf16.gmra.mxu0 %v2294
      %v2343 = vpop.f32.mrf.mxu0
      %v2344 = vadd.f32 0.0, %v2343
      %v2345 = vpop.f32.mrf.mxu0
      %v2346 = vpop.f32.mrf.mxu0
      %v2347 = vadd.f32 0.0, %v2346
      %v2348 = vpop.f32.mrf.mxu0
      %2349 = vmatprep.mubr.bf16.mxu0 0
      %2350 = vmatmul.mubr.bf16.gmra.mxu0 %v2296
      %v2351 = vpop.f32.mrf.mxu0
      %v2352 = vadd.f32 0.0, %v2351
      %v2353 = vpop.f32.mrf.mxu0
      %v2354 = vpop.f32.mrf.mxu0
      %v2355 = vadd.f32 0.0, %v2354
      %v2356 = vpop.f32.mrf.mxu0
      %2357 = vmatprep.mubr.bf16.mxu0 0
      %2358 = vmatmul.mubr.bf16.gmra.mxu0 %v2299
      %v2359 = vpop.f32.mrf.mxu0
      %v2360 = vadd.f32 0.0, %v2359
      %v2361 = vpop.f32.mrf.mxu0
      %v2362 = vpop.f32.mrf.mxu0
      %v2363 = vpop.f32.mrf.mxu0
      %2364 = vdwg.mxu0
      %v2365 = vadd.f32 %v2158, %v2336
      %v2366 = vadd.f32 %v2159, %v2339
      %v2367 = vadd.f32 %v2160, %v2344
      %v2368 = vadd.f32 %v2161, %v2347
      %v2369 = vadd.f32 %v2162, %v2352
      %v2370 = vadd.f32 %v2163, %v2355
      %v2371 = vadd.f32 %v2164, %v2360
      %v2372 = vld [vmem:[%s355] sm:$0xf]
      %v2373 = vld [vmem:[%s1115] sm:$0xf]
      %v2374 = vld [vmem:[%s1126] sm:$0xf]
      %v2375 = vld [vmem:[%s1152] sm:$0xf]
      %v2376 = vld [vmem:[%s1163] sm:$0xf]
      %v2377 = vld [vmem:[%s1189] sm:$0xf]
      %v2378 = vld [vmem:[%s1200] sm:$0xf]
      %v2380 = vunpack.c.l.b16 %v2373
      %v2381 = vpack.c.b16 %v2380, %v2380
      %v2383 = vshrl.u32 %v2381, 16
      %v2385 = vrot.slane %v2383, 4
      %v2386 = vshll.u32 %v2381, 16
      %v2388 = vrot.slane %v2386, 5
      %v2389 = vor.u32 %v2385, %v2388
      %v2392 = vunpack.c.l.b16 %v2374
      %v2393 = vpack.c.b16 %v2392, %v2392
      %v2394 = vrot.slane %v2393, 1
      %v2397 = vunpack.c.l.b16 %v2375
      %v2398 = vpack.c.b16 %v2397, %v2397
      %v2400 = vshrl.u32 %v2398, 16
      %v2402 = vrot.slane %v2400, 5
      %v2403 = vshll.u32 %v2398, 16
      %v2405 = vrot.slane %v2403, 6
      %v2406 = vor.u32 %v2402, %v2405
      %v2409 = vunpack.c.l.b16 %v2376
      %v2410 = vpack.c.b16 %v2409, %v2409
      %v2411 = vrot.slane %v2410, 2
      %v2414 = vunpack.c.l.b16 %v2377
      %v2415 = vpack.c.b16 %v2414, %v2414
      %v2417 = vshrl.u32 %v2415, 16
      %v2419 = vrot.slane %v2417, 6
      %v2420 = vshll.u32 %v2415, 16
      %v2422 = vrot.slane %v2420, 7
      %v2423 = vor.u32 %v2419, %v2422
      %v2426 = vunpack.c.l.b16 %v2378
      %v2427 = vpack.c.b16 %v2426, %v2426
      %v2428 = vrot.slane %v2427, 3
      %v2429 = vsel %vm1533, %v2372, %v2389
      %v2432 = vsel %vm1535, %v2429, %v2394
      %v2433 = vsel %vm1539, %v2394, %v2406
      %v2436 = vsel %vm1541, %v2433, %v2411
      %v2437 = vsel %vm1545, %v2411, %v2423
      %v2440 = vsel %vm490, %v2437, %v2428
      %s2441 = scalar_lea.vmem %s3, 160
      %v2442 = vld [vmem:[%s2441] sm:$0xf]
      %v2443 = vld [vmem:[%s2441 + $0x4] sm:$0xf]
      %v2444 = vld [vmem:[%s2441 + $0x8] sm:$0xf]
      %v2445 = vld [vmem:[%s2441 + $0xc] sm:$0xf]
      %v2446 = vld [vmem:[%s2441 + $0x10] sm:$0xf]
      %v2447 = vld [vmem:[%s2441 + $0x14] sm:$0xf]
      %v2448 = vld [vmem:[%s2441 + $0x18] sm:$0xf]
      %v2449 = vld [vmem:[%s2441 + $0x1c] sm:$0xf]
      %v2458 = vunpack.c.l.b16 %v2442
      %v2459 = vunpack.c.l.b16 %v2443
      %v2460 = vunpack.c.l.b16 %v2444
      %v2461 = vunpack.c.l.b16 %v2445
      %v2462 = vunpack.c.l.b16 %v2446
      %v2463 = vunpack.c.l.b16 %v2447
      %v2464 = vunpack.c.l.b16 %v2448
      %v2465 = vunpack.c.l.b16 %v2449
      %v2466 = vpack.c.b16 %v2459, %v2458
      %v2467 = vpack.c.b16 %v2461, %v2460
      %v2468 = vpack.c.b16 %v2463, %v2462
      %v2469 = vpack.c.b16 %v2465, %v2464
      %v2474 = vsel %vm1660, %v2432, 0
      %v2476 = vsel %vm1660, %v2436, 0
      %v2478 = vsel %vm1660, %v2440, 0
      %v2480 = vsel %vm1660, %v2428, 0
      %2482 = vmatprep.subr.bf16.mxu0 0
      %2483 = vmatpush1.bf16.msra.mxu0 0
      %2484 = vmatprep.subr.bf16.mxu0 0
      %2485 = vmatpush1.bf16.msra.mxu0 0
      %2486 = vmatprep.subr.bf16.mxu0 0
      %2487 = vmatpush1.bf16.msra.mxu0 0
      %2488 = vmatprep.subr.bf16.mxu0 0
      %2489 = vmatpush1.bf16.msra.mxu0 0
      %2490 = vmatprep.subr.bf16.mxu0 0
      %2491 = vmatpush1.bf16.msra.mxu0 %v2469
      %2492 = vmatprep.subr.bf16.mxu0 0
      %2493 = vmatpush1.bf16.msra.mxu0 %v2468
      %2494 = vmatprep.subr.bf16.mxu0 0
      %2495 = vmatpush1.bf16.msra.mxu0 %v2467
      %2496 = vmatprep.subr.bf16.mxu0 0
      %2497 = vmatpush1.bf16.msra.mxu0 %v2466
      %2498 = vmatprep.subr.bf16.mxu0 0
      %2499 = vmatpush2.bf16.msra.mxu0 0
      %2500 = vmatprep.subr.bf16.mxu0 0
      %2501 = vmatpush2.bf16.msra.mxu0 0
      %2502 = vmatprep.subr.bf16.mxu0 0
      %2503 = vmatpush2.bf16.msra.mxu0 0
      %2504 = vmatprep.subr.bf16.mxu0 0
      %2505 = vmatpush2.bf16.msra.mxu0 0
      %2506 = vmatprep.subr.bf16.mxu0 0
      %2507 = vmatpush2.bf16.msra.mxu0 0
      %2508 = vmatprep.subr.bf16.mxu0 0
      %2509 = vmatpush2.bf16.msra.mxu0 0
      %2510 = vmatprep.subr.bf16.mxu0 0
      %2511 = vmatpush2.bf16.msra.mxu0 0
      %2512 = vmatprep.subr.bf16.mxu0 0
      %2513 = vmatpush2.bf16.msra.mxu0 0
      %2514 = vmatprep.mubr.bf16.mxu0 0
      %2515 = vmatmul.mubr.bf16.gmra.mxu0 %v2474
      %v2516 = vpop.f32.mrf.mxu0
      %v2517 = vadd.f32 0.0, %v2516
      %v2518 = vpop.f32.mrf.mxu0
      %v2519 = vpop.f32.mrf.mxu0
      %v2520 = vadd.f32 0.0, %v2519
      %v2521 = vpop.f32.mrf.mxu0
      %2522 = vmatprep.mubr.bf16.mxu0 0
      %2523 = vmatmul.mubr.bf16.gmra.mxu0 %v2476
      %v2524 = vpop.f32.mrf.mxu0
      %v2525 = vadd.f32 0.0, %v2524
      %v2526 = vpop.f32.mrf.mxu0
      %v2527 = vpop.f32.mrf.mxu0
      %v2528 = vadd.f32 0.0, %v2527
      %v2529 = vpop.f32.mrf.mxu0
      %2530 = vmatprep.mubr.bf16.mxu0 0
      %2531 = vmatmul.mubr.bf16.gmra.mxu0 %v2478
      %v2532 = vpop.f32.mrf.mxu0
      %v2533 = vadd.f32 0.0, %v2532
      %v2534 = vpop.f32.mrf.mxu0
      %v2535 = vpop.f32.mrf.mxu0
      %v2536 = vadd.f32 0.0, %v2535
      %v2537 = vpop.f32.mrf.mxu0
      %2538 = vmatprep.mubr.bf16.mxu0 0
      %2539 = vmatmul.mubr.bf16.gmra.mxu0 %v2480
      %v2540 = vpop.f32.mrf.mxu0
      %v2541 = vadd.f32 0.0, %v2540
      %v2542 = vpop.f32.mrf.mxu0
      %v2543 = vpop.f32.mrf.mxu0
      %v2544 = vpop.f32.mrf.mxu0
      %2545 = vdwg.mxu0
      %v2546 = vadd.f32 %v2365, %v2517
      %v2547 = vadd.f32 %v2366, %v2520
      %v2548 = vadd.f32 %v2367, %v2525
      %v2549 = vadd.f32 %v2368, %v2528
      %v2550 = vadd.f32 %v2369, %v2533
      %v2551 = vadd.f32 %v2370, %v2536
      %v2552 = vadd.f32 %v2371, %v2541
      %v2553 = vld [vmem:[%s392] sm:$0xf]
      %v2554 = vld [vmem:[%s1364] sm:$0xf]
      %v2555 = vld [vmem:[%s1375] sm:$0xf]
      %v2556 = vld [vmem:[%s1401] sm:$0xf]
      %v2557 = vld [vmem:[%s1412] sm:$0xf]
      %v2558 = vld [vmem:[%s1438] sm:$0xf]
      %v2559 = vld [vmem:[%s1449] sm:$0xf]
      %v2561 = vunpack.c.l.b16 %v2554
      %v2562 = vpack.c.b16 %v2561, %v2561
      %v2564 = vshrl.u32 %v2562, 16
      %v2566 = vrot.slane %v2564, 4
      %v2567 = vshll.u32 %v2562, 16
      %v2569 = vrot.slane %v2567, 5
      %v2570 = vor.u32 %v2566, %v2569
      %v2573 = vunpack.c.l.b16 %v2555
      %v2574 = vpack.c.b16 %v2573, %v2573
      %v2575 = vrot.slane %v2574, 1
      %v2578 = vunpack.c.l.b16 %v2556
      %v2579 = vpack.c.b16 %v2578, %v2578
      %v2581 = vshrl.u32 %v2579, 16
      %v2583 = vrot.slane %v2581, 5
      %v2584 = vshll.u32 %v2579, 16
      %v2586 = vrot.slane %v2584, 6
      %v2587 = vor.u32 %v2583, %v2586
      %v2590 = vunpack.c.l.b16 %v2557
      %v2591 = vpack.c.b16 %v2590, %v2590
      %v2592 = vrot.slane %v2591, 2
      %v2595 = vunpack.c.l.b16 %v2558
      %v2596 = vpack.c.b16 %v2595, %v2595
      %v2598 = vshrl.u32 %v2596, 16
      %v2600 = vrot.slane %v2598, 6
      %v2601 = vshll.u32 %v2596, 16
      %v2603 = vrot.slane %v2601, 7
      %v2604 = vor.u32 %v2600, %v2603
      %v2607 = vunpack.c.l.b16 %v2559
      %v2608 = vpack.c.b16 %v2607, %v2607
      %v2609 = vrot.slane %v2608, 3
      %v2610 = vsel %vm1533, %v2553, %v2570
      %v2613 = vsel %vm1535, %v2610, %v2575
      %v2614 = vsel %vm1539, %v2575, %v2587
      %v2617 = vsel %vm1541, %v2614, %v2592
      %v2618 = vsel %vm1545, %v2592, %v2604
      %v2621 = vsel %vm490, %v2618, %v2609
      %s2622 = scalar_lea.vmem %s3, 192
      %v2623 = vld [vmem:[%s2622] sm:$0xf]
      %v2624 = vld [vmem:[%s2622 + $0x4] sm:$0xf]
      %v2625 = vld [vmem:[%s2622 + $0x8] sm:$0xf]
      %v2626 = vld [vmem:[%s2622 + $0xc] sm:$0xf]
      %v2627 = vld [vmem:[%s2622 + $0x10] sm:$0xf]
      %v2628 = vld [vmem:[%s2622 + $0x14] sm:$0xf]
      %v2629 = vld [vmem:[%s2622 + $0x18] sm:$0xf]
      %v2630 = vld [vmem:[%s2622 + $0x1c] sm:$0xf]
      %v2639 = vunpack.c.l.b16 %v2623
      %v2640 = vunpack.c.l.b16 %v2624
      %v2641 = vunpack.c.l.b16 %v2625
      %v2642 = vunpack.c.l.b16 %v2626
      %v2643 = vunpack.c.l.b16 %v2627
      %v2644 = vunpack.c.l.b16 %v2628
      %v2645 = vunpack.c.l.b16 %v2629
      %v2646 = vunpack.c.l.b16 %v2630
      %v2647 = vpack.c.b16 %v2640, %v2639
      %v2648 = vpack.c.b16 %v2642, %v2641
      %v2649 = vpack.c.b16 %v2644, %v2643
      %v2650 = vpack.c.b16 %v2646, %v2645
      %v2655 = vsel %vm1660, %v2613, 0
      %v2657 = vsel %vm1660, %v2617, 0
      %v2659 = vsel %vm1660, %v2621, 0
      %v2661 = vsel %vm1660, %v2609, 0
      %2663 = vmatprep.subr.bf16.mxu0 0
      %2664 = vmatpush1.bf16.msra.mxu0 0
      %2665 = vmatprep.subr.bf16.mxu0 0
      %2666 = vmatpush1.bf16.msra.mxu0 0
      %2667 = vmatprep.subr.bf16.mxu0 0
      %2668 = vmatpush1.bf16.msra.mxu0 0
      %2669 = vmatprep.subr.bf16.mxu0 0
      %2670 = vmatpush1.bf16.msra.mxu0 0
      %2671 = vmatprep.subr.bf16.mxu0 0
      %2672 = vmatpush1.bf16.msra.mxu0 %v2650
      %2673 = vmatprep.subr.bf16.mxu0 0
      %2674 = vmatpush1.bf16.msra.mxu0 %v2649
      %2675 = vmatprep.subr.bf16.mxu0 0
      %2676 = vmatpush1.bf16.msra.mxu0 %v2648
      %2677 = vmatprep.subr.bf16.mxu0 0
      %2678 = vmatpush1.bf16.msra.mxu0 %v2647
      %2679 = vmatprep.subr.bf16.mxu0 0
      %2680 = vmatpush2.bf16.msra.mxu0 0
      %2681 = vmatprep.subr.bf16.mxu0 0
      %2682 = vmatpush2.bf16.msra.mxu0 0
      %2683 = vmatprep.subr.bf16.mxu0 0
      %2684 = vmatpush2.bf16.msra.mxu0 0
      %2685 = vmatprep.subr.bf16.mxu0 0
      %2686 = vmatpush2.bf16.msra.mxu0 0
      %2687 = vmatprep.subr.bf16.mxu0 0
      %2688 = vmatpush2.bf16.msra.mxu0 0
      %2689 = vmatprep.subr.bf16.mxu0 0
      %2690 = vmatpush2.bf16.msra.mxu0 0
      %2691 = vmatprep.subr.bf16.mxu0 0
      %2692 = vmatpush2.bf16.msra.mxu0 0
      %2693 = vmatprep.subr.bf16.mxu0 0
      %2694 = vmatpush2.bf16.msra.mxu0 0
      %2695 = vmatprep.mubr.bf16.mxu0 0
      %2696 = vmatmul.mubr.bf16.gmra.mxu0 %v2655
      %v2697 = vpop.f32.mrf.mxu0
      %v2698 = vadd.f32 0.0, %v2697
      %v2699 = vpop.f32.mrf.mxu0
      %v2700 = vpop.f32.mrf.mxu0
      %v2701 = vadd.f32 0.0, %v2700
      %v2702 = vpop.f32.mrf.mxu0
      %2703 = vmatprep.mubr.bf16.mxu0 0
      %2704 = vmatmul.mubr.bf16.gmra.mxu0 %v2657
      %v2705 = vpop.f32.mrf.mxu0
      %v2706 = vadd.f32 0.0, %v2705
      %v2707 = vpop.f32.mrf.mxu0
      %v2708 = vpop.f32.mrf.mxu0
      %v2709 = vadd.f32 0.0, %v2708
      %v2710 = vpop.f32.mrf.mxu0
      %2711 = vmatprep.mubr.bf16.mxu0 0
      %2712 = vmatmul.mubr.bf16.gmra.mxu0 %v2659
      %v2713 = vpop.f32.mrf.mxu0
      %v2714 = vadd.f32 0.0, %v2713
      %v2715 = vpop.f32.mrf.mxu0
      %v2716 = vpop.f32.mrf.mxu0
      %v2717 = vadd.f32 0.0, %v2716
      %v2718 = vpop.f32.mrf.mxu0
      %2719 = vmatprep.mubr.bf16.mxu0 0
      %2720 = vmatmul.mubr.bf16.gmra.mxu0 %v2661
      %v2721 = vpop.f32.mrf.mxu0
      %v2722 = vadd.f32 0.0, %v2721
      %v2723 = vpop.f32.mrf.mxu0
      %v2724 = vpop.f32.mrf.mxu0
      %v2725 = vpop.f32.mrf.mxu0
      %2726 = vdwg.mxu0
      %v2727 = vadd.f32 %v2546, %v2698
      %v2728 = vadd.f32 %v2547, %v2701
      %v2729 = vadd.f32 %v2548, %v2706
      %v2730 = vadd.f32 %v2549, %v2709
      %v2731 = vadd.f32 %v2550, %v2714
      %v2732 = vadd.f32 %v2551, %v2717
      %v2733 = vadd.f32 %v2552, %v2722
      %v2735 = vunpack.c.l.b16 %v2372
      %v2736 = vpack.c.b16 %v2735, %v2735
      %v2738 = vshrl.u32 %v2736, 16
      %v2740 = vshll.u32 %v2736, 16
      %v2742 = vrot.slane %v2740, 1
      %v2743 = vor.u32 %v2738, %v2742
      %v2745 = vrot.slane %v2381, 5
      %v2748 = vshrl.u32 %v2393, 16
      %v2750 = vrot.slane %v2748, 1
      %v2751 = vshll.u32 %v2393, 16
      %v2753 = vrot.slane %v2751, 2
      %v2754 = vor.u32 %v2750, %v2753
      %v2756 = vrot.slane %v2398, 6
      %v2759 = vshrl.u32 %v2410, 16
      %v2761 = vrot.slane %v2759, 2
      %v2762 = vshll.u32 %v2410, 16
      %v2764 = vrot.slane %v2762, 3
      %v2765 = vor.u32 %v2761, %v2764
      %v2767 = vrot.slane %v2415, 7
      %v2770 = vshrl.u32 %v2427, 16
      %v2772 = vrot.slane %v2770, 3
      %v2773 = vshll.u32 %v2427, 16
      %v2775 = vrot.slane %v2773, 4
      %v2776 = vor.u32 %v2772, %v2775
      %v2777 = vsel %vm1533, %v2743, %v2745
      %v2780 = vsel %vm1535, %v2777, %v2754
      %v2781 = vsel %vm1539, %v2754, %v2756
      %v2784 = vsel %vm1541, %v2781, %v2765
      %v2785 = vsel %vm1545, %v2765, %v2767
      %v2788 = vsel %vm490, %v2785, %v2776
      %s2789 = scalar_lea.vmem %s3, 224
      %v2790 = vld [vmem:[%s2789] sm:$0xf]
      %v2791 = vld [vmem:[%s2789 + $0x4] sm:$0xf]
      %v2792 = vld [vmem:[%s2789 + $0x8] sm:$0xf]
      %v2793 = vld [vmem:[%s2789 + $0xc] sm:$0xf]
      %v2794 = vld [vmem:[%s2789 + $0x10] sm:$0xf]
      %v2795 = vld [vmem:[%s2789 + $0x14] sm:$0xf]
      %v2796 = vld [vmem:[%s2789 + $0x18] sm:$0xf]
      %v2797 = vld [vmem:[%s2789 + $0x1c] sm:$0xf]
      %v2806 = vunpack.c.l.b16 %v2790
      %v2807 = vunpack.c.l.b16 %v2791
      %v2808 = vunpack.c.l.b16 %v2792
      %v2809 = vunpack.c.l.b16 %v2793
      %v2810 = vunpack.c.l.b16 %v2794
      %v2811 = vunpack.c.l.b16 %v2795
      %v2812 = vunpack.c.l.b16 %v2796
      %v2813 = vunpack.c.l.b16 %v2797
      %v2814 = vpack.c.b16 %v2807, %v2806
      %v2815 = vpack.c.b16 %v2809, %v2808
      %v2816 = vpack.c.b16 %v2811, %v2810
      %v2817 = vpack.c.b16 %v2813, %v2812
      %v2822 = vsel %vm1660, %v2780, 0
      %v2824 = vsel %vm1660, %v2784, 0
      %v2826 = vsel %vm1660, %v2788, 0
      %v2829 = vsel %vm1660, %v2772, 0
      %2831 = vmatprep.subr.bf16.mxu0 0
      %2832 = vmatpush1.bf16.msra.mxu0 0
      %2833 = vmatprep.subr.bf16.mxu0 0
      %2834 = vmatpush1.bf16.msra.mxu0 0
      %2835 = vmatprep.subr.bf16.mxu0 0
      %2836 = vmatpush1.bf16.msra.mxu0 0
      %2837 = vmatprep.subr.bf16.mxu0 0
      %2838 = vmatpush1.bf16.msra.mxu0 0
      %2839 = vmatprep.subr.bf16.mxu0 0
      %2840 = vmatpush1.bf16.msra.mxu0 %v2817
      %2841 = vmatprep.subr.bf16.mxu0 0
      %2842 = vmatpush1.bf16.msra.mxu0 %v2816
      %2843 = vmatprep.subr.bf16.mxu0 0
      %2844 = vmatpush1.bf16.msra.mxu0 %v2815
      %2845 = vmatprep.subr.bf16.mxu0 0
      %2846 = vmatpush1.bf16.msra.mxu0 %v2814
      %2847 = vmatprep.subr.bf16.mxu0 0
      %2848 = vmatpush2.bf16.msra.mxu0 0
      %2849 = vmatprep.subr.bf16.mxu0 0
      %2850 = vmatpush2.bf16.msra.mxu0 0
      %2851 = vmatprep.subr.bf16.mxu0 0
      %2852 = vmatpush2.bf16.msra.mxu0 0
      %2853 = vmatprep.subr.bf16.mxu0 0
      %2854 = vmatpush2.bf16.msra.mxu0 0
      %2855 = vmatprep.subr.bf16.mxu0 0
      %2856 = vmatpush2.bf16.msra.mxu0 0
      %2857 = vmatprep.subr.bf16.mxu0 0
      %2858 = vmatpush2.bf16.msra.mxu0 0
      %2859 = vmatprep.subr.bf16.mxu0 0
      %2860 = vmatpush2.bf16.msra.mxu0 0
      %2861 = vmatprep.subr.bf16.mxu0 0
      %2862 = vmatpush2.bf16.msra.mxu0 0
      %2863 = vmatprep.mubr.bf16.mxu0 0
      %2864 = vmatmul.mubr.bf16.gmra.mxu0 %v2822
      %v2865 = vpop.f32.mrf.mxu0
      %v2866 = vadd.f32 0.0, %v2865
      %v2867 = vpop.f32.mrf.mxu0
      %v2868 = vpop.f32.mrf.mxu0
      %v2869 = vadd.f32 0.0, %v2868
      %v2870 = vpop.f32.mrf.mxu0
      %2871 = vmatprep.mubr.bf16.mxu0 0
      %2872 = vmatmul.mubr.bf16.gmra.mxu0 %v2824
      %v2873 = vpop.f32.mrf.mxu0
      %v2874 = vadd.f32 0.0, %v2873
      %v2875 = vpop.f32.mrf.mxu0
      %v2876 = vpop.f32.mrf.mxu0
      %v2877 = vadd.f32 0.0, %v2876
      %v2878 = vpop.f32.mrf.mxu0
      %2879 = vmatprep.mubr.bf16.mxu0 0
      %2880 = vmatmul.mubr.bf16.gmra.mxu0 %v2826
      %v2881 = vpop.f32.mrf.mxu0
      %v2882 = vadd.f32 0.0, %v2881
      %v2883 = vpop.f32.mrf.mxu0
      %v2884 = vpop.f32.mrf.mxu0
      %v2885 = vadd.f32 0.0, %v2884
      %v2886 = vpop.f32.mrf.mxu0
      %2887 = vmatprep.mubr.bf16.mxu0 0
      %2888 = vmatmul.mubr.bf16.gmra.mxu0 %v2829
      %v2889 = vpop.f32.mrf.mxu0
      %v2890 = vadd.f32 0.0, %v2889
      %v2891 = vpop.f32.mrf.mxu0
      %v2892 = vpop.f32.mrf.mxu0
      %v2893 = vpop.f32.mrf.mxu0
      %2894 = vdwg.mxu0
      %v2895 = vadd.f32 %v2727, %v2866
      %v2896 = vadd.f32 %v2728, %v2869
      %v2897 = vadd.f32 %v2729, %v2874
      %v2898 = vadd.f32 %v2730, %v2877
      %v2899 = vadd.f32 %v2731, %v2882
      %v2900 = vadd.f32 %v2732, %v2885
      %v2901 = vadd.f32 %v2733, %v2890
      %v2903 = vunpack.c.l.b16 %v2553
      %v2904 = vpack.c.b16 %v2903, %v2903
      %v2906 = vshrl.u32 %v2904, 16
      %v2908 = vshll.u32 %v2904, 16
      %v2910 = vrot.slane %v2908, 1
      %v2911 = vor.u32 %v2906, %v2910
      %v2913 = vrot.slane %v2562, 5
      %v2916 = vshrl.u32 %v2574, 16
      %v2918 = vrot.slane %v2916, 1
      %v2919 = vshll.u32 %v2574, 16
      %v2921 = vrot.slane %v2919, 2
      %v2922 = vor.u32 %v2918, %v2921
      %v2924 = vrot.slane %v2579, 6
      %v2927 = vshrl.u32 %v2591, 16
      %v2929 = vrot.slane %v2927, 2
      %v2930 = vshll.u32 %v2591, 16
      %v2932 = vrot.slane %v2930, 3
      %v2933 = vor.u32 %v2929, %v2932
      %v2935 = vrot.slane %v2596, 7
      %v2938 = vshrl.u32 %v2608, 16
      %v2940 = vrot.slane %v2938, 3
      %v2941 = vshll.u32 %v2608, 16
      %v2943 = vrot.slane %v2941, 4
      %v2944 = vor.u32 %v2940, %v2943
      %v2945 = vsel %vm1533, %v2911, %v2913
      %v2948 = vsel %vm1535, %v2945, %v2922
      %v2949 = vsel %vm1539, %v2922, %v2924
      %v2952 = vsel %vm1541, %v2949, %v2933
      %v2953 = vsel %vm1545, %v2933, %v2935
      %v2956 = vsel %vm490, %v2953, %v2944
      %s2957 = scalar_lea.vmem %s3, 256
      %v2958 = vld [vmem:[%s2957] sm:$0xf]
      %v2959 = vld [vmem:[%s2957 + $0x4] sm:$0xf]
      %v2960 = vld [vmem:[%s2957 + $0x8] sm:$0xf]
      %v2961 = vld [vmem:[%s2957 + $0xc] sm:$0xf]
      %v2962 = vld [vmem:[%s2957 + $0x10] sm:$0xf]
      %v2963 = vld [vmem:[%s2957 + $0x14] sm:$0xf]
      %v2964 = vld [vmem:[%s2957 + $0x18] sm:$0xf]
      %v2965 = vld [vmem:[%s2957 + $0x1c] sm:$0xf]
      %v2974 = vunpack.c.l.b16 %v2958
      %v2975 = vunpack.c.l.b16 %v2959
      %v2976 = vunpack.c.l.b16 %v2960
      %v2977 = vunpack.c.l.b16 %v2961
      %v2978 = vunpack.c.l.b16 %v2962
      %v2979 = vunpack.c.l.b16 %v2963
      %v2980 = vunpack.c.l.b16 %v2964
      %v2981 = vunpack.c.l.b16 %v2965
      %v2982 = vpack.c.b16 %v2975, %v2974
      %v2983 = vpack.c.b16 %v2977, %v2976
      %v2984 = vpack.c.b16 %v2979, %v2978
      %v2985 = vpack.c.b16 %v2981, %v2980
      %v2990 = vsel %vm1660, %v2948, 0
      %v2992 = vsel %vm1660, %v2952, 0
      %v2994 = vsel %vm1660, %v2956, 0
      %v2997 = vsel %vm1660, %v2940, 0
      %2999 = vmatprep.subr.bf16.mxu0 0
      %3000 = vmatpush1.bf16.msra.mxu0 0
      %3001 = vmatprep.subr.bf16.mxu0 0
      %3002 = vmatpush1.bf16.msra.mxu0 0
      %3003 = vmatprep.subr.bf16.mxu0 0
      %3004 = vmatpush1.bf16.msra.mxu0 0
      %3005 = vmatprep.subr.bf16.mxu0 0
      %3006 = vmatpush1.bf16.msra.mxu0 0
      %3007 = vmatprep.subr.bf16.mxu0 0
      %3008 = vmatpush1.bf16.msra.mxu0 %v2985
      %3009 = vmatprep.subr.bf16.mxu0 0
      %3010 = vmatpush1.bf16.msra.mxu0 %v2984
      %3011 = vmatprep.subr.bf16.mxu0 0
      %3012 = vmatpush1.bf16.msra.mxu0 %v2983
      %3013 = vmatprep.subr.bf16.mxu0 0
      %3014 = vmatpush1.bf16.msra.mxu0 %v2982
      %3015 = vmatprep.subr.bf16.mxu0 0
      %3016 = vmatpush2.bf16.msra.mxu0 0
      %3017 = vmatprep.subr.bf16.mxu0 0
      %3018 = vmatpush2.bf16.msra.mxu0 0
      %3019 = vmatprep.subr.bf16.mxu0 0
      %3020 = vmatpush2.bf16.msra.mxu0 0
      %3021 = vmatprep.subr.bf16.mxu0 0
      %3022 = vmatpush2.bf16.msra.mxu0 0
      %3023 = vmatprep.subr.bf16.mxu0 0
      %3024 = vmatpush2.bf16.msra.mxu0 0
      %3025 = vmatprep.subr.bf16.mxu0 0
      %3026 = vmatpush2.bf16.msra.mxu0 0
      %3027 = vmatprep.subr.bf16.mxu0 0
      %3028 = vmatpush2.bf16.msra.mxu0 0
      %3029 = vmatprep.subr.bf16.mxu0 0
      %3030 = vmatpush2.bf16.msra.mxu0 0
      %3031 = vmatprep.mubr.bf16.mxu0 0
      %3032 = vmatmul.mubr.bf16.gmra.mxu0 %v2990
      %v3033 = vpop.f32.mrf.mxu0
      %v3034 = vadd.f32 0.0, %v3033
      %v3035 = vpop.f32.mrf.mxu0
      %v3036 = vpop.f32.mrf.mxu0
      %v3037 = vadd.f32 0.0, %v3036
      %v3038 = vpop.f32.mrf.mxu0
      %3039 = vmatprep.mubr.bf16.mxu0 0
      %3040 = vmatmul.mubr.bf16.gmra.mxu0 %v2992
      %v3041 = vpop.f32.mrf.mxu0
      %v3042 = vadd.f32 0.0, %v3041
      %v3043 = vpop.f32.mrf.mxu0
      %v3044 = vpop.f32.mrf.mxu0
      %v3045 = vadd.f32 0.0, %v3044
      %v3046 = vpop.f32.mrf.mxu0
      %3047 = vmatprep.mubr.bf16.mxu0 0
      %3048 = vmatmul.mubr.bf16.gmra.mxu0 %v2994
      %v3049 = vpop.f32.mrf.mxu0
      %v3050 = vadd.f32 0.0, %v3049
      %v3051 = vpop.f32.mrf.mxu0
      %v3052 = vpop.f32.mrf.mxu0
      %v3053 = vadd.f32 0.0, %v3052
      %v3054 = vpop.f32.mrf.mxu0
      %3055 = vmatprep.mubr.bf16.mxu0 0
      %3056 = vmatmul.mubr.bf16.gmra.mxu0 %v2997
      %v3057 = vpop.f32.mrf.mxu0
      %v3058 = vadd.f32 0.0, %v3057
      %v3059 = vpop.f32.mrf.mxu0
      %v3060 = vpop.f32.mrf.mxu0
      %v3061 = vpop.f32.mrf.mxu0
      %3062 = vdwg.mxu0
      %v3063 = vadd.f32 %v2895, %v3034
      %v3064 = vadd.f32 %v2896, %v3037
      %v3065 = vadd.f32 %v2897, %v3042
      %v3066 = vadd.f32 %v2898, %v3045
      %v3067 = vadd.f32 %v2899, %v3050
      %v3068 = vadd.f32 %v2900, %v3053
      %v3069 = vadd.f32 %v2901, %v3058
      %v3070 = vld [vmem:[%s355] sm:$0xe]
      %v3071 = vld [vmem:[%s355 + $0x4] sm:$0x1]
      %v3072 = vld [vmem:[%s1115] sm:$0xe]
      %v3073 = vld [vmem:[%s1115 + $0x4] sm:$0x1]
      %v3074 = vld [vmem:[%s1126] sm:$0xe]
      %v3075 = vld [vmem:[%s1126 + $0x4] sm:$0x1]
      %v3076 = vld [vmem:[%s1152] sm:$0xe]
      %v3077 = vld [vmem:[%s1152 + $0x4] sm:$0x1]
      %v3078 = vld [vmem:[%s1163] sm:$0xe]
      %v3079 = vld [vmem:[%s1163 + $0x4] sm:$0x1]
      %v3080 = vld [vmem:[%s1189] sm:$0xe]
      %v3081 = vld [vmem:[%s1189 + $0x4] sm:$0x1]
      %v3082 = vld [vmem:[%s1200] sm:$0xe]
      %v3083 = vld [vmem:[%s1200 + $0x4] sm:$0x1]
      %v3086 = vunpack.c.l.b16 %v3070
      %v3087 = vunpack.c.l.b16 %v3071
      %v3088 = vpack.c.b16 %v3087, %v3086
      %v3089 = vrot.slane %v3088, 1
      %v3093 = vunpack.c.l.b16 %v3072
      %v3094 = vunpack.c.l.b16 %v3073
      %v3095 = vpack.c.b16 %v3094, %v3093
      %v3097 = vshrl.u32 %v3095, 16
      %v3099 = vrot.slane %v3097, 5
      %v3100 = vshll.u32 %v3095, 16
      %v3102 = vrot.slane %v3100, 6
      %v3103 = vor.u32 %v3099, %v3102
      %v3107 = vunpack.c.l.b16 %v3074
      %v3108 = vunpack.c.l.b16 %v3075
      %v3109 = vpack.c.b16 %v3108, %v3107
      %v3110 = vrot.slane %v3109, 2
      %v3114 = vunpack.c.l.b16 %v3076
      %v3115 = vunpack.c.l.b16 %v3077
      %v3116 = vpack.c.b16 %v3115, %v3114
      %v3118 = vshrl.u32 %v3116, 16
      %v3120 = vrot.slane %v3118, 6
      %v3121 = vshll.u32 %v3116, 16
      %v3123 = vrot.slane %v3121, 7
      %v3124 = vor.u32 %v3120, %v3123
      %v3128 = vunpack.c.l.b16 %v3078
      %v3129 = vunpack.c.l.b16 %v3079
      %v3130 = vpack.c.b16 %v3129, %v3128
      %v3131 = vrot.slane %v3130, 3
      %v3135 = vunpack.c.l.b16 %v3080
      %v3136 = vunpack.c.l.b16 %v3081
      %v3137 = vpack.c.b16 %v3136, %v3135
      %v3139 = vshrl.u32 %v3137, 16
      %v3141 = vrot.slane %v3139, 7
      %v3142 = vshll.u32 %v3137, 16
      %v3144 = vor.u32 %v3141, %v3142
      %v3148 = vunpack.c.l.b16 %v3082
      %v3149 = vunpack.c.l.b16 %v3083
      %v3150 = vpack.c.b16 %v3148, %v3148
      %v3151 = vpack.c.b16 %v3149, %v3149
      %v3152 = vsel %vm1533, %v3089, %v3103
      %v3155 = vsel %vm1535, %v3152, %v3110
      %v3156 = vsel %vm1539, %v3110, %v3124
      %v3159 = vsel %vm1541, %v3156, %v3131
      %v3160 = vsel %vm1545, %v3131, %v3144
      %v3163 = vsel %vm490, %v3160, %v3150
      %s3164 = scalar_lea.vmem %s3, 288
      %v3165 = vld [vmem:[%s3164] sm:$0xf]
      %v3166 = vld [vmem:[%s3164 + $0x4] sm:$0xf]
      %v3167 = vld [vmem:[%s3164 + $0x8] sm:$0xf]
      %v3168 = vld [vmem:[%s3164 + $0xc] sm:$0xf]
      %v3169 = vld [vmem:[%s3164 + $0x10] sm:$0xf]
      %v3170 = vld [vmem:[%s3164 + $0x14] sm:$0xf]
      %v3171 = vld [vmem:[%s3164 + $0x18] sm:$0xf]
      %v3172 = vld [vmem:[%s3164 + $0x1c] sm:$0xf]
      %v3181 = vunpack.c.l.b16 %v3165
      %v3182 = vunpack.c.l.b16 %v3166
      %v3183 = vunpack.c.l.b16 %v3167
      %v3184 = vunpack.c.l.b16 %v3168
      %v3185 = vunpack.c.l.b16 %v3169
      %v3186 = vunpack.c.l.b16 %v3170
      %v3187 = vunpack.c.l.b16 %v3171
      %v3188 = vunpack.c.l.b16 %v3172
      %v3189 = vpack.c.b16 %v3182, %v3181
      %v3190 = vpack.c.b16 %v3184, %v3183
      %v3191 = vpack.c.b16 %v3186, %v3185
      %v3192 = vpack.c.b16 %v3188, %v3187
      %v3197 = vsel %vm1660, %v3155, 0
      %v3199 = vsel %vm1660, %v3159, 0
      %v3201 = vsel %vm1660, %v3163, 0
      %v3204 = vsel %vm1660, %v3151, 0
      %3206 = vmatprep.subr.bf16.mxu0 0
      %3207 = vmatpush1.bf16.msra.mxu0 0
      %3208 = vmatprep.subr.bf16.mxu0 0
      %3209 = vmatpush1.bf16.msra.mxu0 0
      %3210 = vmatprep.subr.bf16.mxu0 0
      %3211 = vmatpush1.bf16.msra.mxu0 0
      %3212 = vmatprep.subr.bf16.mxu0 0
      %3213 = vmatpush1.bf16.msra.mxu0 0
      %3214 = vmatprep.subr.bf16.mxu0 0
      %3215 = vmatpush1.bf16.msra.mxu0 %v3192
      %3216 = vmatprep.subr.bf16.mxu0 0
      %3217 = vmatpush1.bf16.msra.mxu0 %v3191
      %3218 = vmatprep.subr.bf16.mxu0 0
      %3219 = vmatpush1.bf16.msra.mxu0 %v3190
      %3220 = vmatprep.subr.bf16.mxu0 0
      %3221 = vmatpush1.bf16.msra.mxu0 %v3189
      %3222 = vmatprep.subr.bf16.mxu0 0
      %3223 = vmatpush2.bf16.msra.mxu0 0
      %3224 = vmatprep.subr.bf16.mxu0 0
      %3225 = vmatpush2.bf16.msra.mxu0 0
      %3226 = vmatprep.subr.bf16.mxu0 0
      %3227 = vmatpush2.bf16.msra.mxu0 0
      %3228 = vmatprep.subr.bf16.mxu0 0
      %3229 = vmatpush2.bf16.msra.mxu0 0
      %3230 = vmatprep.subr.bf16.mxu0 0
      %3231 = vmatpush2.bf16.msra.mxu0 0
      %3232 = vmatprep.subr.bf16.mxu0 0
      %3233 = vmatpush2.bf16.msra.mxu0 0
      %3234 = vmatprep.subr.bf16.mxu0 0
      %3235 = vmatpush2.bf16.msra.mxu0 0
      %3236 = vmatprep.subr.bf16.mxu0 0
      %3237 = vmatpush2.bf16.msra.mxu0 0
      %3238 = vmatprep.mubr.bf16.mxu0 0
      %3239 = vmatmul.mubr.bf16.gmra.mxu0 %v3197
      %v3240 = vpop.f32.mrf.mxu0
      %v3241 = vadd.f32 0.0, %v3240
      %v3242 = vpop.f32.mrf.mxu0
      %v3243 = vpop.f32.mrf.mxu0
      %v3244 = vadd.f32 0.0, %v3243
      %v3245 = vpop.f32.mrf.mxu0
      %3246 = vmatprep.mubr.bf16.mxu0 0
      %3247 = vmatmul.mubr.bf16.gmra.mxu0 %v3199
      %v3248 = vpop.f32.mrf.mxu0
      %v3249 = vadd.f32 0.0, %v3248
      %v3250 = vpop.f32.mrf.mxu0
      %v3251 = vpop.f32.mrf.mxu0
      %v3252 = vadd.f32 0.0, %v3251
      %v3253 = vpop.f32.mrf.mxu0
      %3254 = vmatprep.mubr.bf16.mxu0 0
      %3255 = vmatmul.mubr.bf16.gmra.mxu0 %v3201
      %v3256 = vpop.f32.mrf.mxu0
      %v3257 = vadd.f32 0.0, %v3256
      %v3258 = vpop.f32.mrf.mxu0
      %v3259 = vpop.f32.mrf.mxu0
      %v3260 = vadd.f32 0.0, %v3259
      %v3261 = vpop.f32.mrf.mxu0
      %3262 = vmatprep.mubr.bf16.mxu0 0
      %3263 = vmatmul.mubr.bf16.gmra.mxu0 %v3204
      %v3264 = vpop.f32.mrf.mxu0
      %v3265 = vadd.f32 0.0, %v3264
      %v3266 = vpop.f32.mrf.mxu0
      %v3267 = vpop.f32.mrf.mxu0
      %v3268 = vpop.f32.mrf.mxu0
      %3269 = vdwg.mxu0
      %v3270 = vadd.f32 %v3063, %v3241
      %v3271 = vadd.f32 %v3064, %v3244
      %v3272 = vadd.f32 %v3065, %v3249
      %v3273 = vadd.f32 %v3066, %v3252
      %v3274 = vadd.f32 %v3067, %v3257
      %v3275 = vadd.f32 %v3068, %v3260
      %v3276 = vadd.f32 %v3069, %v3265
      %v3277 = vld [vmem:[%s724] sm:$0xf]
      %v3278 = vrot.slane %v1843, 4
      %v3279 = vrot.slane %v1846, 5
      %v3280 = vor.u32 %v3278, %v3279
      %v3282 = vrot.slane %v1501, 1
      %v3284 = vrot.slane %v1854, 5
      %v3285 = vrot.slane %v1857, 6
      %v3286 = vor.u32 %v3284, %v3285
      %v3288 = vrot.slane %v1518, 2
      %v3290 = vrot.slane %v1865, 6
      %v3291 = vrot.slane %v1868, 7
      %v3292 = vor.u32 %v3290, %v3291
      %v3295 = vunpack.c.l.b16 %v3277
      %v3296 = vpack.c.b16 %v3295, %v3295
      %v3297 = vrot.slane %v3296, 3
      %v3298 = vsel %vm1533, %v1476, %v3280
      %v3301 = vsel %vm1535, %v3298, %v3282
      %v3302 = vsel %vm1539, %v3282, %v3286
      %v3305 = vsel %vm1541, %v3302, %v3288
      %v3306 = vsel %vm1545, %v3288, %v3292
      %v3309 = vsel %vm490, %v3306, %v3297
      %s3310 = scalar_lea.vmem %s3, 320
      %v3311 = vld [vmem:[%s3310] sm:$0xf]
      %v3312 = vld [vmem:[%s3310 + $0x4] sm:$0xf]
      %v3313 = vld [vmem:[%s3310 + $0x8] sm:$0xf]
      %v3314 = vld [vmem:[%s3310 + $0xc] sm:$0xf]
      %v3315 = vld [vmem:[%s3310 + $0x10] sm:$0xf]
      %v3316 = vld [vmem:[%s3310 + $0x14] sm:$0xf]
      %v3317 = vld [vmem:[%s3310 + $0x18] sm:$0xf]
      %v3318 = vld [vmem:[%s3310 + $0x1c] sm:$0xf]
      %v3327 = vunpack.c.l.b16 %v3311
      %v3328 = vunpack.c.l.b16 %v3312
      %v3329 = vunpack.c.l.b16 %v3313
      %v3330 = vunpack.c.l.b16 %v3314
      %v3331 = vunpack.c.l.b16 %v3315
      %v3332 = vunpack.c.l.b16 %v3316
      %v3333 = vunpack.c.l.b16 %v3317
      %v3334 = vunpack.c.l.b16 %v3318
      %v3335 = vpack.c.b16 %v3328, %v3327
      %v3336 = vpack.c.b16 %v3330, %v3329
      %v3337 = vpack.c.b16 %v3332, %v3331
      %v3338 = vpack.c.b16 %v3334, %v3333
      %v3343 = vsel %vm1660, %v3301, 0
      %v3345 = vsel %vm1660, %v3305, 0
      %v3347 = vsel %vm1660, %v3309, 0
      %v3349 = vsel %vm1660, %v3297, 0
      %3351 = vmatprep.subr.bf16.mxu0 0
      %3352 = vmatpush1.bf16.msra.mxu0 0
      %3353 = vmatprep.subr.bf16.mxu0 0
      %3354 = vmatpush1.bf16.msra.mxu0 0
      %3355 = vmatprep.subr.bf16.mxu0 0
      %3356 = vmatpush1.bf16.msra.mxu0 0
      %3357 = vmatprep.subr.bf16.mxu0 0
      %3358 = vmatpush1.bf16.msra.mxu0 0
      %3359 = vmatprep.subr.bf16.mxu0 0
      %3360 = vmatpush1.bf16.msra.mxu0 %v3338
      %3361 = vmatprep.subr.bf16.mxu0 0
      %3362 = vmatpush1.bf16.msra.mxu0 %v3337
      %3363 = vmatprep.subr.bf16.mxu0 0
      %3364 = vmatpush1.bf16.msra.mxu0 %v3336
      %3365 = vmatprep.subr.bf16.mxu0 0
      %3366 = vmatpush1.bf16.msra.mxu0 %v3335
      %3367 = vmatprep.subr.bf16.mxu0 0
      %3368 = vmatpush2.bf16.msra.mxu0 0
      %3369 = vmatprep.subr.bf16.mxu0 0
      %3370 = vmatpush2.bf16.msra.mxu0 0
      %3371 = vmatprep.subr.bf16.mxu0 0
      %3372 = vmatpush2.bf16.msra.mxu0 0
      %3373 = vmatprep.subr.bf16.mxu0 0
      %3374 = vmatpush2.bf16.msra.mxu0 0
      %3375 = vmatprep.subr.bf16.mxu0 0
      %3376 = vmatpush2.bf16.msra.mxu0 0
      %3377 = vmatprep.subr.bf16.mxu0 0
      %3378 = vmatpush2.bf16.msra.mxu0 0
      %3379 = vmatprep.subr.bf16.mxu0 0
      %3380 = vmatpush2.bf16.msra.mxu0 0
      %3381 = vmatprep.subr.bf16.mxu0 0
      %3382 = vmatpush2.bf16.msra.mxu0 0
      %3383 = vmatprep.mubr.bf16.mxu0 0
      %3384 = vmatmul.mubr.bf16.gmra.mxu0 %v3343
      %v3385 = vpop.f32.mrf.mxu0
      %v3386 = vadd.f32 0.0, %v3385
      %v3387 = vpop.f32.mrf.mxu0
      %v3388 = vpop.f32.mrf.mxu0
      %v3389 = vadd.f32 0.0, %v3388
      %v3390 = vpop.f32.mrf.mxu0
      %3391 = vmatprep.mubr.bf16.mxu0 0
      %3392 = vmatmul.mubr.bf16.gmra.mxu0 %v3345
      %v3393 = vpop.f32.mrf.mxu0
      %v3394 = vadd.f32 0.0, %v3393
      %v3395 = vpop.f32.mrf.mxu0
      %v3396 = vpop.f32.mrf.mxu0
      %v3397 = vadd.f32 0.0, %v3396
      %v3398 = vpop.f32.mrf.mxu0
      %3399 = vmatprep.mubr.bf16.mxu0 0
      %3400 = vmatmul.mubr.bf16.gmra.mxu0 %v3347
      %v3401 = vpop.f32.mrf.mxu0
      %v3402 = vadd.f32 0.0, %v3401
      %v3403 = vpop.f32.mrf.mxu0
      %v3404 = vpop.f32.mrf.mxu0
      %v3405 = vadd.f32 0.0, %v3404
      %v3406 = vpop.f32.mrf.mxu0
      %3407 = vmatprep.mubr.bf16.mxu0 0
      %3408 = vmatmul.mubr.bf16.gmra.mxu0 %v3349
      %v3409 = vpop.f32.mrf.mxu0
      %v3410 = vadd.f32 0.0, %v3409
      %v3411 = vpop.f32.mrf.mxu0
      %v3412 = vpop.f32.mrf.mxu0
      %v3413 = vpop.f32.mrf.mxu0
      %3414 = vdwg.mxu0
      %v3415 = vadd.f32 %v3270, %v3386
      %v3416 = vadd.f32 %v3271, %v3389
      %v3417 = vadd.f32 %v3272, %v3394
      %v3418 = vadd.f32 %v3273, %v3397
      %v3419 = vadd.f32 %v3274, %v3402
      %v3420 = vadd.f32 %v3275, %v3405
      %v3421 = vadd.f32 %v3276, %v3410
      %v3422 = vld [vmem:[%s973] sm:$0xf]
      %v3423 = vrot.slane %v2011, 4
      %v3424 = vrot.slane %v2014, 5
      %v3425 = vor.u32 %v3423, %v3424
      %v3427 = vrot.slane %v1584, 1
      %v3429 = vrot.slane %v2022, 5
      %v3430 = vrot.slane %v2025, 6
      %v3431 = vor.u32 %v3429, %v3430
      %v3433 = vrot.slane %v1601, 2
      %v3435 = vrot.slane %v2033, 6
      %v3436 = vrot.slane %v2036, 7
      %v3437 = vor.u32 %v3435, %v3436
      %v3440 = vunpack.c.l.b16 %v3422
      %v3441 = vpack.c.b16 %v3440, %v3440
      %v3442 = vrot.slane %v3441, 3
      %v3443 = vsel %vm1533, %v1559, %v3425
      %v3446 = vsel %vm1535, %v3443, %v3427
      %v3447 = vsel %vm1539, %v3427, %v3431
      %v3450 = vsel %vm1541, %v3447, %v3433
      %v3451 = vsel %vm1545, %v3433, %v3437
      %v3454 = vsel %vm490, %v3451, %v3442
      %s3455 = scalar_lea.vmem %s3, 352
      %v3456 = vld [vmem:[%s3455] sm:$0xf]
      %v3457 = vld [vmem:[%s3455 + $0x4] sm:$0xf]
      %v3458 = vld [vmem:[%s3455 + $0x8] sm:$0xf]
      %v3459 = vld [vmem:[%s3455 + $0xc] sm:$0xf]
      %v3460 = vld [vmem:[%s3455 + $0x10] sm:$0xf]
      %v3461 = vld [vmem:[%s3455 + $0x14] sm:$0xf]
      %v3462 = vld [vmem:[%s3455 + $0x18] sm:$0xf]
      %v3463 = vld [vmem:[%s3455 + $0x1c] sm:$0xf]
      %v3472 = vunpack.c.l.b16 %v3456
      %v3473 = vunpack.c.l.b16 %v3457
      %v3474 = vunpack.c.l.b16 %v3458
      %v3475 = vunpack.c.l.b16 %v3459
      %v3476 = vunpack.c.l.b16 %v3460
      %v3477 = vunpack.c.l.b16 %v3461
      %v3478 = vunpack.c.l.b16 %v3462
      %v3479 = vunpack.c.l.b16 %v3463
      %v3480 = vpack.c.b16 %v3473, %v3472
      %v3481 = vpack.c.b16 %v3475, %v3474
      %v3482 = vpack.c.b16 %v3477, %v3476
      %v3483 = vpack.c.b16 %v3479, %v3478
      %v3488 = vsel %vm1660, %v3446, 0
      %v3490 = vsel %vm1660, %v3450, 0
      %v3492 = vsel %vm1660, %v3454, 0
      %v3494 = vsel %vm1660, %v3442, 0
      %3496 = vmatprep.subr.bf16.mxu0 0
      %3497 = vmatpush1.bf16.msra.mxu0 0
      %3498 = vmatprep.subr.bf16.mxu0 0
      %3499 = vmatpush1.bf16.msra.mxu0 0
      %3500 = vmatprep.subr.bf16.mxu0 0
      %3501 = vmatpush1.bf16.msra.mxu0 0
      %3502 = vmatprep.subr.bf16.mxu0 0
      %3503 = vmatpush1.bf16.msra.mxu0 0
      %3504 = vmatprep.subr.bf16.mxu0 0
      %3505 = vmatpush1.bf16.msra.mxu0 %v3483
      %3506 = vmatprep.subr.bf16.mxu0 0
      %3507 = vmatpush1.bf16.msra.mxu0 %v3482
      %3508 = vmatprep.subr.bf16.mxu0 0
      %3509 = vmatpush1.bf16.msra.mxu0 %v3481
      %3510 = vmatprep.subr.bf16.mxu0 0
      %3511 = vmatpush1.bf16.msra.mxu0 %v3480
      %3512 = vmatprep.subr.bf16.mxu0 0
      %3513 = vmatpush2.bf16.msra.mxu0 0
      %3514 = vmatprep.subr.bf16.mxu0 0
      %3515 = vmatpush2.bf16.msra.mxu0 0
      %3516 = vmatprep.subr.bf16.mxu0 0
      %3517 = vmatpush2.bf16.msra.mxu0 0
      %3518 = vmatprep.subr.bf16.mxu0 0
      %3519 = vmatpush2.bf16.msra.mxu0 0
      %3520 = vmatprep.subr.bf16.mxu0 0
      %3521 = vmatpush2.bf16.msra.mxu0 0
      %3522 = vmatprep.subr.bf16.mxu0 0
      %3523 = vmatpush2.bf16.msra.mxu0 0
      %3524 = vmatprep.subr.bf16.mxu0 0
      %3525 = vmatpush2.bf16.msra.mxu0 0
      %3526 = vmatprep.subr.bf16.mxu0 0
      %3527 = vmatpush2.bf16.msra.mxu0 0
      %3528 = vmatprep.mubr.bf16.mxu0 0
      %3529 = vmatmul.mubr.bf16.gmra.mxu0 %v3488
      %v3530 = vpop.f32.mrf.mxu0
      %v3531 = vadd.f32 0.0, %v3530
      %v3532 = vpop.f32.mrf.mxu0
      %v3533 = vpop.f32.mrf.mxu0
      %v3534 = vadd.f32 0.0, %v3533
      %v3535 = vpop.f32.mrf.mxu0
      %3536 = vmatprep.mubr.bf16.mxu0 0
      %3537 = vmatmul.mubr.bf16.gmra.mxu0 %v3490
      %v3538 = vpop.f32.mrf.mxu0
      %v3539 = vadd.f32 0.0, %v3538
      %v3540 = vpop.f32.mrf.mxu0
      %v3541 = vpop.f32.mrf.mxu0
      %v3542 = vadd.f32 0.0, %v3541
      %v3543 = vpop.f32.mrf.mxu0
      %3544 = vmatprep.mubr.bf16.mxu0 0
      %3545 = vmatmul.mubr.bf16.gmra.mxu0 %v3492
      %v3546 = vpop.f32.mrf.mxu0
      %v3547 = vadd.f32 0.0, %v3546
      %v3548 = vpop.f32.mrf.mxu0
      %v3549 = vpop.f32.mrf.mxu0
      %v3550 = vadd.f32 0.0, %v3549
      %v3551 = vpop.f32.mrf.mxu0
      %3552 = vmatprep.mubr.bf16.mxu0 0
      %3553 = vmatmul.mubr.bf16.gmra.mxu0 %v3494
      %v3554 = vpop.f32.mrf.mxu0
      %v3555 = vadd.f32 0.0, %v3554
      %v3556 = vpop.f32.mrf.mxu0
      %v3557 = vpop.f32.mrf.mxu0
      %v3558 = vpop.f32.mrf.mxu0
      %3559 = vdwg.mxu0
      %v3560 = vadd.f32 %v3415, %v3531
      %v3561 = vadd.f32 %v3416, %v3534
      %v3562 = vadd.f32 %v3417, %v3539
      %v3563 = vadd.f32 %v3418, %v3542
      %v3564 = vadd.f32 %v3419, %v3547
      %v3565 = vadd.f32 %v3420, %v3550
      %v3566 = vadd.f32 %v3421, %v3555
      %v3567 = vrot.slane %v1489, 1
      %v3568 = vor.u32 %v1486, %v3567
      %v3570 = vrot.slane %v1496, 5
      %v3572 = vrot.slane %v1503, 1
      %v3573 = vrot.slane %v1506, 2
      %v3574 = vor.u32 %v3572, %v3573
      %v3576 = vrot.slane %v1513, 6
      %v3578 = vrot.slane %v1520, 2
      %v3579 = vrot.slane %v1523, 3
      %v3580 = vor.u32 %v3578, %v3579
      %v3582 = vrot.slane %v1530, 7
      %v3585 = vshrl.u32 %v3296, 16
      %v3587 = vrot.slane %v3585, 3
      %v3588 = vshll.u32 %v3296, 16
      %v3590 = vrot.slane %v3588, 4
      %v3591 = vor.u32 %v3587, %v3590
      %v3592 = vsel %vm1533, %v3568, %v3570
      %v3595 = vsel %vm1535, %v3592, %v3574
      %v3596 = vsel %vm1539, %v3574, %v3576
      %v3599 = vsel %vm1541, %v3596, %v3580
      %v3600 = vsel %vm1545, %v3580, %v3582
      %v3603 = vsel %vm490, %v3600, %v3591
      %s3604 = scalar_lea.vmem %s3, 384
      %v3605 = vld [vmem:[%s3604] sm:$0xf]
      %v3606 = vld [vmem:[%s3604 + $0x4] sm:$0xf]
      %v3607 = vld [vmem:[%s3604 + $0x8] sm:$0xf]
      %v3608 = vld [vmem:[%s3604 + $0xc] sm:$0xf]
      %v3609 = vld [vmem:[%s3604 + $0x10] sm:$0xf]
      %v3610 = vld [vmem:[%s3604 + $0x14] sm:$0xf]
      %v3611 = vld [vmem:[%s3604 + $0x18] sm:$0xf]
      %v3612 = vld [vmem:[%s3604 + $0x1c] sm:$0xf]
      %v3621 = vunpack.c.l.b16 %v3605
      %v3622 = vunpack.c.l.b16 %v3606
      %v3623 = vunpack.c.l.b16 %v3607
      %v3624 = vunpack.c.l.b16 %v3608
      %v3625 = vunpack.c.l.b16 %v3609
      %v3626 = vunpack.c.l.b16 %v3610
      %v3627 = vunpack.c.l.b16 %v3611
      %v3628 = vunpack.c.l.b16 %v3612
      %v3629 = vpack.c.b16 %v3622, %v3621
      %v3630 = vpack.c.b16 %v3624, %v3623
      %v3631 = vpack.c.b16 %v3626, %v3625
      %v3632 = vpack.c.b16 %v3628, %v3627
      %v3637 = vsel %vm1660, %v3595, 0
      %v3639 = vsel %vm1660, %v3599, 0
      %v3641 = vsel %vm1660, %v3603, 0
      %v3644 = vsel %vm1660, %v3587, 0
      %3646 = vmatprep.subr.bf16.mxu0 0
      %3647 = vmatpush1.bf16.msra.mxu0 0
      %3648 = vmatprep.subr.bf16.mxu0 0
      %3649 = vmatpush1.bf16.msra.mxu0 0
      %3650 = vmatprep.subr.bf16.mxu0 0
      %3651 = vmatpush1.bf16.msra.mxu0 0
      %3652 = vmatprep.subr.bf16.mxu0 0
      %3653 = vmatpush1.bf16.msra.mxu0 0
      %3654 = vmatprep.subr.bf16.mxu0 0
      %3655 = vmatpush1.bf16.msra.mxu0 %v3632
      %3656 = vmatprep.subr.bf16.mxu0 0
      %3657 = vmatpush1.bf16.msra.mxu0 %v3631
      %3658 = vmatprep.subr.bf16.mxu0 0
      %3659 = vmatpush1.bf16.msra.mxu0 %v3630
      %3660 = vmatprep.subr.bf16.mxu0 0
      %3661 = vmatpush1.bf16.msra.mxu0 %v3629
      %3662 = vmatprep.subr.bf16.mxu0 0
      %3663 = vmatpush2.bf16.msra.mxu0 0
      %3664 = vmatprep.subr.bf16.mxu0 0
      %3665 = vmatpush2.bf16.msra.mxu0 0
      %3666 = vmatprep.subr.bf16.mxu0 0
      %3667 = vmatpush2.bf16.msra.mxu0 0
      %3668 = vmatprep.subr.bf16.mxu0 0
      %3669 = vmatpush2.bf16.msra.mxu0 0
      %3670 = vmatprep.subr.bf16.mxu0 0
      %3671 = vmatpush2.bf16.msra.mxu0 0
      %3672 = vmatprep.subr.bf16.mxu0 0
      %3673 = vmatpush2.bf16.msra.mxu0 0
      %3674 = vmatprep.subr.bf16.mxu0 0
      %3675 = vmatpush2.bf16.msra.mxu0 0
      %3676 = vmatprep.subr.bf16.mxu0 0
      %3677 = vmatpush2.bf16.msra.mxu0 0
      %3678 = vmatprep.mubr.bf16.mxu0 0
      %3679 = vmatmul.mubr.bf16.gmra.mxu0 %v3637
      %v3680 = vpop.f32.mrf.mxu0
      %v3681 = vadd.f32 0.0, %v3680
      %v3682 = vpop.f32.mrf.mxu0
      %v3683 = vpop.f32.mrf.mxu0
      %v3684 = vadd.f32 0.0, %v3683
      %v3685 = vpop.f32.mrf.mxu0
      %3686 = vmatprep.mubr.bf16.mxu0 0
      %3687 = vmatmul.mubr.bf16.gmra.mxu0 %v3639
      %v3688 = vpop.f32.mrf.mxu0
      %v3689 = vadd.f32 0.0, %v3688
      %v3690 = vpop.f32.mrf.mxu0
      %v3691 = vpop.f32.mrf.mxu0
      %v3692 = vadd.f32 0.0, %v3691
      %v3693 = vpop.f32.mrf.mxu0
      %3694 = vmatprep.mubr.bf16.mxu0 0
      %3695 = vmatmul.mubr.bf16.gmra.mxu0 %v3641
      %v3696 = vpop.f32.mrf.mxu0
      %v3697 = vadd.f32 0.0, %v3696
      %v3698 = vpop.f32.mrf.mxu0
      %v3699 = vpop.f32.mrf.mxu0
      %v3700 = vadd.f32 0.0, %v3699
      %v3701 = vpop.f32.mrf.mxu0
      %3702 = vmatprep.mubr.bf16.mxu0 0
      %3703 = vmatmul.mubr.bf16.gmra.mxu0 %v3644
      %v3704 = vpop.f32.mrf.mxu0
      %v3705 = vadd.f32 0.0, %v3704
      %v3706 = vpop.f32.mrf.mxu0
      %v3707 = vpop.f32.mrf.mxu0
      %v3708 = vpop.f32.mrf.mxu0
      %3709 = vdwg.mxu0
      %v3710 = vadd.f32 %v3560, %v3681
      %v3711 = vadd.f32 %v3561, %v3684
      %v3712 = vadd.f32 %v3562, %v3689
      %v3713 = vadd.f32 %v3563, %v3692
      %v3714 = vadd.f32 %v3564, %v3697
      %v3715 = vadd.f32 %v3565, %v3700
      %v3716 = vadd.f32 %v3566, %v3705
      %v3717 = vrot.slane %v1572, 1
      %v3718 = vor.u32 %v1569, %v3717
      %v3720 = vrot.slane %v1579, 5
      %v3722 = vrot.slane %v1586, 1
      %v3723 = vrot.slane %v1589, 2
      %v3724 = vor.u32 %v3722, %v3723
      %v3726 = vrot.slane %v1596, 6
      %v3728 = vrot.slane %v1603, 2
      %v3729 = vrot.slane %v1606, 3
      %v3730 = vor.u32 %v3728, %v3729
      %v3732 = vrot.slane %v1613, 7
      %v3735 = vshrl.u32 %v3441, 16
      %v3737 = vrot.slane %v3735, 3
      %v3738 = vshll.u32 %v3441, 16
      %v3740 = vrot.slane %v3738, 4
      %v3741 = vor.u32 %v3737, %v3740
      %v3742 = vsel %vm1533, %v3718, %v3720
      %v3745 = vsel %vm1535, %v3742, %v3724
      %v3746 = vsel %vm1539, %v3724, %v3726
      %v3749 = vsel %vm1541, %v3746, %v3730
      %v3750 = vsel %vm1545, %v3730, %v3732
      %v3753 = vsel %vm490, %v3750, %v3741
      %s3754 = scalar_lea.vmem %s3, 416
      %v3755 = vld [vmem:[%s3754] sm:$0xf]
      %v3756 = vld [vmem:[%s3754 + $0x4] sm:$0xf]
      %v3757 = vld [vmem:[%s3754 + $0x8] sm:$0xf]
      %v3758 = vld [vmem:[%s3754 + $0xc] sm:$0xf]
      %v3759 = vld [vmem:[%s3754 + $0x10] sm:$0xf]
      %v3760 = vld [vmem:[%s3754 + $0x14] sm:$0xf]
      %v3761 = vld [vmem:[%s3754 + $0x18] sm:$0xf]
      %v3762 = vld [vmem:[%s3754 + $0x1c] sm:$0xf]
      %v3771 = vunpack.c.l.b16 %v3755
      %v3772 = vunpack.c.l.b16 %v3756
      %v3773 = vunpack.c.l.b16 %v3757
      %v3774 = vunpack.c.l.b16 %v3758
      %v3775 = vunpack.c.l.b16 %v3759
      %v3776 = vunpack.c.l.b16 %v3760
      %v3777 = vunpack.c.l.b16 %v3761
      %v3778 = vunpack.c.l.b16 %v3762
      %v3779 = vpack.c.b16 %v3772, %v3771
      %v3780 = vpack.c.b16 %v3774, %v3773
      %v3781 = vpack.c.b16 %v3776, %v3775
      %v3782 = vpack.c.b16 %v3778, %v3777
      %v3787 = vsel %vm1660, %v3745, 0
      %v3789 = vsel %vm1660, %v3749, 0
      %v3791 = vsel %vm1660, %v3753, 0
      %v3794 = vsel %vm1660, %v3737, 0
      %3796 = vmatprep.subr.bf16.mxu0 0
      %3797 = vmatpush1.bf16.msra.mxu0 0
      %3798 = vmatprep.subr.bf16.mxu0 0
      %3799 = vmatpush1.bf16.msra.mxu0 0
      %3800 = vmatprep.subr.bf16.mxu0 0
      %3801 = vmatpush1.bf16.msra.mxu0 0
      %3802 = vmatprep.subr.bf16.mxu0 0
      %3803 = vmatpush1.bf16.msra.mxu0 0
      %3804 = vmatprep.subr.bf16.mxu0 0
      %3805 = vmatpush1.bf16.msra.mxu0 %v3782
      %3806 = vmatprep.subr.bf16.mxu0 0
      %3807 = vmatpush1.bf16.msra.mxu0 %v3781
      %3808 = vmatprep.subr.bf16.mxu0 0
      %3809 = vmatpush1.bf16.msra.mxu0 %v3780
      %3810 = vmatprep.subr.bf16.mxu0 0
      %3811 = vmatpush1.bf16.msra.mxu0 %v3779
      %3812 = vmatprep.subr.bf16.mxu0 0
      %3813 = vmatpush2.bf16.msra.mxu0 0
      %3814 = vmatprep.subr.bf16.mxu0 0
      %3815 = vmatpush2.bf16.msra.mxu0 0
      %3816 = vmatprep.subr.bf16.mxu0 0
      %3817 = vmatpush2.bf16.msra.mxu0 0
      %3818 = vmatprep.subr.bf16.mxu0 0
      %3819 = vmatpush2.bf16.msra.mxu0 0
      %3820 = vmatprep.subr.bf16.mxu0 0
      %3821 = vmatpush2.bf16.msra.mxu0 0
      %3822 = vmatprep.subr.bf16.mxu0 0
      %3823 = vmatpush2.bf16.msra.mxu0 0
      %3824 = vmatprep.subr.bf16.mxu0 0
      %3825 = vmatpush2.bf16.msra.mxu0 0
      %3826 = vmatprep.subr.bf16.mxu0 0
      %3827 = vmatpush2.bf16.msra.mxu0 0
      %3828 = vmatprep.mubr.bf16.mxu0 0
      %3829 = vmatmul.mubr.bf16.gmra.mxu0 %v3787
      %v3830 = vpop.f32.mrf.mxu0
      %v3831 = vadd.f32 0.0, %v3830
      %v3832 = vpop.f32.mrf.mxu0
      %v3833 = vpop.f32.mrf.mxu0
      %v3834 = vadd.f32 0.0, %v3833
      %v3835 = vpop.f32.mrf.mxu0
      %3836 = vmatprep.mubr.bf16.mxu0 0
      %3837 = vmatmul.mubr.bf16.gmra.mxu0 %v3789
      %v3838 = vpop.f32.mrf.mxu0
      %v3839 = vadd.f32 0.0, %v3838
      %v3840 = vpop.f32.mrf.mxu0
      %v3841 = vpop.f32.mrf.mxu0
      %v3842 = vadd.f32 0.0, %v3841
      %v3843 = vpop.f32.mrf.mxu0
      %3844 = vmatprep.mubr.bf16.mxu0 0
      %3845 = vmatmul.mubr.bf16.gmra.mxu0 %v3791
      %v3846 = vpop.f32.mrf.mxu0
      %v3847 = vadd.f32 0.0, %v3846
      %v3848 = vpop.f32.mrf.mxu0
      %v3849 = vpop.f32.mrf.mxu0
      %v3850 = vadd.f32 0.0, %v3849
      %v3851 = vpop.f32.mrf.mxu0
      %3852 = vmatprep.mubr.bf16.mxu0 0
      %3853 = vmatmul.mubr.bf16.gmra.mxu0 %v3794
      %v3854 = vpop.f32.mrf.mxu0
      %v3855 = vadd.f32 0.0, %v3854
      %v3856 = vpop.f32.mrf.mxu0
      %v3857 = vpop.f32.mrf.mxu0
      %v3858 = vpop.f32.mrf.mxu0
      %3859 = vdwg.mxu0
      %v3860 = vadd.f32 %v3710, %v3831
      %v3861 = vadd.f32 %v3711, %v3834
      %v3862 = vadd.f32 %v3712, %v3839
      %v3863 = vadd.f32 %v3713, %v3842
      %v3864 = vadd.f32 %v3714, %v3847
      %v3865 = vadd.f32 %v3715, %v3850
      %v3866 = vadd.f32 %v3716, %v3855
      %v3867 = vld [vmem:[%s724] sm:$0xe]
      %v3868 = vld [vmem:[%s724 + $0x4] sm:$0x1]
      %v3869 = vrot.slane %v2190, 1
      %v3872 = vshrl.u32 %v2204, 16
      %v3874 = vrot.slane %v3872, 5
      %v3875 = vshll.u32 %v2204, 16
      %v3877 = vrot.slane %v3875, 6
      %v3878 = vor.u32 %v3874, %v3877
      %v3880 = vrot.slane %v2211, 2
      %v3883 = vshrl.u32 %v2225, 16
      %v3885 = vrot.slane %v3883, 6
      %v3886 = vshll.u32 %v2225, 16
      %v3888 = vrot.slane %v3886, 7
      %v3889 = vor.u32 %v3885, %v3888
      %v3891 = vrot.slane %v2232, 3
      %v3893 = vpack.c.b16 %v2244, %v2243
      %v3895 = vshrl.u32 %v3893, 16
      %v3897 = vrot.slane %v3895, 7
      %v3898 = vshll.u32 %v3893, 16
      %v3900 = vor.u32 %v3897, %v3898
      %v3904 = vunpack.c.l.b16 %v3867
      %v3905 = vunpack.c.l.b16 %v3868
      %v3906 = vpack.c.b16 %v3904, %v3904
      %v3907 = vpack.c.b16 %v3905, %v3905
      %v3908 = vsel %vm1533, %v3869, %v3878
      %v3911 = vsel %vm1535, %v3908, %v3880
      %v3912 = vsel %vm1539, %v3880, %v3889
      %v3915 = vsel %vm1541, %v3912, %v3891
      %v3916 = vsel %vm1545, %v3891, %v3900
      %v3919 = vsel %vm490, %v3916, %v3906
      %s3920 = scalar_lea.vmem %s3, 448
      %v3921 = vld [vmem:[%s3920] sm:$0xf]
      %v3922 = vld [vmem:[%s3920 + $0x4] sm:$0xf]
      %v3923 = vld [vmem:[%s3920 + $0x8] sm:$0xf]
      %v3924 = vld [vmem:[%s3920 + $0xc] sm:$0xf]
      %v3925 = vld [vmem:[%s3920 + $0x10] sm:$0xf]
      %v3926 = vld [vmem:[%s3920 + $0x14] sm:$0xf]
      %v3927 = vld [vmem:[%s3920 + $0x18] sm:$0xf]
      %v3928 = vld [vmem:[%s3920 + $0x1c] sm:$0xf]
      %v3937 = vunpack.c.l.b16 %v3921
      %v3938 = vunpack.c.l.b16 %v3922
      %v3939 = vunpack.c.l.b16 %v3923
      %v3940 = vunpack.c.l.b16 %v3924
      %v3941 = vunpack.c.l.b16 %v3925
      %v3942 = vunpack.c.l.b16 %v3926
      %v3943 = vunpack.c.l.b16 %v3927
      %v3944 = vunpack.c.l.b16 %v3928
      %v3945 = vpack.c.b16 %v3938, %v3937
      %v3946 = vpack.c.b16 %v3940, %v3939
      %v3947 = vpack.c.b16 %v3942, %v3941
      %v3948 = vpack.c.b16 %v3944, %v3943
      %v3953 = vsel %vm1660, %v3911, 0
      %v3955 = vsel %vm1660, %v3915, 0
      %v3957 = vsel %vm1660, %v3919, 0
      %v3960 = vsel %vm1660, %v3907, 0
      %3962 = vmatprep.subr.bf16.mxu0 0
      %3963 = vmatpush1.bf16.msra.mxu0 0
      %3964 = vmatprep.subr.bf16.mxu0 0
      %3965 = vmatpush1.bf16.msra.mxu0 0
      %3966 = vmatprep.subr.bf16.mxu0 0
      %3967 = vmatpush1.bf16.msra.mxu0 0
      %3968 = vmatprep.subr.bf16.mxu0 0
      %3969 = vmatpush1.bf16.msra.mxu0 0
      %3970 = vmatprep.subr.bf16.mxu0 0
      %3971 = vmatpush1.bf16.msra.mxu0 %v3948
      %3972 = vmatprep.subr.bf16.mxu0 0
      %3973 = vmatpush1.bf16.msra.mxu0 %v3947
      %3974 = vmatprep.subr.bf16.mxu0 0
      %3975 = vmatpush1.bf16.msra.mxu0 %v3946
      %3976 = vmatprep.subr.bf16.mxu0 0
      %3977 = vmatpush1.bf16.msra.mxu0 %v3945
      %3978 = vmatprep.subr.bf16.mxu0 0
      %3979 = vmatpush2.bf16.msra.mxu0 0
      %3980 = vmatprep.subr.bf16.mxu0 0
      %3981 = vmatpush2.bf16.msra.mxu0 0
      %3982 = vmatprep.subr.bf16.mxu0 0
      %3983 = vmatpush2.bf16.msra.mxu0 0
      %3984 = vmatprep.subr.bf16.mxu0 0
      %3985 = vmatpush2.bf16.msra.mxu0 0
      %3986 = vmatprep.subr.bf16.mxu0 0
      %3987 = vmatpush2.bf16.msra.mxu0 0
      %3988 = vmatprep.subr.bf16.mxu0 0
      %3989 = vmatpush2.bf16.msra.mxu0 0
      %3990 = vmatprep.subr.bf16.mxu0 0
      %3991 = vmatpush2.bf16.msra.mxu0 0
      %3992 = vmatprep.subr.bf16.mxu0 0
      %3993 = vmatpush2.bf16.msra.mxu0 0
      %3994 = vmatprep.mubr.bf16.mxu0 0
      %3995 = vmatmul.mubr.bf16.gmra.mxu0 %v3953
      %v3996 = vpop.f32.mrf.mxu0
      %v3997 = vadd.f32 0.0, %v3996
      %v3998 = vpop.f32.mrf.mxu0
      %v3999 = vpop.f32.mrf.mxu0
      %v4000 = vadd.f32 0.0, %v3999
      %v4001 = vpop.f32.mrf.mxu0
      %4002 = vmatprep.mubr.bf16.mxu0 0
      %4003 = vmatmul.mubr.bf16.gmra.mxu0 %v3955
      %v4004 = vpop.f32.mrf.mxu0
      %v4005 = vadd.f32 0.0, %v4004
      %v4006 = vpop.f32.mrf.mxu0
      %v4007 = vpop.f32.mrf.mxu0
      %v4008 = vadd.f32 0.0, %v4007
      %v4009 = vpop.f32.mrf.mxu0
      %4010 = vmatprep.mubr.bf16.mxu0 0
      %4011 = vmatmul.mubr.bf16.gmra.mxu0 %v3957
      %v4012 = vpop.f32.mrf.mxu0
      %v4013 = vadd.f32 0.0, %v4012
      %v4014 = vpop.f32.mrf.mxu0
      %v4015 = vpop.f32.mrf.mxu0
      %v4016 = vadd.f32 0.0, %v4015
      %v4017 = vpop.f32.mrf.mxu0
      %4018 = vmatprep.mubr.bf16.mxu0 0
      %4019 = vmatmul.mubr.bf16.gmra.mxu0 %v3960
      %v4020 = vpop.f32.mrf.mxu0
      %v4021 = vadd.f32 0.0, %v4020
      %v4022 = vpop.f32.mrf.mxu0
      %v4023 = vpop.f32.mrf.mxu0
      %v4024 = vpop.f32.mrf.mxu0
      %4025 = vdwg.mxu0
      %v4026 = vadd.f32 %v3860, %v3997
      %v4027 = vadd.f32 %v3861, %v4000
      %v4028 = vadd.f32 %v3862, %v4005
      %v4029 = vadd.f32 %v3863, %v4008
      %v4030 = vadd.f32 %v3864, %v4013
      %v4031 = vadd.f32 %v3865, %v4016
      %v4032 = vadd.f32 %v3866, %v4021
      %v4033 = vld [vmem:[%s1222] sm:$0xf]
      %v4034 = vrot.slane %v2748, 4
      %v4035 = vrot.slane %v2751, 5
      %v4036 = vor.u32 %v4034, %v4035
      %v4038 = vrot.slane %v2398, 1
      %v4040 = vrot.slane %v2759, 5
      %v4041 = vrot.slane %v2762, 6
      %v4042 = vor.u32 %v4040, %v4041
      %v4044 = vrot.slane %v2415, 2
      %v4046 = vrot.slane %v2770, 6
      %v4047 = vrot.slane %v2773, 7
      %v4048 = vor.u32 %v4046, %v4047
      %v4051 = vunpack.c.l.b16 %v4033
      %v4052 = vpack.c.b16 %v4051, %v4051
      %v4053 = vrot.slane %v4052, 3
      %v4054 = vsel %vm1533, %v2373, %v4036
      %v4057 = vsel %vm1535, %v4054, %v4038
      %v4058 = vsel %vm1539, %v4038, %v4042
      %v4061 = vsel %vm1541, %v4058, %v4044
      %v4062 = vsel %vm1545, %v4044, %v4048
      %v4065 = vsel %vm490, %v4062, %v4053
      %s4066 = scalar_lea.vmem %s3, 480
      %v4067 = vld [vmem:[%s4066] sm:$0xf]
      %v4068 = vld [vmem:[%s4066 + $0x4] sm:$0xf]
      %v4069 = vld [vmem:[%s4066 + $0x8] sm:$0xf]
      %v4070 = vld [vmem:[%s4066 + $0xc] sm:$0xf]
      %v4071 = vld [vmem:[%s4066 + $0x10] sm:$0xf]
      %v4072 = vld [vmem:[%s4066 + $0x14] sm:$0xf]
      %v4073 = vld [vmem:[%s4066 + $0x18] sm:$0xf]
      %v4074 = vld [vmem:[%s4066 + $0x1c] sm:$0xf]
      %v4083 = vunpack.c.l.b16 %v4067
      %v4084 = vunpack.c.l.b16 %v4068
      %v4085 = vunpack.c.l.b16 %v4069
      %v4086 = vunpack.c.l.b16 %v4070
      %v4087 = vunpack.c.l.b16 %v4071
      %v4088 = vunpack.c.l.b16 %v4072
      %v4089 = vunpack.c.l.b16 %v4073
      %v4090 = vunpack.c.l.b16 %v4074
      %v4091 = vpack.c.b16 %v4084, %v4083
      %v4092 = vpack.c.b16 %v4086, %v4085
      %v4093 = vpack.c.b16 %v4088, %v4087
      %v4094 = vpack.c.b16 %v4090, %v4089
      %v4099 = vsel %vm1660, %v4057, 0
      %v4101 = vsel %vm1660, %v4061, 0
      %v4103 = vsel %vm1660, %v4065, 0
      %v4105 = vsel %vm1660, %v4053, 0
      %4107 = vmatprep.subr.bf16.mxu0 0
      %4108 = vmatpush1.bf16.msra.mxu0 0
      %4109 = vmatprep.subr.bf16.mxu0 0
      %4110 = vmatpush1.bf16.msra.mxu0 0
      %4111 = vmatprep.subr.bf16.mxu0 0
      %4112 = vmatpush1.bf16.msra.mxu0 0
      %4113 = vmatprep.subr.bf16.mxu0 0
      %4114 = vmatpush1.bf16.msra.mxu0 0
      %4115 = vmatprep.subr.bf16.mxu0 0
      %4116 = vmatpush1.bf16.msra.mxu0 %v4094
      %4117 = vmatprep.subr.bf16.mxu0 0
      %4118 = vmatpush1.bf16.msra.mxu0 %v4093
      %4119 = vmatprep.subr.bf16.mxu0 0
      %4120 = vmatpush1.bf16.msra.mxu0 %v4092
      %4121 = vmatprep.subr.bf16.mxu0 0
      %4122 = vmatpush1.bf16.msra.mxu0 %v4091
      %4123 = vmatprep.subr.bf16.mxu0 0
      %4124 = vmatpush2.bf16.msra.mxu0 0
      %4125 = vmatprep.subr.bf16.mxu0 0
      %4126 = vmatpush2.bf16.msra.mxu0 0
      %4127 = vmatprep.subr.bf16.mxu0 0
      %4128 = vmatpush2.bf16.msra.mxu0 0
      %4129 = vmatprep.subr.bf16.mxu0 0
      %4130 = vmatpush2.bf16.msra.mxu0 0
      %4131 = vmatprep.subr.bf16.mxu0 0
      %4132 = vmatpush2.bf16.msra.mxu0 0
      %4133 = vmatprep.subr.bf16.mxu0 0
      %4134 = vmatpush2.bf16.msra.mxu0 0
      %4135 = vmatprep.subr.bf16.mxu0 0
      %4136 = vmatpush2.bf16.msra.mxu0 0
      %4137 = vmatprep.subr.bf16.mxu0 0
      %4138 = vmatpush2.bf16.msra.mxu0 0
      %4139 = vmatprep.mubr.bf16.mxu0 0
      %4140 = vmatmul.mubr.bf16.gmra.mxu0 %v4099
      %v4141 = vpop.f32.mrf.mxu0
      %v4142 = vadd.f32 0.0, %v4141
      %v4143 = vpop.f32.mrf.mxu0
      %v4144 = vpop.f32.mrf.mxu0
      %v4145 = vadd.f32 0.0, %v4144
      %v4146 = vpop.f32.mrf.mxu0
      %4147 = vmatprep.mubr.bf16.mxu0 0
      %4148 = vmatmul.mubr.bf16.gmra.mxu0 %v4101
      %v4149 = vpop.f32.mrf.mxu0
      %v4150 = vadd.f32 0.0, %v4149
      %v4151 = vpop.f32.mrf.mxu0
      %v4152 = vpop.f32.mrf.mxu0
      %v4153 = vadd.f32 0.0, %v4152
      %v4154 = vpop.f32.mrf.mxu0
      %4155 = vmatprep.mubr.bf16.mxu0 0
      %4156 = vmatmul.mubr.bf16.gmra.mxu0 %v4103
      %v4157 = vpop.f32.mrf.mxu0
      %v4158 = vadd.f32 0.0, %v4157
      %v4159 = vpop.f32.mrf.mxu0
      %v4160 = vpop.f32.mrf.mxu0
      %v4161 = vadd.f32 0.0, %v4160
      %v4162 = vpop.f32.mrf.mxu0
      %4163 = vmatprep.mubr.bf16.mxu0 0
      %4164 = vmatmul.mubr.bf16.gmra.mxu0 %v4105
      %v4165 = vpop.f32.mrf.mxu0
      %v4166 = vadd.f32 0.0, %v4165
      %v4167 = vpop.f32.mrf.mxu0
      %v4168 = vpop.f32.mrf.mxu0
      %v4169 = vpop.f32.mrf.mxu0
      %4170 = vdwg.mxu0
      %v4171 = vadd.f32 %v4026, %v4142
      %v4172 = vadd.f32 %v4027, %v4145
      %v4173 = vadd.f32 %v4028, %v4150
      %v4174 = vadd.f32 %v4029, %v4153
      %v4175 = vadd.f32 %v4030, %v4158
      %v4176 = vadd.f32 %v4031, %v4161
      %v4177 = vadd.f32 %v4032, %v4166
      %v4178 = vld [vmem:[%s1471] sm:$0xf]
      %v4179 = vrot.slane %v2916, 4
      %v4180 = vrot.slane %v2919, 5
      %v4181 = vor.u32 %v4179, %v4180
      %v4183 = vrot.slane %v2579, 1
      %v4185 = vrot.slane %v2927, 5
      %v4186 = vrot.slane %v2930, 6
      %v4187 = vor.u32 %v4185, %v4186
      %v4189 = vrot.slane %v2596, 2
      %v4191 = vrot.slane %v2938, 6
      %v4192 = vrot.slane %v2941, 7
      %v4193 = vor.u32 %v4191, %v4192
      %v4196 = vunpack.c.l.b16 %v4178
      %v4197 = vpack.c.b16 %v4196, %v4196
      %v4198 = vrot.slane %v4197, 3
      %v4199 = vsel %vm1533, %v2554, %v4181
      %v4202 = vsel %vm1535, %v4199, %v4183
      %v4203 = vsel %vm1539, %v4183, %v4187
      %v4206 = vsel %vm1541, %v4203, %v4189
      %v4207 = vsel %vm1545, %v4189, %v4193
      %v4210 = vsel %vm490, %v4207, %v4198
      %s4211 = scalar_lea.vmem %s3, 512
      %v4212 = vld [vmem:[%s4211] sm:$0xf]
      %v4213 = vld [vmem:[%s4211 + $0x4] sm:$0xf]
      %v4214 = vld [vmem:[%s4211 + $0x8] sm:$0xf]
      %v4215 = vld [vmem:[%s4211 + $0xc] sm:$0xf]
      %v4216 = vld [vmem:[%s4211 + $0x10] sm:$0xf]
      %v4217 = vld [vmem:[%s4211 + $0x14] sm:$0xf]
      %v4218 = vld [vmem:[%s4211 + $0x18] sm:$0xf]
      %v4219 = vld [vmem:[%s4211 + $0x1c] sm:$0xf]
      %v4228 = vunpack.c.l.b16 %v4212
      %v4229 = vunpack.c.l.b16 %v4213
      %v4230 = vunpack.c.l.b16 %v4214
      %v4231 = vunpack.c.l.b16 %v4215
      %v4232 = vunpack.c.l.b16 %v4216
      %v4233 = vunpack.c.l.b16 %v4217
      %v4234 = vunpack.c.l.b16 %v4218
      %v4235 = vunpack.c.l.b16 %v4219
      %v4236 = vpack.c.b16 %v4229, %v4228
      %v4237 = vpack.c.b16 %v4231, %v4230
      %v4238 = vpack.c.b16 %v4233, %v4232
      %v4239 = vpack.c.b16 %v4235, %v4234
      %v4244 = vsel %vm1660, %v4202, 0
      %v4246 = vsel %vm1660, %v4206, 0
      %v4248 = vsel %vm1660, %v4210, 0
      %v4250 = vsel %vm1660, %v4198, 0
      %4252 = vmatprep.subr.bf16.mxu0 0
      %4253 = vmatpush1.bf16.msra.mxu0 0
      %4254 = vmatprep.subr.bf16.mxu0 0
      %4255 = vmatpush1.bf16.msra.mxu0 0
      %4256 = vmatprep.subr.bf16.mxu0 0
      %4257 = vmatpush1.bf16.msra.mxu0 0
      %4258 = vmatprep.subr.bf16.mxu0 0
      %4259 = vmatpush1.bf16.msra.mxu0 0
      %4260 = vmatprep.subr.bf16.mxu0 0
      %4261 = vmatpush1.bf16.msra.mxu0 %v4239
      %4262 = vmatprep.subr.bf16.mxu0 0
      %4263 = vmatpush1.bf16.msra.mxu0 %v4238
      %4264 = vmatprep.subr.bf16.mxu0 0
      %4265 = vmatpush1.bf16.msra.mxu0 %v4237
      %4266 = vmatprep.subr.bf16.mxu0 0
      %4267 = vmatpush1.bf16.msra.mxu0 %v4236
      %4268 = vmatprep.subr.bf16.mxu0 0
      %4269 = vmatpush2.bf16.msra.mxu0 0
      %4270 = vmatprep.subr.bf16.mxu0 0
      %4271 = vmatpush2.bf16.msra.mxu0 0
      %4272 = vmatprep.subr.bf16.mxu0 0
      %4273 = vmatpush2.bf16.msra.mxu0 0
      %4274 = vmatprep.subr.bf16.mxu0 0
      %4275 = vmatpush2.bf16.msra.mxu0 0
      %4276 = vmatprep.subr.bf16.mxu0 0
      %4277 = vmatpush2.bf16.msra.mxu0 0
      %4278 = vmatprep.subr.bf16.mxu0 0
      %4279 = vmatpush2.bf16.msra.mxu0 0
      %4280 = vmatprep.subr.bf16.mxu0 0
      %4281 = vmatpush2.bf16.msra.mxu0 0
      %4282 = vmatprep.subr.bf16.mxu0 0
      %4283 = vmatpush2.bf16.msra.mxu0 0
      %4284 = vmatprep.mubr.bf16.mxu0 0
      %4285 = vmatmul.mubr.bf16.gmra.mxu0 %v4244
      %v4286 = vpop.f32.mrf.mxu0
      %v4287 = vadd.f32 0.0, %v4286
      %v4288 = vpop.f32.mrf.mxu0
      %v4289 = vpop.f32.mrf.mxu0
      %v4290 = vadd.f32 0.0, %v4289
      %v4291 = vpop.f32.mrf.mxu0
      %4292 = vmatprep.mubr.bf16.mxu0 0
      %4293 = vmatmul.mubr.bf16.gmra.mxu0 %v4246
      %v4294 = vpop.f32.mrf.mxu0
      %v4295 = vadd.f32 0.0, %v4294
      %v4296 = vpop.f32.mrf.mxu0
      %v4297 = vpop.f32.mrf.mxu0
      %v4298 = vadd.f32 0.0, %v4297
      %v4299 = vpop.f32.mrf.mxu0
      %4300 = vmatprep.mubr.bf16.mxu0 0
      %4301 = vmatmul.mubr.bf16.gmra.mxu0 %v4248
      %v4302 = vpop.f32.mrf.mxu0
      %v4303 = vadd.f32 0.0, %v4302
      %v4304 = vpop.f32.mrf.mxu0
      %v4305 = vpop.f32.mrf.mxu0
      %v4306 = vadd.f32 0.0, %v4305
      %v4307 = vpop.f32.mrf.mxu0
      %4308 = vmatprep.mubr.bf16.mxu0 0
      %4309 = vmatmul.mubr.bf16.gmra.mxu0 %v4250
      %v4310 = vpop.f32.mrf.mxu0
      %v4311 = vadd.f32 0.0, %v4310
      %v4312 = vpop.f32.mrf.mxu0
      %v4313 = vpop.f32.mrf.mxu0
      %v4314 = vpop.f32.mrf.mxu0
      %4315 = vdwg.mxu0
      %v4316 = vadd.f32 %v4171, %v4287
      %v4317 = vadd.f32 %v4172, %v4290
      %v4318 = vadd.f32 %v4173, %v4295
      %v4319 = vadd.f32 %v4174, %v4298
      %v4320 = vadd.f32 %v4175, %v4303
      %v4321 = vadd.f32 %v4176, %v4306
      %v4322 = vadd.f32 %v4177, %v4311
      %v4323 = vrot.slane %v2386, 1
      %v4324 = vor.u32 %v2383, %v4323
      %v4326 = vrot.slane %v2393, 5
      %v4328 = vrot.slane %v2400, 1
      %v4329 = vrot.slane %v2403, 2
      %v4330 = vor.u32 %v4328, %v4329
      %v4332 = vrot.slane %v2410, 6
      %v4334 = vrot.slane %v2417, 2
      %v4335 = vrot.slane %v2420, 3
      %v4336 = vor.u32 %v4334, %v4335
      %v4338 = vrot.slane %v2427, 7
      %v4341 = vshrl.u32 %v4052, 16
      %v4343 = vrot.slane %v4341, 3
      %v4344 = vshll.u32 %v4052, 16
      %v4346 = vrot.slane %v4344, 4
      %v4347 = vor.u32 %v4343, %v4346
      %v4348 = vsel %vm1533, %v4324, %v4326
      %v4351 = vsel %vm1535, %v4348, %v4330
      %v4352 = vsel %vm1539, %v4330, %v4332
      %v4355 = vsel %vm1541, %v4352, %v4336
      %v4356 = vsel %vm1545, %v4336, %v4338
      %v4359 = vsel %vm490, %v4356, %v4347
      %s4360 = scalar_lea.vmem %s3, 544
      %v4361 = vld [vmem:[%s4360] sm:$0xf]
      %v4362 = vld [vmem:[%s4360 + $0x4] sm:$0xf]
      %v4363 = vld [vmem:[%s4360 + $0x8] sm:$0xf]
      %v4364 = vld [vmem:[%s4360 + $0xc] sm:$0xf]
      %v4365 = vld [vmem:[%s4360 + $0x10] sm:$0xf]
      %v4366 = vld [vmem:[%s4360 + $0x14] sm:$0xf]
      %v4367 = vld [vmem:[%s4360 + $0x18] sm:$0xf]
      %v4368 = vld [vmem:[%s4360 + $0x1c] sm:$0xf]
      %v4377 = vunpack.c.l.b16 %v4361
      %v4378 = vunpack.c.l.b16 %v4362
      %v4379 = vunpack.c.l.b16 %v4363
      %v4380 = vunpack.c.l.b16 %v4364
      %v4381 = vunpack.c.l.b16 %v4365
      %v4382 = vunpack.c.l.b16 %v4366
      %v4383 = vunpack.c.l.b16 %v4367
      %v4384 = vunpack.c.l.b16 %v4368
      %v4385 = vpack.c.b16 %v4378, %v4377
      %v4386 = vpack.c.b16 %v4380, %v4379
      %v4387 = vpack.c.b16 %v4382, %v4381
      %v4388 = vpack.c.b16 %v4384, %v4383
      %v4393 = vsel %vm1660, %v4351, 0
      %v4395 = vsel %vm1660, %v4355, 0
      %v4397 = vsel %vm1660, %v4359, 0
      %v4400 = vsel %vm1660, %v4343, 0
      %4402 = vmatprep.subr.bf16.mxu0 0
      %4403 = vmatpush1.bf16.msra.mxu0 0
      %4404 = vmatprep.subr.bf16.mxu0 0
      %4405 = vmatpush1.bf16.msra.mxu0 0
      %4406 = vmatprep.subr.bf16.mxu0 0
      %4407 = vmatpush1.bf16.msra.mxu0 0
      %4408 = vmatprep.subr.bf16.mxu0 0
      %4409 = vmatpush1.bf16.msra.mxu0 0
      %4410 = vmatprep.subr.bf16.mxu0 0
      %4411 = vmatpush1.bf16.msra.mxu0 %v4388
      %4412 = vmatprep.subr.bf16.mxu0 0
      %4413 = vmatpush1.bf16.msra.mxu0 %v4387
      %4414 = vmatprep.subr.bf16.mxu0 0
      %4415 = vmatpush1.bf16.msra.mxu0 %v4386
      %4416 = vmatprep.subr.bf16.mxu0 0
      %4417 = vmatpush1.bf16.msra.mxu0 %v4385
      %4418 = vmatprep.subr.bf16.mxu0 0
      %4419 = vmatpush2.bf16.msra.mxu0 0
      %4420 = vmatprep.subr.bf16.mxu0 0
      %4421 = vmatpush2.bf16.msra.mxu0 0
      %4422 = vmatprep.subr.bf16.mxu0 0
      %4423 = vmatpush2.bf16.msra.mxu0 0
      %4424 = vmatprep.subr.bf16.mxu0 0
      %4425 = vmatpush2.bf16.msra.mxu0 0
      %4426 = vmatprep.subr.bf16.mxu0 0
      %4427 = vmatpush2.bf16.msra.mxu0 0
      %4428 = vmatprep.subr.bf16.mxu0 0
      %4429 = vmatpush2.bf16.msra.mxu0 0
      %4430 = vmatprep.subr.bf16.mxu0 0
      %4431 = vmatpush2.bf16.msra.mxu0 0
      %4432 = vmatprep.subr.bf16.mxu0 0
      %4433 = vmatpush2.bf16.msra.mxu0 0
      %4434 = vmatprep.mubr.bf16.mxu0 0
      %4435 = vmatmul.mubr.bf16.gmra.mxu0 %v4393
      %v4436 = vpop.f32.mrf.mxu0
      %v4437 = vadd.f32 0.0, %v4436
      %v4438 = vpop.f32.mrf.mxu0
      %v4439 = vpop.f32.mrf.mxu0
      %v4440 = vadd.f32 0.0, %v4439
      %v4441 = vpop.f32.mrf.mxu0
      %4442 = vmatprep.mubr.bf16.mxu0 0
      %4443 = vmatmul.mubr.bf16.gmra.mxu0 %v4395
      %v4444 = vpop.f32.mrf.mxu0
      %v4445 = vadd.f32 0.0, %v4444
      %v4446 = vpop.f32.mrf.mxu0
      %v4447 = vpop.f32.mrf.mxu0
      %v4448 = vadd.f32 0.0, %v4447
      %v4449 = vpop.f32.mrf.mxu0
      %4450 = vmatprep.mubr.bf16.mxu0 0
      %4451 = vmatmul.mubr.bf16.gmra.mxu0 %v4397
      %v4452 = vpop.f32.mrf.mxu0
      %v4453 = vadd.f32 0.0, %v4452
      %v4454 = vpop.f32.mrf.mxu0
      %v4455 = vpop.f32.mrf.mxu0
      %v4456 = vadd.f32 0.0, %v4455
      %v4457 = vpop.f32.mrf.mxu0
      %4458 = vmatprep.mubr.bf16.mxu0 0
      %4459 = vmatmul.mubr.bf16.gmra.mxu0 %v4400
      %v4460 = vpop.f32.mrf.mxu0
      %v4461 = vadd.f32 0.0, %v4460
      %v4462 = vpop.f32.mrf.mxu0
      %v4463 = vpop.f32.mrf.mxu0
      %v4464 = vpop.f32.mrf.mxu0
      %4465 = vdwg.mxu0
      %v4466 = vadd.f32 %v4316, %v4437
      %v4467 = vadd.f32 %v4317, %v4440
      %v4468 = vadd.f32 %v4318, %v4445
      %v4469 = vadd.f32 %v4319, %v4448
      %v4470 = vadd.f32 %v4320, %v4453
      %v4471 = vadd.f32 %v4321, %v4456
      %v4472 = vadd.f32 %v4322, %v4461
      %v4473 = vrot.slane %v2567, 1
      %v4474 = vor.u32 %v2564, %v4473
      %v4476 = vrot.slane %v2574, 5
      %v4478 = vrot.slane %v2581, 1
      %v4479 = vrot.slane %v2584, 2
      %v4480 = vor.u32 %v4478, %v4479
      %v4482 = vrot.slane %v2591, 6
      %v4484 = vrot.slane %v2598, 2
      %v4485 = vrot.slane %v2601, 3
      %v4486 = vor.u32 %v4484, %v4485
      %v4488 = vrot.slane %v2608, 7
      %v4491 = vshrl.u32 %v4197, 16
      %v4493 = vrot.slane %v4491, 3
      %v4494 = vshll.u32 %v4197, 16
      %v4496 = vrot.slane %v4494, 4
      %v4497 = vor.u32 %v4493, %v4496
      %v4498 = vsel %vm1533, %v4474, %v4476
      %v4501 = vsel %vm1535, %v4498, %v4480
      %v4502 = vsel %vm1539, %v4480, %v4482
      %v4505 = vsel %vm1541, %v4502, %v4486
      %v4506 = vsel %vm1545, %v4486, %v4488
      %v4509 = vsel %vm490, %v4506, %v4497
      %s4510 = scalar_lea.vmem %s3, 576
      %v4511 = vld [vmem:[%s4510] sm:$0xf]
      %v4512 = vld [vmem:[%s4510 + $0x4] sm:$0xf]
      %v4513 = vld [vmem:[%s4510 + $0x8] sm:$0xf]
      %v4514 = vld [vmem:[%s4510 + $0xc] sm:$0xf]
      %v4515 = vld [vmem:[%s4510 + $0x10] sm:$0xf]
      %v4516 = vld [vmem:[%s4510 + $0x14] sm:$0xf]
      %v4517 = vld [vmem:[%s4510 + $0x18] sm:$0xf]
      %v4518 = vld [vmem:[%s4510 + $0x1c] sm:$0xf]
      %v4527 = vunpack.c.l.b16 %v4511
      %v4528 = vunpack.c.l.b16 %v4512
      %v4529 = vunpack.c.l.b16 %v4513
      %v4530 = vunpack.c.l.b16 %v4514
      %v4531 = vunpack.c.l.b16 %v4515
      %v4532 = vunpack.c.l.b16 %v4516
      %v4533 = vunpack.c.l.b16 %v4517
      %v4534 = vunpack.c.l.b16 %v4518
      %v4535 = vpack.c.b16 %v4528, %v4527
      %v4536 = vpack.c.b16 %v4530, %v4529
      %v4537 = vpack.c.b16 %v4532, %v4531
      %v4538 = vpack.c.b16 %v4534, %v4533
      %v4543 = vsel %vm1660, %v4501, 0
      %v4545 = vsel %vm1660, %v4505, 0
      %v4547 = vsel %vm1660, %v4509, 0
      %v4550 = vsel %vm1660, %v4493, 0
      %4552 = vmatprep.subr.bf16.mxu0 0
      %4553 = vmatpush1.bf16.msra.mxu0 0
      %4554 = vmatprep.subr.bf16.mxu0 0
      %4555 = vmatpush1.bf16.msra.mxu0 0
      %4556 = vmatprep.subr.bf16.mxu0 0
      %4557 = vmatpush1.bf16.msra.mxu0 0
      %4558 = vmatprep.subr.bf16.mxu0 0
      %4559 = vmatpush1.bf16.msra.mxu0 0
      %4560 = vmatprep.subr.bf16.mxu0 0
      %4561 = vmatpush1.bf16.msra.mxu0 %v4538
      %4562 = vmatprep.subr.bf16.mxu0 0
      %4563 = vmatpush1.bf16.msra.mxu0 %v4537
      %4564 = vmatprep.subr.bf16.mxu0 0
      %4565 = vmatpush1.bf16.msra.mxu0 %v4536
      %4566 = vmatprep.subr.bf16.mxu0 0
      %4567 = vmatpush1.bf16.msra.mxu0 %v4535
      %4568 = vmatprep.subr.bf16.mxu0 0
      %4569 = vmatpush2.bf16.msra.mxu0 0
      %4570 = vmatprep.subr.bf16.mxu0 0
      %4571 = vmatpush2.bf16.msra.mxu0 0
      %4572 = vmatprep.subr.bf16.mxu0 0
      %4573 = vmatpush2.bf16.msra.mxu0 0
      %4574 = vmatprep.subr.bf16.mxu0 0
      %4575 = vmatpush2.bf16.msra.mxu0 0
      %4576 = vmatprep.subr.bf16.mxu0 0
      %4577 = vmatpush2.bf16.msra.mxu0 0
      %4578 = vmatprep.subr.bf16.mxu0 0
      %4579 = vmatpush2.bf16.msra.mxu0 0
      %4580 = vmatprep.subr.bf16.mxu0 0
      %4581 = vmatpush2.bf16.msra.mxu0 0
      %4582 = vmatprep.subr.bf16.mxu0 0
      %4583 = vmatpush2.bf16.msra.mxu0 0
      %4584 = vmatprep.mubr.bf16.mxu0 0
      %4585 = vmatmul.mubr.bf16.gmra.mxu0 %v4543
      %v4586 = vpop.f32.mrf.mxu0
      %v4587 = vadd.f32 0.0, %v4586
      %v4588 = vpop.f32.mrf.mxu0
      %v4589 = vpop.f32.mrf.mxu0
      %v4590 = vadd.f32 0.0, %v4589
      %v4591 = vpop.f32.mrf.mxu0
      %4592 = vmatprep.mubr.bf16.mxu0 0
      %4593 = vmatmul.mubr.bf16.gmra.mxu0 %v4545
      %v4594 = vpop.f32.mrf.mxu0
      %v4595 = vadd.f32 0.0, %v4594
      %v4596 = vpop.f32.mrf.mxu0
      %v4597 = vpop.f32.mrf.mxu0
      %v4598 = vadd.f32 0.0, %v4597
      %v4599 = vpop.f32.mrf.mxu0
      %4600 = vmatprep.mubr.bf16.mxu0 0
      %4601 = vmatmul.mubr.bf16.gmra.mxu0 %v4547
      %v4602 = vpop.f32.mrf.mxu0
      %v4603 = vadd.f32 0.0, %v4602
      %v4604 = vpop.f32.mrf.mxu0
      %v4605 = vpop.f32.mrf.mxu0
      %v4606 = vadd.f32 0.0, %v4605
      %v4607 = vpop.f32.mrf.mxu0
      %4608 = vmatprep.mubr.bf16.mxu0 0
      %4609 = vmatmul.mubr.bf16.gmra.mxu0 %v4550
      %v4610 = vpop.f32.mrf.mxu0
      %v4611 = vadd.f32 0.0, %v4610
      %v4612 = vpop.f32.mrf.mxu0
      %v4613 = vpop.f32.mrf.mxu0
      %v4614 = vpop.f32.mrf.mxu0
      %4615 = vdwg.mxu0
      %v4616 = vadd.f32 %v4466, %v4587
      %v4617 = vadd.f32 %v4467, %v4590
      %v4618 = vadd.f32 %v4468, %v4595
      %v4619 = vadd.f32 %v4469, %v4598
      %v4620 = vadd.f32 %v4470, %v4603
      %v4621 = vadd.f32 %v4471, %v4606
      %v4622 = vadd.f32 %v4472, %v4611
      %v4623 = vld [vmem:[%s1222] sm:$0xe]
      %v4624 = vld [vmem:[%s1222 + $0x4] sm:$0x1]
      %v4625 = vrot.slane %v3095, 1
      %v4628 = vshrl.u32 %v3109, 16
      %v4630 = vrot.slane %v4628, 5
      %v4631 = vshll.u32 %v3109, 16
      %v4633 = vrot.slane %v4631, 6
      %v4634 = vor.u32 %v4630, %v4633
      %v4636 = vrot.slane %v3116, 2
      %v4639 = vshrl.u32 %v3130, 16
      %v4641 = vrot.slane %v4639, 6
      %v4642 = vshll.u32 %v3130, 16
      %v4644 = vrot.slane %v4642, 7
      %v4645 = vor.u32 %v4641, %v4644
      %v4647 = vrot.slane %v3137, 3
      %v4649 = vpack.c.b16 %v3149, %v3148
      %v4651 = vshrl.u32 %v4649, 16
      %v4653 = vrot.slane %v4651, 7
      %v4654 = vshll.u32 %v4649, 16
      %v4656 = vor.u32 %v4653, %v4654
      %v4660 = vunpack.c.l.b16 %v4623
      %v4661 = vunpack.c.l.b16 %v4624
      %v4662 = vpack.c.b16 %v4660, %v4660
      %v4663 = vpack.c.b16 %v4661, %v4661
      %v4664 = vsel %vm1533, %v4625, %v4634
      %v4667 = vsel %vm1535, %v4664, %v4636
      %v4668 = vsel %vm1539, %v4636, %v4645
      %v4671 = vsel %vm1541, %v4668, %v4647
      %v4672 = vsel %vm1545, %v4647, %v4656
      %v4675 = vsel %vm490, %v4672, %v4662
      %s4676 = scalar_lea.vmem %s3, 608
      %v4677 = vld [vmem:[%s4676] sm:$0xf]
      %v4678 = vld [vmem:[%s4676 + $0x4] sm:$0xf]
      %v4679 = vld [vmem:[%s4676 + $0x8] sm:$0xf]
      %v4680 = vld [vmem:[%s4676 + $0xc] sm:$0xf]
      %v4681 = vld [vmem:[%s4676 + $0x10] sm:$0xf]
      %v4682 = vld [vmem:[%s4676 + $0x14] sm:$0xf]
      %v4683 = vld [vmem:[%s4676 + $0x18] sm:$0xf]
      %v4684 = vld [vmem:[%s4676 + $0x1c] sm:$0xf]
      %v4693 = vunpack.c.l.b16 %v4677
      %v4694 = vunpack.c.l.b16 %v4678
      %v4695 = vunpack.c.l.b16 %v4679
      %v4696 = vunpack.c.l.b16 %v4680
      %v4697 = vunpack.c.l.b16 %v4681
      %v4698 = vunpack.c.l.b16 %v4682
      %v4699 = vunpack.c.l.b16 %v4683
      %v4700 = vunpack.c.l.b16 %v4684
      %v4701 = vpack.c.b16 %v4694, %v4693
      %v4702 = vpack.c.b16 %v4696, %v4695
      %v4703 = vpack.c.b16 %v4698, %v4697
      %v4704 = vpack.c.b16 %v4700, %v4699
      %v4709 = vsel %vm1660, %v4667, 0
      %v4711 = vsel %vm1660, %v4671, 0
      %v4713 = vsel %vm1660, %v4675, 0
      %v4716 = vsel %vm1660, %v4663, 0
      %4718 = vmatprep.subr.bf16.mxu0 0
      %4719 = vmatpush1.bf16.msra.mxu0 0
      %4720 = vmatprep.subr.bf16.mxu0 0
      %4721 = vmatpush1.bf16.msra.mxu0 0
      %4722 = vmatprep.subr.bf16.mxu0 0
      %4723 = vmatpush1.bf16.msra.mxu0 0
      %4724 = vmatprep.subr.bf16.mxu0 0
      %4725 = vmatpush1.bf16.msra.mxu0 0
      %4726 = vmatprep.subr.bf16.mxu0 0
      %4727 = vmatpush1.bf16.msra.mxu0 %v4704
      %4728 = vmatprep.subr.bf16.mxu0 0
      %4729 = vmatpush1.bf16.msra.mxu0 %v4703
      %4730 = vmatprep.subr.bf16.mxu0 0
      %4731 = vmatpush1.bf16.msra.mxu0 %v4702
      %4732 = vmatprep.subr.bf16.mxu0 0
      %4733 = vmatpush1.bf16.msra.mxu0 %v4701
      %4734 = vmatprep.subr.bf16.mxu0 0
      %4735 = vmatpush2.bf16.msra.mxu0 0
      %4736 = vmatprep.subr.bf16.mxu0 0
      %4737 = vmatpush2.bf16.msra.mxu0 0
      %4738 = vmatprep.subr.bf16.mxu0 0
      %4739 = vmatpush2.bf16.msra.mxu0 0
      %4740 = vmatprep.subr.bf16.mxu0 0
      %4741 = vmatpush2.bf16.msra.mxu0 0
      %4742 = vmatprep.subr.bf16.mxu0 0
      %4743 = vmatpush2.bf16.msra.mxu0 0
      %4744 = vmatprep.subr.bf16.mxu0 0
      %4745 = vmatpush2.bf16.msra.mxu0 0
      %4746 = vmatprep.subr.bf16.mxu0 0
      %4747 = vmatpush2.bf16.msra.mxu0 0
      %4748 = vmatprep.subr.bf16.mxu0 0
      %4749 = vmatpush2.bf16.msra.mxu0 0
      %4750 = vmatprep.mubr.bf16.mxu0 0
      %4751 = vmatmul.mubr.bf16.gmra.mxu0 %v4709
      %v4752 = vpop.f32.mrf.mxu0
      %v4753 = vadd.f32 0.0, %v4752
      %v4754 = vpop.f32.mrf.mxu0
      %v4755 = vpop.f32.mrf.mxu0
      %v4756 = vadd.f32 0.0, %v4755
      %v4757 = vpop.f32.mrf.mxu0
      %4758 = vmatprep.mubr.bf16.mxu0 0
      %4759 = vmatmul.mubr.bf16.gmra.mxu0 %v4711
      %v4760 = vpop.f32.mrf.mxu0
      %v4761 = vadd.f32 0.0, %v4760
      %v4762 = vpop.f32.mrf.mxu0
      %v4763 = vpop.f32.mrf.mxu0
      %v4764 = vadd.f32 0.0, %v4763
      %v4765 = vpop.f32.mrf.mxu0
      %4766 = vmatprep.mubr.bf16.mxu0 0
      %4767 = vmatmul.mubr.bf16.gmra.mxu0 %v4713
      %v4768 = vpop.f32.mrf.mxu0
      %v4769 = vadd.f32 0.0, %v4768
      %v4770 = vpop.f32.mrf.mxu0
      %v4771 = vpop.f32.mrf.mxu0
      %v4772 = vadd.f32 0.0, %v4771
      %v4773 = vpop.f32.mrf.mxu0
      %4774 = vmatprep.mubr.bf16.mxu0 0
      %4775 = vmatmul.mubr.bf16.gmra.mxu0 %v4716
      %v4776 = vpop.f32.mrf.mxu0
      %v4777 = vadd.f32 0.0, %v4776
      %v4778 = vpop.f32.mrf.mxu0
      %v4779 = vpop.f32.mrf.mxu0
      %v4780 = vpop.f32.mrf.mxu0
      %4781 = vdwg.mxu0
      %v4782 = vadd.f32 %v4616, %v4753
      %v4783 = vadd.f32 %v4617, %v4756
      %v4784 = vadd.f32 %v4618, %v4761
      %v4785 = vadd.f32 %v4619, %v4764
      %v4786 = vadd.f32 %v4620, %v4769
      %v4787 = vadd.f32 %v4621, %v4772
      %v4788 = vadd.f32 %v4622, %v4777
      %s4789 = scalar_lea.vmem [#allocation2], 64
      %v4790 = vld [vmem:[%s4789] sm:$0xf]
      %v4791 = vrot.slane %v1503, 4
      %v4792 = vrot.slane %v1506, 5
      %v4793 = vor.u32 %v4791, %v4792
      %v4795 = vrot.slane %v1513, 1
      %v4797 = vrot.slane %v1520, 5
      %v4798 = vrot.slane %v1523, 6
      %v4799 = vor.u32 %v4797, %v4798
      %v4801 = vrot.slane %v1530, 2
      %v4803 = vrot.slane %v3585, 6
      %v4804 = vrot.slane %v3588, 7
      %v4805 = vor.u32 %v4803, %v4804
      %v4808 = vunpack.c.l.b16 %v4790
      %v4809 = vpack.c.b16 %v4808, %v4808
      %v4810 = vrot.slane %v4809, 3
      %v4811 = vsel %vm1533, %v1477, %v4793
      %v4814 = vsel %vm1535, %v4811, %v4795
      %v4815 = vsel %vm1539, %v4795, %v4799
      %v4818 = vsel %vm1541, %v4815, %v4801
      %v4819 = vsel %vm1545, %v4801, %v4805
      %v4822 = vsel %vm490, %v4819, %v4810
      %s4823 = scalar_lea.vmem %s3, 640
      %v4824 = vld [vmem:[%s4823] sm:$0xf]
      %v4825 = vld [vmem:[%s4823 + $0x4] sm:$0xf]
      %v4826 = vld [vmem:[%s4823 + $0x8] sm:$0xf]
      %v4827 = vld [vmem:[%s4823 + $0xc] sm:$0xf]
      %v4828 = vld [vmem:[%s4823 + $0x10] sm:$0xf]
      %v4829 = vld [vmem:[%s4823 + $0x14] sm:$0xf]
      %v4830 = vld [vmem:[%s4823 + $0x18] sm:$0xf]
      %v4831 = vld [vmem:[%s4823 + $0x1c] sm:$0xf]
      %v4840 = vunpack.c.l.b16 %v4824
      %v4841 = vunpack.c.l.b16 %v4825
      %v4842 = vunpack.c.l.b16 %v4826
      %v4843 = vunpack.c.l.b16 %v4827
      %v4844 = vunpack.c.l.b16 %v4828
      %v4845 = vunpack.c.l.b16 %v4829
      %v4846 = vunpack.c.l.b16 %v4830
      %v4847 = vunpack.c.l.b16 %v4831
      %v4848 = vpack.c.b16 %v4841, %v4840
      %v4849 = vpack.c.b16 %v4843, %v4842
      %v4850 = vpack.c.b16 %v4845, %v4844
      %v4851 = vpack.c.b16 %v4847, %v4846
      %v4856 = vsel %vm1660, %v4814, 0
      %v4858 = vsel %vm1660, %v4818, 0
      %v4860 = vsel %vm1660, %v4822, 0
      %v4862 = vsel %vm1660, %v4810, 0
      %4864 = vmatprep.subr.bf16.mxu0 0
      %4865 = vmatpush1.bf16.msra.mxu0 0
      %4866 = vmatprep.subr.bf16.mxu0 0
      %4867 = vmatpush1.bf16.msra.mxu0 0
      %4868 = vmatprep.subr.bf16.mxu0 0
      %4869 = vmatpush1.bf16.msra.mxu0 0
      %4870 = vmatprep.subr.bf16.mxu0 0
      %4871 = vmatpush1.bf16.msra.mxu0 0
      %4872 = vmatprep.subr.bf16.mxu0 0
      %4873 = vmatpush1.bf16.msra.mxu0 %v4851
      %4874 = vmatprep.subr.bf16.mxu0 0
      %4875 = vmatpush1.bf16.msra.mxu0 %v4850
      %4876 = vmatprep.subr.bf16.mxu0 0
      %4877 = vmatpush1.bf16.msra.mxu0 %v4849
      %4878 = vmatprep.subr.bf16.mxu0 0
      %4879 = vmatpush1.bf16.msra.mxu0 %v4848
      %4880 = vmatprep.subr.bf16.mxu0 0
      %4881 = vmatpush2.bf16.msra.mxu0 0
      %4882 = vmatprep.subr.bf16.mxu0 0
      %4883 = vmatpush2.bf16.msra.mxu0 0
      %4884 = vmatprep.subr.bf16.mxu0 0
      %4885 = vmatpush2.bf16.msra.mxu0 0
      %4886 = vmatprep.subr.bf16.mxu0 0
      %4887 = vmatpush2.bf16.msra.mxu0 0
      %4888 = vmatprep.subr.bf16.mxu0 0
      %4889 = vmatpush2.bf16.msra.mxu0 0
      %4890 = vmatprep.subr.bf16.mxu0 0
      %4891 = vmatpush2.bf16.msra.mxu0 0
      %4892 = vmatprep.subr.bf16.mxu0 0
      %4893 = vmatpush2.bf16.msra.mxu0 0
      %4894 = vmatprep.subr.bf16.mxu0 0
      %4895 = vmatpush2.bf16.msra.mxu0 0
      %4896 = vmatprep.mubr.bf16.mxu0 0
      %4897 = vmatmul.mubr.bf16.gmra.mxu0 %v4856
      %v4898 = vpop.f32.mrf.mxu0
      %v4899 = vadd.f32 0.0, %v4898
      %v4900 = vpop.f32.mrf.mxu0
      %v4901 = vpop.f32.mrf.mxu0
      %v4902 = vadd.f32 0.0, %v4901
      %v4903 = vpop.f32.mrf.mxu0
      %4904 = vmatprep.mubr.bf16.mxu0 0
      %4905 = vmatmul.mubr.bf16.gmra.mxu0 %v4858
      %v4906 = vpop.f32.mrf.mxu0
      %v4907 = vadd.f32 0.0, %v4906
      %v4908 = vpop.f32.mrf.mxu0
      %v4909 = vpop.f32.mrf.mxu0
      %v4910 = vadd.f32 0.0, %v4909
      %v4911 = vpop.f32.mrf.mxu0
      %4912 = vmatprep.mubr.bf16.mxu0 0
      %4913 = vmatmul.mubr.bf16.gmra.mxu0 %v4860
      %v4914 = vpop.f32.mrf.mxu0
      %v4915 = vadd.f32 0.0, %v4914
      %v4916 = vpop.f32.mrf.mxu0
      %v4917 = vpop.f32.mrf.mxu0
      %v4918 = vadd.f32 0.0, %v4917
      %v4919 = vpop.f32.mrf.mxu0
      %4920 = vmatprep.mubr.bf16.mxu0 0
      %4921 = vmatmul.mubr.bf16.gmra.mxu0 %v4862
      %v4922 = vpop.f32.mrf.mxu0
      %v4923 = vadd.f32 0.0, %v4922
      %v4924 = vpop.f32.mrf.mxu0
      %v4925 = vpop.f32.mrf.mxu0
      %v4926 = vpop.f32.mrf.mxu0
      %4927 = vdwg.mxu0
      %v4928 = vadd.f32 %v4782, %v4899
      %v4929 = vadd.f32 %v4783, %v4902
      %v4930 = vadd.f32 %v4784, %v4907
      %v4931 = vadd.f32 %v4785, %v4910
      %v4932 = vadd.f32 %v4786, %v4915
      %v4933 = vadd.f32 %v4787, %v4918
      %v4934 = vadd.f32 %v4788, %v4923
      %s4935 = scalar_lea.vmem [#allocation2], 136
      %v4936 = vld [vmem:[%s4935] sm:$0xf]
      %v4937 = vrot.slane %v1586, 4
      %v4938 = vrot.slane %v1589, 5
      %v4939 = vor.u32 %v4937, %v4938
      %v4941 = vrot.slane %v1596, 1
      %v4943 = vrot.slane %v1603, 5
      %v4944 = vrot.slane %v1606, 6
      %v4945 = vor.u32 %v4943, %v4944
      %v4947 = vrot.slane %v1613, 2
      %v4949 = vrot.slane %v3735, 6
      %v4950 = vrot.slane %v3738, 7
      %v4951 = vor.u32 %v4949, %v4950
      %v4954 = vunpack.c.l.b16 %v4936
      %v4955 = vpack.c.b16 %v4954, %v4954
      %v4956 = vrot.slane %v4955, 3
      %v4957 = vsel %vm1533, %v1560, %v4939
      %v4960 = vsel %vm1535, %v4957, %v4941
      %v4961 = vsel %vm1539, %v4941, %v4945
      %v4964 = vsel %vm1541, %v4961, %v4947
      %v4965 = vsel %vm1545, %v4947, %v4951
      %v4968 = vsel %vm490, %v4965, %v4956
      %s4969 = scalar_lea.vmem %s3, 672
      %v4970 = vld [vmem:[%s4969] sm:$0xf]
      %v4971 = vld [vmem:[%s4969 + $0x4] sm:$0xf]
      %v4972 = vld [vmem:[%s4969 + $0x8] sm:$0xf]
      %v4973 = vld [vmem:[%s4969 + $0xc] sm:$0xf]
      %v4974 = vld [vmem:[%s4969 + $0x10] sm:$0xf]
      %v4975 = vld [vmem:[%s4969 + $0x14] sm:$0xf]
      %v4976 = vld [vmem:[%s4969 + $0x18] sm:$0xf]
      %v4977 = vld [vmem:[%s4969 + $0x1c] sm:$0xf]
      %v4986 = vunpack.c.l.b16 %v4970
      %v4987 = vunpack.c.l.b16 %v4971
      %v4988 = vunpack.c.l.b16 %v4972
      %v4989 = vunpack.c.l.b16 %v4973
      %v4990 = vunpack.c.l.b16 %v4974
      %v4991 = vunpack.c.l.b16 %v4975
      %v4992 = vunpack.c.l.b16 %v4976
      %v4993 = vunpack.c.l.b16 %v4977
      %v4994 = vpack.c.b16 %v4987, %v4986
      %v4995 = vpack.c.b16 %v4989, %v4988
      %v4996 = vpack.c.b16 %v4991, %v4990
      %v4997 = vpack.c.b16 %v4993, %v4992
      %v5002 = vsel %vm1660, %v4960, 0
      %v5004 = vsel %vm1660, %v4964, 0
      %v5006 = vsel %vm1660, %v4968, 0
      %v5008 = vsel %vm1660, %v4956, 0
      %5010 = vmatprep.subr.bf16.mxu0 0
      %5011 = vmatpush1.bf16.msra.mxu0 0
      %5012 = vmatprep.subr.bf16.mxu0 0
      %5013 = vmatpush1.bf16.msra.mxu0 0
      %5014 = vmatprep.subr.bf16.mxu0 0
      %5015 = vmatpush1.bf16.msra.mxu0 0
      %5016 = vmatprep.subr.bf16.mxu0 0
      %5017 = vmatpush1.bf16.msra.mxu0 0
      %5018 = vmatprep.subr.bf16.mxu0 0
      %5019 = vmatpush1.bf16.msra.mxu0 %v4997
      %5020 = vmatprep.subr.bf16.mxu0 0
      %5021 = vmatpush1.bf16.msra.mxu0 %v4996
      %5022 = vmatprep.subr.bf16.mxu0 0
      %5023 = vmatpush1.bf16.msra.mxu0 %v4995
      %5024 = vmatprep.subr.bf16.mxu0 0
      %5025 = vmatpush1.bf16.msra.mxu0 %v4994
      %5026 = vmatprep.subr.bf16.mxu0 0
      %5027 = vmatpush2.bf16.msra.mxu0 0
      %5028 = vmatprep.subr.bf16.mxu0 0
      %5029 = vmatpush2.bf16.msra.mxu0 0
      %5030 = vmatprep.subr.bf16.mxu0 0
      %5031 = vmatpush2.bf16.msra.mxu0 0
      %5032 = vmatprep.subr.bf16.mxu0 0
      %5033 = vmatpush2.bf16.msra.mxu0 0
      %5034 = vmatprep.subr.bf16.mxu0 0
      %5035 = vmatpush2.bf16.msra.mxu0 0
      %5036 = vmatprep.subr.bf16.mxu0 0
      %5037 = vmatpush2.bf16.msra.mxu0 0
      %5038 = vmatprep.subr.bf16.mxu0 0
      %5039 = vmatpush2.bf16.msra.mxu0 0
      %5040 = vmatprep.subr.bf16.mxu0 0
      %5041 = vmatpush2.bf16.msra.mxu0 0
      %5042 = vmatprep.mubr.bf16.mxu0 0
      %5043 = vmatmul.mubr.bf16.gmra.mxu0 %v5002
      %v5044 = vpop.f32.mrf.mxu0
      %v5045 = vadd.f32 0.0, %v5044
      %v5046 = vpop.f32.mrf.mxu0
      %v5047 = vpop.f32.mrf.mxu0
      %v5048 = vadd.f32 0.0, %v5047
      %v5049 = vpop.f32.mrf.mxu0
      %5050 = vmatprep.mubr.bf16.mxu0 0
      %5051 = vmatmul.mubr.bf16.gmra.mxu0 %v5004
      %v5052 = vpop.f32.mrf.mxu0
      %v5053 = vadd.f32 0.0, %v5052
      %v5054 = vpop.f32.mrf.mxu0
      %v5055 = vpop.f32.mrf.mxu0
      %v5056 = vadd.f32 0.0, %v5055
      %v5057 = vpop.f32.mrf.mxu0
      %5058 = vmatprep.mubr.bf16.mxu0 0
      %5059 = vmatmul.mubr.bf16.gmra.mxu0 %v5006
      %v5060 = vpop.f32.mrf.mxu0
      %v5061 = vadd.f32 0.0, %v5060
      %v5062 = vpop.f32.mrf.mxu0
      %v5063 = vpop.f32.mrf.mxu0
      %v5064 = vadd.f32 0.0, %v5063
      %v5065 = vpop.f32.mrf.mxu0
      %5066 = vmatprep.mubr.bf16.mxu0 0
      %5067 = vmatmul.mubr.bf16.gmra.mxu0 %v5008
      %v5068 = vpop.f32.mrf.mxu0
      %v5069 = vadd.f32 0.0, %v5068
      %v5070 = vpop.f32.mrf.mxu0
      %v5071 = vpop.f32.mrf.mxu0
      %v5072 = vpop.f32.mrf.mxu0
      %5073 = vdwg.mxu0
      %v5074 = vadd.f32 %v4928, %v5045
      %v5075 = vadd.f32 %v4929, %v5048
      %v5076 = vadd.f32 %v4930, %v5053
      %v5077 = vadd.f32 %v4931, %v5056
      %v5078 = vadd.f32 %v4932, %v5061
      %v5079 = vadd.f32 %v4933, %v5064
      %v5080 = vadd.f32 %v4934, %v5069
      %v5081 = vrot.slane %v1846, 1
      %v5082 = vor.u32 %v1843, %v5081
      %v5084 = vrot.slane %v1501, 5
      %v5086 = vrot.slane %v1854, 1
      %v5087 = vrot.slane %v1857, 2
      %v5088 = vor.u32 %v5086, %v5087
      %v5090 = vrot.slane %v1518, 6
      %v5092 = vrot.slane %v1865, 2
      %v5093 = vrot.slane %v1868, 3
      %v5094 = vor.u32 %v5092, %v5093
      %v5096 = vrot.slane %v3296, 7
      %v5099 = vshrl.u32 %v4809, 16
      %v5101 = vrot.slane %v5099, 3
      %v5102 = vshll.u32 %v4809, 16
      %v5104 = vrot.slane %v5102, 4
      %v5105 = vor.u32 %v5101, %v5104
      %v5106 = vsel %vm1533, %v5082, %v5084
      %v5109 = vsel %vm1535, %v5106, %v5088
      %v5110 = vsel %vm1539, %v5088, %v5090
      %v5113 = vsel %vm1541, %v5110, %v5094
      %v5114 = vsel %vm1545, %v5094, %v5096
      %v5117 = vsel %vm490, %v5114, %v5105
      %s5118 = scalar_lea.vmem %s3, 704
      %v5119 = vld [vmem:[%s5118] sm:$0xf]
      %v5120 = vld [vmem:[%s5118 + $0x4] sm:$0xf]
      %v5121 = vld [vmem:[%s5118 + $0x8] sm:$0xf]
      %v5122 = vld [vmem:[%s5118 + $0xc] sm:$0xf]
      %v5123 = vld [vmem:[%s5118 + $0x10] sm:$0xf]
      %v5124 = vld [vmem:[%s5118 + $0x14] sm:$0xf]
      %v5125 = vld [vmem:[%s5118 + $0x18] sm:$0xf]
      %v5126 = vld [vmem:[%s5118 + $0x1c] sm:$0xf]
      %v5135 = vunpack.c.l.b16 %v5119
      %v5136 = vunpack.c.l.b16 %v5120
      %v5137 = vunpack.c.l.b16 %v5121
      %v5138 = vunpack.c.l.b16 %v5122
      %v5139 = vunpack.c.l.b16 %v5123
      %v5140 = vunpack.c.l.b16 %v5124
      %v5141 = vunpack.c.l.b16 %v5125
      %v5142 = vunpack.c.l.b16 %v5126
      %v5143 = vpack.c.b16 %v5136, %v5135
      %v5144 = vpack.c.b16 %v5138, %v5137
      %v5145 = vpack.c.b16 %v5140, %v5139
      %v5146 = vpack.c.b16 %v5142, %v5141
      %v5151 = vsel %vm1660, %v5109, 0
      %v5153 = vsel %vm1660, %v5113, 0
      %v5155 = vsel %vm1660, %v5117, 0
      %v5158 = vsel %vm1660, %v5101, 0
      %5160 = vmatprep.subr.bf16.mxu0 0
      %5161 = vmatpush1.bf16.msra.mxu0 0
      %5162 = vmatprep.subr.bf16.mxu0 0
      %5163 = vmatpush1.bf16.msra.mxu0 0
      %5164 = vmatprep.subr.bf16.mxu0 0
      %5165 = vmatpush1.bf16.msra.mxu0 0
      %5166 = vmatprep.subr.bf16.mxu0 0
      %5167 = vmatpush1.bf16.msra.mxu0 0
      %5168 = vmatprep.subr.bf16.mxu0 0
      %5169 = vmatpush1.bf16.msra.mxu0 %v5146
      %5170 = vmatprep.subr.bf16.mxu0 0
      %5171 = vmatpush1.bf16.msra.mxu0 %v5145
      %5172 = vmatprep.subr.bf16.mxu0 0
      %5173 = vmatpush1.bf16.msra.mxu0 %v5144
      %5174 = vmatprep.subr.bf16.mxu0 0
      %5175 = vmatpush1.bf16.msra.mxu0 %v5143
      %5176 = vmatprep.subr.bf16.mxu0 0
      %5177 = vmatpush2.bf16.msra.mxu0 0
      %5178 = vmatprep.subr.bf16.mxu0 0
      %5179 = vmatpush2.bf16.msra.mxu0 0
      %5180 = vmatprep.subr.bf16.mxu0 0
      %5181 = vmatpush2.bf16.msra.mxu0 0
      %5182 = vmatprep.subr.bf16.mxu0 0
      %5183 = vmatpush2.bf16.msra.mxu0 0
      %5184 = vmatprep.subr.bf16.mxu0 0
      %5185 = vmatpush2.bf16.msra.mxu0 0
      %5186 = vmatprep.subr.bf16.mxu0 0
      %5187 = vmatpush2.bf16.msra.mxu0 0
      %5188 = vmatprep.subr.bf16.mxu0 0
      %5189 = vmatpush2.bf16.msra.mxu0 0
      %5190 = vmatprep.subr.bf16.mxu0 0
      %5191 = vmatpush2.bf16.msra.mxu0 0
      %5192 = vmatprep.mubr.bf16.mxu0 0
      %5193 = vmatmul.mubr.bf16.gmra.mxu0 %v5151
      %v5194 = vpop.f32.mrf.mxu0
      %v5195 = vadd.f32 0.0, %v5194
      %v5196 = vpop.f32.mrf.mxu0
      %v5197 = vpop.f32.mrf.mxu0
      %v5198 = vadd.f32 0.0, %v5197
      %v5199 = vpop.f32.mrf.mxu0
      %5200 = vmatprep.mubr.bf16.mxu0 0
      %5201 = vmatmul.mubr.bf16.gmra.mxu0 %v5153
      %v5202 = vpop.f32.mrf.mxu0
      %v5203 = vadd.f32 0.0, %v5202
      %v5204 = vpop.f32.mrf.mxu0
      %v5205 = vpop.f32.mrf.mxu0
      %v5206 = vadd.f32 0.0, %v5205
      %v5207 = vpop.f32.mrf.mxu0
      %5208 = vmatprep.mubr.bf16.mxu0 0
      %5209 = vmatmul.mubr.bf16.gmra.mxu0 %v5155
      %v5210 = vpop.f32.mrf.mxu0
      %v5211 = vadd.f32 0.0, %v5210
      %v5212 = vpop.f32.mrf.mxu0
      %v5213 = vpop.f32.mrf.mxu0
      %v5214 = vadd.f32 0.0, %v5213
      %v5215 = vpop.f32.mrf.mxu0
      %5216 = vmatprep.mubr.bf16.mxu0 0
      %5217 = vmatmul.mubr.bf16.gmra.mxu0 %v5158
      %v5218 = vpop.f32.mrf.mxu0
      %v5219 = vadd.f32 0.0, %v5218
      %v5220 = vpop.f32.mrf.mxu0
      %v5221 = vpop.f32.mrf.mxu0
      %v5222 = vpop.f32.mrf.mxu0
      %5223 = vdwg.mxu0
      %v5224 = vadd.f32 %v5074, %v5195
      %v5225 = vadd.f32 %v5075, %v5198
      %v5226 = vadd.f32 %v5076, %v5203
      %v5227 = vadd.f32 %v5077, %v5206
      %v5228 = vadd.f32 %v5078, %v5211
      %v5229 = vadd.f32 %v5079, %v5214
      %v5230 = vadd.f32 %v5080, %v5219
      %v5231 = vrot.slane %v2014, 1
      %v5232 = vor.u32 %v2011, %v5231
      %v5234 = vrot.slane %v1584, 5
      %v5236 = vrot.slane %v2022, 1
      %v5237 = vrot.slane %v2025, 2
      %v5238 = vor.u32 %v5236, %v5237
      %v5240 = vrot.slane %v1601, 6
      %v5242 = vrot.slane %v2033, 2
      %v5243 = vrot.slane %v2036, 3
      %v5244 = vor.u32 %v5242, %v5243
      %v5246 = vrot.slane %v3441, 7
      %v5249 = vshrl.u32 %v4955, 16
      %v5251 = vrot.slane %v5249, 3
      %v5252 = vshll.u32 %v4955, 16
      %v5254 = vrot.slane %v5252, 4
      %v5255 = vor.u32 %v5251, %v5254
      %v5256 = vsel %vm1533, %v5232, %v5234
      %v5259 = vsel %vm1535, %v5256, %v5238
      %v5260 = vsel %vm1539, %v5238, %v5240
      %v5263 = vsel %vm1541, %v5260, %v5244
      %v5264 = vsel %vm1545, %v5244, %v5246
      %v5267 = vsel %vm490, %v5264, %v5255
      %s5268 = scalar_lea.vmem %s3, 736
      %v5269 = vld [vmem:[%s5268] sm:$0xf]
      %v5270 = vld [vmem:[%s5268 + $0x4] sm:$0xf]
      %v5271 = vld [vmem:[%s5268 + $0x8] sm:$0xf]
      %v5272 = vld [vmem:[%s5268 + $0xc] sm:$0xf]
      %v5273 = vld [vmem:[%s5268 + $0x10] sm:$0xf]
      %v5274 = vld [vmem:[%s5268 + $0x14] sm:$0xf]
      %v5275 = vld [vmem:[%s5268 + $0x18] sm:$0xf]
      %v5276 = vld [vmem:[%s5268 + $0x1c] sm:$0xf]
      %v5285 = vunpack.c.l.b16 %v5269
      %v5286 = vunpack.c.l.b16 %v5270
      %v5287 = vunpack.c.l.b16 %v5271
      %v5288 = vunpack.c.l.b16 %v5272
      %v5289 = vunpack.c.l.b16 %v5273
      %v5290 = vunpack.c.l.b16 %v5274
      %v5291 = vunpack.c.l.b16 %v5275
      %v5292 = vunpack.c.l.b16 %v5276
      %v5293 = vpack.c.b16 %v5286, %v5285
      %v5294 = vpack.c.b16 %v5288, %v5287
      %v5295 = vpack.c.b16 %v5290, %v5289
      %v5296 = vpack.c.b16 %v5292, %v5291
      %v5301 = vsel %vm1660, %v5259, 0
      %v5303 = vsel %vm1660, %v5263, 0
      %v5305 = vsel %vm1660, %v5267, 0
      %v5308 = vsel %vm1660, %v5251, 0
      %5310 = vmatprep.subr.bf16.mxu0 0
      %5311 = vmatpush1.bf16.msra.mxu0 0
      %5312 = vmatprep.subr.bf16.mxu0 0
      %5313 = vmatpush1.bf16.msra.mxu0 0
      %5314 = vmatprep.subr.bf16.mxu0 0
      %5315 = vmatpush1.bf16.msra.mxu0 0
      %5316 = vmatprep.subr.bf16.mxu0 0
      %5317 = vmatpush1.bf16.msra.mxu0 0
      %5318 = vmatprep.subr.bf16.mxu0 0
      %5319 = vmatpush1.bf16.msra.mxu0 %v5296
      %5320 = vmatprep.subr.bf16.mxu0 0
      %5321 = vmatpush1.bf16.msra.mxu0 %v5295
      %5322 = vmatprep.subr.bf16.mxu0 0
      %5323 = vmatpush1.bf16.msra.mxu0 %v5294
      %5324 = vmatprep.subr.bf16.mxu0 0
      %5325 = vmatpush1.bf16.msra.mxu0 %v5293
      %5326 = vmatprep.subr.bf16.mxu0 0
      %5327 = vmatpush2.bf16.msra.mxu0 0
      %5328 = vmatprep.subr.bf16.mxu0 0
      %5329 = vmatpush2.bf16.msra.mxu0 0
      %5330 = vmatprep.subr.bf16.mxu0 0
      %5331 = vmatpush2.bf16.msra.mxu0 0
      %5332 = vmatprep.subr.bf16.mxu0 0
      %5333 = vmatpush2.bf16.msra.mxu0 0
      %5334 = vmatprep.subr.bf16.mxu0 0
      %5335 = vmatpush2.bf16.msra.mxu0 0
      %5336 = vmatprep.subr.bf16.mxu0 0
      %5337 = vmatpush2.bf16.msra.mxu0 0
      %5338 = vmatprep.subr.bf16.mxu0 0
      %5339 = vmatpush2.bf16.msra.mxu0 0
      %5340 = vmatprep.subr.bf16.mxu0 0
      %5341 = vmatpush2.bf16.msra.mxu0 0
      %5342 = vmatprep.mubr.bf16.mxu0 0
      %5343 = vmatmul.mubr.bf16.gmra.mxu0 %v5301
      %v5344 = vpop.f32.mrf.mxu0
      %v5345 = vadd.f32 0.0, %v5344
      %v5346 = vpop.f32.mrf.mxu0
      %v5347 = vpop.f32.mrf.mxu0
      %v5348 = vadd.f32 0.0, %v5347
      %v5349 = vpop.f32.mrf.mxu0
      %5350 = vmatprep.mubr.bf16.mxu0 0
      %5351 = vmatmul.mubr.bf16.gmra.mxu0 %v5303
      %v5352 = vpop.f32.mrf.mxu0
      %v5353 = vadd.f32 0.0, %v5352
      %v5354 = vpop.f32.mrf.mxu0
      %v5355 = vpop.f32.mrf.mxu0
      %v5356 = vadd.f32 0.0, %v5355
      %v5357 = vpop.f32.mrf.mxu0
      %5358 = vmatprep.mubr.bf16.mxu0 0
      %5359 = vmatmul.mubr.bf16.gmra.mxu0 %v5305
      %v5360 = vpop.f32.mrf.mxu0
      %v5361 = vadd.f32 0.0, %v5360
      %v5362 = vpop.f32.mrf.mxu0
      %v5363 = vpop.f32.mrf.mxu0
      %v5364 = vadd.f32 0.0, %v5363
      %v5365 = vpop.f32.mrf.mxu0
      %5366 = vmatprep.mubr.bf16.mxu0 0
      %5367 = vmatmul.mubr.bf16.gmra.mxu0 %v5308
      %v5368 = vpop.f32.mrf.mxu0
      %v5369 = vadd.f32 0.0, %v5368
      %v5370 = vpop.f32.mrf.mxu0
      %v5371 = vpop.f32.mrf.mxu0
      %v5372 = vpop.f32.mrf.mxu0
      %5373 = vdwg.mxu0
      %v5374 = vadd.f32 %v5224, %v5345
      %v5375 = vadd.f32 %v5225, %v5348
      %v5376 = vadd.f32 %v5226, %v5353
      %v5377 = vadd.f32 %v5227, %v5356
      %v5378 = vadd.f32 %v5228, %v5361
      %v5379 = vadd.f32 %v5229, %v5364
      %v5380 = vadd.f32 %v5230, %v5369
      %v5381 = vld [vmem:[%s4789] sm:$0xe]
      %v5382 = vld [vmem:[%s4789 + $0x4] sm:$0x1]
      %v5383 = vrot.slane %v2204, 1
      %v5385 = vrot.slane %v2213, 5
      %v5386 = vrot.slane %v2216, 6
      %v5387 = vor.u32 %v5385, %v5386
      %v5389 = vrot.slane %v2225, 2
      %v5391 = vrot.slane %v2234, 6
      %v5392 = vrot.slane %v2237, 7
      %v5393 = vor.u32 %v5391, %v5392
      %v5395 = vrot.slane %v3893, 3
      %v5397 = vpack.c.b16 %v3905, %v3904
      %v5399 = vshrl.u32 %v5397, 16
      %v5401 = vrot.slane %v5399, 7
      %v5402 = vshll.u32 %v5397, 16
      %v5404 = vor.u32 %v5401, %v5402
      %v5408 = vunpack.c.l.b16 %v5381
      %v5409 = vunpack.c.l.b16 %v5382
      %v5410 = vpack.c.b16 %v5408, %v5408
      %v5411 = vpack.c.b16 %v5409, %v5409
      %v5412 = vsel %vm1533, %v5383, %v5387
      %v5415 = vsel %vm1535, %v5412, %v5389
      %v5416 = vsel %vm1539, %v5389, %v5393
      %v5419 = vsel %vm1541, %v5416, %v5395
      %v5420 = vsel %vm1545, %v5395, %v5404
      %v5423 = vsel %vm490, %v5420, %v5410
      %s5424 = scalar_lea.vmem %s3, 768
      %v5425 = vld [vmem:[%s5424] sm:$0xf]
      %v5426 = vld [vmem:[%s5424 + $0x4] sm:$0xf]
      %v5427 = vld [vmem:[%s5424 + $0x8] sm:$0xf]
      %v5428 = vld [vmem:[%s5424 + $0xc] sm:$0xf]
      %v5429 = vld [vmem:[%s5424 + $0x10] sm:$0xf]
      %v5430 = vld [vmem:[%s5424 + $0x14] sm:$0xf]
      %v5431 = vld [vmem:[%s5424 + $0x18] sm:$0xf]
      %v5432 = vld [vmem:[%s5424 + $0x1c] sm:$0xf]
      %v5441 = vunpack.c.l.b16 %v5425
      %v5442 = vunpack.c.l.b16 %v5426
      %v5443 = vunpack.c.l.b16 %v5427
      %v5444 = vunpack.c.l.b16 %v5428
      %v5445 = vunpack.c.l.b16 %v5429
      %v5446 = vunpack.c.l.b16 %v5430
      %v5447 = vunpack.c.l.b16 %v5431
      %v5448 = vunpack.c.l.b16 %v5432
      %v5449 = vpack.c.b16 %v5442, %v5441
      %v5450 = vpack.c.b16 %v5444, %v5443
      %v5451 = vpack.c.b16 %v5446, %v5445
      %v5452 = vpack.c.b16 %v5448, %v5447
      %v5457 = vsel %vm1660, %v5415, 0
      %v5459 = vsel %vm1660, %v5419, 0
      %v5461 = vsel %vm1660, %v5423, 0
      %v5464 = vsel %vm1660, %v5411, 0
      %5466 = vmatprep.subr.bf16.mxu0 0
      %5467 = vmatpush1.bf16.msra.mxu0 0
      %5468 = vmatprep.subr.bf16.mxu0 0
      %5469 = vmatpush1.bf16.msra.mxu0 0
      %5470 = vmatprep.subr.bf16.mxu0 0
      %5471 = vmatpush1.bf16.msra.mxu0 0
      %5472 = vmatprep.subr.bf16.mxu0 0
      %5473 = vmatpush1.bf16.msra.mxu0 0
      %5474 = vmatprep.subr.bf16.mxu0 0
      %5475 = vmatpush1.bf16.msra.mxu0 %v5452
      %5476 = vmatprep.subr.bf16.mxu0 0
      %5477 = vmatpush1.bf16.msra.mxu0 %v5451
      %5478 = vmatprep.subr.bf16.mxu0 0
      %5479 = vmatpush1.bf16.msra.mxu0 %v5450
      %5480 = vmatprep.subr.bf16.mxu0 0
      %5481 = vmatpush1.bf16.msra.mxu0 %v5449
      %5482 = vmatprep.subr.bf16.mxu0 0
      %5483 = vmatpush2.bf16.msra.mxu0 0
      %5484 = vmatprep.subr.bf16.mxu0 0
      %5485 = vmatpush2.bf16.msra.mxu0 0
      %5486 = vmatprep.subr.bf16.mxu0 0
      %5487 = vmatpush2.bf16.msra.mxu0 0
      %5488 = vmatprep.subr.bf16.mxu0 0
      %5489 = vmatpush2.bf16.msra.mxu0 0
      %5490 = vmatprep.subr.bf16.mxu0 0
      %5491 = vmatpush2.bf16.msra.mxu0 0
      %5492 = vmatprep.subr.bf16.mxu0 0
      %5493 = vmatpush2.bf16.msra.mxu0 0
      %5494 = vmatprep.subr.bf16.mxu0 0
      %5495 = vmatpush2.bf16.msra.mxu0 0
      %5496 = vmatprep.subr.bf16.mxu0 0
      %5497 = vmatpush2.bf16.msra.mxu0 0
      %5498 = vmatprep.mubr.bf16.mxu0 0
      %5499 = vmatmul.mubr.bf16.gmra.mxu0 %v5457
      %v5500 = vpop.f32.mrf.mxu0
      %v5501 = vadd.f32 0.0, %v5500
      %v5502 = vpop.f32.mrf.mxu0
      %v5503 = vpop.f32.mrf.mxu0
      %v5504 = vadd.f32 0.0, %v5503
      %v5505 = vpop.f32.mrf.mxu0
      %5506 = vmatprep.mubr.bf16.mxu0 0
      %5507 = vmatmul.mubr.bf16.gmra.mxu0 %v5459
      %v5508 = vpop.f32.mrf.mxu0
      %v5509 = vadd.f32 0.0, %v5508
      %v5510 = vpop.f32.mrf.mxu0
      %v5511 = vpop.f32.mrf.mxu0
      %v5512 = vadd.f32 0.0, %v5511
      %v5513 = vpop.f32.mrf.mxu0
      %5514 = vmatprep.mubr.bf16.mxu0 0
      %5515 = vmatmul.mubr.bf16.gmra.mxu0 %v5461
      %v5516 = vpop.f32.mrf.mxu0
      %v5517 = vadd.f32 0.0, %v5516
      %v5518 = vpop.f32.mrf.mxu0
      %v5519 = vpop.f32.mrf.mxu0
      %v5520 = vadd.f32 0.0, %v5519
      %v5521 = vpop.f32.mrf.mxu0
      %5522 = vmatprep.mubr.bf16.mxu0 0
      %5523 = vmatmul.mubr.bf16.gmra.mxu0 %v5464
      %v5524 = vpop.f32.mrf.mxu0
      %v5525 = vadd.f32 0.0, %v5524
      %v5526 = vpop.f32.mrf.mxu0
      %v5527 = vpop.f32.mrf.mxu0
      %v5528 = vpop.f32.mrf.mxu0
      %5529 = vdwg.mxu0
      %v5530 = vadd.f32 %v5374, %v5501
      %v5531 = vadd.f32 %v5375, %v5504
      %v5532 = vadd.f32 %v5376, %v5509
      %v5533 = vadd.f32 %v5377, %v5512
      %v5534 = vadd.f32 %v5378, %v5517
      %v5535 = vadd.f32 %v5379, %v5520
      %v5536 = vadd.f32 %v5380, %v5525
      %v5537 = vld [vmem:[%s4] sm:$0x1]
      %v5539 = vlaneseq
      %v5540 = vshrl.u32 %v5539, 7
      %v5541 = vsub.s32 0, %v5540
      %v5542 = vrot.slane %v5537, %v5541
      %v5544 = vadd.f32 %v5530, %v5542
      %v5545 = vadd.f32 %v5531, %v5542
      %v5546 = vadd.f32 %v5532, %v5542
      %v5547 = vadd.f32 %v5533, %v5542
      %v5548 = vadd.f32 %v5534, %v5542
      %v5549 = vadd.f32 %v5535, %v5542
      %v5550 = vadd.f32 %v5536, %v5542
      %vm5551 = vcmp.gt.f32.partialorder %v5544, 0.0
      %vm5552 = vcmp.gt.f32.partialorder %v5545, 0.0
      %vm5553 = vcmp.gt.f32.partialorder %v5546, 0.0
      %vm5554 = vcmp.gt.f32.partialorder %v5547, 0.0
      %vm5555 = vcmp.gt.f32.partialorder %v5548, 0.0
      %vm5556 = vcmp.gt.f32.partialorder %v5549, 0.0
      %vm5557 = vcmp.gt.f32.partialorder %v5550, 0.0
      %v5558 = vmul.f32 %v5544, 0.2
      %v5559 = vmul.f32 %v5545, 0.2
      %v5560 = vmul.f32 %v5546, 0.2
      %v5561 = vmul.f32 %v5547, 0.2
      %v5562 = vmul.f32 %v5548, 0.2
      %v5563 = vmul.f32 %v5549, 0.2
      %v5564 = vmul.f32 %v5550, 0.2
      %v5565 = vsel %vm5551, %v5544, %v5558
      %v5566 = vsel %vm5552, %v5545, %v5559
      %v5567 = vsel %vm5553, %v5546, %v5560
      %v5568 = vsel %vm5554, %v5547, %v5561
      %v5569 = vsel %vm5555, %v5548, %v5562
      %v5570 = vsel %vm5556, %v5549, %v5563
      %v5571 = vsel %vm5557, %v5550, %v5564
      %v5572 = vld [vmem:[%s5] sm:$0xff]
      %v5573 = vld [vmem:[%s5 + $0x8] sm:$0xff]
      %v5574 = vld [vmem:[%s5 + $0x10] sm:$0xff]
      %v5575 = vld [vmem:[%s5 + $0x18] sm:$0xff]
      %v5576 = vld [vmem:[%s5 + $0x20] sm:$0xff]
      %v5577 = vld [vmem:[%s5 + $0x28] sm:$0xff]
      %v5578 = vld [vmem:[%s5 + $0x30] sm:$0x1]
      %v5579 = vmul.f32 %v5565, %v5572
      %v5580 = vmul.f32 %v5566, %v5573
      %v5581 = vmul.f32 %v5567, %v5574
      %v5582 = vmul.f32 %v5568, %v5575
      %v5583 = vmul.f32 %v5569, %v5576
      %v5584 = vmul.f32 %v5570, %v5577
      %v5585 = vmul.f32 %v5571, %v5578
      %5586 = vadd.xlane.f32.xlu0 %v5579
      %v5587 = vpop.xlane.xlu0 %5586
      %5588 = vadd.xlane.f32.xlu0 %v5580
      %v5589 = vpop.xlane.xlu0 %5588
      %5590 = vadd.xlane.f32.xlu0 %v5581
      %v5591 = vpop.xlane.xlu0 %5590
      %5592 = vadd.xlane.f32.xlu0 %v5582
      %v5593 = vpop.xlane.xlu0 %5592
      %5594 = vadd.xlane.f32.xlu0 %v5583
      %v5595 = vpop.xlane.xlu0 %5594
      %5596 = vadd.xlane.f32.xlu0 %v5584
      %v5597 = vpop.xlane.xlu0 %5596
      %vm5598 = vcmask 1040384
      %v5599 = vsel %vm5598, %v5585, 0.0
      %5600 = vadd.xlane.f32.xlu0 %v5599
      %v5601 = vpop.xlane.xlu0 %5600
      %v5602 = vadd.f32 %v5587, %v5589
      %v5603 = vadd.f32 %v5602, %v5591
      %v5604 = vadd.f32 %v5603, %v5593
      %v5605 = vadd.f32 %v5604, %v5595
      %v5606 = vadd.f32 %v5605, %v5597
      %v5607 = vsel %vm5598, %v5601, 0.0
      %v5608 = vadd.f32 %v5606, %v5607
      %v5609 = vrot.slane %v5608, 4
      %v5610 = vadd.f32 %v5608, %v5609
      %v5611 = vrot.slane %v5610, 2
      %v5612 = vadd.f32 %v5610, %v5611
      %v5613 = vrot.slane %v5612, 1
      %v5614 = vadd.f32 %v5612, %v5613
      %v5615 = vld [vmem:[#allocation3] sm:$0x1]
      %v5616 = vadd.f32 %v5614, %v5615
      %v5617 = vsub.f32 0.0, %v5616
      %v5618 = vmul.f32 %v5617, 1.442695
      %v5619 = vpow.pop %v5618
      %v5620 = vadd.f32 %v5619, 1.0
      %v5621 = vrcp.pop %v5620
      %vm5622 = vcmask 0
      %5623 = vst.msk [vmem:[%s276] sm:$0x1] %vm5622, %v5621
      %p5624 = scmp.lt.s32.totalorder %s20, 1
      %s5625 = scalar_select %p5624, %s20, 1
      %s5626 = scalar_lea.vmem %s7, %s5625
      // Predicated region
      $region49: #{discriminator_forward.1} parent=47 // pred_check
        %p5627 = pneg %p190
      $region50: #{discriminator_forward.1} parent=47 // pred_check_branch
        %5629 = sbr.rel (%p5627) target = $region52
      $region51: #{discriminator_forward.1} parent=47 // pred_region
        _
      $region52: #{discriminator_forward.1} parent=47 // pred_fallthru
        _
    $region48: #{discriminator_forward.1} parent=5 // pred_fallthru
      _
    %p5630 = scmp.le.s32.totalorder 2, %s15
    // Predicated region
    $region53: #{discriminator_forward.1} parent=5 // pred_check
      %p5631 = pneg %p5630
    $region54: #{discriminator_forward.1} parent=5 // pred_check_branch
      %5633 = sbr.rel (%p5631) target = $region56
    $region55: #{discriminator_forward.1} parent=5 // pred_region
      %s5634 = ssub.s32 %s15, 2
      // Predicated region
      $region57: #{discriminator_forward.1} parent=55 // pred_check
        %p5635 = pneg %p196
      $region58: #{discriminator_forward.1} parent=55 // pred_check_branch
        %5637 = sbr.rel (%p5635) target = $region60
      $region59: #{discriminator_forward.1} parent=55 // pred_region
        %p5638 = scmp.lt.s32.totalorder %s21, 1
        %s5639 = scalar_select %p5638, %s21, 1
        %s5640 = scalar_lea.vmem %s7, %s5639
      $region60: #{discriminator_forward.1} parent=55 // pred_fallthru
        _
    $region56: #{discriminator_forward.1} parent=5 // pred_fallthru
      _
  $region6: #{discriminator_forward.1} parent=0 // loop_footer
    %s19 = sadd.s32 1, %s15
  $region7: #{discriminator_forward.1} parent=0 // loop_footer_branch
    %14 = sbr.rel target = $region3
  $region8: #{discriminator_forward.1} parent=0 // loop_exit
    _

</llo_original>
